<compile_context>
chip_gen: v6e
topology: v6e:2x2x1
jax: 0.10.0
libtpu: 0.0.40
codegen_flags: <defaults>
</compile_context>

<pallas_src>
import jax
import jax.numpy as jnp
from jax.experimental import pallas as pl
from jax.experimental.pallas import tpu as pltpu

C = 128        # fixed by the module: Conv2d(128, 128, kernel_size=3, padding=1)
HIDDEN = 800   # Linear(n_inputs, 800)
EPS = 1e-5     # BatchNorm2d default eps
N_EXTRA = 10   # p1..p9, p0


def _round_up(x, m):
    return (x + m - 1) // m * m


def _even(x):
    return x + (x % 2)


def _stage_dims(h, w):
    """Padded (rows, row-stride) for a zero-haloed layout; both forced even so
    MaxPool(2,2,p=1) is an exact pairwise max of adjacent flat rows."""
    return _even(h + 2), _even(w + 2)


# ---------------------------------------------------------------------------
# Fused kernel
# ---------------------------------------------------------------------------
def _make_fused_kernel(b_tile, hi, wi):
    # stage-1 geometry (conv1 on hi x wi)
    sh1, sw1 = _stage_dims(hi, wi)
    blk1 = sh1 * sw1                    # per-image block in the padded layout
    lead1 = sw1 + 1                     # leading zero margin (tap offsets >= 0)
    m1 = _round_up(b_tile * blk1, 8)    # conv1 matmul rows (incl. halo rows)
    h2, w2 = hi // 2 + 1, wi // 2 + 1
    # stage-2 geometry (conv2 on h2 x w2)
    sh2, sw2 = _stage_dims(h2, w2)
    blk2 = sh2 * sw2
    lead2 = sw2 + 1
    m2 = _round_up(b_tile * blk2, 8)
    h3, w3 = h2 // 2 + 1, w2 // 2 + 1
    fC = C * h3 * w3                    # flattened conv features
    wq1, wq2 = sw1 // 2, sw2 // 2

    def kernel(x_ref, ex_ref, msk1_ref, msk2_ref,
               cw1_ref, cs1_ref, cb1_ref, cw2_ref, cs2_ref, cb2_ref,
               lw1_ref, lb1_ref, lw2_ref, lb2_ref,
               o_ref,
               xp1, xp2, lhs, ybuf, ywbuf, linr):
        # Zero the padded conv-input scratches every step: halos/tails must be
        # zero and the interiors are rewritten below.  (Not gated on
        # program_id==0 so the kernel stays correct if the parallel batch axis
        # is sharded across TensorCores.)
        xp1[...] = jnp.zeros_like(xp1)
        xp2[...] = jnp.zeros_like(xp2)

        # ---- stage 1: copy the NHWC input interior into conv1's padded layout --
        for b in range(b_tile):
            for r in range(hi):
                row = lead1 + b * blk1 + (1 + r) * sw1 + 1
                xp1[pl.ds(row, wi), :] = x_ref[b, r]

        # ---- stage 2: conv1 = one im2col bf16 matmul + folded BN + ReLU + mask --
        for t in range(9):
            kh, kw = t // 3, t % 3
            lhs[pl.ds(0, m1), pl.ds(t * C, C)] = (
                xp1[pl.ds(kh * sw1 + kw, m1), :].astype(jnp.bfloat16))
        acc = jnp.dot(lhs[pl.ds(0, m1), :], cw1_ref[...],
                      preferred_element_type=jnp.float32)
        ybuf[pl.ds(0, m1), :] = (
            jnp.maximum(acc * cs1_ref[...] + cb1_ref[...], 0.0) * msk1_ref[...])

        # ---- stage 3: maxpool(2,2,p=1) -> conv2's padded interior ---------------
        # W-direction: pairwise max of even/odd flat rows (exact: values >= 0,
        # halo positions are zero thanks to the mask).
        ywbuf[pl.ds(0, m1 // 2), :] = jnp.maximum(
            ybuf[pl.ds(0, m1 // 2, stride=2), :],
            ybuf[pl.ds(1, m1 // 2, stride=2), :])
        # H-direction: max of adjacent pooled rows, stored into xp2's interior.
        for b in range(b_tile):
            for rr in range(h2):
                r0 = ywbuf[pl.ds((b * sh1 + 2 * rr) * wq1, w2), :]
                r1 = ywbuf[pl.ds((b * sh1 + 2 * rr + 1) * wq1, w2), :]
                xp2[pl.ds(lead2 + b * blk2 + (1 + rr) * sw2 + 1, w2), :] = (
                    jnp.maximum(r0, r1))

        # ---- stage 4: conv2 (same structure) ------------------------------------
        for t in range(9):
            kh, kw = t // 3, t % 3
            lhs[pl.ds(0, m2), pl.ds(t * C, C)] = (
                xp2[pl.ds(kh * sw2 + kw, m2), :].astype(jnp.bfloat16))
        acc2 = jnp.dot(lhs[pl.ds(0, m2), :], cw2_ref[...],
                       preferred_element_type=jnp.float32)
        ybuf[pl.ds(0, m2), :] = (
            jnp.maximum(acc2 * cs2_ref[...] + cb2_ref[...], 0.0) * msk2_ref[...])

        # ---- stage 5: maxpool + flatten (HWC order; W1 rows pre-permuted) -------
        ywbuf[pl.ds(0, m2 // 2), :] = jnp.maximum(
            ybuf[pl.ds(0, m2 // 2, stride=2), :],
            ybuf[pl.ds(1, m2 // 2, stride=2), :])
        for b in range(b_tile):
            for rr in range(h3):
                r0 = ywbuf[pl.ds((b * sh2 + 2 * rr) * wq2, w3), :]
                r1 = ywbuf[pl.ds((b * sh2 + 2 * rr + 1) * wq2, w3), :]
                pr = jnp.maximum(r0, r1)                         # (w3, C)
                for cc in range(w3):
                    linr[pl.ds(b, 1), pl.ds((rr * w3 + cc) * C, C)] = (
                        pr[cc:cc + 1, :])
        linr[:, pl.ds(fC, C)] = ex_ref[...]     # 10 extra scalars, zero-padded to C

        # ---- stage 6: MLP head on the whole batch tile --------------------------
        lv = linr[...].astype(jnp.bfloat16)                      # (b_tile, n_in_p)
        pre = jnp.dot(lv, lw1_ref[...], preferred_element_type=jnp.float32)
        hact = jnp.tanh(pre + lb1_ref[...])                      # f32 (b_tile, h1p)
        z = jnp.sum(hact * lw2_ref[...], axis=-1, keepdims=True) + lb2_ref[0, 0]
        o_ref[...] = 1.0 / (1.0 + jnp.exp(-z))

    dims = dict(sh1=sh1, sw1=sw1, blk1=blk1, m1=m1, h2=h2, w2=w2,
                sh2=sh2, sw2=sw2, blk2=blk2, m2=m2, h3=h3, w3=w3, fC=fC)
    return kernel, dims


def class_specialist_forward(kp, x_nchw, ps, b_tile=None):
    b = x_nchw.shape[0]
    hi, wi = x_nchw.shape[2], x_nchw.shape[3]
    if b_tile is None:
        b_tile = b if b <= 8 else 8
    b_pad = _round_up(b, b_tile)

    # NCHW -> NHWC (layout conversion forced by the PyTorch-style input contract).
    x = jnp.transpose(x_nchw, (0, 2, 3, 1)).astype(jnp.float32)
    extras = jnp.concatenate(list(ps), axis=1).astype(jnp.float32)      # (B, 10)
    extras = jnp.pad(extras, ((0, 0), (0, C - extras.shape[1])))        # (B, 128)
    if b_pad != b:
        x = jnp.pad(x, ((0, b_pad - b), (0, 0), (0, 0), (0, 0)))
        extras = jnp.pad(extras, ((0, b_pad - b), (0, 0)))

    kernel, d = _make_fused_kernel(b_tile, hi, wi)

    def make_mask(m_rows, blk, sw, h, w):
        j = jnp.arange(m_rows)
        bb = j // blk
        q = j % blk
        rp = q // sw
        cp = q % sw
        valid = (bb < b_tile) & (rp >= 1) & (rp <= h) & (cp >= 1) & (cp <= w)
        return valid.astype(jnp.float32).reshape(m_rows, 1)

    msk1 = make_mask(d["m1"], d["blk1"], d["sw1"], hi, wi)
    msk2 = make_mask(d["m2"], d["blk2"], d["sw2"], d["h2"], d["w2"])

    n_in_p = kp["w1t"].shape[0]
    h1p = kp["w1t"].shape[1]

    xp1_rows = _round_up(d["m1"] + 2 * d["sw1"] + 2, 8)
    xp2_rows = _round_up(d["m2"] + 2 * d["sw2"] + 2, 8)
    m_max = max(d["m1"], d["m2"])

    out = pl.pallas_call(
        kernel,
        out_shape=jax.ShapeDtypeStruct((b_pad, 1), jnp.float32),
        grid_spec=pltpu.PrefetchScalarGridSpec(
            num_scalar_prefetch=0,
            grid=(b_pad // b_tile,),
            in_specs=[
                pl.BlockSpec((b_tile, hi, wi, C), lambda i: (i, 0, 0, 0)),   # x
                pl.BlockSpec((b_tile, C), lambda i: (i, 0)),                 # extras
                pl.BlockSpec((d["m1"], 1), lambda i: (0, 0)),                # mask1
                pl.BlockSpec((d["m2"], 1), lambda i: (0, 0)),                # mask2
                pl.BlockSpec((9 * C, C), lambda i: (0, 0)),                  # conv1 W (im2col, bf16)
                pl.BlockSpec((1, C), lambda i: (0, 0)),                      # bn1 scale
                pl.BlockSpec((1, C), lambda i: (0, 0)),                      # bn1 bias
                pl.BlockSpec((9 * C, C), lambda i: (0, 0)),                  # conv2 W (im2col, bf16)
                pl.BlockSpec((1, C), lambda i: (0, 0)),                      # bn2 scale
                pl.BlockSpec((1, C), lambda i: (0, 0)),                      # bn2 bias
                pl.BlockSpec((n_in_p, h1p), lambda i: (0, 0)),               # W1 (bf16)
                pl.BlockSpec((1, h1p), lambda i: (0, 0)),                    # b1
                pl.BlockSpec((1, h1p), lambda i: (0, 0)),                    # W2 row
                pl.BlockSpec(memory_space=pltpu.MemorySpace.SMEM),           # b2 scalar
            ],
            out_specs=pl.BlockSpec((b_tile, 1), lambda i: (i, 0)),
            scratch_shapes=[
                pltpu.VMEM((xp1_rows, C), jnp.float32),        # padded conv1 input
                pltpu.VMEM((xp2_rows, C), jnp.float32),        # padded conv2 input
                pltpu.VMEM((m_max, 9 * C), jnp.bfloat16),      # im2col LHS (shared)
                pltpu.VMEM((m_max, C), jnp.float32),           # conv activations
                pltpu.VMEM((m_max // 2, C), jnp.float32),      # W-pooled activations
                pltpu.VMEM((b_tile, n_in_p), jnp.float32),     # flattened MLP input
            ]),
        compiler_params=pltpu.CompilerParams(
            dimension_semantics=("parallel",)),
    )(x, extras, msk1, msk2,
      kp["w9_1"], kp["s1"], kp["bb1"], kp["w9_2"], kp["s2"], kp["bb2"],
      kp["w1t"], kp["b1r"], kp["w2r"], kp["b2r"])
    return out[:b]


# ---------------------------------------------------------------------------
# Parameters (deterministic, PyTorch layouts: conv OIHW, linear (out, in))
# ---------------------------------------------------------------------------
def init_params(key, n_inputs):
    ks = list(jax.random.split(key, 16))

    def nrm(k, shape, s):
        return jax.random.normal(k, shape, jnp.float32) * s

    p = {}
    p["cw1"] = nrm(ks[0], (C, C, 3, 3), 0.05)
    p["cb1"] = nrm(ks[1], (C,), 0.05)
    p["g1"] = 1.0 + nrm(ks[2], (C,), 0.1)
    p["be1"] = nrm(ks[3], (C,), 0.1)
    p["rm1"] = nrm(ks[4], (C,), 0.1)
    p["rv1"] = jnp.abs(1.0 + nrm(ks[5], (C,), 0.1))
    p["cw2"] = nrm(ks[6], (C, C, 3, 3), 0.05)
    p["cb2"] = nrm(ks[7], (C,), 0.05)
    p["g2"] = 1.0 + nrm(ks[8], (C,), 0.1)
    p["be2"] = nrm(ks[9], (C,), 0.1)
    p["rm2"] = nrm(ks[10], (C,), 0.1)
    p["rv2"] = jnp.abs(1.0 + nrm(ks[11], (C,), 0.1))
    p["lw1"] = nrm(ks[12], (HIDDEN, n_inputs), 0.02)
    p["lb1"] = nrm(ks[13], (HIDDEN,), 0.02)
    p["lw2"] = nrm(ks[14], (1, HIDDEN), 0.05)
    p["lb2"] = nrm(ks[15], (1,), 0.05)
    return p


def prepare_kernel_params(p, n_inputs, h3, w3):
    def fold(cw, cb, g, be, rm, rv):
        # OIHW -> im2col RHS [(kh*3+kw)*C + ci, co] (bf16); BN folded into affine.
        w9 = jnp.transpose(cw, (2, 3, 1, 0)).reshape(9 * C, C)
        scale = g / jnp.sqrt(rv + EPS)
        bias = be + (cb - rm) * scale
        return w9.astype(jnp.bfloat16), scale.reshape(1, C), bias.reshape(1, C)

    w9_1, s1, bb1 = fold(p["cw1"], p["cb1"], p["g1"], p["be1"], p["rm1"], p["rv1"])
    w9_2, s2, bb2 = fold(p["cw2"], p["cb2"], p["g2"], p["be2"], p["rm2"], p["rv2"])

    f = C * h3 * w3
    n_in_p = f + C                      # conv features + one lane-tile for extras
    h1p = _round_up(HIDDEN, 128)

    # Permute W1 rows from torch NCHW-flatten order (c, ho, wo) to the kernel's
    # cheap HWC order (ho, wo, c).  Exact reparameterization, no numeric change.
    w1t = p["lw1"].T                                                  # (n_in, 800)
    w1_feat = (w1t[:f].reshape(C, h3, w3, HIDDEN)
               .transpose(1, 2, 0, 3).reshape(f, HIDDEN))
    w1_extra = w1t[f:]
    w1_pad = jnp.zeros((n_in_p, h1p), jnp.float32)
    w1_pad = w1_pad.at[:f, :HIDDEN].set(w1_feat)
    w1_pad = w1_pad.at[f:f + w1_extra.shape[0], :HIDDEN].set(w1_extra)

    b1r = jnp.zeros((1, h1p), jnp.float32).at[:, :HIDDEN].set(p["lb1"][None, :])
    w2r = jnp.zeros((1, h1p), jnp.float32).at[:, :HIDDEN].set(p["lw2"])
    b2r = p["lb2"].reshape(1, 1)

    return dict(w9_1=w9_1, s1=s1, bb1=bb1, w9_2=w9_2, s2=s2, bb2=bb2,
                w1t=w1_pad.astype(jnp.bfloat16),      # bf16 weight, f32 accumulation
                b1r=b1r, w2r=w2r, b2r=b2r)


# ---------------------------------------------------------------------------
# Pure-JAX reference (PyTorch semantics)
# ---------------------------------------------------------------------------
def forward_reference(p, x_nchw, ps):
    def conv_block(x, cw, cb, g, be, rm, rv):
        y = jax.lax.conv_general_dilated(
            x, cw, window_strides=(1, 1), padding=((1, 1), (1, 1)),
            dimension_numbers=("NCHW", "OIHW", "NCHW"))
        y = y + cb[None, :, None, None]
        y = (y - rm[None, :, None, None]) / jnp.sqrt(rv[None, :, None, None] + EPS)
        y = y * g[None, :, None, None] + be[None, :, None, None]
        y = jnp.maximum(y, 0.0)
        y = jax.lax.reduce_window(y, -jnp.inf, jax.lax.max,
                                  (1, 1, 2, 2), (1, 1, 2, 2),
                                  ((0, 0), (0, 0), (1, 1), (1, 1)))
        return y

    y = conv_block(x_nchw, p["cw1"], p["cb1"], p["g1"], p["be1"], p["rm1"], p["rv1"])
    y = conv_block(y, p["cw2"], p["cb2"], p["g2"], p["be2"], p["rm2"], p["rv2"])
    feats = y.reshape(y.shape[0], -1)
    lin = jnp.concatenate([feats] + list(ps), axis=1)
    h = jnp.tanh(lin @ p["lw1"].T + p["lb1"])
    z = h @ p["lw2"].T + p["lb2"]
    return 1.0 / (1.0 + jnp.exp(-z))


if __name__ == "__main__":
    key = jax.random.PRNGKey(0)
    B, H, W = 2, 8, 8
    # spatial size after two (conv + maxpool(k=2, s=2, p=1)) blocks: 8 -> 5 -> 3
    H3 = W3 = 3
    n_inputs = C * H3 * W3 + N_EXTRA      # 1152 + 10 = 1162

    k_x, k_p, k_params = jax.random.split(key, 3)
    x = jax.random.normal(k_x, (B, C, H, W), jnp.float32)     # NCHW, like PyTorch
    p_keys = jax.random.split(k_p, N_EXTRA)
    ps = tuple(jax.random.uniform(k, (B, 1), jnp.float32) for k in p_keys)

    params = init_params(k_params, n_inputs)
    kparams = prepare_kernel_params(params, n_inputs, H3, W3)

    out = jax.jit(class_specialist_forward)(kparams, x, ps)
    out = jax.block_until_ready(out)

    ref = forward_reference(params, x, ps)
    assert out.shape == (B, 1), out.shape
    assert jnp.allclose(out, ref, atol=2e-2, rtol=2e-2), (out, ref)
    print("KERNEL_OK")
</pallas_src>

<mosaic_0001>
module attributes {stable_mosaic.version = 11 : i64} {
  func.func @kernel(%arg0: i32, %arg1: memref<2x8x8x128xf32, #tpu.memory_space<vmem>>, %arg2: memref<2x128xf32, #tpu.memory_space<vmem>>, %arg3: memref<200x1xf32, #tpu.memory_space<vmem>>, %arg4: memref<128x1xf32, #tpu.memory_space<vmem>>, %arg5: memref<1152x128xbf16, #tpu.memory_space<vmem>>, %arg6: memref<1x128xf32, #tpu.memory_space<vmem>>, %arg7: memref<1x128xf32, #tpu.memory_space<vmem>>, %arg8: memref<1152x128xbf16, #tpu.memory_space<vmem>>, %arg9: memref<1x128xf32, #tpu.memory_space<vmem>>, %arg10: memref<1x128xf32, #tpu.memory_space<vmem>>, %arg11: memref<1280x896xbf16, #tpu.memory_space<vmem>>, %arg12: memref<1x896xf32, #tpu.memory_space<vmem>>, %arg13: memref<1x896xf32, #tpu.memory_space<vmem>>, %arg14: memref<1x1xf32, #tpu.memory_space<smem>>, %arg15: memref<2x1xf32, #tpu.memory_space<vmem>>, %arg16: memref<224x128xf32, #tpu.memory_space<vmem>>, %arg17: memref<152x128xf32, #tpu.memory_space<vmem>>, %arg18: memref<200x1152xbf16, #tpu.memory_space<vmem>>, %arg19: memref<200x128xf32, #tpu.memory_space<vmem>>, %arg20: memref<100x128xf32, #tpu.memory_space<vmem>>, %arg21: memref<2x1280xf32, #tpu.memory_space<vmem>>) attributes {dimension_semantics = [#tpu.dimension_semantics<parallel>], iteration_bounds = array<i64: 1>, scalar_prefetch = 0 : i64, scratch_operands = 6 : i64, tpu.core_type = #tpu.core_type<tc>, window_params = [{transform_indices = @transform_0, window_bounds = array<i64: 2, 8, 8, 128>}, {transform_indices = @transform_1, window_bounds = array<i64: 2, 128>}, {pipeline_mode = #tpu.pipeline_mode<synchronous>, transform_indices = @transform_2, window_bounds = array<i64: 200, 1>}, {pipeline_mode = #tpu.pipeline_mode<synchronous>, transform_indices = @transform_3, window_bounds = array<i64: 128, 1>}, {pipeline_mode = #tpu.pipeline_mode<synchronous>, transform_indices = @transform_4, window_bounds = array<i64: 1152, 128>}, {pipeline_mode = #tpu.pipeline_mode<synchronous>, transform_indices = @transform_5, window_bounds = array<i64: 1, 128>}, {pipeline_mode = #tpu.pipeline_mode<synchronous>, transform_indices = @transform_6, window_bounds = array<i64: 1, 128>}, {pipeline_mode = #tpu.pipeline_mode<synchronous>, transform_indices = @transform_7, window_bounds = array<i64: 1152, 128>}, {pipeline_mode = #tpu.pipeline_mode<synchronous>, transform_indices = @transform_8, window_bounds = array<i64: 1, 128>}, {pipeline_mode = #tpu.pipeline_mode<synchronous>, transform_indices = @transform_9, window_bounds = array<i64: 1, 128>}, {pipeline_mode = #tpu.pipeline_mode<synchronous>, transform_indices = @transform_10, window_bounds = array<i64: 1280, 896>}, {pipeline_mode = #tpu.pipeline_mode<synchronous>, transform_indices = @transform_11, window_bounds = array<i64: 1, 896>}, {pipeline_mode = #tpu.pipeline_mode<synchronous>, transform_indices = @transform_12, window_bounds = array<i64: 1, 896>}, {transform_indices = @transform_13, window_bounds = array<i64: 1, 1>}, {transform_indices = @transform_14, window_bounds = array<i64: 2, 1>}]} {
    %cst = arith.constant 0.000000e+00 : f32
    %0 = vector.broadcast %cst : f32 to vector<224x128xf32>
    %c0 = arith.constant 0 : index
    %c0_0 = arith.constant 0 : index
    %1 = vector.load %arg16[%c0, %c0_0] : memref<224x128xf32, #tpu.memory_space<vmem>>, vector<224x128xf32>
    tpu.vector_store %arg16[%c0, %c0_0], %0 {strides = array<i32>} : memref<224x128xf32, #tpu.memory_space<vmem>>, vector<224x128xf32>,
    %cst_1 = arith.constant 0.000000e+00 : f32
    %2 = vector.broadcast %cst_1 : f32 to vector<152x128xf32>
    %c0_2 = arith.constant 0 : index
    %c0_3 = arith.constant 0 : index
    %3 = vector.load %arg17[%c0_2, %c0_3] : memref<152x128xf32, #tpu.memory_space<vmem>>, vector<152x128xf32>
    tpu.vector_store %arg17[%c0_2, %c0_3], %2 {strides = array<i32>} : memref<152x128xf32, #tpu.memory_space<vmem>>, vector<152x128xf32>,
    %c0_4 = arith.constant 0 : index
    %c0_5 = arith.constant 0 : index
    %c0_6 = arith.constant 0 : index
    %c0_7 = arith.constant 0 : index
    %4 = vector.load %arg1[%c0_4, %c0_5, %c0_6, %c0_7] : memref<2x8x8x128xf32, #tpu.memory_space<vmem>>, vector<1x1x8x128xf32>
    %5 = vector.shape_cast %4 : vector<1x1x8x128xf32> to vector<8x128xf32>
    %c22 = arith.constant 22 : index
    %c0_8 = arith.constant 0 : index
    %6 = vector.load %arg16[%c22, %c0_8] : memref<224x128xf32, #tpu.memory_space<vmem>>, vector<8x128xf32>
    tpu.vector_store %arg16[%c22, %c0_8], %5 {strides = array<i32>} : memref<224x128xf32, #tpu.memory_space<vmem>>, vector<8x128xf32>,
    %c0_9 = arith.constant 0 : index
    %c1 = arith.constant 1 : index
    %c0_10 = arith.constant 0 : index
    %c0_11 = arith.constant 0 : index
    %7 = vector.load %arg1[%c0_9, %c1, %c0_10, %c0_11] : memref<2x8x8x128xf32, #tpu.memory_space<vmem>>, vector<1x1x8x128xf32>
    %8 = vector.shape_cast %7 : vector<1x1x8x128xf32> to vector<8x128xf32>
    %c32 = arith.constant 32 : index
    %c0_12 = arith.constant 0 : index
    %9 = vector.load %arg16[%c32, %c0_12] : memref<224x128xf32, #tpu.memory_space<vmem>>, vector<8x128xf32>
    tpu.vector_store %arg16[%c32, %c0_12], %8 {strides = array<i32>} : memref<224x128xf32, #tpu.memory_space<vmem>>, vector<8x128xf32>,
    %c0_13 = arith.constant 0 : index
    %c2 = arith.constant 2 : index
    %c0_14 = arith.constant 0 : index
    %c0_15 = arith.constant 0 : index
    %10 = vector.load %arg1[%c0_13, %c2, %c0_14, %c0_15] : memref<2x8x8x128xf32, #tpu.memory_space<vmem>>, vector<1x1x8x128xf32>
    %11 = vector.shape_cast %10 : vector<1x1x8x128xf32> to vector<8x128xf32>
    %c42 = arith.constant 42 : index
    %c0_16 = arith.constant 0 : index
    %12 = vector.load %arg16[%c42, %c0_16] : memref<224x128xf32, #tpu.memory_space<vmem>>, vector<8x128xf32>
    tpu.vector_store %arg16[%c42, %c0_16], %11 {strides = array<i32>} : memref<224x128xf32, #tpu.memory_space<vmem>>, vector<8x128xf32>,
    %c0_17 = arith.constant 0 : index
    %c3 = arith.constant 3 : index
    %c0_18 = arith.constant 0 : index
    %c0_19 = arith.constant 0 : index
    %13 = vector.load %arg1[%c0_17, %c3, %c0_18, %c0_19] : memref<2x8x8x128xf32, #tpu.memory_space<vmem>>, vector<1x1x8x128xf32>
    %14 = vector.shape_cast %13 : vector<1x1x8x128xf32> to vector<8x128xf32>
    %c52 = arith.constant 52 : index
    %c0_20 = arith.constant 0 : index
    %15 = vector.load %arg16[%c52, %c0_20] : memref<224x128xf32, #tpu.memory_space<vmem>>, vector<8x128xf32>
    tpu.vector_store %arg16[%c52, %c0_20], %14 {strides = array<i32>} : memref<224x128xf32, #tpu.memory_space<vmem>>, vector<8x128xf32>,
    %c0_21 = arith.constant 0 : index
    %c4 = arith.constant 4 : index
    %c0_22 = arith.constant 0 : index
    %c0_23 = arith.constant 0 : index
    %16 = vector.load %arg1[%c0_21, %c4, %c0_22, %c0_23] : memref<2x8x8x128xf32, #tpu.memory_space<vmem>>, vector<1x1x8x128xf32>
    %17 = vector.shape_cast %16 : vector<1x1x8x128xf32> to vector<8x128xf32>
    %c62 = arith.constant 62 : index
    %c0_24 = arith.constant 0 : index
    %18 = vector.load %arg16[%c62, %c0_24] : memref<224x128xf32, #tpu.memory_space<vmem>>, vector<8x128xf32>
    tpu.vector_store %arg16[%c62, %c0_24], %17 {strides = array<i32>} : memref<224x128xf32, #tpu.memory_space<vmem>>, vector<8x128xf32>,
    %c0_25 = arith.constant 0 : index
    %c5 = arith.constant 5 : index
    %c0_26 = arith.constant 0 : index
    %c0_27 = arith.constant 0 : index
    %19 = vector.load %arg1[%c0_25, %c5, %c0_26, %c0_27] : memref<2x8x8x128xf32, #tpu.memory_space<vmem>>, vector<1x1x8x128xf32>
    %20 = vector.shape_cast %19 : vector<1x1x8x128xf32> to vector<8x128xf32>
    %c72 = arith.constant 72 : index
    %c0_28 = arith.constant 0 : index
    %21 = vector.load %arg16[%c72, %c0_28] : memref<224x128xf32, #tpu.memory_space<vmem>>, vector<8x128xf32>
    tpu.vector_store %arg16[%c72, %c0_28], %20 {strides = array<i32>} : memref<224x128xf32, #tpu.memory_space<vmem>>, vector<8x128xf32>,
    %c0_29 = arith.constant 0 : index
    %c6 = arith.constant 6 : index
    %c0_30 = arith.constant 0 : index
    %c0_31 = arith.constant 0 : index
    %22 = vector.load %arg1[%c0_29, %c6, %c0_30, %c0_31] : memref<2x8x8x128xf32, #tpu.memory_space<vmem>>, vector<1x1x8x128xf32>
    %23 = vector.shape_cast %22 : vector<1x1x8x128xf32> to vector<8x128xf32>
    %c82 = arith.constant 82 : index
    %c0_32 = arith.constant 0 : index
    %24 = vector.load %arg16[%c82, %c0_32] : memref<224x128xf32, #tpu.memory_space<vmem>>, vector<8x128xf32>
    tpu.vector_store %arg16[%c82, %c0_32], %23 {strides = array<i32>} : memref<224x128xf32, #tpu.memory_space<vmem>>, vector<8x128xf32>,
    %c0_33 = arith.constant 0 : index
    %c7 = arith.constant 7 : index
    %c0_34 = arith.constant 0 : index
    %c0_35 = arith.constant 0 : index
    %25 = vector.load %arg1[%c0_33, %c7, %c0_34, %c0_35] : memref<2x8x8x128xf32, #tpu.memory_space<vmem>>, vector<1x1x8x128xf32>
    %26 = vector.shape_cast %25 : vector<1x1x8x128xf32> to vector<8x128xf32>
    %c92 = arith.constant 92 : index
    %c0_36 = arith.constant 0 : index
    %27 = vector.load %arg16[%c92, %c0_36] : memref<224x128xf32, #tpu.memory_space<vmem>>, vector<8x128xf32>
    tpu.vector_store %arg16[%c92, %c0_36], %26 {strides = array<i32>} : memref<224x128xf32, #tpu.memory_space<vmem>>, vector<8x128xf32>,
    %c1_37 = arith.constant 1 : index
    %c0_38 = arith.constant 0 : index
    %c0_39 = arith.constant 0 : index
    %c0_40 = arith.constant 0 : index
    %28 = vector.load %arg1[%c1_37, %c0_38, %c0_39, %c0_40] : memref<2x8x8x128xf32, #tpu.memory_space<vmem>>, vector<1x1x8x128xf32>
    %29 = vector.shape_cast %28 : vector<1x1x8x128xf32> to vector<8x128xf32>
    %c122 = arith.constant 122 : index
    %c0_41 = arith.constant 0 : index
    %30 = vector.load %arg16[%c122, %c0_41] : memref<224x128xf32, #tpu.memory_space<vmem>>, vector<8x128xf32>
    tpu.vector_store %arg16[%c122, %c0_41], %29 {strides = array<i32>} : memref<224x128xf32, #tpu.memory_space<vmem>>, vector<8x128xf32>,
    %c1_42 = arith.constant 1 : index
    %c1_43 = arith.constant 1 : index
    %c0_44 = arith.constant 0 : index
    %c0_45 = arith.constant 0 : index
    %31 = vector.load %arg1[%c1_42, %c1_43, %c0_44, %c0_45] : memref<2x8x8x128xf32, #tpu.memory_space<vmem>>, vector<1x1x8x128xf32>
    %32 = vector.shape_cast %31 : vector<1x1x8x128xf32> to vector<8x128xf32>
    %c132 = arith.constant 132 : index
    %c0_46 = arith.constant 0 : index
    %33 = vector.load %arg16[%c132, %c0_46] : memref<224x128xf32, #tpu.memory_space<vmem>>, vector<8x128xf32>
    tpu.vector_store %arg16[%c132, %c0_46], %32 {strides = array<i32>} : memref<224x128xf32, #tpu.memory_space<vmem>>, vector<8x128xf32>,
    %c1_47 = arith.constant 1 : index
    %c2_48 = arith.constant 2 : index
    %c0_49 = arith.constant 0 : index
    %c0_50 = arith.constant 0 : index
    %34 = vector.load %arg1[%c1_47, %c2_48, %c0_49, %c0_50] : memref<2x8x8x128xf32, #tpu.memory_space<vmem>>, vector<1x1x8x128xf32>
    %35 = vector.shape_cast %34 : vector<1x1x8x128xf32> to vector<8x128xf32>
    %c142 = arith.constant 142 : index
    %c0_51 = arith.constant 0 : index
    %36 = vector.load %arg16[%c142, %c0_51] : memref<224x128xf32, #tpu.memory_space<vmem>>, vector<8x128xf32>
    tpu.vector_store %arg16[%c142, %c0_51], %35 {strides = array<i32>} : memref<224x128xf32, #tpu.memory_space<vmem>>, vector<8x128xf32>,
    %c1_52 = arith.constant 1 : index
    %c3_53 = arith.constant 3 : index
    %c0_54 = arith.constant 0 : index
    %c0_55 = arith.constant 0 : index
    %37 = vector.load %arg1[%c1_52, %c3_53, %c0_54, %c0_55] : memref<2x8x8x128xf32, #tpu.memory_space<vmem>>, vector<1x1x8x128xf32>
    %38 = vector.shape_cast %37 : vector<1x1x8x128xf32> to vector<8x128xf32>
    %c152 = arith.constant 152 : index
    %c0_56 = arith.constant 0 : index
    %39 = vector.load %arg16[%c152, %c0_56] : memref<224x128xf32, #tpu.memory_space<vmem>>, vector<8x128xf32>
    tpu.vector_store %arg16[%c152, %c0_56], %38 {strides = array<i32>} : memref<224x128xf32, #tpu.memory_space<vmem>>, vector<8x128xf32>,
    %c1_57 = arith.constant 1 : index
    %c4_58 = arith.constant 4 : index
    %c0_59 = arith.constant 0 : index
    %c0_60 = arith.constant 0 : index
    %40 = vector.load %arg1[%c1_57, %c4_58, %c0_59, %c0_60] : memref<2x8x8x128xf32, #tpu.memory_space<vmem>>, vector<1x1x8x128xf32>
    %41 = vector.shape_cast %40 : vector<1x1x8x128xf32> to vector<8x128xf32>
    %c162 = arith.constant 162 : index
    %c0_61 = arith.constant 0 : index
    %42 = vector.load %arg16[%c162, %c0_61] : memref<224x128xf32, #tpu.memory_space<vmem>>, vector<8x128xf32>
    tpu.vector_store %arg16[%c162, %c0_61], %41 {strides = array<i32>} : memref<224x128xf32, #tpu.memory_space<vmem>>, vector<8x128xf32>,
    %c1_62 = arith.constant 1 : index
    %c5_63 = arith.constant 5 : index
    %c0_64 = arith.constant 0 : index
    %c0_65 = arith.constant 0 : index
    %43 = vector.load %arg1[%c1_62, %c5_63, %c0_64, %c0_65] : memref<2x8x8x128xf32, #tpu.memory_space<vmem>>, vector<1x1x8x128xf32>
    %44 = vector.shape_cast %43 : vector<1x1x8x128xf32> to vector<8x128xf32>
    %c172 = arith.constant 172 : index
    %c0_66 = arith.constant 0 : index
    %45 = vector.load %arg16[%c172, %c0_66] : memref<224x128xf32, #tpu.memory_space<vmem>>, vector<8x128xf32>
    tpu.vector_store %arg16[%c172, %c0_66], %44 {strides = array<i32>} : memref<224x128xf32, #tpu.memory_space<vmem>>, vector<8x128xf32>,
    %c1_67 = arith.constant 1 : index
    %c6_68 = arith.constant 6 : index
    %c0_69 = arith.constant 0 : index
    %c0_70 = arith.constant 0 : index
    %46 = vector.load %arg1[%c1_67, %c6_68, %c0_69, %c0_70] : memref<2x8x8x128xf32, #tpu.memory_space<vmem>>, vector<1x1x8x128xf32>
    %47 = vector.shape_cast %46 : vector<1x1x8x128xf32> to vector<8x128xf32>
    %c182 = arith.constant 182 : index
    %c0_71 = arith.constant 0 : index
    %48 = vector.load %arg16[%c182, %c0_71] : memref<224x128xf32, #tpu.memory_space<vmem>>, vector<8x128xf32>
    tpu.vector_store %arg16[%c182, %c0_71], %47 {strides = array<i32>} : memref<224x128xf32, #tpu.memory_space<vmem>>, vector<8x128xf32>,
    %c1_72 = arith.constant 1 : index
    %c7_73 = arith.constant 7 : index
    %c0_74 = arith.constant 0 : index
    %c0_75 = arith.constant 0 : index
    %49 = vector.load %arg1[%c1_72, %c7_73, %c0_74, %c0_75] : memref<2x8x8x128xf32, #tpu.memory_space<vmem>>, vector<1x1x8x128xf32>
    %50 = vector.shape_cast %49 : vector<1x1x8x128xf32> to vector<8x128xf32>
    %c192 = arith.constant 192 : index
    %c0_76 = arith.constant 0 : index
    %51 = vector.load %arg16[%c192, %c0_76] : memref<224x128xf32, #tpu.memory_space<vmem>>, vector<8x128xf32>
    tpu.vector_store %arg16[%c192, %c0_76], %50 {strides = array<i32>} : memref<224x128xf32, #tpu.memory_space<vmem>>, vector<8x128xf32>,
    %c0_77 = arith.constant 0 : index
    %c0_78 = arith.constant 0 : index
    %52 = vector.load %arg16[%c0_77, %c0_78] : memref<224x128xf32, #tpu.memory_space<vmem>>, vector<200x128xf32>
    %53 = arith.truncf %52 : vector<200x128xf32> to vector<200x128xbf16>
    %c0_79 = arith.constant 0 : index
    %c0_80 = arith.constant 0 : index
    %54 = vector.load %arg18[%c0_79, %c0_80] : memref<200x1152xbf16, #tpu.memory_space<vmem>>, vector<200x128xbf16>
    tpu.vector_store %arg18[%c0_79, %c0_80], %53 {strides = array<i32>} : memref<200x1152xbf16, #tpu.memory_space<vmem>>, vector<200x128xbf16>,
    %c1_81 = arith.constant 1 : index
    %c0_82 = arith.constant 0 : index
    %55 = vector.load %arg16[%c1_81, %c0_82] : memref<224x128xf32, #tpu.memory_space<vmem>>, vector<200x128xf32>
    %56 = arith.truncf %55 : vector<200x128xf32> to vector<200x128xbf16>
    %c0_83 = arith.constant 0 : index
    %c128 = arith.constant 128 : index
    %57 = vector.load %arg18[%c0_83, %c128] : memref<200x1152xbf16, #tpu.memory_space<vmem>>, vector<200x128xbf16>
    tpu.vector_store %arg18[%c0_83, %c128], %56 {strides = array<i32>} : memref<200x1152xbf16, #tpu.memory_space<vmem>>, vector<200x128xbf16>,
    %c2_84 = arith.constant 2 : index
    %c0_85 = arith.constant 0 : index
    %58 = vector.load %arg16[%c2_84, %c0_85] : memref<224x128xf32, #tpu.memory_space<vmem>>, vector<200x128xf32>
    %59 = arith.truncf %58 : vector<200x128xf32> to vector<200x128xbf16>
    %c0_86 = arith.constant 0 : index
    %c256 = arith.constant 256 : index
    %60 = vector.load %arg18[%c0_86, %c256] : memref<200x1152xbf16, #tpu.memory_space<vmem>>, vector<200x128xbf16>
    tpu.vector_store %arg18[%c0_86, %c256], %59 {strides = array<i32>} : memref<200x1152xbf16, #tpu.memory_space<vmem>>, vector<200x128xbf16>,
    %c10 = arith.constant 10 : index
    %c0_87 = arith.constant 0 : index
    %61 = vector.load %arg16[%c10, %c0_87] : memref<224x128xf32, #tpu.memory_space<vmem>>, vector<200x128xf32>
    %62 = arith.truncf %61 : vector<200x128xf32> to vector<200x128xbf16>
    %c0_88 = arith.constant 0 : index
    %c384 = arith.constant 384 : index
    %63 = vector.load %arg18[%c0_88, %c384] : memref<200x1152xbf16, #tpu.memory_space<vmem>>, vector<200x128xbf16>
    tpu.vector_store %arg18[%c0_88, %c384], %62 {strides = array<i32>} : memref<200x1152xbf16, #tpu.memory_space<vmem>>, vector<200x128xbf16>,
    %c11 = arith.constant 11 : index
    %c0_89 = arith.constant 0 : index
    %64 = vector.load %arg16[%c11, %c0_89] : memref<224x128xf32, #tpu.memory_space<vmem>>, vector<200x128xf32>
    %65 = arith.truncf %64 : vector<200x128xf32> to vector<200x128xbf16>
    %c0_90 = arith.constant 0 : index
    %c512 = arith.constant 512 : index
    %66 = vector.load %arg18[%c0_90, %c512] : memref<200x1152xbf16, #tpu.memory_space<vmem>>, vector<200x128xbf16>
    tpu.vector_store %arg18[%c0_90, %c512], %65 {strides = array<i32>} : memref<200x1152xbf16, #tpu.memory_space<vmem>>, vector<200x128xbf16>,
    %c12 = arith.constant 12 : index
    %c0_91 = arith.constant 0 : index
    %67 = vector.load %arg16[%c12, %c0_91] : memref<224x128xf32, #tpu.memory_space<vmem>>, vector<200x128xf32>
    %68 = arith.truncf %67 : vector<200x128xf32> to vector<200x128xbf16>
    %c0_92 = arith.constant 0 : index
    %c640 = arith.constant 640 : index
    %69 = vector.load %arg18[%c0_92, %c640] : memref<200x1152xbf16, #tpu.memory_space<vmem>>, vector<200x128xbf16>
    tpu.vector_store %arg18[%c0_92, %c640], %68 {strides = array<i32>} : memref<200x1152xbf16, #tpu.memory_space<vmem>>, vector<200x128xbf16>,
    %c20 = arith.constant 20 : index
    %c0_93 = arith.constant 0 : index
    %70 = vector.load %arg16[%c20, %c0_93] : memref<224x128xf32, #tpu.memory_space<vmem>>, vector<200x128xf32>
    %71 = arith.truncf %70 : vector<200x128xf32> to vector<200x128xbf16>
    %c0_94 = arith.constant 0 : index
    %c768 = arith.constant 768 : index
    %72 = vector.load %arg18[%c0_94, %c768] : memref<200x1152xbf16, #tpu.memory_space<vmem>>, vector<200x128xbf16>
    tpu.vector_store %arg18[%c0_94, %c768], %71 {strides = array<i32>} : memref<200x1152xbf16, #tpu.memory_space<vmem>>, vector<200x128xbf16>,
    %c21 = arith.constant 21 : index
    %c0_95 = arith.constant 0 : index
    %73 = vector.load %arg16[%c21, %c0_95] : memref<224x128xf32, #tpu.memory_space<vmem>>, vector<200x128xf32>
    %74 = arith.truncf %73 : vector<200x128xf32> to vector<200x128xbf16>
    %c0_96 = arith.constant 0 : index
    %c896 = arith.constant 896 : index
    %75 = vector.load %arg18[%c0_96, %c896] : memref<200x1152xbf16, #tpu.memory_space<vmem>>, vector<200x128xbf16>
    tpu.vector_store %arg18[%c0_96, %c896], %74 {strides = array<i32>} : memref<200x1152xbf16, #tpu.memory_space<vmem>>, vector<200x128xbf16>,
    %c22_97 = arith.constant 22 : index
    %c0_98 = arith.constant 0 : index
    %76 = vector.load %arg16[%c22_97, %c0_98] : memref<224x128xf32, #tpu.memory_space<vmem>>, vector<200x128xf32>
    %77 = arith.truncf %76 : vector<200x128xf32> to vector<200x128xbf16>
    %c0_99 = arith.constant 0 : index
    %c1024 = arith.constant 1024 : index
    %78 = vector.load %arg18[%c0_99, %c1024] : memref<200x1152xbf16, #tpu.memory_space<vmem>>, vector<200x128xbf16>
    tpu.vector_store %arg18[%c0_99, %c1024], %77 {strides = array<i32>} : memref<200x1152xbf16, #tpu.memory_space<vmem>>, vector<200x128xbf16>,
    %c0_100 = arith.constant 0 : index
    %c0_101 = arith.constant 0 : index
    %79 = vector.load %arg18[%c0_100, %c0_101] : memref<200x1152xbf16, #tpu.memory_space<vmem>>, vector<200x1152xbf16>
    %c0_102 = arith.constant 0 : index
    %c0_103 = arith.constant 0 : index
    %80 = vector.load %arg5[%c0_102, %c0_103] : memref<1152x128xbf16, #tpu.memory_space<vmem>>, vector<1152x128xbf16>
    %cst_104 = arith.constant dense<0.000000e+00> : vector<200x128xf32>
    %81 = tpu.matmul %79, %80, %cst_104 {dimension_numbers = #tpu.dot_dimension_numbers<[1], [0], [0], [1], [0, 0, 1, 1], [], []>} : vector<200x1152xbf16>, vector<1152x128xbf16>, vector<200x128xf32> -> vector<200x128xf32>
    %c0_105 = arith.constant 0 : index
    %c0_106 = arith.constant 0 : index
    %82 = vector.load %arg6[%c0_105, %c0_106] : memref<1x128xf32, #tpu.memory_space<vmem>>, vector<1x128xf32>
    %83 = vector.broadcast %82 : vector<1x128xf32> to vector<200x128xf32>
    %84 = arith.mulf %81, %83 : vector<200x128xf32>
    %c0_107 = arith.constant 0 : index
    %c0_108 = arith.constant 0 : index
    %85 = vector.load %arg7[%c0_107, %c0_108] : memref<1x128xf32, #tpu.memory_space<vmem>>, vector<1x128xf32>
    %86 = vector.broadcast %85 : vector<1x128xf32> to vector<200x128xf32>
    %87 = arith.addf %84, %86 : vector<200x128xf32>
    %cst_109 = arith.constant 0.000000e+00 : f32
    %88 = vector.broadcast %cst_109 : f32 to vector<200x128xf32>
    %89 = arith.maximumf %87, %88 : vector<200x128xf32>
    %c0_110 = arith.constant 0 : index
    %c0_111 = arith.constant 0 : index
    %90 = vector.load %arg3[%c0_110, %c0_111] : memref<200x1xf32, #tpu.memory_space<vmem>>, vector<200x1xf32>
    %91 = vector.broadcast %90 : vector<200x1xf32> to vector<200x128xf32>
    %92 = arith.mulf %89, %91 : vector<200x128xf32>
    %c0_112 = arith.constant 0 : index
    %c0_113 = arith.constant 0 : index
    %93 = vector.load %arg19[%c0_112, %c0_113] : memref<200x128xf32, #tpu.memory_space<vmem>>, vector<200x128xf32>
    tpu.vector_store %arg19[%c0_112, %c0_113], %92 {strides = array<i32>} : memref<200x128xf32, #tpu.memory_space<vmem>>, vector<200x128xf32>,
    %c0_114 = arith.constant 0 : index
    %c0_115 = arith.constant 0 : index
    %94 = tpu.strided_load %arg19[%c0_114, %c0_115] {strides = array<i32: 2, 1>} : memref<200x128xf32, #tpu.memory_space<vmem>>, vector<100x128xf32>
    %c1_116 = arith.constant 1 : index
    %c0_117 = arith.constant 0 : index
    %95 = tpu.strided_load %arg19[%c1_116, %c0_117] {strides = array<i32: 2, 1>} : memref<200x128xf32, #tpu.memory_space<vmem>>, vector<100x128xf32>
    %96 = arith.maximumf %94, %95 : vector<100x128xf32>
    %c0_118 = arith.constant 0 : index
    %c0_119 = arith.constant 0 : index
    %97 = vector.load %arg20[%c0_118, %c0_119] : memref<100x128xf32, #tpu.memory_space<vmem>>, vector<100x128xf32>
    tpu.vector_store %arg20[%c0_118, %c0_119], %96 {strides = array<i32>} : memref<100x128xf32, #tpu.memory_space<vmem>>, vector<100x128xf32>,
    %c0_120 = arith.constant 0 : index
    %c0_121 = arith.constant 0 : index
    %98 = vector.load %arg20[%c0_120, %c0_121] : memref<100x128xf32, #tpu.memory_space<vmem>>, vector<5x128xf32>
    %c5_122 = arith.constant 5 : index
    %c0_123 = arith.constant 0 : index
    %99 = vector.load %arg20[%c5_122, %c0_123] : memref<100x128xf32, #tpu.memory_space<vmem>>, vector<5x128xf32>
    %100 = arith.maximumf %98, %99 : vector<5x128xf32>
    %c18 = arith.constant 18 : index
    %c0_124 = arith.constant 0 : index
    %101 = vector.load %arg17[%c18, %c0_124] : memref<152x128xf32, #tpu.memory_space<vmem>>, vector<5x128xf32>
    tpu.vector_store %arg17[%c18, %c0_124], %100 {strides = array<i32>} : memref<152x128xf32, #tpu.memory_space<vmem>>, vector<5x128xf32>,
    %c10_125 = arith.constant 10 : index
    %c0_126 = arith.constant 0 : index
    %102 = vector.load %arg20[%c10_125, %c0_126] : memref<100x128xf32, #tpu.memory_space<vmem>>, vector<5x128xf32>
    %c15 = arith.constant 15 : index
    %c0_127 = arith.constant 0 : index
    %103 = vector.load %arg20[%c15, %c0_127] : memref<100x128xf32, #tpu.memory_space<vmem>>, vector<5x128xf32>
    %104 = arith.maximumf %102, %103 : vector<5x128xf32>
    %c26 = arith.constant 26 : index
    %c0_128 = arith.constant 0 : index
    %105 = vector.load %arg17[%c26, %c0_128] : memref<152x128xf32, #tpu.memory_space<vmem>>, vector<5x128xf32>
    tpu.vector_store %arg17[%c26, %c0_128], %104 {strides = array<i32>} : memref<152x128xf32, #tpu.memory_space<vmem>>, vector<5x128xf32>,
    %c20_129 = arith.constant 20 : index
    %c0_130 = arith.constant 0 : index
    %106 = vector.load %arg20[%c20_129, %c0_130] : memref<100x128xf32, #tpu.memory_space<vmem>>, vector<5x128xf32>
    %c25 = arith.constant 25 : index
    %c0_131 = arith.constant 0 : index
    %107 = vector.load %arg20[%c25, %c0_131] : memref<100x128xf32, #tpu.memory_space<vmem>>, vector<5x128xf32>
    %108 = arith.maximumf %106, %107 : vector<5x128xf32>
    %c34 = arith.constant 34 : index
    %c0_132 = arith.constant 0 : index
    %109 = vector.load %arg17[%c34, %c0_132] : memref<152x128xf32, #tpu.memory_space<vmem>>, vector<5x128xf32>
    tpu.vector_store %arg17[%c34, %c0_132], %108 {strides = array<i32>} : memref<152x128xf32, #tpu.memory_space<vmem>>, vector<5x128xf32>,
    %c30 = arith.constant 30 : index
    %c0_133 = arith.constant 0 : index
    %110 = vector.load %arg20[%c30, %c0_133] : memref<100x128xf32, #tpu.memory_space<vmem>>, vector<5x128xf32>
    %c35 = arith.constant 35 : index
    %c0_134 = arith.constant 0 : index
    %111 = vector.load %arg20[%c35, %c0_134] : memref<100x128xf32, #tpu.memory_space<vmem>>, vector<5x128xf32>
    %112 = arith.maximumf %110, %111 : vector<5x128xf32>
    %c42_135 = arith.constant 42 : index
    %c0_136 = arith.constant 0 : index
    %113 = vector.load %arg17[%c42_135, %c0_136] : memref<152x128xf32, #tpu.memory_space<vmem>>, vector<5x128xf32>
    tpu.vector_store %arg17[%c42_135, %c0_136], %112 {strides = array<i32>} : memref<152x128xf32, #tpu.memory_space<vmem>>, vector<5x128xf32>,
    %c40 = arith.constant 40 : index
    %c0_137 = arith.constant 0 : index
    %114 = vector.load %arg20[%c40, %c0_137] : memref<100x128xf32, #tpu.memory_space<vmem>>, vector<5x128xf32>
    %c45 = arith.constant 45 : index
    %c0_138 = arith.constant 0 : index
    %115 = vector.load %arg20[%c45, %c0_138] : memref<100x128xf32, #tpu.memory_space<vmem>>, vector<5x128xf32>
    %116 = arith.maximumf %114, %115 : vector<5x128xf32>
    %c50 = arith.constant 50 : index
    %c0_139 = arith.constant 0 : index
    %117 = vector.load %arg17[%c50, %c0_139] : memref<152x128xf32, #tpu.memory_space<vmem>>, vector<5x128xf32>
    tpu.vector_store %arg17[%c50, %c0_139], %116 {strides = array<i32>} : memref<152x128xf32, #tpu.memory_space<vmem>>, vector<5x128xf32>,
    %c50_140 = arith.constant 50 : index
    %c0_141 = arith.constant 0 : index
    %118 = vector.load %arg20[%c50_140, %c0_141] : memref<100x128xf32, #tpu.memory_space<vmem>>, vector<5x128xf32>
    %c55 = arith.constant 55 : index
    %c0_142 = arith.constant 0 : index
    %119 = vector.load %arg20[%c55, %c0_142] : memref<100x128xf32, #tpu.memory_space<vmem>>, vector<5x128xf32>
    %120 = arith.maximumf %118, %119 : vector<5x128xf32>
    %c82_143 = arith.constant 82 : index
    %c0_144 = arith.constant 0 : index
    %121 = vector.load %arg17[%c82_143, %c0_144] : memref<152x128xf32, #tpu.memory_space<vmem>>, vector<5x128xf32>
    tpu.vector_store %arg17[%c82_143, %c0_144], %120 {strides = array<i32>} : memref<152x128xf32, #tpu.memory_space<vmem>>, vector<5x128xf32>,
    %c60 = arith.constant 60 : index
    %c0_145 = arith.constant 0 : index
    %122 = vector.load %arg20[%c60, %c0_145] : memref<100x128xf32, #tpu.memory_space<vmem>>, vector<5x128xf32>
    %c65 = arith.constant 65 : index
    %c0_146 = arith.constant 0 : index
    %123 = vector.load %arg20[%c65, %c0_146] : memref<100x128xf32, #tpu.memory_space<vmem>>, vector<5x128xf32>
    %124 = arith.maximumf %122, %123 : vector<5x128xf32>
    %c90 = arith.constant 90 : index
    %c0_147 = arith.constant 0 : index
    %125 = vector.load %arg17[%c90, %c0_147] : memref<152x128xf32, #tpu.memory_space<vmem>>, vector<5x128xf32>
    tpu.vector_store %arg17[%c90, %c0_147], %124 {strides = array<i32>} : memref<152x128xf32, #tpu.memory_space<vmem>>, vector<5x128xf32>,
    %c70 = arith.constant 70 : index
    %c0_148 = arith.constant 0 : index
    %126 = vector.load %arg20[%c70, %c0_148] : memref<100x128xf32, #tpu.memory_space<vmem>>, vector<5x128xf32>
    %c75 = arith.constant 75 : index
    %c0_149 = arith.constant 0 : index
    %127 = vector.load %arg20[%c75, %c0_149] : memref<100x128xf32, #tpu.memory_space<vmem>>, vector<5x128xf32>
    %128 = arith.maximumf %126, %127 : vector<5x128xf32>
    %c98 = arith.constant 98 : index
    %c0_150 = arith.constant 0 : index
    %129 = vector.load %arg17[%c98, %c0_150] : memref<152x128xf32, #tpu.memory_space<vmem>>, vector<5x128xf32>
    tpu.vector_store %arg17[%c98, %c0_150], %128 {strides = array<i32>} : memref<152x128xf32, #tpu.memory_space<vmem>>, vector<5x128xf32>,
    %c80 = arith.constant 80 : index
    %c0_151 = arith.constant 0 : index
    %130 = vector.load %arg20[%c80, %c0_151] : memref<100x128xf32, #tpu.memory_space<vmem>>, vector<5x128xf32>
    %c85 = arith.constant 85 : index
    %c0_152 = arith.constant 0 : index
    %131 = vector.load %arg20[%c85, %c0_152] : memref<100x128xf32, #tpu.memory_space<vmem>>, vector<5x128xf32>
    %132 = arith.maximumf %130, %131 : vector<5x128xf32>
    %c106 = arith.constant 106 : index
    %c0_153 = arith.constant 0 : index
    %133 = vector.load %arg17[%c106, %c0_153] : memref<152x128xf32, #tpu.memory_space<vmem>>, vector<5x128xf32>
    tpu.vector_store %arg17[%c106, %c0_153], %132 {strides = array<i32>} : memref<152x128xf32, #tpu.memory_space<vmem>>, vector<5x128xf32>,
    %c90_154 = arith.constant 90 : index
    %c0_155 = arith.constant 0 : index
    %134 = vector.load %arg20[%c90_154, %c0_155] : memref<100x128xf32, #tpu.memory_space<vmem>>, vector<5x128xf32>
    %c95 = arith.constant 95 : index
    %c0_156 = arith.constant 0 : index
    %135 = vector.load %arg20[%c95, %c0_156] : memref<100x128xf32, #tpu.memory_space<vmem>>, vector<5x128xf32>
    %136 = arith.maximumf %134, %135 : vector<5x128xf32>
    %c114 = arith.constant 114 : index
    %c0_157 = arith.constant 0 : index
    %137 = vector.load %arg17[%c114, %c0_157] : memref<152x128xf32, #tpu.memory_space<vmem>>, vector<5x128xf32>
    tpu.vector_store %arg17[%c114, %c0_157], %136 {strides = array<i32>} : memref<152x128xf32, #tpu.memory_space<vmem>>, vector<5x128xf32>,
    %c0_158 = arith.constant 0 : index
    %c0_159 = arith.constant 0 : index
    %138 = vector.load %arg17[%c0_158, %c0_159] : memref<152x128xf32, #tpu.memory_space<vmem>>, vector<128x128xf32>
    %139 = arith.truncf %138 : vector<128x128xf32> to vector<128x128xbf16>
    %c0_160 = arith.constant 0 : index
    %c0_161 = arith.constant 0 : index
    %140 = vector.load %arg18[%c0_160, %c0_161] : memref<200x1152xbf16, #tpu.memory_space<vmem>>, vector<128x128xbf16>
    tpu.vector_store %arg18[%c0_160, %c0_161], %139 {strides = array<i32>} : memref<200x1152xbf16, #tpu.memory_space<vmem>>, vector<128x128xbf16>,
    %c1_162 = arith.constant 1 : index
    %c0_163 = arith.constant 0 : index
    %141 = vector.load %arg17[%c1_162, %c0_163] : memref<152x128xf32, #tpu.memory_space<vmem>>, vector<128x128xf32>
    %142 = arith.truncf %141 : vector<128x128xf32> to vector<128x128xbf16>
    %c0_164 = arith.constant 0 : index
    %c128_165 = arith.constant 128 : index
    %143 = vector.load %arg18[%c0_164, %c128_165] : memref<200x1152xbf16, #tpu.memory_space<vmem>>, vector<128x128xbf16>
    tpu.vector_store %arg18[%c0_164, %c128_165], %142 {strides = array<i32>} : memref<200x1152xbf16, #tpu.memory_space<vmem>>, vector<128x128xbf16>,
    %c2_166 = arith.constant 2 : index
    %c0_167 = arith.constant 0 : index
    %144 = vector.load %arg17[%c2_166, %c0_167] : memref<152x128xf32, #tpu.memory_space<vmem>>, vector<128x128xf32>
    %145 = arith.truncf %144 : vector<128x128xf32> to vector<128x128xbf16>
    %c0_168 = arith.constant 0 : index
    %c256_169 = arith.constant 256 : index
    %146 = vector.load %arg18[%c0_168, %c256_169] : memref<200x1152xbf16, #tpu.memory_space<vmem>>, vector<128x128xbf16>
    tpu.vector_store %arg18[%c0_168, %c256_169], %145 {strides = array<i32>} : memref<200x1152xbf16, #tpu.memory_space<vmem>>, vector<128x128xbf16>,
    %c8 = arith.constant 8 : index
    %c0_170 = arith.constant 0 : index
    %147 = vector.load %arg17[%c8, %c0_170] : memref<152x128xf32, #tpu.memory_space<vmem>>, vector<128x128xf32>
    %148 = arith.truncf %147 : vector<128x128xf32> to vector<128x128xbf16>
    %c0_171 = arith.constant 0 : index
    %c384_172 = arith.constant 384 : index
    %149 = vector.load %arg18[%c0_171, %c384_172] : memref<200x1152xbf16, #tpu.memory_space<vmem>>, vector<128x128xbf16>
    tpu.vector_store %arg18[%c0_171, %c384_172], %148 {strides = array<i32>} : memref<200x1152xbf16, #tpu.memory_space<vmem>>, vector<128x128xbf16>,
    %c9 = arith.constant 9 : index
    %c0_173 = arith.constant 0 : index
    %150 = vector.load %arg17[%c9, %c0_173] : memref<152x128xf32, #tpu.memory_space<vmem>>, vector<128x128xf32>
    %151 = arith.truncf %150 : vector<128x128xf32> to vector<128x128xbf16>
    %c0_174 = arith.constant 0 : index
    %c512_175 = arith.constant 512 : index
    %152 = vector.load %arg18[%c0_174, %c512_175] : memref<200x1152xbf16, #tpu.memory_space<vmem>>, vector<128x128xbf16>
    tpu.vector_store %arg18[%c0_174, %c512_175], %151 {strides = array<i32>} : memref<200x1152xbf16, #tpu.memory_space<vmem>>, vector<128x128xbf16>,
    %c10_176 = arith.constant 10 : index
    %c0_177 = arith.constant 0 : index
    %153 = vector.load %arg17[%c10_176, %c0_177] : memref<152x128xf32, #tpu.memory_space<vmem>>, vector<128x128xf32>
    %154 = arith.truncf %153 : vector<128x128xf32> to vector<128x128xbf16>
    %c0_178 = arith.constant 0 : index
    %c640_179 = arith.constant 640 : index
    %155 = vector.load %arg18[%c0_178, %c640_179] : memref<200x1152xbf16, #tpu.memory_space<vmem>>, vector<128x128xbf16>
    tpu.vector_store %arg18[%c0_178, %c640_179], %154 {strides = array<i32>} : memref<200x1152xbf16, #tpu.memory_space<vmem>>, vector<128x128xbf16>,
    %c16 = arith.constant 16 : index
    %c0_180 = arith.constant 0 : index
    %156 = vector.load %arg17[%c16, %c0_180] : memref<152x128xf32, #tpu.memory_space<vmem>>, vector<128x128xf32>
    %157 = arith.truncf %156 : vector<128x128xf32> to vector<128x128xbf16>
    %c0_181 = arith.constant 0 : index
    %c768_182 = arith.constant 768 : index
    %158 = vector.load %arg18[%c0_181, %c768_182] : memref<200x1152xbf16, #tpu.memory_space<vmem>>, vector<128x128xbf16>
    tpu.vector_store %arg18[%c0_181, %c768_182], %157 {strides = array<i32>} : memref<200x1152xbf16, #tpu.memory_space<vmem>>, vector<128x128xbf16>,
    %c17 = arith.constant 17 : index
    %c0_183 = arith.constant 0 : index
    %159 = vector.load %arg17[%c17, %c0_183] : memref<152x128xf32, #tpu.memory_space<vmem>>, vector<128x128xf32>
    %160 = arith.truncf %159 : vector<128x128xf32> to vector<128x128xbf16>
    %c0_184 = arith.constant 0 : index
    %c896_185 = arith.constant 896 : index
    %161 = vector.load %arg18[%c0_184, %c896_185] : memref<200x1152xbf16, #tpu.memory_space<vmem>>, vector<128x128xbf16>
    tpu.vector_store %arg18[%c0_184, %c896_185], %160 {strides = array<i32>} : memref<200x1152xbf16, #tpu.memory_space<vmem>>, vector<128x128xbf16>,
    %c18_186 = arith.constant 18 : index
    %c0_187 = arith.constant 0 : index
    %162 = vector.load %arg17[%c18_186, %c0_187] : memref<152x128xf32, #tpu.memory_space<vmem>>, vector<128x128xf32>
    %163 = arith.truncf %162 : vector<128x128xf32> to vector<128x128xbf16>
    %c0_188 = arith.constant 0 : index
    %c1024_189 = arith.constant 1024 : index
    %164 = vector.load %arg18[%c0_188, %c1024_189] : memref<200x1152xbf16, #tpu.memory_space<vmem>>, vector<128x128xbf16>
    tpu.vector_store %arg18[%c0_188, %c1024_189], %163 {strides = array<i32>} : memref<200x1152xbf16, #tpu.memory_space<vmem>>, vector<128x128xbf16>,
    %c0_190 = arith.constant 0 : index
    %c0_191 = arith.constant 0 : index
    %165 = vector.load %arg18[%c0_190, %c0_191] : memref<200x1152xbf16, #tpu.memory_space<vmem>>, vector<128x1152xbf16>
    %c0_192 = arith.constant 0 : index
    %c0_193 = arith.constant 0 : index
    %166 = vector.load %arg8[%c0_192, %c0_193] : memref<1152x128xbf16, #tpu.memory_space<vmem>>, vector<1152x128xbf16>
    %cst_194 = arith.constant dense<0.000000e+00> : vector<128x128xf32>
    %167 = tpu.matmul %165, %166, %cst_194 {dimension_numbers = #tpu.dot_dimension_numbers<[1], [0], [0], [1], [0, 0, 1, 1], [], []>} : vector<128x1152xbf16>, vector<1152x128xbf16>, vector<128x128xf32> -> vector<128x128xf32>
    %c0_195 = arith.constant 0 : index
    %c0_196 = arith.constant 0 : index
    %168 = vector.load %arg9[%c0_195, %c0_196] : memref<1x128xf32, #tpu.memory_space<vmem>>, vector<1x128xf32>
    %169 = vector.broadcast %168 : vector<1x128xf32> to vector<128x128xf32>
    %170 = arith.mulf %167, %169 : vector<128x128xf32>
    %c0_197 = arith.constant 0 : index
    %c0_198 = arith.constant 0 : index
    %171 = vector.load %arg10[%c0_197, %c0_198] : memref<1x128xf32, #tpu.memory_space<vmem>>, vector<1x128xf32>
    %172 = vector.broadcast %171 : vector<1x128xf32> to vector<128x128xf32>
    %173 = arith.addf %170, %172 : vector<128x128xf32>
    %cst_199 = arith.constant 0.000000e+00 : f32
    %174 = vector.broadcast %cst_199 : f32 to vector<128x128xf32>
    %175 = arith.maximumf %173, %174 : vector<128x128xf32>
    %c0_200 = arith.constant 0 : index
    %c0_201 = arith.constant 0 : index
    %176 = vector.load %arg4[%c0_200, %c0_201] : memref<128x1xf32, #tpu.memory_space<vmem>>, vector<128x1xf32>
    %177 = vector.broadcast %176 : vector<128x1xf32> to vector<128x128xf32>
    %178 = arith.mulf %175, %177 : vector<128x128xf32>
    %c0_202 = arith.constant 0 : index
    %c0_203 = arith.constant 0 : index
    %179 = vector.load %arg19[%c0_202, %c0_203] : memref<200x128xf32, #tpu.memory_space<vmem>>, vector<128x128xf32>
    tpu.vector_store %arg19[%c0_202, %c0_203], %178 {strides = array<i32>} : memref<200x128xf32, #tpu.memory_space<vmem>>, vector<128x128xf32>,
    %c0_204 = arith.constant 0 : index
    %c0_205 = arith.constant 0 : index
    %180 = tpu.strided_load %arg19[%c0_204, %c0_205] {strides = array<i32: 2, 1>} : memref<200x128xf32, #tpu.memory_space<vmem>>, vector<64x128xf32>
    %c1_206 = arith.constant 1 : index
    %c0_207 = arith.constant 0 : index
    %181 = tpu.strided_load %arg19[%c1_206, %c0_207] {strides = array<i32: 2, 1>} : memref<200x128xf32, #tpu.memory_space<vmem>>, vector<64x128xf32>
    %182 = arith.maximumf %180, %181 : vector<64x128xf32>
    %c0_208 = arith.constant 0 : index
    %c0_209 = arith.constant 0 : index
    %183 = vector.load %arg20[%c0_208, %c0_209] : memref<100x128xf32, #tpu.memory_space<vmem>>, vector<64x128xf32>
    tpu.vector_store %arg20[%c0_208, %c0_209], %182 {strides = array<i32>} : memref<100x128xf32, #tpu.memory_space<vmem>>, vector<64x128xf32>,
    %c0_210 = arith.constant 0 : index
    %c0_211 = arith.constant 0 : index
    %184 = vector.load %arg20[%c0_210, %c0_211] : memref<100x128xf32, #tpu.memory_space<vmem>>, vector<3x128xf32>
    %c4_212 = arith.constant 4 : index
    %c0_213 = arith.constant 0 : index
    %185 = vector.load %arg20[%c4_212, %c0_213] : memref<100x128xf32, #tpu.memory_space<vmem>>, vector<3x128xf32>
    %186 = arith.maximumf %184, %185 : vector<3x128xf32>
    %187 = vector.extract_strided_slice %186 {offsets = [0, 0], sizes = [1, 128], strides = [1, 1]} : vector<3x128xf32> to vector<1x128xf32>
    %c0_214 = arith.constant 0 : index
    %c0_215 = arith.constant 0 : index
    %188 = vector.load %arg21[%c0_214, %c0_215] : memref<2x1280xf32, #tpu.memory_space<vmem>>, vector<1x128xf32>
    tpu.vector_store %arg21[%c0_214, %c0_215], %187 {strides = array<i32>} : memref<2x1280xf32, #tpu.memory_space<vmem>>, vector<1x128xf32>,
    %189 = vector.extract_strided_slice %186 {offsets = [1, 0], sizes = [1, 128], strides = [1, 1]} : vector<3x128xf32> to vector<1x128xf32>
    %c0_216 = arith.constant 0 : index
    %c128_217 = arith.constant 128 : index
    %190 = vector.load %arg21[%c0_216, %c128_217] : memref<2x1280xf32, #tpu.memory_space<vmem>>, vector<1x128xf32>
    tpu.vector_store %arg21[%c0_216, %c128_217], %189 {strides = array<i32>} : memref<2x1280xf32, #tpu.memory_space<vmem>>, vector<1x128xf32>,
    %191 = vector.extract_strided_slice %186 {offsets = [2, 0], sizes = [1, 128], strides = [1, 1]} : vector<3x128xf32> to vector<1x128xf32>
    %c0_218 = arith.constant 0 : index
    %c256_219 = arith.constant 256 : index
    %192 = vector.load %arg21[%c0_218, %c256_219] : memref<2x1280xf32, #tpu.memory_space<vmem>>, vector<1x128xf32>
    tpu.vector_store %arg21[%c0_218, %c256_219], %191 {strides = array<i32>} : memref<2x1280xf32, #tpu.memory_space<vmem>>, vector<1x128xf32>,
    %c8_220 = arith.constant 8 : index
    %c0_221 = arith.constant 0 : index
    %193 = vector.load %arg20[%c8_220, %c0_221] : memref<100x128xf32, #tpu.memory_space<vmem>>, vector<3x128xf32>
    %c12_222 = arith.constant 12 : index
    %c0_223 = arith.constant 0 : index
    %194 = vector.load %arg20[%c12_222, %c0_223] : memref<100x128xf32, #tpu.memory_space<vmem>>, vector<3x128xf32>
    %195 = arith.maximumf %193, %194 : vector<3x128xf32>
    %196 = vector.extract_strided_slice %195 {offsets = [0, 0], sizes = [1, 128], strides = [1, 1]} : vector<3x128xf32> to vector<1x128xf32>
    %c0_224 = arith.constant 0 : index
    %c384_225 = arith.constant 384 : index
    %197 = vector.load %arg21[%c0_224, %c384_225] : memref<2x1280xf32, #tpu.memory_space<vmem>>, vector<1x128xf32>
    tpu.vector_store %arg21[%c0_224, %c384_225], %196 {strides = array<i32>} : memref<2x1280xf32, #tpu.memory_space<vmem>>, vector<1x128xf32>,
    %198 = vector.extract_strided_slice %195 {offsets = [1, 0], sizes = [1, 128], strides = [1, 1]} : vector<3x128xf32> to vector<1x128xf32>
    %c0_226 = arith.constant 0 : index
    %c512_227 = arith.constant 512 : index
    %199 = vector.load %arg21[%c0_226, %c512_227] : memref<2x1280xf32, #tpu.memory_space<vmem>>, vector<1x128xf32>
    tpu.vector_store %arg21[%c0_226, %c512_227], %198 {strides = array<i32>} : memref<2x1280xf32, #tpu.memory_space<vmem>>, vector<1x128xf32>,
    %200 = vector.extract_strided_slice %195 {offsets = [2, 0], sizes = [1, 128], strides = [1, 1]} : vector<3x128xf32> to vector<1x128xf32>
    %c0_228 = arith.constant 0 : index
    %c640_229 = arith.constant 640 : index
    %201 = vector.load %arg21[%c0_228, %c640_229] : memref<2x1280xf32, #tpu.memory_space<vmem>>, vector<1x128xf32>
    tpu.vector_store %arg21[%c0_228, %c640_229], %200 {strides = array<i32>} : memref<2x1280xf32, #tpu.memory_space<vmem>>, vector<1x128xf32>,
    %c16_230 = arith.constant 16 : index
    %c0_231 = arith.constant 0 : index
    %202 = vector.load %arg20[%c16_230, %c0_231] : memref<100x128xf32, #tpu.memory_space<vmem>>, vector<3x128xf32>
    %c20_232 = arith.constant 20 : index
    %c0_233 = arith.constant 0 : index
    %203 = vector.load %arg20[%c20_232, %c0_233] : memref<100x128xf32, #tpu.memory_space<vmem>>, vector<3x128xf32>
    %204 = arith.maximumf %202, %203 : vector<3x128xf32>
    %205 = vector.extract_strided_slice %204 {offsets = [0, 0], sizes = [1, 128], strides = [1, 1]} : vector<3x128xf32> to vector<1x128xf32>
    %c0_234 = arith.constant 0 : index
    %c768_235 = arith.constant 768 : index
    %206 = vector.load %arg21[%c0_234, %c768_235] : memref<2x1280xf32, #tpu.memory_space<vmem>>, vector<1x128xf32>
    tpu.vector_store %arg21[%c0_234, %c768_235], %205 {strides = array<i32>} : memref<2x1280xf32, #tpu.memory_space<vmem>>, vector<1x128xf32>,
    %207 = vector.extract_strided_slice %204 {offsets = [1, 0], sizes = [1, 128], strides = [1, 1]} : vector<3x128xf32> to vector<1x128xf32>
    %c0_236 = arith.constant 0 : index
    %c896_237 = arith.constant 896 : index
    %208 = vector.load %arg21[%c0_236, %c896_237] : memref<2x1280xf32, #tpu.memory_space<vmem>>, vector<1x128xf32>
    tpu.vector_store %arg21[%c0_236, %c896_237], %207 {strides = array<i32>} : memref<2x1280xf32, #tpu.memory_space<vmem>>, vector<1x128xf32>,
    %209 = vector.extract_strided_slice %204 {offsets = [2, 0], sizes = [1, 128], strides = [1, 1]} : vector<3x128xf32> to vector<1x128xf32>
    %c0_238 = arith.constant 0 : index
    %c1024_239 = arith.constant 1024 : index
    %210 = vector.load %arg21[%c0_238, %c1024_239] : memref<2x1280xf32, #tpu.memory_space<vmem>>, vector<1x128xf32>
    tpu.vector_store %arg21[%c0_238, %c1024_239], %209 {strides = array<i32>} : memref<2x1280xf32, #tpu.memory_space<vmem>>, vector<1x128xf32>,
    %c32_240 = arith.constant 32 : index
    %c0_241 = arith.constant 0 : index
    %211 = vector.load %arg20[%c32_240, %c0_241] : memref<100x128xf32, #tpu.memory_space<vmem>>, vector<3x128xf32>
    %c36 = arith.constant 36 : index
    %c0_242 = arith.constant 0 : index
    %212 = vector.load %arg20[%c36, %c0_242] : memref<100x128xf32, #tpu.memory_space<vmem>>, vector<3x128xf32>
    %213 = arith.maximumf %211, %212 : vector<3x128xf32>
    %214 = vector.extract_strided_slice %213 {offsets = [0, 0], sizes = [1, 128], strides = [1, 1]} : vector<3x128xf32> to vector<1x128xf32>
    %c1_243 = arith.constant 1 : index
    %c0_244 = arith.constant 0 : index
    %215 = vector.load %arg21[%c1_243, %c0_244] : memref<2x1280xf32, #tpu.memory_space<vmem>>, vector<1x128xf32>
    tpu.vector_store %arg21[%c1_243, %c0_244], %214 {strides = array<i32>} : memref<2x1280xf32, #tpu.memory_space<vmem>>, vector<1x128xf32>,
    %216 = vector.extract_strided_slice %213 {offsets = [1, 0], sizes = [1, 128], strides = [1, 1]} : vector<3x128xf32> to vector<1x128xf32>
    %c1_245 = arith.constant 1 : index
    %c128_246 = arith.constant 128 : index
    %217 = vector.load %arg21[%c1_245, %c128_246] : memref<2x1280xf32, #tpu.memory_space<vmem>>, vector<1x128xf32>
    tpu.vector_store %arg21[%c1_245, %c128_246], %216 {strides = array<i32>} : memref<2x1280xf32, #tpu.memory_space<vmem>>, vector<1x128xf32>,
    %218 = vector.extract_strided_slice %213 {offsets = [2, 0], sizes = [1, 128], strides = [1, 1]} : vector<3x128xf32> to vector<1x128xf32>
    %c1_247 = arith.constant 1 : index
    %c256_248 = arith.constant 256 : index
    %219 = vector.load %arg21[%c1_247, %c256_248] : memref<2x1280xf32, #tpu.memory_space<vmem>>, vector<1x128xf32>
    tpu.vector_store %arg21[%c1_247, %c256_248], %218 {strides = array<i32>} : memref<2x1280xf32, #tpu.memory_space<vmem>>, vector<1x128xf32>,
    %c40_249 = arith.constant 40 : index
    %c0_250 = arith.constant 0 : index
    %220 = vector.load %arg20[%c40_249, %c0_250] : memref<100x128xf32, #tpu.memory_space<vmem>>, vector<3x128xf32>
    %c44 = arith.constant 44 : index
    %c0_251 = arith.constant 0 : index
    %221 = vector.load %arg20[%c44, %c0_251] : memref<100x128xf32, #tpu.memory_space<vmem>>, vector<3x128xf32>
    %222 = arith.maximumf %220, %221 : vector<3x128xf32>
    %223 = vector.extract_strided_slice %222 {offsets = [0, 0], sizes = [1, 128], strides = [1, 1]} : vector<3x128xf32> to vector<1x128xf32>
    %c1_252 = arith.constant 1 : index
    %c384_253 = arith.constant 384 : index
    %224 = vector.load %arg21[%c1_252, %c384_253] : memref<2x1280xf32, #tpu.memory_space<vmem>>, vector<1x128xf32>
    tpu.vector_store %arg21[%c1_252, %c384_253], %223 {strides = array<i32>} : memref<2x1280xf32, #tpu.memory_space<vmem>>, vector<1x128xf32>,
    %225 = vector.extract_strided_slice %222 {offsets = [1, 0], sizes = [1, 128], strides = [1, 1]} : vector<3x128xf32> to vector<1x128xf32>
    %c1_254 = arith.constant 1 : index
    %c512_255 = arith.constant 512 : index
    %226 = vector.load %arg21[%c1_254, %c512_255] : memref<2x1280xf32, #tpu.memory_space<vmem>>, vector<1x128xf32>
    tpu.vector_store %arg21[%c1_254, %c512_255], %225 {strides = array<i32>} : memref<2x1280xf32, #tpu.memory_space<vmem>>, vector<1x128xf32>,
    %227 = vector.extract_strided_slice %222 {offsets = [2, 0], sizes = [1, 128], strides = [1, 1]} : vector<3x128xf32> to vector<1x128xf32>
    %c1_256 = arith.constant 1 : index
    %c640_257 = arith.constant 640 : index
    %228 = vector.load %arg21[%c1_256, %c640_257] : memref<2x1280xf32, #tpu.memory_space<vmem>>, vector<1x128xf32>
    tpu.vector_store %arg21[%c1_256, %c640_257], %227 {strides = array<i32>} : memref<2x1280xf32, #tpu.memory_space<vmem>>, vector<1x128xf32>,
    %c48 = arith.constant 48 : index
    %c0_258 = arith.constant 0 : index
    %229 = vector.load %arg20[%c48, %c0_258] : memref<100x128xf32, #tpu.memory_space<vmem>>, vector<3x128xf32>
    %c52_259 = arith.constant 52 : index
    %c0_260 = arith.constant 0 : index
    %230 = vector.load %arg20[%c52_259, %c0_260] : memref<100x128xf32, #tpu.memory_space<vmem>>, vector<3x128xf32>
    %231 = arith.maximumf %229, %230 : vector<3x128xf32>
    %232 = vector.extract_strided_slice %231 {offsets = [0, 0], sizes = [1, 128], strides = [1, 1]} : vector<3x128xf32> to vector<1x128xf32>
    %c1_261 = arith.constant 1 : index
    %c768_262 = arith.constant 768 : index
    %233 = vector.load %arg21[%c1_261, %c768_262] : memref<2x1280xf32, #tpu.memory_space<vmem>>, vector<1x128xf32>
    tpu.vector_store %arg21[%c1_261, %c768_262], %232 {strides = array<i32>} : memref<2x1280xf32, #tpu.memory_space<vmem>>, vector<1x128xf32>,
    %234 = vector.extract_strided_slice %231 {offsets = [1, 0], sizes = [1, 128], strides = [1, 1]} : vector<3x128xf32> to vector<1x128xf32>
    %c1_263 = arith.constant 1 : index
    %c896_264 = arith.constant 896 : index
    %235 = vector.load %arg21[%c1_263, %c896_264] : memref<2x1280xf32, #tpu.memory_space<vmem>>, vector<1x128xf32>
    tpu.vector_store %arg21[%c1_263, %c896_264], %234 {strides = array<i32>} : memref<2x1280xf32, #tpu.memory_space<vmem>>, vector<1x128xf32>,
    %236 = vector.extract_strided_slice %231 {offsets = [2, 0], sizes = [1, 128], strides = [1, 1]} : vector<3x128xf32> to vector<1x128xf32>
    %c1_265 = arith.constant 1 : index
    %c1024_266 = arith.constant 1024 : index
    %237 = vector.load %arg21[%c1_265, %c1024_266] : memref<2x1280xf32, #tpu.memory_space<vmem>>, vector<1x128xf32>
    tpu.vector_store %arg21[%c1_265, %c1024_266], %236 {strides = array<i32>} : memref<2x1280xf32, #tpu.memory_space<vmem>>, vector<1x128xf32>,
    %c0_267 = arith.constant 0 : index
    %c0_268 = arith.constant 0 : index
    %238 = vector.load %arg2[%c0_267, %c0_268] : memref<2x128xf32, #tpu.memory_space<vmem>>, vector<2x128xf32>
    %c0_269 = arith.constant 0 : index
    %c1152 = arith.constant 1152 : index
    %239 = vector.load %arg21[%c0_269, %c1152] : memref<2x1280xf32, #tpu.memory_space<vmem>>, vector<2x128xf32>
    tpu.vector_store %arg21[%c0_269, %c1152], %238 {strides = array<i32>} : memref<2x1280xf32, #tpu.memory_space<vmem>>, vector<2x128xf32>,
    %c0_270 = arith.constant 0 : index
    %c0_271 = arith.constant 0 : index
    %240 = vector.load %arg21[%c0_270, %c0_271] : memref<2x1280xf32, #tpu.memory_space<vmem>>, vector<2x1280xf32>
    %241 = arith.truncf %240 : vector<2x1280xf32> to vector<2x1280xbf16>
    %c0_272 = arith.constant 0 : index
    %c0_273 = arith.constant 0 : index
    %242 = vector.load %arg11[%c0_272, %c0_273] : memref<1280x896xbf16, #tpu.memory_space<vmem>>, vector<1280x896xbf16>
    %cst_274 = arith.constant dense<0.000000e+00> : vector<2x896xf32>
    %243 = tpu.matmul %241, %242, %cst_274 {dimension_numbers = #tpu.dot_dimension_numbers<[1], [0], [0], [1], [0, 0, 1, 1], [], []>} : vector<2x1280xbf16>, vector<1280x896xbf16>, vector<2x896xf32> -> vector<2x896xf32>
    %c0_275 = arith.constant 0 : index
    %c0_276 = arith.constant 0 : index
    %244 = vector.load %arg12[%c0_275, %c0_276] : memref<1x896xf32, #tpu.memory_space<vmem>>, vector<1x896xf32>
    %245 = vector.broadcast %244 : vector<1x896xf32> to vector<2x896xf32>
    %246 = arith.addf %243, %245 : vector<2x896xf32>
    %247 = math.tanh %246 : vector<2x896xf32>
    %c0_277 = arith.constant 0 : index
    %c0_278 = arith.constant 0 : index
    %248 = vector.load %arg13[%c0_277, %c0_278] : memref<1x896xf32, #tpu.memory_space<vmem>>, vector<1x896xf32>
    %249 = vector.broadcast %248 : vector<1x896xf32> to vector<2x896xf32>
    %250 = arith.mulf %247, %249 : vector<2x896xf32>
    %cst_279 = arith.constant dense<0.000000e+00> : vector<2xf32>
    %251 = vector.multi_reduction <add>, %250, %cst_279 [1] : vector<2x896xf32> to vector<2xf32>
    %252 = vector.shape_cast %251 : vector<2xf32> to vector<2x1xf32>
    %c0_280 = arith.constant 0 : index
    %c0_281 = arith.constant 0 : index
    %253 = memref.load %arg14[%c0_280, %c0_281] : memref<1x1xf32, #tpu.memory_space<smem>>
    %254 = vector.broadcast %253 : f32 to vector<2x1xf32>
    %255 = arith.addf %252, %254 : vector<2x1xf32>
    %cst_282 = arith.constant 0.000000e+00 : f32
    %256 = vector.broadcast %cst_282 : f32 to vector<2x1xf32>
    %257 = arith.subf %256, %255 : vector<2x1xf32>
    %258 = math.exp %257 : vector<2x1xf32>
    %cst_283 = arith.constant 1.000000e+00 : f32
    %259 = vector.broadcast %cst_283 : f32 to vector<2x1xf32>
    %260 = arith.addf %259, %258 : vector<2x1xf32>
    %cst_284 = arith.constant 1.000000e+00 : f32
    %261 = vector.broadcast %cst_284 : f32 to vector<2x1xf32>
    %262 = arith.divf %261, %260 : vector<2x1xf32>
    %c0_285 = arith.constant 0 : index
    %c0_286 = arith.constant 0 : index
    %263 = vector.load %arg15[%c0_285, %c0_286] : memref<2x1xf32, #tpu.memory_space<vmem>>, vector<2x1xf32>
    tpu.vector_store %arg15[%c0_285, %c0_286], %262 {strides = array<i32>} : memref<2x1xf32, #tpu.memory_space<vmem>>, vector<2x1xf32>,
    return
  }
  func.func @transform_0(%arg0: i32) -> (i32, i32, i32, i32) {
    %c0_i32 = arith.constant 0 : i32
    %c0_i32_0 = arith.constant 0 : i32
    %c0_i32_1 = arith.constant 0 : i32
    %c0_i32_2 = arith.constant 0 : i32
    return %arg0, %c0_i32, %c0_i32_0, %c0_i32_1 : i32, i32, i32, i32
  }
  func.func @transform_1(%arg0: i32) -> (i32, i32) {
    %c0_i32 = arith.constant 0 : i32
    %c0_i32_0 = arith.constant 0 : i32
    return %arg0, %c0_i32 : i32, i32
  }
  func.func @transform_2(%arg0: i32) -> (i32, i32) {
    %c0_i32 = arith.constant 0 : i32
    %c0_i32_0 = arith.constant 0 : i32
    %c0_i32_1 = arith.constant 0 : i32
    return %c0_i32, %c0_i32_0 : i32, i32
  }
  func.func @transform_3(%arg0: i32) -> (i32, i32) {
    %c0_i32 = arith.constant 0 : i32
    %c0_i32_0 = arith.constant 0 : i32
    %c0_i32_1 = arith.constant 0 : i32
    return %c0_i32, %c0_i32_0 : i32, i32
  }
  func.func @transform_4(%arg0: i32) -> (i32, i32) {
    %c0_i32 = arith.constant 0 : i32
    %c0_i32_0 = arith.constant 0 : i32
    %c0_i32_1 = arith.constant 0 : i32
    return %c0_i32, %c0_i32_0 : i32, i32
  }
  func.func @transform_5(%arg0: i32) -> (i32, i32) {
    %c0_i32 = arith.constant 0 : i32
    %c0_i32_0 = arith.constant 0 : i32
    %c0_i32_1 = arith.constant 0 : i32
    return %c0_i32, %c0_i32_0 : i32, i32
  }
  func.func @transform_6(%arg0: i32) -> (i32, i32) {
    %c0_i32 = arith.constant 0 : i32
    %c0_i32_0 = arith.constant 0 : i32
    %c0_i32_1 = arith.constant 0 : i32
    return %c0_i32, %c0_i32_0 : i32, i32
  }
  func.func @transform_7(%arg0: i32) -> (i32, i32) {
    %c0_i32 = arith.constant 0 : i32
    %c0_i32_0 = arith.constant 0 : i32
    %c0_i32_1 = arith.constant 0 : i32
    return %c0_i32, %c0_i32_0 : i32, i32
  }
  func.func @transform_8(%arg0: i32) -> (i32, i32) {
    %c0_i32 = arith.constant 0 : i32
    %c0_i32_0 = arith.constant 0 : i32
    %c0_i32_1 = arith.constant 0 : i32
    return %c0_i32, %c0_i32_0 : i32, i32
  }
  func.func @transform_9(%arg0: i32) -> (i32, i32) {
    %c0_i32 = arith.constant 0 : i32
    %c0_i32_0 = arith.constant 0 : i32
    %c0_i32_1 = arith.constant 0 : i32
    return %c0_i32, %c0_i32_0 : i32, i32
  }
  func.func @transform_10(%arg0: i32) -> (i32, i32) {
    %c0_i32 = arith.constant 0 : i32
    %c0_i32_0 = arith.constant 0 : i32
    %c0_i32_1 = arith.constant 0 : i32
    return %c0_i32, %c0_i32_0 : i32, i32
  }
  func.func @transform_11(%arg0: i32) -> (i32, i32) {
    %c0_i32 = arith.constant 0 : i32
    %c0_i32_0 = arith.constant 0 : i32
    %c0_i32_1 = arith.constant 0 : i32
    return %c0_i32, %c0_i32_0 : i32, i32
  }
  func.func @transform_12(%arg0: i32) -> (i32, i32) {
    %c0_i32 = arith.constant 0 : i32
    %c0_i32_0 = arith.constant 0 : i32
    %c0_i32_1 = arith.constant 0 : i32
    return %c0_i32, %c0_i32_0 : i32, i32
  }
  func.func @transform_13(%arg0: i32) -> (i32, i32) {
    %c0_i32 = arith.constant 0 : i32
    %c0_i32_0 = arith.constant 0 : i32
    %c0_i32_1 = arith.constant 0 : i32
    return %c0_i32, %c0_i32_0 : i32, i32
  }
  func.func @transform_14(%arg0: i32) -> (i32, i32) {
    %c0_i32 = arith.constant 0 : i32
    %c0_i32_0 = arith.constant 0 : i32
    return %arg0, %c0_i32 : i32, i32
  }
}

</mosaic_0001>

<llo_original>
// kernel: class_specialist_forward.1
$region0: #{class_specialist_forward.1}
  #allocation0 [shape = 'u32[]', space=smem, size = 0x4, offset = 0x4, fixed_abs, tag = 'smem constant byte address 0x4 - core index']
  #allocation1 [shape = 'u32[144,128]{1,0:T(1,128)}', space=vmem, size = 0x12000, scoped, tag = 'internal scratch']
  #allocation2 [shape = 'f32[224,128]{1,0:T(8,128)}', space=vmem, size = 0x1c000, scoped, tag = 'scratch operand']
  #allocation3 [shape = 'f32[152,128]{1,0:T(8,128)}', space=vmem, size = 0x13000, scoped, tag = 'scratch operand']
  #allocation4 [shape = 'bf16[200,1152]{1,0:T(8,128)(2,1)}', space=vmem, size = 0x70800, scoped, tag = 'scratch operand']
  #allocation5 [shape = 'f32[200,128]{1,0:T(8,128)}', space=vmem, size = 0x19000, scoped, tag = 'scratch operand']
  #allocation6 [shape = 'f32[100,128]{1,0:T(8,128)}', space=vmem, size = 0xd000, scoped, tag = 'scratch operand']
  #allocation7 [shape = 'f32[2,1280]{1,0:T(2,128)}', space=vmem, size = 0x2800, scoped, tag = 'scratch operand']
  #allocation8 [shape = 'f32[1,1]{1,0:T(1,128)S(6)}', space=smem, size = 0x200, scoped, tag = 'scoped memory for class_specialist_forward.1']
  %s0 = inlined_call_operand.hbm [shape: f32[2,8,8,128], index: 0, kind: input, shape index: {}]
  %s1 = inlined_call_operand.vmem [shape: f32[2,128], index: 1, kind: input, shape index: {}]
  %s2 = inlined_call_operand.vmem [shape: f32[200,1], index: 2, kind: input, shape index: {}]
  %s3 = inlined_call_operand.vmem [shape: f32[128,1], index: 3, kind: input, shape index: {}]
  %s4 = inlined_call_operand.hbm [shape: bf16[1152,128], index: 4, kind: input, shape index: {}]
  %s5 = inlined_call_operand.hbm [shape: f32[1,128], index: 5, kind: input, shape index: {}]
  %s6 = inlined_call_operand.hbm [shape: f32[1,128], index: 6, kind: input, shape index: {}]
  %s7 = inlined_call_operand.hbm [shape: bf16[1152,128], index: 7, kind: input, shape index: {}]
  %s8 = inlined_call_operand.hbm [shape: f32[1,128], index: 8, kind: input, shape index: {}]
  %s9 = inlined_call_operand.hbm [shape: f32[1,128], index: 9, kind: input, shape index: {}]
  %s10 = inlined_call_operand.hbm [shape: bf16[1280,896], index: 10, kind: input, shape index: {}]
  %s11 = inlined_call_operand.hbm [shape: f32[1,896], index: 11, kind: input, shape index: {}]
  %s12 = inlined_call_operand.hbm [shape: f32[1,896], index: 12, kind: input, shape index: {}]
  %s13 = inlined_call_operand.<no memory space> [shape: f32[1,1], index: 13, kind: input, shape index: {}]
  %s14 = inlined_call_operand.vmem [shape: f32[2,1], index: 14, kind: output, shape index: {}]
  %s15 = sld [smem:[#allocation0]]
  $region106: #{class_specialist_forward.1} parent=0
    _
  %s17 = ssub.s32 1, %s15
  %s18 = scalar_select 0, %s17, %s15
  %19 = sst [smem:[#allocation8]] %s13
  $region1: #{class_specialist_forward.1} parent=0
    #allocation9 [shape = 'u8[65536]{0}', space=vmem, size = 0x10000, scoped, tag = 'input window, operand 0, single buffered']
    #allocation10 [shape = 's32[1]{0}', space=sflag, size = 0x4, scoped, tag = 'scoped memory for class_specialist_forward.1']
    #allocation11 [shape = 'u8[294912]{0}', space=vmem, size = 0x48000, scoped, tag = 'input window, operand 4, single buffered']
    #allocation12 [shape = 's32[1]{0}', space=sflag, size = 0x4, scoped, tag = 'scoped memory for class_specialist_forward.1']
    #allocation13 [shape = 'u8[512]{0}', space=vmem, size = 0x400, scoped, tag = 'input window, operand 5, single buffered']
    #allocation14 [shape = 'u8[512]{0}', space=vmem, size = 0x400, scoped, tag = 'input window, operand 6, single buffered']
    #allocation15 [shape = 's32[1]{0}', space=sflag, size = 0x4, scoped, tag = 'scoped memory for class_specialist_forward.1']
    #allocation16 [shape = 'u8[294912]{0}', space=vmem, size = 0x48000, scoped, tag = 'input window, operand 7, single buffered']
    #allocation17 [shape = 'u8[512]{0}', space=vmem, size = 0x400, scoped, tag = 'input window, operand 8, single buffered']
    #allocation18 [shape = 's32[1]{0}', space=sflag, size = 0x4, scoped, tag = 'scoped memory for class_specialist_forward.1']
    #allocation19 [shape = 'u8[512]{0}', space=vmem, size = 0x400, scoped, tag = 'input window, operand 9, single buffered']
    #allocation20 [shape = 'u8[2293760]{0}', space=vmem, size = 0x230000, scoped, tag = 'input window, operand 10, single buffered']
    #allocation21 [shape = 's32[1]{0}', space=sflag, size = 0x4, scoped, tag = 'scoped memory for class_specialist_forward.1']
    #allocation22 [shape = 'u8[3584]{0}', space=vmem, size = 0x1000, scoped, tag = 'input window, operand 11, single buffered']
    #allocation23 [shape = 'u8[3584]{0}', space=vmem, size = 0x1000, scoped, tag = 'input window, operand 12, single buffered']
    #allocation24 [shape = 's32[1]{0}', space=sflag, size = 0x4, scoped, tag = 'scoped memory for class_specialist_forward.1']
    %20 = vsyncpa [#allocation10], 0
    %21 = vsyncpa [#allocation12], 0
    %22 = vsyncpa [#allocation15], 0
    %23 = vsyncpa [#allocation18], 0
    %24 = vsyncpa [#allocation21], 0
    %25 = vsyncpa [#allocation24], 0
    // Predicated region
    $region2: #{class_specialist_forward.1} parent=1 // pred_check
      _
    $region3: #{class_specialist_forward.1} parent=1 // pred_check_branch
      %27 = sbr.rel (0) target = $region5
    $region4: #{class_specialist_forward.1} parent=1 // pred_region
      %s29 = ssub.s32 2048, 2048
      %30 = vsyncadd [#allocation10], %s29
      %s31 = sshll.u32 [#allocation9], 4
      %s32 = int_to_ptr.vmem [resolvable:$true] %s31
      %37 = dma.hbm_to_vmem [thread:$0]  %s0, 2048, %s32, [#allocation10], 128, 128, 8
    $region5: #{class_specialist_forward.1} parent=1 // pred_fallthru
      _
    // Predicated region
    $region6: #{class_specialist_forward.1} parent=1 // pred_check
      _
    $region7: #{class_specialist_forward.1} parent=1 // pred_check_branch
      %39 = sbr.rel (0) target = $region9
    $region8: #{class_specialist_forward.1} parent=1 // pred_region
      _
    $region9: #{class_specialist_forward.1} parent=1 // pred_fallthru
      _
    // Predicated region
    $region10: #{class_specialist_forward.1} parent=1 // pred_check
      _
    $region11: #{class_specialist_forward.1} parent=1 // pred_check_branch
      %41 = sbr.rel (0) target = $region13
    $region12: #{class_specialist_forward.1} parent=1 // pred_region
      _
    $region13: #{class_specialist_forward.1} parent=1 // pred_fallthru
      _
    // Predicated region
    $region14: #{class_specialist_forward.1} parent=1 // pred_check
      _
    $region15: #{class_specialist_forward.1} parent=1 // pred_check_branch
      %43 = sbr.rel (0) target = $region17
    $region16: #{class_specialist_forward.1} parent=1 // pred_region
      _
    $region17: #{class_specialist_forward.1} parent=1 // pred_fallthru
      _
    // Predicated region
    $region18: #{class_specialist_forward.1} parent=1 // pred_check
      _
    $region19: #{class_specialist_forward.1} parent=1 // pred_check_branch
      %45 = sbr.rel (0) target = $region21
    $region20: #{class_specialist_forward.1} parent=1 // pred_region
      %s47 = ssub.s32 9216, 9216
      %48 = vsyncadd [#allocation12], %s47
      %s49 = sshll.u32 [#allocation11], 4
      %s50 = int_to_ptr.vmem [resolvable:$true] %s49
      %55 = dma.hbm_to_vmem [thread:$0]  %s4, 9216, %s50, [#allocation12], 64, 64, 4
    $region21: #{class_specialist_forward.1} parent=1 // pred_fallthru
      _
    // Predicated region
    $region22: #{class_specialist_forward.1} parent=1 // pred_check
      _
    $region23: #{class_specialist_forward.1} parent=1 // pred_check_branch
      %57 = sbr.rel (0) target = $region25
    $region24: #{class_specialist_forward.1} parent=1 // pred_region
      %s59 = ssub.s32 16, 16
      %60 = vsyncadd [#allocation12], %s59
      %s62 = sshll.u32 [#allocation13], 4
      %s63 = int_to_ptr.vmem [resolvable:$true] %s62
      %65 = dma.hbm_to_vmem [thread:$0]  %s5, 16, %s63, [#allocation12]
    $region25: #{class_specialist_forward.1} parent=1 // pred_fallthru
      _
    // Predicated region
    $region26: #{class_specialist_forward.1} parent=1 // pred_check
      _
    $region27: #{class_specialist_forward.1} parent=1 // pred_check_branch
      %67 = sbr.rel (0) target = $region29
    $region28: #{class_specialist_forward.1} parent=1 // pred_region
      %s69 = ssub.s32 16, 16
      %70 = vsyncadd [#allocation15], %s69
      %s72 = sshll.u32 [#allocation14], 4
      %s73 = int_to_ptr.vmem [resolvable:$true] %s72
      %75 = dma.hbm_to_vmem [thread:$0]  %s6, 16, %s73, [#allocation15]
    $region29: #{class_specialist_forward.1} parent=1 // pred_fallthru
      _
    // Predicated region
    $region30: #{class_specialist_forward.1} parent=1 // pred_check
      _
    $region31: #{class_specialist_forward.1} parent=1 // pred_check_branch
      %77 = sbr.rel (0) target = $region33
    $region32: #{class_specialist_forward.1} parent=1 // pred_region
      %s79 = ssub.s32 9216, 9216
      %80 = vsyncadd [#allocation15], %s79
      %s81 = sshll.u32 [#allocation16], 4
      %s82 = int_to_ptr.vmem [resolvable:$true] %s81
      %87 = dma.hbm_to_vmem [thread:$0]  %s7, 9216, %s82, [#allocation15], 64, 64, 4
    $region33: #{class_specialist_forward.1} parent=1 // pred_fallthru
      _
    // Predicated region
    $region34: #{class_specialist_forward.1} parent=1 // pred_check
      _
    $region35: #{class_specialist_forward.1} parent=1 // pred_check_branch
      %89 = sbr.rel (0) target = $region37
    $region36: #{class_specialist_forward.1} parent=1 // pred_region
      %s91 = ssub.s32 16, 16
      %92 = vsyncadd [#allocation18], %s91
      %s94 = sshll.u32 [#allocation17], 4
      %s95 = int_to_ptr.vmem [resolvable:$true] %s94
      %97 = dma.hbm_to_vmem [thread:$0]  %s8, 16, %s95, [#allocation18]
    $region37: #{class_specialist_forward.1} parent=1 // pred_fallthru
      _
    // Predicated region
    $region38: #{class_specialist_forward.1} parent=1 // pred_check
      _
    $region39: #{class_specialist_forward.1} parent=1 // pred_check_branch
      %99 = sbr.rel (0) target = $region41
    $region40: #{class_specialist_forward.1} parent=1 // pred_region
      %s101 = ssub.s32 16, 16
      %102 = vsyncadd [#allocation18], %s101
      %s104 = sshll.u32 [#allocation19], 4
      %s105 = int_to_ptr.vmem [resolvable:$true] %s104
      %107 = dma.hbm_to_vmem [thread:$0]  %s9, 16, %s105, [#allocation18]
    $region41: #{class_specialist_forward.1} parent=1 // pred_fallthru
      _
    // Predicated region
    $region42: #{class_specialist_forward.1} parent=1 // pred_check
      _
    $region43: #{class_specialist_forward.1} parent=1 // pred_check_branch
      %109 = sbr.rel (0) target = $region45
    $region44: #{class_specialist_forward.1} parent=1 // pred_region
      %s111 = ssub.s32 71680, 71680
      %112 = vsyncadd [#allocation21], %s111
      %s113 = sshll.u32 [#allocation20], 4
      %s114 = int_to_ptr.vmem [resolvable:$true] %s113
      %119 = dma.hbm_to_vmem [thread:$0]  %s10, 71680, %s114, [#allocation21], 448, 448, 28
    $region45: #{class_specialist_forward.1} parent=1 // pred_fallthru
      _
    // Predicated region
    $region46: #{class_specialist_forward.1} parent=1 // pred_check
      _
    $region47: #{class_specialist_forward.1} parent=1 // pred_check_branch
      %121 = sbr.rel (0) target = $region49
    $region48: #{class_specialist_forward.1} parent=1 // pred_region
      %s123 = ssub.s32 112, 112
      %124 = vsyncadd [#allocation21], %s123
      %s126 = sshll.u32 [#allocation22], 4
      %s127 = int_to_ptr.vmem [resolvable:$true] %s126
      %129 = dma.hbm_to_vmem [thread:$0]  %s11, 112, %s127, [#allocation21]
    $region49: #{class_specialist_forward.1} parent=1 // pred_fallthru
      _
    // Predicated region
    $region50: #{class_specialist_forward.1} parent=1 // pred_check
      _
    $region51: #{class_specialist_forward.1} parent=1 // pred_check_branch
      %131 = sbr.rel (0) target = $region53
    $region52: #{class_specialist_forward.1} parent=1 // pred_region
      %s133 = ssub.s32 112, 112
      %134 = vsyncadd [#allocation24], %s133
      %s136 = sshll.u32 [#allocation23], 4
      %s137 = int_to_ptr.vmem [resolvable:$true] %s136
      %139 = dma.hbm_to_vmem [thread:$0]  %s12, 112, %s137, [#allocation24]
    $region53: #{class_specialist_forward.1} parent=1 // pred_fallthru
      _
    // Predicated region
    $region54: #{class_specialist_forward.1} parent=1 // pred_check
      _
    $region55: #{class_specialist_forward.1} parent=1 // pred_check_branch
      %141 = sbr.rel (0) target = $region57
    $region56: #{class_specialist_forward.1} parent=1 // pred_region
      _
    $region57: #{class_specialist_forward.1} parent=1 // pred_fallthru
      _
    // Predicated region
    $region58: #{class_specialist_forward.1} parent=1 // pred_check
      _
    $region59: #{class_specialist_forward.1} parent=1 // pred_check_branch
      %143 = sbr.rel (0) target = $region61
    $region60: #{class_specialist_forward.1} parent=1 // pred_region
      %144 = dma.done [#allocation10], 2048
    $region61: #{class_specialist_forward.1} parent=1 // pred_fallthru
      _
    // Predicated region
    $region62: #{class_specialist_forward.1} parent=1 // pred_check
      _
    $region63: #{class_specialist_forward.1} parent=1 // pred_check_branch
      %146 = sbr.rel (0) target = $region65
    $region64: #{class_specialist_forward.1} parent=1 // pred_region
      %147 = dma.done [#allocation12], 9216
    $region65: #{class_specialist_forward.1} parent=1 // pred_fallthru
      _
    // Predicated region
    $region66: #{class_specialist_forward.1} parent=1 // pred_check
      _
    $region67: #{class_specialist_forward.1} parent=1 // pred_check_branch
      %149 = sbr.rel (0) target = $region69
    $region68: #{class_specialist_forward.1} parent=1 // pred_region
      %150 = dma.done [#allocation12], 16
    $region69: #{class_specialist_forward.1} parent=1 // pred_fallthru
      _
    // Predicated region
    $region70: #{class_specialist_forward.1} parent=1 // pred_check
      _
    $region71: #{class_specialist_forward.1} parent=1 // pred_check_branch
      %152 = sbr.rel (0) target = $region73
    $region72: #{class_specialist_forward.1} parent=1 // pred_region
      %153 = dma.done [#allocation15], 16
    $region73: #{class_specialist_forward.1} parent=1 // pred_fallthru
      _
    // Predicated region
    $region74: #{class_specialist_forward.1} parent=1 // pred_check
      _
    $region75: #{class_specialist_forward.1} parent=1 // pred_check_branch
      %155 = sbr.rel (0) target = $region77
    $region76: #{class_specialist_forward.1} parent=1 // pred_region
      %156 = dma.done [#allocation15], 9216
    $region77: #{class_specialist_forward.1} parent=1 // pred_fallthru
      _
    // Predicated region
    $region78: #{class_specialist_forward.1} parent=1 // pred_check
      _
    $region79: #{class_specialist_forward.1} parent=1 // pred_check_branch
      %158 = sbr.rel (0) target = $region81
    $region80: #{class_specialist_forward.1} parent=1 // pred_region
      %159 = dma.done [#allocation18], 16
    $region81: #{class_specialist_forward.1} parent=1 // pred_fallthru
      _
    // Predicated region
    $region82: #{class_specialist_forward.1} parent=1 // pred_check
      _
    $region83: #{class_specialist_forward.1} parent=1 // pred_check_branch
      %161 = sbr.rel (0) target = $region85
    $region84: #{class_specialist_forward.1} parent=1 // pred_region
      %162 = dma.done [#allocation18], 16
    $region85: #{class_specialist_forward.1} parent=1 // pred_fallthru
      _
    // Predicated region
    $region86: #{class_specialist_forward.1} parent=1 // pred_check
      _
    $region87: #{class_specialist_forward.1} parent=1 // pred_check_branch
      %164 = sbr.rel (0) target = $region89
    $region88: #{class_specialist_forward.1} parent=1 // pred_region
      %165 = dma.done [#allocation21], 71680
    $region89: #{class_specialist_forward.1} parent=1 // pred_fallthru
      _
    // Predicated region
    $region90: #{class_specialist_forward.1} parent=1 // pred_check
      _
    $region91: #{class_specialist_forward.1} parent=1 // pred_check_branch
      %167 = sbr.rel (0) target = $region93
    $region92: #{class_specialist_forward.1} parent=1 // pred_region
      %168 = dma.done [#allocation21], 112
    $region93: #{class_specialist_forward.1} parent=1 // pred_fallthru
      _
    // Predicated region
    $region94: #{class_specialist_forward.1} parent=1 // pred_check
      _
    $region95: #{class_specialist_forward.1} parent=1 // pred_check_branch
      %170 = sbr.rel (0) target = $region97
    $region96: #{class_specialist_forward.1} parent=1 // pred_region
      %171 = dma.done [#allocation24], 112
    $region97: #{class_specialist_forward.1} parent=1 // pred_fallthru
      _
    %173 = vst [vmem:[#allocation2] sm:$0xff] 0.0
    %174 = vst [vmem:[#allocation2 + $0x8] sm:$0xff] 0.0
    %175 = vst [vmem:[#allocation2 + $0x10] sm:$0xff] 0.0
    %176 = vst [vmem:[#allocation2 + $0x18] sm:$0xff] 0.0
    %177 = vst [vmem:[#allocation2 + $0x20] sm:$0xff] 0.0
    %178 = vst [vmem:[#allocation2 + $0x28] sm:$0xff] 0.0
    %179 = vst [vmem:[#allocation2 + $0x30] sm:$0xff] 0.0
    %180 = vst [vmem:[#allocation2 + $0x38] sm:$0xff] 0.0
    %181 = vst [vmem:[#allocation2 + $0x40] sm:$0xff] 0.0
    %182 = vst [vmem:[#allocation2 + $0x48] sm:$0xff] 0.0
    %183 = vst [vmem:[#allocation2 + $0x50] sm:$0xff] 0.0
    %184 = vst [vmem:[#allocation2 + $0x58] sm:$0xff] 0.0
    %185 = vst [vmem:[#allocation2 + $0x60] sm:$0xff] 0.0
    %186 = vst [vmem:[#allocation2 + $0x68] sm:$0xff] 0.0
    %187 = vst [vmem:[#allocation2 + $0x70] sm:$0xff] 0.0
    %188 = vst [vmem:[#allocation2 + $0x78] sm:$0xff] 0.0
    %189 = vst [vmem:[#allocation2 + $0x80] sm:$0xff] 0.0
    %190 = vst [vmem:[#allocation2 + $0x88] sm:$0xff] 0.0
    %191 = vst [vmem:[#allocation2 + $0x90] sm:$0xff] 0.0
    %192 = vst [vmem:[#allocation2 + $0x98] sm:$0xff] 0.0
    %193 = vst [vmem:[#allocation2 + $0xa0] sm:$0xff] 0.0
    %194 = vst [vmem:[#allocation2 + $0xa8] sm:$0xff] 0.0
    %195 = vst [vmem:[#allocation2 + $0xb0] sm:$0xff] 0.0
    %196 = vst [vmem:[#allocation2 + $0xb8] sm:$0xff] 0.0
    %197 = vst [vmem:[#allocation2 + $0xc0] sm:$0xff] 0.0
    %198 = vst [vmem:[#allocation2 + $0xc8] sm:$0xff] 0.0
    %199 = vst [vmem:[#allocation2 + $0xd0] sm:$0xff] 0.0
    %200 = vst [vmem:[#allocation2 + $0xd8] sm:$0xff] 0.0
    %201 = vst [vmem:[#allocation3] sm:$0xff] 0.0
    %202 = vst [vmem:[#allocation3 + $0x8] sm:$0xff] 0.0
    %203 = vst [vmem:[#allocation3 + $0x10] sm:$0xff] 0.0
    %204 = vst [vmem:[#allocation3 + $0x18] sm:$0xff] 0.0
    %205 = vst [vmem:[#allocation3 + $0x20] sm:$0xff] 0.0
    %206 = vst [vmem:[#allocation3 + $0x28] sm:$0xff] 0.0
    %207 = vst [vmem:[#allocation3 + $0x30] sm:$0xff] 0.0
    %208 = vst [vmem:[#allocation3 + $0x38] sm:$0xff] 0.0
    %209 = vst [vmem:[#allocation3 + $0x40] sm:$0xff] 0.0
    %210 = vst [vmem:[#allocation3 + $0x48] sm:$0xff] 0.0
    %211 = vst [vmem:[#allocation3 + $0x50] sm:$0xff] 0.0
    %212 = vst [vmem:[#allocation3 + $0x58] sm:$0xff] 0.0
    %213 = vst [vmem:[#allocation3 + $0x60] sm:$0xff] 0.0
    %214 = vst [vmem:[#allocation3 + $0x68] sm:$0xff] 0.0
    %215 = vst [vmem:[#allocation3 + $0x70] sm:$0xff] 0.0
    %216 = vst [vmem:[#allocation3 + $0x78] sm:$0xff] 0.0
    %217 = vst [vmem:[#allocation3 + $0x80] sm:$0xff] 0.0
    %218 = vst [vmem:[#allocation3 + $0x88] sm:$0xff] 0.0
    %219 = vst [vmem:[#allocation3 + $0x90] sm:$0xff] 0.0
    %v220 = vld [vmem:[#allocation9] sm:$0xff]
    %221 = vst [vmem:[#allocation2 + $0x16] sm:$0xff] %v220
    %s222 = scalar_lea.vmem [#allocation9], 8
    %v223 = vld [vmem:[%s222] sm:$0xff]
    %224 = vst [vmem:[#allocation2 + $0x20] sm:$0xff] %v223
    %s225 = scalar_lea.vmem [#allocation9], 16
    %v226 = vld [vmem:[%s225] sm:$0xff]
    %227 = vst [vmem:[#allocation2 + $0x2a] sm:$0xff] %v226
    %s228 = scalar_lea.vmem [#allocation9], 24
    %v229 = vld [vmem:[%s228] sm:$0xff]
    %230 = vst [vmem:[#allocation2 + $0x34] sm:$0xff] %v229
    %s231 = scalar_lea.vmem [#allocation9], 32
    %v232 = vld [vmem:[%s231] sm:$0xff]
    %233 = vst [vmem:[#allocation2 + $0x3e] sm:$0xff] %v232
    %s234 = scalar_lea.vmem [#allocation9], 40
    %v235 = vld [vmem:[%s234] sm:$0xff]
    %236 = vst [vmem:[#allocation2 + $0x48] sm:$0xff] %v235
    %s237 = scalar_lea.vmem [#allocation9], 48
    %v238 = vld [vmem:[%s237] sm:$0xff]
    %239 = vst [vmem:[#allocation2 + $0x52] sm:$0xff] %v238
    %s240 = scalar_lea.vmem [#allocation9], 56
    %v241 = vld [vmem:[%s240] sm:$0xff]
    %242 = vst [vmem:[#allocation2 + $0x5c] sm:$0xff] %v241
    %s243 = scalar_lea.vmem [#allocation9], 64
    %v244 = vld [vmem:[%s243] sm:$0xff]
    %245 = vst [vmem:[#allocation2 + $0x7a] sm:$0xff] %v244
    %s246 = scalar_lea.vmem [#allocation9], 72
    %v247 = vld [vmem:[%s246] sm:$0xff]
    %248 = vst [vmem:[#allocation2 + $0x84] sm:$0xff] %v247
    %s249 = scalar_lea.vmem [#allocation9], 80
    %v250 = vld [vmem:[%s249] sm:$0xff]
    %251 = vst [vmem:[#allocation2 + $0x8e] sm:$0xff] %v250
    %s252 = scalar_lea.vmem [#allocation9], 88
    %v253 = vld [vmem:[%s252] sm:$0xff]
    %254 = vst [vmem:[#allocation2 + $0x98] sm:$0xff] %v253
    %s255 = scalar_lea.vmem [#allocation9], 96
    %v256 = vld [vmem:[%s255] sm:$0xff]
    %257 = vst [vmem:[#allocation2 + $0xa2] sm:$0xff] %v256
    %s258 = scalar_lea.vmem [#allocation9], 104
    %v259 = vld [vmem:[%s258] sm:$0xff]
    %260 = vst [vmem:[#allocation2 + $0xac] sm:$0xff] %v259
    %s261 = scalar_lea.vmem [#allocation9], 112
    %v262 = vld [vmem:[%s261] sm:$0xff]
    %263 = vst [vmem:[#allocation2 + $0xb6] sm:$0xff] %v262
    %s264 = scalar_lea.vmem [#allocation9], 120
    %v265 = vld [vmem:[%s264] sm:$0xff]
    %266 = vst [vmem:[#allocation2 + $0xc0] sm:$0xff] %v265
    %v267 = vld [vmem:[#allocation2] sm:$0xff]
    %v268 = vld [vmem:[#allocation2 + $0x8] sm:$0xff]
    %v269 = vld [vmem:[#allocation2 + $0x10] sm:$0xff]
    %v270 = vld [vmem:[#allocation2 + $0x18] sm:$0xff]
    %v271 = vld [vmem:[#allocation2 + $0x20] sm:$0xff]
    %v272 = vld [vmem:[#allocation2 + $0x28] sm:$0xff]
    %v273 = vld [vmem:[#allocation2 + $0x30] sm:$0xff]
    %v274 = vld [vmem:[#allocation2 + $0x38] sm:$0xff]
    %v275 = vld [vmem:[#allocation2 + $0x40] sm:$0xff]
    %v276 = vld [vmem:[#allocation2 + $0x48] sm:$0xff]
    %v277 = vld [vmem:[#allocation2 + $0x50] sm:$0xff]
    %v278 = vld [vmem:[#allocation2 + $0x58] sm:$0xff]
    %v279 = vld [vmem:[#allocation2 + $0x60] sm:$0xff]
    %v280 = vld [vmem:[#allocation2 + $0x68] sm:$0xff]
    %v281 = vld [vmem:[#allocation2 + $0x70] sm:$0xff]
    %v282 = vld [vmem:[#allocation2 + $0x78] sm:$0xff]
    %v283 = vld [vmem:[#allocation2 + $0x80] sm:$0xff]
    %v284 = vld [vmem:[#allocation2 + $0x88] sm:$0xff]
    %v285 = vld [vmem:[#allocation2 + $0x90] sm:$0xff]
    %v286 = vld [vmem:[#allocation2 + $0x98] sm:$0xff]
    %v287 = vld [vmem:[#allocation2 + $0xa0] sm:$0xff]
    %v288 = vld [vmem:[#allocation2 + $0xa8] sm:$0xff]
    %v289 = vld [vmem:[#allocation2 + $0xb0] sm:$0xff]
    %v290 = vld [vmem:[#allocation2 + $0xb8] sm:$0xff]
    %v291 = vld [vmem:[#allocation2 + $0xc0] sm:$0xff]
    %v292 = vpack.c.bf16 %v268, %v267
    %v293 = vpack.c.bf16 %v270, %v269
    %v294 = vpack.c.bf16 %v272, %v271
    %v295 = vpack.c.bf16 %v274, %v273
    %v296 = vpack.c.bf16 %v276, %v275
    %v297 = vpack.c.bf16 %v278, %v277
    %v298 = vpack.c.bf16 %v280, %v279
    %v299 = vpack.c.bf16 %v282, %v281
    %v300 = vpack.c.bf16 %v284, %v283
    %v301 = vpack.c.bf16 %v286, %v285
    %v302 = vpack.c.bf16 %v288, %v287
    %v303 = vpack.c.bf16 %v290, %v289
    %v304 = vpack.c.bf16 %v291, %v291
    %v318 = vunpack.c.l.b16 %v292
    %v319 = vunpack.c.h.b16 %v292
    %v320 = vunpack.c.l.b16 %v293
    %v321 = vunpack.c.h.b16 %v293
    %v322 = vunpack.c.l.b16 %v294
    %v323 = vunpack.c.h.b16 %v294
    %v324 = vunpack.c.l.b16 %v295
    %v325 = vunpack.c.h.b16 %v295
    %v326 = vunpack.c.l.b16 %v296
    %v327 = vunpack.c.h.b16 %v296
    %v328 = vunpack.c.l.b16 %v297
    %v329 = vunpack.c.h.b16 %v297
    %v330 = vunpack.c.l.b16 %v298
    %v331 = vunpack.c.h.b16 %v298
    %v332 = vunpack.c.l.b16 %v299
    %v333 = vunpack.c.h.b16 %v299
    %v334 = vunpack.c.l.b16 %v300
    %v335 = vunpack.c.h.b16 %v300
    %v336 = vunpack.c.l.b16 %v301
    %v337 = vunpack.c.h.b16 %v301
    %v338 = vunpack.c.l.b16 %v302
    %v339 = vunpack.c.h.b16 %v302
    %v340 = vunpack.c.l.b16 %v303
    %v341 = vunpack.c.h.b16 %v303
    %v342 = vunpack.c.l.b16 %v304
    %v343 = vpack.c.b16 %v318, %v318
    %v344 = vpack.c.b16 %v319, %v319
    %v345 = vpack.c.b16 %v320, %v320
    %v346 = vpack.c.b16 %v321, %v321
    %v347 = vpack.c.b16 %v322, %v322
    %v348 = vpack.c.b16 %v323, %v323
    %v349 = vpack.c.b16 %v324, %v324
    %v350 = vpack.c.b16 %v325, %v325
    %v351 = vpack.c.b16 %v326, %v326
    %v352 = vpack.c.b16 %v327, %v327
    %v353 = vpack.c.b16 %v328, %v328
    %v354 = vpack.c.b16 %v329, %v329
    %v355 = vpack.c.b16 %v330, %v330
    %v356 = vpack.c.b16 %v331, %v331
    %v357 = vpack.c.b16 %v332, %v332
    %v358 = vpack.c.b16 %v333, %v333
    %v359 = vpack.c.b16 %v334, %v334
    %v360 = vpack.c.b16 %v335, %v335
    %v361 = vpack.c.b16 %v336, %v336
    %v362 = vpack.c.b16 %v337, %v337
    %v363 = vpack.c.b16 %v338, %v338
    %v364 = vpack.c.b16 %v339, %v339
    %v365 = vpack.c.b16 %v340, %v340
    %v366 = vpack.c.b16 %v341, %v341
    %v367 = vpack.c.b16 %v342, %v342
    %393 = vst [vmem:[#allocation4] sm:$0xf] %v343
    %394 = vst [vmem:[#allocation4 + $0x24] sm:$0xf] %v344
    %395 = vst [vmem:[#allocation4 + $0x48] sm:$0xf] %v345
    %396 = vst [vmem:[#allocation4 + $0x6c] sm:$0xf] %v346
    %397 = vst [vmem:[#allocation4 + $0x90] sm:$0xf] %v347
    %398 = vst [vmem:[#allocation4 + $0xb4] sm:$0xf] %v348
    %399 = vst [vmem:[#allocation4 + $0xd8] sm:$0xf] %v349
    %400 = vst [vmem:[#allocation4 + $0xfc] sm:$0xf] %v350
    %401 = vst [vmem:[#allocation4 + $0x120] sm:$0xf] %v351
    %402 = vst [vmem:[#allocation4 + $0x144] sm:$0xf] %v352
    %403 = vst [vmem:[#allocation4 + $0x168] sm:$0xf] %v353
    %404 = vst [vmem:[#allocation4 + $0x18c] sm:$0xf] %v354
    %405 = vst [vmem:[#allocation4 + $0x1b0] sm:$0xf] %v355
    %406 = vst [vmem:[#allocation4 + $0x1d4] sm:$0xf] %v356
    %407 = vst [vmem:[#allocation4 + $0x1f8] sm:$0xf] %v357
    %408 = vst [vmem:[#allocation4 + $0x21c] sm:$0xf] %v358
    %409 = vst [vmem:[#allocation4 + $0x240] sm:$0xf] %v359
    %410 = vst [vmem:[#allocation4 + $0x264] sm:$0xf] %v360
    %411 = vst [vmem:[#allocation4 + $0x288] sm:$0xf] %v361
    %412 = vst [vmem:[#allocation4 + $0x2ac] sm:$0xf] %v362
    %413 = vst [vmem:[#allocation4 + $0x2d0] sm:$0xf] %v363
    %414 = vst [vmem:[#allocation4 + $0x2f4] sm:$0xf] %v364
    %415 = vst [vmem:[#allocation4 + $0x318] sm:$0xf] %v365
    %416 = vst [vmem:[#allocation4 + $0x33c] sm:$0xf] %v366
    %417 = vst [vmem:[#allocation4 + $0x360] sm:$0xf] %v367
    %v418 = vld [vmem:[#allocation2 + $0x1] sm:$0xff]
    %v419 = vld [vmem:[#allocation2 + $0x9] sm:$0xff]
    %v420 = vld [vmem:[#allocation2 + $0x11] sm:$0xff]
    %v421 = vld [vmem:[#allocation2 + $0x19] sm:$0xff]
    %v422 = vld [vmem:[#allocation2 + $0x21] sm:$0xff]
    %v423 = vld [vmem:[#allocation2 + $0x29] sm:$0xff]
    %v424 = vld [vmem:[#allocation2 + $0x31] sm:$0xff]
    %v425 = vld [vmem:[#allocation2 + $0x39] sm:$0xff]
    %v426 = vld [vmem:[#allocation2 + $0x41] sm:$0xff]
    %v427 = vld [vmem:[#allocation2 + $0x49] sm:$0xff]
    %v428 = vld [vmem:[#allocation2 + $0x51] sm:$0xff]
    %v429 = vld [vmem:[#allocation2 + $0x59] sm:$0xff]
    %v430 = vld [vmem:[#allocation2 + $0x61] sm:$0xff]
    %v431 = vld [vmem:[#allocation2 + $0x69] sm:$0xff]
    %v432 = vld [vmem:[#allocation2 + $0x71] sm:$0xff]
    %v433 = vld [vmem:[#allocation2 + $0x79] sm:$0xff]
    %v434 = vld [vmem:[#allocation2 + $0x81] sm:$0xff]
    %v435 = vld [vmem:[#allocation2 + $0x89] sm:$0xff]
    %v436 = vld [vmem:[#allocation2 + $0x91] sm:$0xff]
    %v437 = vld [vmem:[#allocation2 + $0x99] sm:$0xff]
    %v438 = vld [vmem:[#allocation2 + $0xa1] sm:$0xff]
    %v439 = vld [vmem:[#allocation2 + $0xa9] sm:$0xff]
    %v440 = vld [vmem:[#allocation2 + $0xb1] sm:$0xff]
    %v441 = vld [vmem:[#allocation2 + $0xb9] sm:$0xff]
    %v442 = vld [vmem:[#allocation2 + $0xc1] sm:$0xff]
    %v443 = vpack.c.bf16 %v419, %v418
    %v444 = vpack.c.bf16 %v421, %v420
    %v445 = vpack.c.bf16 %v423, %v422
    %v446 = vpack.c.bf16 %v425, %v424
    %v447 = vpack.c.bf16 %v427, %v426
    %v448 = vpack.c.bf16 %v429, %v428
    %v449 = vpack.c.bf16 %v431, %v430
    %v450 = vpack.c.bf16 %v433, %v432
    %v451 = vpack.c.bf16 %v435, %v434
    %v452 = vpack.c.bf16 %v437, %v436
    %v453 = vpack.c.bf16 %v439, %v438
    %v454 = vpack.c.bf16 %v441, %v440
    %v455 = vpack.c.bf16 %v442, %v442
    %v469 = vunpack.c.l.b16 %v443
    %v470 = vunpack.c.h.b16 %v443
    %v471 = vunpack.c.l.b16 %v444
    %v472 = vunpack.c.h.b16 %v444
    %v473 = vunpack.c.l.b16 %v445
    %v474 = vunpack.c.h.b16 %v445
    %v475 = vunpack.c.l.b16 %v446
    %v476 = vunpack.c.h.b16 %v446
    %v477 = vunpack.c.l.b16 %v447
    %v478 = vunpack.c.h.b16 %v447
    %v479 = vunpack.c.l.b16 %v448
    %v480 = vunpack.c.h.b16 %v448
    %v481 = vunpack.c.l.b16 %v449
    %v482 = vunpack.c.h.b16 %v449
    %v483 = vunpack.c.l.b16 %v450
    %v484 = vunpack.c.h.b16 %v450
    %v485 = vunpack.c.l.b16 %v451
    %v486 = vunpack.c.h.b16 %v451
    %v487 = vunpack.c.l.b16 %v452
    %v488 = vunpack.c.h.b16 %v452
    %v489 = vunpack.c.l.b16 %v453
    %v490 = vunpack.c.h.b16 %v453
    %v491 = vunpack.c.l.b16 %v454
    %v492 = vunpack.c.h.b16 %v454
    %v493 = vunpack.c.l.b16 %v455
    %v494 = vpack.c.b16 %v469, %v469
    %v495 = vpack.c.b16 %v470, %v470
    %v496 = vpack.c.b16 %v471, %v471
    %v497 = vpack.c.b16 %v472, %v472
    %v498 = vpack.c.b16 %v473, %v473
    %v499 = vpack.c.b16 %v474, %v474
    %v500 = vpack.c.b16 %v475, %v475
    %v501 = vpack.c.b16 %v476, %v476
    %v502 = vpack.c.b16 %v477, %v477
    %v503 = vpack.c.b16 %v478, %v478
    %v504 = vpack.c.b16 %v479, %v479
    %v505 = vpack.c.b16 %v480, %v480
    %v506 = vpack.c.b16 %v481, %v481
    %v507 = vpack.c.b16 %v482, %v482
    %v508 = vpack.c.b16 %v483, %v483
    %v509 = vpack.c.b16 %v484, %v484
    %v510 = vpack.c.b16 %v485, %v485
    %v511 = vpack.c.b16 %v486, %v486
    %v512 = vpack.c.b16 %v487, %v487
    %v513 = vpack.c.b16 %v488, %v488
    %v514 = vpack.c.b16 %v489, %v489
    %v515 = vpack.c.b16 %v490, %v490
    %v516 = vpack.c.b16 %v491, %v491
    %v517 = vpack.c.b16 %v492, %v492
    %v518 = vpack.c.b16 %v493, %v493
    %544 = vst [vmem:[#allocation4 + $0x4] sm:$0xf] %v494
    %545 = vst [vmem:[#allocation4 + $0x28] sm:$0xf] %v495
    %546 = vst [vmem:[#allocation4 + $0x4c] sm:$0xf] %v496
    %547 = vst [vmem:[#allocation4 + $0x70] sm:$0xf] %v497
    %548 = vst [vmem:[#allocation4 + $0x94] sm:$0xf] %v498
    %549 = vst [vmem:[#allocation4 + $0xb8] sm:$0xf] %v499
    %550 = vst [vmem:[#allocation4 + $0xdc] sm:$0xf] %v500
    %551 = vst [vmem:[#allocation4 + $0x100] sm:$0xf] %v501
    %552 = vst [vmem:[#allocation4 + $0x124] sm:$0xf] %v502
    %553 = vst [vmem:[#allocation4 + $0x148] sm:$0xf] %v503
    %554 = vst [vmem:[#allocation4 + $0x16c] sm:$0xf] %v504
    %555 = vst [vmem:[#allocation4 + $0x190] sm:$0xf] %v505
    %556 = vst [vmem:[#allocation4 + $0x1b4] sm:$0xf] %v506
    %557 = vst [vmem:[#allocation4 + $0x1d8] sm:$0xf] %v507
    %558 = vst [vmem:[#allocation4 + $0x1fc] sm:$0xf] %v508
    %559 = vst [vmem:[#allocation4 + $0x220] sm:$0xf] %v509
    %560 = vst [vmem:[#allocation4 + $0x244] sm:$0xf] %v510
    %561 = vst [vmem:[#allocation4 + $0x268] sm:$0xf] %v511
    %562 = vst [vmem:[#allocation4 + $0x28c] sm:$0xf] %v512
    %563 = vst [vmem:[#allocation4 + $0x2b0] sm:$0xf] %v513
    %564 = vst [vmem:[#allocation4 + $0x2d4] sm:$0xf] %v514
    %565 = vst [vmem:[#allocation4 + $0x2f8] sm:$0xf] %v515
    %566 = vst [vmem:[#allocation4 + $0x31c] sm:$0xf] %v516
    %567 = vst [vmem:[#allocation4 + $0x340] sm:$0xf] %v517
    %568 = vst [vmem:[#allocation4 + $0x364] sm:$0xf] %v518
    %v569 = vld [vmem:[#allocation2 + $0x2] sm:$0xff]
    %v570 = vld [vmem:[#allocation2 + $0xa] sm:$0xff]
    %v571 = vld [vmem:[#allocation2 + $0x12] sm:$0xff]
    %v572 = vld [vmem:[#allocation2 + $0x1a] sm:$0xff]
    %v573 = vld [vmem:[#allocation2 + $0x22] sm:$0xff]
    %v574 = vld [vmem:[#allocation2 + $0x2a] sm:$0xff]
    %v575 = vld [vmem:[#allocation2 + $0x32] sm:$0xff]
    %v576 = vld [vmem:[#allocation2 + $0x3a] sm:$0xff]
    %v577 = vld [vmem:[#allocation2 + $0x42] sm:$0xff]
    %v578 = vld [vmem:[#allocation2 + $0x4a] sm:$0xff]
    %v579 = vld [vmem:[#allocation2 + $0x52] sm:$0xff]
    %v580 = vld [vmem:[#allocation2 + $0x5a] sm:$0xff]
    %v581 = vld [vmem:[#allocation2 + $0x62] sm:$0xff]
    %v582 = vld [vmem:[#allocation2 + $0x6a] sm:$0xff]
    %v583 = vld [vmem:[#allocation2 + $0x72] sm:$0xff]
    %v584 = vld [vmem:[#allocation2 + $0x7a] sm:$0xff]
    %v585 = vld [vmem:[#allocation2 + $0x82] sm:$0xff]
    %v586 = vld [vmem:[#allocation2 + $0x8a] sm:$0xff]
    %v587 = vld [vmem:[#allocation2 + $0x92] sm:$0xff]
    %v588 = vld [vmem:[#allocation2 + $0x9a] sm:$0xff]
    %v589 = vld [vmem:[#allocation2 + $0xa2] sm:$0xff]
    %v590 = vld [vmem:[#allocation2 + $0xaa] sm:$0xff]
    %v591 = vld [vmem:[#allocation2 + $0xb2] sm:$0xff]
    %v592 = vld [vmem:[#allocation2 + $0xba] sm:$0xff]
    %v593 = vld [vmem:[#allocation2 + $0xc2] sm:$0xff]
    %v594 = vpack.c.bf16 %v570, %v569
    %v595 = vpack.c.bf16 %v572, %v571
    %v596 = vpack.c.bf16 %v574, %v573
    %v597 = vpack.c.bf16 %v576, %v575
    %v598 = vpack.c.bf16 %v578, %v577
    %v599 = vpack.c.bf16 %v580, %v579
    %v600 = vpack.c.bf16 %v582, %v581
    %v601 = vpack.c.bf16 %v584, %v583
    %v602 = vpack.c.bf16 %v586, %v585
    %v603 = vpack.c.bf16 %v588, %v587
    %v604 = vpack.c.bf16 %v590, %v589
    %v605 = vpack.c.bf16 %v592, %v591
    %v606 = vpack.c.bf16 %v593, %v593
    %v620 = vunpack.c.l.b16 %v594
    %v621 = vunpack.c.h.b16 %v594
    %v622 = vunpack.c.l.b16 %v595
    %v623 = vunpack.c.h.b16 %v595
    %v624 = vunpack.c.l.b16 %v596
    %v625 = vunpack.c.h.b16 %v596
    %v626 = vunpack.c.l.b16 %v597
    %v627 = vunpack.c.h.b16 %v597
    %v628 = vunpack.c.l.b16 %v598
    %v629 = vunpack.c.h.b16 %v598
    %v630 = vunpack.c.l.b16 %v599
    %v631 = vunpack.c.h.b16 %v599
    %v632 = vunpack.c.l.b16 %v600
    %v633 = vunpack.c.h.b16 %v600
    %v634 = vunpack.c.l.b16 %v601
    %v635 = vunpack.c.h.b16 %v601
    %v636 = vunpack.c.l.b16 %v602
    %v637 = vunpack.c.h.b16 %v602
    %v638 = vunpack.c.l.b16 %v603
    %v639 = vunpack.c.h.b16 %v603
    %v640 = vunpack.c.l.b16 %v604
    %v641 = vunpack.c.h.b16 %v604
    %v642 = vunpack.c.l.b16 %v605
    %v643 = vunpack.c.h.b16 %v605
    %v644 = vunpack.c.l.b16 %v606
    %v645 = vpack.c.b16 %v620, %v620
    %v646 = vpack.c.b16 %v621, %v621
    %v647 = vpack.c.b16 %v622, %v622
    %v648 = vpack.c.b16 %v623, %v623
    %v649 = vpack.c.b16 %v624, %v624
    %v650 = vpack.c.b16 %v625, %v625
    %v651 = vpack.c.b16 %v626, %v626
    %v652 = vpack.c.b16 %v627, %v627
    %v653 = vpack.c.b16 %v628, %v628
    %v654 = vpack.c.b16 %v629, %v629
    %v655 = vpack.c.b16 %v630, %v630
    %v656 = vpack.c.b16 %v631, %v631
    %v657 = vpack.c.b16 %v632, %v632
    %v658 = vpack.c.b16 %v633, %v633
    %v659 = vpack.c.b16 %v634, %v634
    %v660 = vpack.c.b16 %v635, %v635
    %v661 = vpack.c.b16 %v636, %v636
    %v662 = vpack.c.b16 %v637, %v637
    %v663 = vpack.c.b16 %v638, %v638
    %v664 = vpack.c.b16 %v639, %v639
    %v665 = vpack.c.b16 %v640, %v640
    %v666 = vpack.c.b16 %v641, %v641
    %v667 = vpack.c.b16 %v642, %v642
    %v668 = vpack.c.b16 %v643, %v643
    %v669 = vpack.c.b16 %v644, %v644
    %695 = vst [vmem:[#allocation4 + $0x8] sm:$0xf] %v645
    %696 = vst [vmem:[#allocation4 + $0x2c] sm:$0xf] %v646
    %697 = vst [vmem:[#allocation4 + $0x50] sm:$0xf] %v647
    %698 = vst [vmem:[#allocation4 + $0x74] sm:$0xf] %v648
    %699 = vst [vmem:[#allocation4 + $0x98] sm:$0xf] %v649
    %700 = vst [vmem:[#allocation4 + $0xbc] sm:$0xf] %v650
    %701 = vst [vmem:[#allocation4 + $0xe0] sm:$0xf] %v651
    %702 = vst [vmem:[#allocation4 + $0x104] sm:$0xf] %v652
    %703 = vst [vmem:[#allocation4 + $0x128] sm:$0xf] %v653
    %704 = vst [vmem:[#allocation4 + $0x14c] sm:$0xf] %v654
    %705 = vst [vmem:[#allocation4 + $0x170] sm:$0xf] %v655
    %706 = vst [vmem:[#allocation4 + $0x194] sm:$0xf] %v656
    %707 = vst [vmem:[#allocation4 + $0x1b8] sm:$0xf] %v657
    %708 = vst [vmem:[#allocation4 + $0x1dc] sm:$0xf] %v658
    %709 = vst [vmem:[#allocation4 + $0x200] sm:$0xf] %v659
    %710 = vst [vmem:[#allocation4 + $0x224] sm:$0xf] %v660
    %711 = vst [vmem:[#allocation4 + $0x248] sm:$0xf] %v661
    %712 = vst [vmem:[#allocation4 + $0x26c] sm:$0xf] %v662
    %713 = vst [vmem:[#allocation4 + $0x290] sm:$0xf] %v663
    %714 = vst [vmem:[#allocation4 + $0x2b4] sm:$0xf] %v664
    %715 = vst [vmem:[#allocation4 + $0x2d8] sm:$0xf] %v665
    %716 = vst [vmem:[#allocation4 + $0x2fc] sm:$0xf] %v666
    %717 = vst [vmem:[#allocation4 + $0x320] sm:$0xf] %v667
    %718 = vst [vmem:[#allocation4 + $0x344] sm:$0xf] %v668
    %719 = vst [vmem:[#allocation4 + $0x368] sm:$0xf] %v669
    %v720 = vld [vmem:[#allocation2 + $0xa] sm:$0xff]
    %v721 = vld [vmem:[#allocation2 + $0x12] sm:$0xff]
    %v722 = vld [vmem:[#allocation2 + $0x1a] sm:$0xff]
    %v723 = vld [vmem:[#allocation2 + $0x22] sm:$0xff]
    %v724 = vld [vmem:[#allocation2 + $0x2a] sm:$0xff]
    %v725 = vld [vmem:[#allocation2 + $0x32] sm:$0xff]
    %v726 = vld [vmem:[#allocation2 + $0x3a] sm:$0xff]
    %v727 = vld [vmem:[#allocation2 + $0x42] sm:$0xff]
    %v728 = vld [vmem:[#allocation2 + $0x4a] sm:$0xff]
    %v729 = vld [vmem:[#allocation2 + $0x52] sm:$0xff]
    %v730 = vld [vmem:[#allocation2 + $0x5a] sm:$0xff]
    %v731 = vld [vmem:[#allocation2 + $0x62] sm:$0xff]
    %v732 = vld [vmem:[#allocation2 + $0x6a] sm:$0xff]
    %v733 = vld [vmem:[#allocation2 + $0x72] sm:$0xff]
    %v734 = vld [vmem:[#allocation2 + $0x7a] sm:$0xff]
    %v735 = vld [vmem:[#allocation2 + $0x82] sm:$0xff]
    %v736 = vld [vmem:[#allocation2 + $0x8a] sm:$0xff]
    %v737 = vld [vmem:[#allocation2 + $0x92] sm:$0xff]
    %v738 = vld [vmem:[#allocation2 + $0x9a] sm:$0xff]
    %v739 = vld [vmem:[#allocation2 + $0xa2] sm:$0xff]
    %v740 = vld [vmem:[#allocation2 + $0xaa] sm:$0xff]
    %v741 = vld [vmem:[#allocation2 + $0xb2] sm:$0xff]
    %v742 = vld [vmem:[#allocation2 + $0xba] sm:$0xff]
    %v743 = vld [vmem:[#allocation2 + $0xc2] sm:$0xff]
    %v744 = vld [vmem:[#allocation2 + $0xca] sm:$0xff]
    %v745 = vpack.c.bf16 %v721, %v720
    %v746 = vpack.c.bf16 %v723, %v722
    %v747 = vpack.c.bf16 %v725, %v724
    %v748 = vpack.c.bf16 %v727, %v726
    %v749 = vpack.c.bf16 %v729, %v728
    %v750 = vpack.c.bf16 %v731, %v730
    %v751 = vpack.c.bf16 %v733, %v732
    %v752 = vpack.c.bf16 %v735, %v734
    %v753 = vpack.c.bf16 %v737, %v736
    %v754 = vpack.c.bf16 %v739, %v738
    %v755 = vpack.c.bf16 %v741, %v740
    %v756 = vpack.c.bf16 %v743, %v742
    %v757 = vpack.c.bf16 %v744, %v744
    %v771 = vunpack.c.l.b16 %v745
    %v772 = vunpack.c.h.b16 %v745
    %v773 = vunpack.c.l.b16 %v746
    %v774 = vunpack.c.h.b16 %v746
    %v775 = vunpack.c.l.b16 %v747
    %v776 = vunpack.c.h.b16 %v747
    %v777 = vunpack.c.l.b16 %v748
    %v778 = vunpack.c.h.b16 %v748
    %v779 = vunpack.c.l.b16 %v749
    %v780 = vunpack.c.h.b16 %v749
    %v781 = vunpack.c.l.b16 %v750
    %v782 = vunpack.c.h.b16 %v750
    %v783 = vunpack.c.l.b16 %v751
    %v784 = vunpack.c.h.b16 %v751
    %v785 = vunpack.c.l.b16 %v752
    %v786 = vunpack.c.h.b16 %v752
    %v787 = vunpack.c.l.b16 %v753
    %v788 = vunpack.c.h.b16 %v753
    %v789 = vunpack.c.l.b16 %v754
    %v790 = vunpack.c.h.b16 %v754
    %v791 = vunpack.c.l.b16 %v755
    %v792 = vunpack.c.h.b16 %v755
    %v793 = vunpack.c.l.b16 %v756
    %v794 = vunpack.c.h.b16 %v756
    %v795 = vunpack.c.l.b16 %v757
    %v796 = vpack.c.b16 %v771, %v771
    %v797 = vpack.c.b16 %v772, %v772
    %v798 = vpack.c.b16 %v773, %v773
    %v799 = vpack.c.b16 %v774, %v774
    %v800 = vpack.c.b16 %v775, %v775
    %v801 = vpack.c.b16 %v776, %v776
    %v802 = vpack.c.b16 %v777, %v777
    %v803 = vpack.c.b16 %v778, %v778
    %v804 = vpack.c.b16 %v779, %v779
    %v805 = vpack.c.b16 %v780, %v780
    %v806 = vpack.c.b16 %v781, %v781
    %v807 = vpack.c.b16 %v782, %v782
    %v808 = vpack.c.b16 %v783, %v783
    %v809 = vpack.c.b16 %v784, %v784
    %v810 = vpack.c.b16 %v785, %v785
    %v811 = vpack.c.b16 %v786, %v786
    %v812 = vpack.c.b16 %v787, %v787
    %v813 = vpack.c.b16 %v788, %v788
    %v814 = vpack.c.b16 %v789, %v789
    %v815 = vpack.c.b16 %v790, %v790
    %v816 = vpack.c.b16 %v791, %v791
    %v817 = vpack.c.b16 %v792, %v792
    %v818 = vpack.c.b16 %v793, %v793
    %v819 = vpack.c.b16 %v794, %v794
    %v820 = vpack.c.b16 %v795, %v795
    %846 = vst [vmem:[#allocation4 + $0xc] sm:$0xf] %v796
    %847 = vst [vmem:[#allocation4 + $0x30] sm:$0xf] %v797
    %848 = vst [vmem:[#allocation4 + $0x54] sm:$0xf] %v798
    %849 = vst [vmem:[#allocation4 + $0x78] sm:$0xf] %v799
    %850 = vst [vmem:[#allocation4 + $0x9c] sm:$0xf] %v800
    %851 = vst [vmem:[#allocation4 + $0xc0] sm:$0xf] %v801
    %852 = vst [vmem:[#allocation4 + $0xe4] sm:$0xf] %v802
    %853 = vst [vmem:[#allocation4 + $0x108] sm:$0xf] %v803
    %854 = vst [vmem:[#allocation4 + $0x12c] sm:$0xf] %v804
    %855 = vst [vmem:[#allocation4 + $0x150] sm:$0xf] %v805
    %856 = vst [vmem:[#allocation4 + $0x174] sm:$0xf] %v806
    %857 = vst [vmem:[#allocation4 + $0x198] sm:$0xf] %v807
    %858 = vst [vmem:[#allocation4 + $0x1bc] sm:$0xf] %v808
    %859 = vst [vmem:[#allocation4 + $0x1e0] sm:$0xf] %v809
    %860 = vst [vmem:[#allocation4 + $0x204] sm:$0xf] %v810
    %861 = vst [vmem:[#allocation4 + $0x228] sm:$0xf] %v811
    %862 = vst [vmem:[#allocation4 + $0x24c] sm:$0xf] %v812
    %863 = vst [vmem:[#allocation4 + $0x270] sm:$0xf] %v813
    %864 = vst [vmem:[#allocation4 + $0x294] sm:$0xf] %v814
    %865 = vst [vmem:[#allocation4 + $0x2b8] sm:$0xf] %v815
    %866 = vst [vmem:[#allocation4 + $0x2dc] sm:$0xf] %v816
    %867 = vst [vmem:[#allocation4 + $0x300] sm:$0xf] %v817
    %868 = vst [vmem:[#allocation4 + $0x324] sm:$0xf] %v818
    %869 = vst [vmem:[#allocation4 + $0x348] sm:$0xf] %v819
    %870 = vst [vmem:[#allocation4 + $0x36c] sm:$0xf] %v820
    %v871 = vld [vmem:[#allocation2 + $0xb] sm:$0xff]
    %v872 = vld [vmem:[#allocation2 + $0x13] sm:$0xff]
    %v873 = vld [vmem:[#allocation2 + $0x1b] sm:$0xff]
    %v874 = vld [vmem:[#allocation2 + $0x23] sm:$0xff]
    %v875 = vld [vmem:[#allocation2 + $0x2b] sm:$0xff]
    %v876 = vld [vmem:[#allocation2 + $0x33] sm:$0xff]
    %v877 = vld [vmem:[#allocation2 + $0x3b] sm:$0xff]
    %v878 = vld [vmem:[#allocation2 + $0x43] sm:$0xff]
    %v879 = vld [vmem:[#allocation2 + $0x4b] sm:$0xff]
    %v880 = vld [vmem:[#allocation2 + $0x53] sm:$0xff]
    %v881 = vld [vmem:[#allocation2 + $0x5b] sm:$0xff]
    %v882 = vld [vmem:[#allocation2 + $0x63] sm:$0xff]
    %v883 = vld [vmem:[#allocation2 + $0x6b] sm:$0xff]
    %v884 = vld [vmem:[#allocation2 + $0x73] sm:$0xff]
    %v885 = vld [vmem:[#allocation2 + $0x7b] sm:$0xff]
    %v886 = vld [vmem:[#allocation2 + $0x83] sm:$0xff]
    %v887 = vld [vmem:[#allocation2 + $0x8b] sm:$0xff]
    %v888 = vld [vmem:[#allocation2 + $0x93] sm:$0xff]
    %v889 = vld [vmem:[#allocation2 + $0x9b] sm:$0xff]
    %v890 = vld [vmem:[#allocation2 + $0xa3] sm:$0xff]
    %v891 = vld [vmem:[#allocation2 + $0xab] sm:$0xff]
    %v892 = vld [vmem:[#allocation2 + $0xb3] sm:$0xff]
    %v893 = vld [vmem:[#allocation2 + $0xbb] sm:$0xff]
    %v894 = vld [vmem:[#allocation2 + $0xc3] sm:$0xff]
    %v895 = vld [vmem:[#allocation2 + $0xcb] sm:$0xff]
    %v896 = vpack.c.bf16 %v872, %v871
    %v897 = vpack.c.bf16 %v874, %v873
    %v898 = vpack.c.bf16 %v876, %v875
    %v899 = vpack.c.bf16 %v878, %v877
    %v900 = vpack.c.bf16 %v880, %v879
    %v901 = vpack.c.bf16 %v882, %v881
    %v902 = vpack.c.bf16 %v884, %v883
    %v903 = vpack.c.bf16 %v886, %v885
    %v904 = vpack.c.bf16 %v888, %v887
    %v905 = vpack.c.bf16 %v890, %v889
    %v906 = vpack.c.bf16 %v892, %v891
    %v907 = vpack.c.bf16 %v894, %v893
    %v908 = vpack.c.bf16 %v895, %v895
    %v922 = vunpack.c.l.b16 %v896
    %v923 = vunpack.c.h.b16 %v896
    %v924 = vunpack.c.l.b16 %v897
    %v925 = vunpack.c.h.b16 %v897
    %v926 = vunpack.c.l.b16 %v898
    %v927 = vunpack.c.h.b16 %v898
    %v928 = vunpack.c.l.b16 %v899
    %v929 = vunpack.c.h.b16 %v899
    %v930 = vunpack.c.l.b16 %v900
    %v931 = vunpack.c.h.b16 %v900
    %v932 = vunpack.c.l.b16 %v901
    %v933 = vunpack.c.h.b16 %v901
    %v934 = vunpack.c.l.b16 %v902
    %v935 = vunpack.c.h.b16 %v902
    %v936 = vunpack.c.l.b16 %v903
    %v937 = vunpack.c.h.b16 %v903
    %v938 = vunpack.c.l.b16 %v904
    %v939 = vunpack.c.h.b16 %v904
    %v940 = vunpack.c.l.b16 %v905
    %v941 = vunpack.c.h.b16 %v905
    %v942 = vunpack.c.l.b16 %v906
    %v943 = vunpack.c.h.b16 %v906
    %v944 = vunpack.c.l.b16 %v907
    %v945 = vunpack.c.h.b16 %v907
    %v946 = vunpack.c.l.b16 %v908
    %v947 = vpack.c.b16 %v922, %v922
    %v948 = vpack.c.b16 %v923, %v923
    %v949 = vpack.c.b16 %v924, %v924
    %v950 = vpack.c.b16 %v925, %v925
    %v951 = vpack.c.b16 %v926, %v926
    %v952 = vpack.c.b16 %v927, %v927
    %v953 = vpack.c.b16 %v928, %v928
    %v954 = vpack.c.b16 %v929, %v929
    %v955 = vpack.c.b16 %v930, %v930
    %v956 = vpack.c.b16 %v931, %v931
    %v957 = vpack.c.b16 %v932, %v932
    %v958 = vpack.c.b16 %v933, %v933
    %v959 = vpack.c.b16 %v934, %v934
    %v960 = vpack.c.b16 %v935, %v935
    %v961 = vpack.c.b16 %v936, %v936
    %v962 = vpack.c.b16 %v937, %v937
    %v963 = vpack.c.b16 %v938, %v938
    %v964 = vpack.c.b16 %v939, %v939
    %v965 = vpack.c.b16 %v940, %v940
    %v966 = vpack.c.b16 %v941, %v941
    %v967 = vpack.c.b16 %v942, %v942
    %v968 = vpack.c.b16 %v943, %v943
    %v969 = vpack.c.b16 %v944, %v944
    %v970 = vpack.c.b16 %v945, %v945
    %v971 = vpack.c.b16 %v946, %v946
    %997 = vst [vmem:[#allocation4 + $0x10] sm:$0xf] %v947
    %998 = vst [vmem:[#allocation4 + $0x34] sm:$0xf] %v948
    %999 = vst [vmem:[#allocation4 + $0x58] sm:$0xf] %v949
    %1000 = vst [vmem:[#allocation4 + $0x7c] sm:$0xf] %v950
    %1001 = vst [vmem:[#allocation4 + $0xa0] sm:$0xf] %v951
    %1002 = vst [vmem:[#allocation4 + $0xc4] sm:$0xf] %v952
    %1003 = vst [vmem:[#allocation4 + $0xe8] sm:$0xf] %v953
    %1004 = vst [vmem:[#allocation4 + $0x10c] sm:$0xf] %v954
    %1005 = vst [vmem:[#allocation4 + $0x130] sm:$0xf] %v955
    %1006 = vst [vmem:[#allocation4 + $0x154] sm:$0xf] %v956
    %1007 = vst [vmem:[#allocation4 + $0x178] sm:$0xf] %v957
    %1008 = vst [vmem:[#allocation4 + $0x19c] sm:$0xf] %v958
    %1009 = vst [vmem:[#allocation4 + $0x1c0] sm:$0xf] %v959
    %1010 = vst [vmem:[#allocation4 + $0x1e4] sm:$0xf] %v960
    %1011 = vst [vmem:[#allocation4 + $0x208] sm:$0xf] %v961
    %1012 = vst [vmem:[#allocation4 + $0x22c] sm:$0xf] %v962
    %1013 = vst [vmem:[#allocation4 + $0x250] sm:$0xf] %v963
    %1014 = vst [vmem:[#allocation4 + $0x274] sm:$0xf] %v964
    %1015 = vst [vmem:[#allocation4 + $0x298] sm:$0xf] %v965
    %1016 = vst [vmem:[#allocation4 + $0x2bc] sm:$0xf] %v966
    %1017 = vst [vmem:[#allocation4 + $0x2e0] sm:$0xf] %v967
    %1018 = vst [vmem:[#allocation4 + $0x304] sm:$0xf] %v968
    %1019 = vst [vmem:[#allocation4 + $0x328] sm:$0xf] %v969
    %1020 = vst [vmem:[#allocation4 + $0x34c] sm:$0xf] %v970
    %1021 = vst [vmem:[#allocation4 + $0x370] sm:$0xf] %v971
    %v1022 = vld [vmem:[#allocation2 + $0xc] sm:$0xff]
    %v1023 = vld [vmem:[#allocation2 + $0x14] sm:$0xff]
    %v1024 = vld [vmem:[#allocation2 + $0x1c] sm:$0xff]
    %v1025 = vld [vmem:[#allocation2 + $0x24] sm:$0xff]
    %v1026 = vld [vmem:[#allocation2 + $0x2c] sm:$0xff]
    %v1027 = vld [vmem:[#allocation2 + $0x34] sm:$0xff]
    %v1028 = vld [vmem:[#allocation2 + $0x3c] sm:$0xff]
    %v1029 = vld [vmem:[#allocation2 + $0x44] sm:$0xff]
    %v1030 = vld [vmem:[#allocation2 + $0x4c] sm:$0xff]
    %v1031 = vld [vmem:[#allocation2 + $0x54] sm:$0xff]
    %v1032 = vld [vmem:[#allocation2 + $0x5c] sm:$0xff]
    %v1033 = vld [vmem:[#allocation2 + $0x64] sm:$0xff]
    %v1034 = vld [vmem:[#allocation2 + $0x6c] sm:$0xff]
    %v1035 = vld [vmem:[#allocation2 + $0x74] sm:$0xff]
    %v1036 = vld [vmem:[#allocation2 + $0x7c] sm:$0xff]
    %v1037 = vld [vmem:[#allocation2 + $0x84] sm:$0xff]
    %v1038 = vld [vmem:[#allocation2 + $0x8c] sm:$0xff]
    %v1039 = vld [vmem:[#allocation2 + $0x94] sm:$0xff]
    %v1040 = vld [vmem:[#allocation2 + $0x9c] sm:$0xff]
    %v1041 = vld [vmem:[#allocation2 + $0xa4] sm:$0xff]
    %v1042 = vld [vmem:[#allocation2 + $0xac] sm:$0xff]
    %v1043 = vld [vmem:[#allocation2 + $0xb4] sm:$0xff]
    %v1044 = vld [vmem:[#allocation2 + $0xbc] sm:$0xff]
    %v1045 = vld [vmem:[#allocation2 + $0xc4] sm:$0xff]
    %v1046 = vld [vmem:[#allocation2 + $0xcc] sm:$0xff]
    %v1047 = vpack.c.bf16 %v1023, %v1022
    %v1048 = vpack.c.bf16 %v1025, %v1024
    %v1049 = vpack.c.bf16 %v1027, %v1026
    %v1050 = vpack.c.bf16 %v1029, %v1028
    %v1051 = vpack.c.bf16 %v1031, %v1030
    %v1052 = vpack.c.bf16 %v1033, %v1032
    %v1053 = vpack.c.bf16 %v1035, %v1034
    %v1054 = vpack.c.bf16 %v1037, %v1036
    %v1055 = vpack.c.bf16 %v1039, %v1038
    %v1056 = vpack.c.bf16 %v1041, %v1040
    %v1057 = vpack.c.bf16 %v1043, %v1042
    %v1058 = vpack.c.bf16 %v1045, %v1044
    %v1059 = vpack.c.bf16 %v1046, %v1046
    %v1073 = vunpack.c.l.b16 %v1047
    %v1074 = vunpack.c.h.b16 %v1047
    %v1075 = vunpack.c.l.b16 %v1048
    %v1076 = vunpack.c.h.b16 %v1048
    %v1077 = vunpack.c.l.b16 %v1049
    %v1078 = vunpack.c.h.b16 %v1049
    %v1079 = vunpack.c.l.b16 %v1050
    %v1080 = vunpack.c.h.b16 %v1050
    %v1081 = vunpack.c.l.b16 %v1051
    %v1082 = vunpack.c.h.b16 %v1051
    %v1083 = vunpack.c.l.b16 %v1052
    %v1084 = vunpack.c.h.b16 %v1052
    %v1085 = vunpack.c.l.b16 %v1053
    %v1086 = vunpack.c.h.b16 %v1053
    %v1087 = vunpack.c.l.b16 %v1054
    %v1088 = vunpack.c.h.b16 %v1054
    %v1089 = vunpack.c.l.b16 %v1055
    %v1090 = vunpack.c.h.b16 %v1055
    %v1091 = vunpack.c.l.b16 %v1056
    %v1092 = vunpack.c.h.b16 %v1056
    %v1093 = vunpack.c.l.b16 %v1057
    %v1094 = vunpack.c.h.b16 %v1057
    %v1095 = vunpack.c.l.b16 %v1058
    %v1096 = vunpack.c.h.b16 %v1058
    %v1097 = vunpack.c.l.b16 %v1059
    %v1098 = vpack.c.b16 %v1073, %v1073
    %v1099 = vpack.c.b16 %v1074, %v1074
    %v1100 = vpack.c.b16 %v1075, %v1075
    %v1101 = vpack.c.b16 %v1076, %v1076
    %v1102 = vpack.c.b16 %v1077, %v1077
    %v1103 = vpack.c.b16 %v1078, %v1078
    %v1104 = vpack.c.b16 %v1079, %v1079
    %v1105 = vpack.c.b16 %v1080, %v1080
    %v1106 = vpack.c.b16 %v1081, %v1081
    %v1107 = vpack.c.b16 %v1082, %v1082
    %v1108 = vpack.c.b16 %v1083, %v1083
    %v1109 = vpack.c.b16 %v1084, %v1084
    %v1110 = vpack.c.b16 %v1085, %v1085
    %v1111 = vpack.c.b16 %v1086, %v1086
    %v1112 = vpack.c.b16 %v1087, %v1087
    %v1113 = vpack.c.b16 %v1088, %v1088
    %v1114 = vpack.c.b16 %v1089, %v1089
    %v1115 = vpack.c.b16 %v1090, %v1090
    %v1116 = vpack.c.b16 %v1091, %v1091
    %v1117 = vpack.c.b16 %v1092, %v1092
    %v1118 = vpack.c.b16 %v1093, %v1093
    %v1119 = vpack.c.b16 %v1094, %v1094
    %v1120 = vpack.c.b16 %v1095, %v1095
    %v1121 = vpack.c.b16 %v1096, %v1096
    %v1122 = vpack.c.b16 %v1097, %v1097
    %1148 = vst [vmem:[#allocation4 + $0x14] sm:$0xf] %v1098
    %1149 = vst [vmem:[#allocation4 + $0x38] sm:$0xf] %v1099
    %1150 = vst [vmem:[#allocation4 + $0x5c] sm:$0xf] %v1100
    %1151 = vst [vmem:[#allocation4 + $0x80] sm:$0xf] %v1101
    %1152 = vst [vmem:[#allocation4 + $0xa4] sm:$0xf] %v1102
    %1153 = vst [vmem:[#allocation4 + $0xc8] sm:$0xf] %v1103
    %1154 = vst [vmem:[#allocation4 + $0xec] sm:$0xf] %v1104
    %1155 = vst [vmem:[#allocation4 + $0x110] sm:$0xf] %v1105
    %1156 = vst [vmem:[#allocation4 + $0x134] sm:$0xf] %v1106
    %1157 = vst [vmem:[#allocation4 + $0x158] sm:$0xf] %v1107
    %1158 = vst [vmem:[#allocation4 + $0x17c] sm:$0xf] %v1108
    %1159 = vst [vmem:[#allocation4 + $0x1a0] sm:$0xf] %v1109
    %1160 = vst [vmem:[#allocation4 + $0x1c4] sm:$0xf] %v1110
    %1161 = vst [vmem:[#allocation4 + $0x1e8] sm:$0xf] %v1111
    %1162 = vst [vmem:[#allocation4 + $0x20c] sm:$0xf] %v1112
    %1163 = vst [vmem:[#allocation4 + $0x230] sm:$0xf] %v1113
    %1164 = vst [vmem:[#allocation4 + $0x254] sm:$0xf] %v1114
    %1165 = vst [vmem:[#allocation4 + $0x278] sm:$0xf] %v1115
    %1166 = vst [vmem:[#allocation4 + $0x29c] sm:$0xf] %v1116
    %1167 = vst [vmem:[#allocation4 + $0x2c0] sm:$0xf] %v1117
    %1168 = vst [vmem:[#allocation4 + $0x2e4] sm:$0xf] %v1118
    %1169 = vst [vmem:[#allocation4 + $0x308] sm:$0xf] %v1119
    %1170 = vst [vmem:[#allocation4 + $0x32c] sm:$0xf] %v1120
    %1171 = vst [vmem:[#allocation4 + $0x350] sm:$0xf] %v1121
    %1172 = vst [vmem:[#allocation4 + $0x374] sm:$0xf] %v1122
    %v1173 = vld [vmem:[#allocation2 + $0x14] sm:$0xff]
    %v1174 = vld [vmem:[#allocation2 + $0x1c] sm:$0xff]
    %v1175 = vld [vmem:[#allocation2 + $0x24] sm:$0xff]
    %v1176 = vld [vmem:[#allocation2 + $0x2c] sm:$0xff]
    %v1177 = vld [vmem:[#allocation2 + $0x34] sm:$0xff]
    %v1178 = vld [vmem:[#allocation2 + $0x3c] sm:$0xff]
    %v1179 = vld [vmem:[#allocation2 + $0x44] sm:$0xff]
    %v1180 = vld [vmem:[#allocation2 + $0x4c] sm:$0xff]
    %v1181 = vld [vmem:[#allocation2 + $0x54] sm:$0xff]
    %v1182 = vld [vmem:[#allocation2 + $0x5c] sm:$0xff]
    %v1183 = vld [vmem:[#allocation2 + $0x64] sm:$0xff]
    %v1184 = vld [vmem:[#allocation2 + $0x6c] sm:$0xff]
    %v1185 = vld [vmem:[#allocation2 + $0x74] sm:$0xff]
    %v1186 = vld [vmem:[#allocation2 + $0x7c] sm:$0xff]
    %v1187 = vld [vmem:[#allocation2 + $0x84] sm:$0xff]
    %v1188 = vld [vmem:[#allocation2 + $0x8c] sm:$0xff]
    %v1189 = vld [vmem:[#allocation2 + $0x94] sm:$0xff]
    %v1190 = vld [vmem:[#allocation2 + $0x9c] sm:$0xff]
    %v1191 = vld [vmem:[#allocation2 + $0xa4] sm:$0xff]
    %v1192 = vld [vmem:[#allocation2 + $0xac] sm:$0xff]
    %v1193 = vld [vmem:[#allocation2 + $0xb4] sm:$0xff]
    %v1194 = vld [vmem:[#allocation2 + $0xbc] sm:$0xff]
    %v1195 = vld [vmem:[#allocation2 + $0xc4] sm:$0xff]
    %v1196 = vld [vmem:[#allocation2 + $0xcc] sm:$0xff]
    %v1197 = vld [vmem:[#allocation2 + $0xd4] sm:$0xff]
    %v1198 = vpack.c.bf16 %v1174, %v1173
    %v1199 = vpack.c.bf16 %v1176, %v1175
    %v1200 = vpack.c.bf16 %v1178, %v1177
    %v1201 = vpack.c.bf16 %v1180, %v1179
    %v1202 = vpack.c.bf16 %v1182, %v1181
    %v1203 = vpack.c.bf16 %v1184, %v1183
    %v1204 = vpack.c.bf16 %v1186, %v1185
    %v1205 = vpack.c.bf16 %v1188, %v1187
    %v1206 = vpack.c.bf16 %v1190, %v1189
    %v1207 = vpack.c.bf16 %v1192, %v1191
    %v1208 = vpack.c.bf16 %v1194, %v1193
    %v1209 = vpack.c.bf16 %v1196, %v1195
    %v1210 = vpack.c.bf16 %v1197, %v1197
    %v1224 = vunpack.c.l.b16 %v1198
    %v1225 = vunpack.c.h.b16 %v1198
    %v1226 = vunpack.c.l.b16 %v1199
    %v1227 = vunpack.c.h.b16 %v1199
    %v1228 = vunpack.c.l.b16 %v1200
    %v1229 = vunpack.c.h.b16 %v1200
    %v1230 = vunpack.c.l.b16 %v1201
    %v1231 = vunpack.c.h.b16 %v1201
    %v1232 = vunpack.c.l.b16 %v1202
    %v1233 = vunpack.c.h.b16 %v1202
    %v1234 = vunpack.c.l.b16 %v1203
    %v1235 = vunpack.c.h.b16 %v1203
    %v1236 = vunpack.c.l.b16 %v1204
    %v1237 = vunpack.c.h.b16 %v1204
    %v1238 = vunpack.c.l.b16 %v1205
    %v1239 = vunpack.c.h.b16 %v1205
    %v1240 = vunpack.c.l.b16 %v1206
    %v1241 = vunpack.c.h.b16 %v1206
    %v1242 = vunpack.c.l.b16 %v1207
    %v1243 = vunpack.c.h.b16 %v1207
    %v1244 = vunpack.c.l.b16 %v1208
    %v1245 = vunpack.c.h.b16 %v1208
    %v1246 = vunpack.c.l.b16 %v1209
    %v1247 = vunpack.c.h.b16 %v1209
    %v1248 = vunpack.c.l.b16 %v1210
    %v1249 = vpack.c.b16 %v1224, %v1224
    %v1250 = vpack.c.b16 %v1225, %v1225
    %v1251 = vpack.c.b16 %v1226, %v1226
    %v1252 = vpack.c.b16 %v1227, %v1227
    %v1253 = vpack.c.b16 %v1228, %v1228
    %v1254 = vpack.c.b16 %v1229, %v1229
    %v1255 = vpack.c.b16 %v1230, %v1230
    %v1256 = vpack.c.b16 %v1231, %v1231
    %v1257 = vpack.c.b16 %v1232, %v1232
    %v1258 = vpack.c.b16 %v1233, %v1233
    %v1259 = vpack.c.b16 %v1234, %v1234
    %v1260 = vpack.c.b16 %v1235, %v1235
    %v1261 = vpack.c.b16 %v1236, %v1236
    %v1262 = vpack.c.b16 %v1237, %v1237
    %v1263 = vpack.c.b16 %v1238, %v1238
    %v1264 = vpack.c.b16 %v1239, %v1239
    %v1265 = vpack.c.b16 %v1240, %v1240
    %v1266 = vpack.c.b16 %v1241, %v1241
    %v1267 = vpack.c.b16 %v1242, %v1242
    %v1268 = vpack.c.b16 %v1243, %v1243
    %v1269 = vpack.c.b16 %v1244, %v1244
    %v1270 = vpack.c.b16 %v1245, %v1245
    %v1271 = vpack.c.b16 %v1246, %v1246
    %v1272 = vpack.c.b16 %v1247, %v1247
    %v1273 = vpack.c.b16 %v1248, %v1248
    %1299 = vst [vmem:[#allocation4 + $0x18] sm:$0xf] %v1249
    %1300 = vst [vmem:[#allocation4 + $0x3c] sm:$0xf] %v1250
    %1301 = vst [vmem:[#allocation4 + $0x60] sm:$0xf] %v1251
    %1302 = vst [vmem:[#allocation4 + $0x84] sm:$0xf] %v1252
    %1303 = vst [vmem:[#allocation4 + $0xa8] sm:$0xf] %v1253
    %1304 = vst [vmem:[#allocation4 + $0xcc] sm:$0xf] %v1254
    %1305 = vst [vmem:[#allocation4 + $0xf0] sm:$0xf] %v1255
    %1306 = vst [vmem:[#allocation4 + $0x114] sm:$0xf] %v1256
    %1307 = vst [vmem:[#allocation4 + $0x138] sm:$0xf] %v1257
    %1308 = vst [vmem:[#allocation4 + $0x15c] sm:$0xf] %v1258
    %1309 = vst [vmem:[#allocation4 + $0x180] sm:$0xf] %v1259
    %1310 = vst [vmem:[#allocation4 + $0x1a4] sm:$0xf] %v1260
    %1311 = vst [vmem:[#allocation4 + $0x1c8] sm:$0xf] %v1261
    %1312 = vst [vmem:[#allocation4 + $0x1ec] sm:$0xf] %v1262
    %1313 = vst [vmem:[#allocation4 + $0x210] sm:$0xf] %v1263
    %1314 = vst [vmem:[#allocation4 + $0x234] sm:$0xf] %v1264
    %1315 = vst [vmem:[#allocation4 + $0x258] sm:$0xf] %v1265
    %1316 = vst [vmem:[#allocation4 + $0x27c] sm:$0xf] %v1266
    %1317 = vst [vmem:[#allocation4 + $0x2a0] sm:$0xf] %v1267
    %1318 = vst [vmem:[#allocation4 + $0x2c4] sm:$0xf] %v1268
    %1319 = vst [vmem:[#allocation4 + $0x2e8] sm:$0xf] %v1269
    %1320 = vst [vmem:[#allocation4 + $0x30c] sm:$0xf] %v1270
    %1321 = vst [vmem:[#allocation4 + $0x330] sm:$0xf] %v1271
    %1322 = vst [vmem:[#allocation4 + $0x354] sm:$0xf] %v1272
    %1323 = vst [vmem:[#allocation4 + $0x378] sm:$0xf] %v1273
    %v1324 = vld [vmem:[#allocation2 + $0x15] sm:$0xff]
    %v1325 = vld [vmem:[#allocation2 + $0x1d] sm:$0xff]
    %v1326 = vld [vmem:[#allocation2 + $0x25] sm:$0xff]
    %v1327 = vld [vmem:[#allocation2 + $0x2d] sm:$0xff]
    %v1328 = vld [vmem:[#allocation2 + $0x35] sm:$0xff]
    %v1329 = vld [vmem:[#allocation2 + $0x3d] sm:$0xff]
    %v1330 = vld [vmem:[#allocation2 + $0x45] sm:$0xff]
    %v1331 = vld [vmem:[#allocation2 + $0x4d] sm:$0xff]
    %v1332 = vld [vmem:[#allocation2 + $0x55] sm:$0xff]
    %v1333 = vld [vmem:[#allocation2 + $0x5d] sm:$0xff]
    %v1334 = vld [vmem:[#allocation2 + $0x65] sm:$0xff]
    %v1335 = vld [vmem:[#allocation2 + $0x6d] sm:$0xff]
    %v1336 = vld [vmem:[#allocation2 + $0x75] sm:$0xff]
    %v1337 = vld [vmem:[#allocation2 + $0x7d] sm:$0xff]
    %v1338 = vld [vmem:[#allocation2 + $0x85] sm:$0xff]
    %v1339 = vld [vmem:[#allocation2 + $0x8d] sm:$0xff]
    %v1340 = vld [vmem:[#allocation2 + $0x95] sm:$0xff]
    %v1341 = vld [vmem:[#allocation2 + $0x9d] sm:$0xff]
    %v1342 = vld [vmem:[#allocation2 + $0xa5] sm:$0xff]
    %v1343 = vld [vmem:[#allocation2 + $0xad] sm:$0xff]
    %v1344 = vld [vmem:[#allocation2 + $0xb5] sm:$0xff]
    %v1345 = vld [vmem:[#allocation2 + $0xbd] sm:$0xff]
    %v1346 = vld [vmem:[#allocation2 + $0xc5] sm:$0xff]
    %v1347 = vld [vmem:[#allocation2 + $0xcd] sm:$0xff]
    %v1348 = vld [vmem:[#allocation2 + $0xd5] sm:$0xff]
    %v1349 = vpack.c.bf16 %v1325, %v1324
    %v1350 = vpack.c.bf16 %v1327, %v1326
    %v1351 = vpack.c.bf16 %v1329, %v1328
    %v1352 = vpack.c.bf16 %v1331, %v1330
    %v1353 = vpack.c.bf16 %v1333, %v1332
    %v1354 = vpack.c.bf16 %v1335, %v1334
    %v1355 = vpack.c.bf16 %v1337, %v1336
    %v1356 = vpack.c.bf16 %v1339, %v1338
    %v1357 = vpack.c.bf16 %v1341, %v1340
    %v1358 = vpack.c.bf16 %v1343, %v1342
    %v1359 = vpack.c.bf16 %v1345, %v1344
    %v1360 = vpack.c.bf16 %v1347, %v1346
    %v1361 = vpack.c.bf16 %v1348, %v1348
    %v1375 = vunpack.c.l.b16 %v1349
    %v1376 = vunpack.c.h.b16 %v1349
    %v1377 = vunpack.c.l.b16 %v1350
    %v1378 = vunpack.c.h.b16 %v1350
    %v1379 = vunpack.c.l.b16 %v1351
    %v1380 = vunpack.c.h.b16 %v1351
    %v1381 = vunpack.c.l.b16 %v1352
    %v1382 = vunpack.c.h.b16 %v1352
    %v1383 = vunpack.c.l.b16 %v1353
    %v1384 = vunpack.c.h.b16 %v1353
    %v1385 = vunpack.c.l.b16 %v1354
    %v1386 = vunpack.c.h.b16 %v1354
    %v1387 = vunpack.c.l.b16 %v1355
    %v1388 = vunpack.c.h.b16 %v1355
    %v1389 = vunpack.c.l.b16 %v1356
    %v1390 = vunpack.c.h.b16 %v1356
    %v1391 = vunpack.c.l.b16 %v1357
    %v1392 = vunpack.c.h.b16 %v1357
    %v1393 = vunpack.c.l.b16 %v1358
    %v1394 = vunpack.c.h.b16 %v1358
    %v1395 = vunpack.c.l.b16 %v1359
    %v1396 = vunpack.c.h.b16 %v1359
    %v1397 = vunpack.c.l.b16 %v1360
    %v1398 = vunpack.c.h.b16 %v1360
    %v1399 = vunpack.c.l.b16 %v1361
    %v1400 = vpack.c.b16 %v1375, %v1375
    %v1401 = vpack.c.b16 %v1376, %v1376
    %v1402 = vpack.c.b16 %v1377, %v1377
    %v1403 = vpack.c.b16 %v1378, %v1378
    %v1404 = vpack.c.b16 %v1379, %v1379
    %v1405 = vpack.c.b16 %v1380, %v1380
    %v1406 = vpack.c.b16 %v1381, %v1381
    %v1407 = vpack.c.b16 %v1382, %v1382
    %v1408 = vpack.c.b16 %v1383, %v1383
    %v1409 = vpack.c.b16 %v1384, %v1384
    %v1410 = vpack.c.b16 %v1385, %v1385
    %v1411 = vpack.c.b16 %v1386, %v1386
    %v1412 = vpack.c.b16 %v1387, %v1387
    %v1413 = vpack.c.b16 %v1388, %v1388
    %v1414 = vpack.c.b16 %v1389, %v1389
    %v1415 = vpack.c.b16 %v1390, %v1390
    %v1416 = vpack.c.b16 %v1391, %v1391
    %v1417 = vpack.c.b16 %v1392, %v1392
    %v1418 = vpack.c.b16 %v1393, %v1393
    %v1419 = vpack.c.b16 %v1394, %v1394
    %v1420 = vpack.c.b16 %v1395, %v1395
    %v1421 = vpack.c.b16 %v1396, %v1396
    %v1422 = vpack.c.b16 %v1397, %v1397
    %v1423 = vpack.c.b16 %v1398, %v1398
    %v1424 = vpack.c.b16 %v1399, %v1399
    %1450 = vst [vmem:[#allocation4 + $0x1c] sm:$0xf] %v1400
    %1451 = vst [vmem:[#allocation4 + $0x40] sm:$0xf] %v1401
    %1452 = vst [vmem:[#allocation4 + $0x64] sm:$0xf] %v1402
    %1453 = vst [vmem:[#allocation4 + $0x88] sm:$0xf] %v1403
    %1454 = vst [vmem:[#allocation4 + $0xac] sm:$0xf] %v1404
    %1455 = vst [vmem:[#allocation4 + $0xd0] sm:$0xf] %v1405
    %1456 = vst [vmem:[#allocation4 + $0xf4] sm:$0xf] %v1406
    %1457 = vst [vmem:[#allocation4 + $0x118] sm:$0xf] %v1407
    %1458 = vst [vmem:[#allocation4 + $0x13c] sm:$0xf] %v1408
    %1459 = vst [vmem:[#allocation4 + $0x160] sm:$0xf] %v1409
    %1460 = vst [vmem:[#allocation4 + $0x184] sm:$0xf] %v1410
    %1461 = vst [vmem:[#allocation4 + $0x1a8] sm:$0xf] %v1411
    %1462 = vst [vmem:[#allocation4 + $0x1cc] sm:$0xf] %v1412
    %1463 = vst [vmem:[#allocation4 + $0x1f0] sm:$0xf] %v1413
    %1464 = vst [vmem:[#allocation4 + $0x214] sm:$0xf] %v1414
    %1465 = vst [vmem:[#allocation4 + $0x238] sm:$0xf] %v1415
    %1466 = vst [vmem:[#allocation4 + $0x25c] sm:$0xf] %v1416
    %1467 = vst [vmem:[#allocation4 + $0x280] sm:$0xf] %v1417
    %1468 = vst [vmem:[#allocation4 + $0x2a4] sm:$0xf] %v1418
    %1469 = vst [vmem:[#allocation4 + $0x2c8] sm:$0xf] %v1419
    %1470 = vst [vmem:[#allocation4 + $0x2ec] sm:$0xf] %v1420
    %1471 = vst [vmem:[#allocation4 + $0x310] sm:$0xf] %v1421
    %1472 = vst [vmem:[#allocation4 + $0x334] sm:$0xf] %v1422
    %1473 = vst [vmem:[#allocation4 + $0x358] sm:$0xf] %v1423
    %1474 = vst [vmem:[#allocation4 + $0x37c] sm:$0xf] %v1424
    %v1475 = vld [vmem:[#allocation2 + $0x16] sm:$0xff]
    %v1476 = vld [vmem:[#allocation2 + $0x1e] sm:$0xff]
    %v1477 = vld [vmem:[#allocation2 + $0x26] sm:$0xff]
    %v1478 = vld [vmem:[#allocation2 + $0x2e] sm:$0xff]
    %v1479 = vld [vmem:[#allocation2 + $0x36] sm:$0xff]
    %v1480 = vld [vmem:[#allocation2 + $0x3e] sm:$0xff]
    %v1481 = vld [vmem:[#allocation2 + $0x46] sm:$0xff]
    %v1482 = vld [vmem:[#allocation2 + $0x4e] sm:$0xff]
    %v1483 = vld [vmem:[#allocation2 + $0x56] sm:$0xff]
    %v1484 = vld [vmem:[#allocation2 + $0x5e] sm:$0xff]
    %v1485 = vld [vmem:[#allocation2 + $0x66] sm:$0xff]
    %v1486 = vld [vmem:[#allocation2 + $0x6e] sm:$0xff]
    %v1487 = vld [vmem:[#allocation2 + $0x76] sm:$0xff]
    %v1488 = vld [vmem:[#allocation2 + $0x7e] sm:$0xff]
    %v1489 = vld [vmem:[#allocation2 + $0x86] sm:$0xff]
    %v1490 = vld [vmem:[#allocation2 + $0x8e] sm:$0xff]
    %v1491 = vld [vmem:[#allocation2 + $0x96] sm:$0xff]
    %v1492 = vld [vmem:[#allocation2 + $0x9e] sm:$0xff]
    %v1493 = vld [vmem:[#allocation2 + $0xa6] sm:$0xff]
    %v1494 = vld [vmem:[#allocation2 + $0xae] sm:$0xff]
    %v1495 = vld [vmem:[#allocation2 + $0xb6] sm:$0xff]
    %v1496 = vld [vmem:[#allocation2 + $0xbe] sm:$0xff]
    %v1497 = vld [vmem:[#allocation2 + $0xc6] sm:$0xff]
    %v1498 = vld [vmem:[#allocation2 + $0xce] sm:$0xff]
    %v1499 = vld [vmem:[#allocation2 + $0xd6] sm:$0xff]
    %v1500 = vpack.c.bf16 %v1476, %v1475
    %v1501 = vpack.c.bf16 %v1478, %v1477
    %v1502 = vpack.c.bf16 %v1480, %v1479
    %v1503 = vpack.c.bf16 %v1482, %v1481
    %v1504 = vpack.c.bf16 %v1484, %v1483
    %v1505 = vpack.c.bf16 %v1486, %v1485
    %v1506 = vpack.c.bf16 %v1488, %v1487
    %v1507 = vpack.c.bf16 %v1490, %v1489
    %v1508 = vpack.c.bf16 %v1492, %v1491
    %v1509 = vpack.c.bf16 %v1494, %v1493
    %v1510 = vpack.c.bf16 %v1496, %v1495
    %v1511 = vpack.c.bf16 %v1498, %v1497
    %v1512 = vpack.c.bf16 %v1499, %v1499
    %v1526 = vunpack.c.l.b16 %v1500
    %v1527 = vunpack.c.h.b16 %v1500
    %v1528 = vunpack.c.l.b16 %v1501
    %v1529 = vunpack.c.h.b16 %v1501
    %v1530 = vunpack.c.l.b16 %v1502
    %v1531 = vunpack.c.h.b16 %v1502
    %v1532 = vunpack.c.l.b16 %v1503
    %v1533 = vunpack.c.h.b16 %v1503
    %v1534 = vunpack.c.l.b16 %v1504
    %v1535 = vunpack.c.h.b16 %v1504
    %v1536 = vunpack.c.l.b16 %v1505
    %v1537 = vunpack.c.h.b16 %v1505
    %v1538 = vunpack.c.l.b16 %v1506
    %v1539 = vunpack.c.h.b16 %v1506
    %v1540 = vunpack.c.l.b16 %v1507
    %v1541 = vunpack.c.h.b16 %v1507
    %v1542 = vunpack.c.l.b16 %v1508
    %v1543 = vunpack.c.h.b16 %v1508
    %v1544 = vunpack.c.l.b16 %v1509
    %v1545 = vunpack.c.h.b16 %v1509
    %v1546 = vunpack.c.l.b16 %v1510
    %v1547 = vunpack.c.h.b16 %v1510
    %v1548 = vunpack.c.l.b16 %v1511
    %v1549 = vunpack.c.h.b16 %v1511
    %v1550 = vunpack.c.l.b16 %v1512
    %v1551 = vpack.c.b16 %v1526, %v1526
    %v1552 = vpack.c.b16 %v1527, %v1527
    %v1553 = vpack.c.b16 %v1528, %v1528
    %v1554 = vpack.c.b16 %v1529, %v1529
    %v1555 = vpack.c.b16 %v1530, %v1530
    %v1556 = vpack.c.b16 %v1531, %v1531
    %v1557 = vpack.c.b16 %v1532, %v1532
    %v1558 = vpack.c.b16 %v1533, %v1533
    %v1559 = vpack.c.b16 %v1534, %v1534
    %v1560 = vpack.c.b16 %v1535, %v1535
    %v1561 = vpack.c.b16 %v1536, %v1536
    %v1562 = vpack.c.b16 %v1537, %v1537
    %v1563 = vpack.c.b16 %v1538, %v1538
    %v1564 = vpack.c.b16 %v1539, %v1539
    %v1565 = vpack.c.b16 %v1540, %v1540
    %v1566 = vpack.c.b16 %v1541, %v1541
    %v1567 = vpack.c.b16 %v1542, %v1542
    %v1568 = vpack.c.b16 %v1543, %v1543
    %v1569 = vpack.c.b16 %v1544, %v1544
    %v1570 = vpack.c.b16 %v1545, %v1545
    %v1571 = vpack.c.b16 %v1546, %v1546
    %v1572 = vpack.c.b16 %v1547, %v1547
    %v1573 = vpack.c.b16 %v1548, %v1548
    %v1574 = vpack.c.b16 %v1549, %v1549
    %v1575 = vpack.c.b16 %v1550, %v1550
    %1601 = vst [vmem:[#allocation4 + $0x20] sm:$0xf] %v1551
    %1602 = vst [vmem:[#allocation4 + $0x44] sm:$0xf] %v1552
    %1603 = vst [vmem:[#allocation4 + $0x68] sm:$0xf] %v1553
    %1604 = vst [vmem:[#allocation4 + $0x8c] sm:$0xf] %v1554
    %1605 = vst [vmem:[#allocation4 + $0xb0] sm:$0xf] %v1555
    %1606 = vst [vmem:[#allocation4 + $0xd4] sm:$0xf] %v1556
    %1607 = vst [vmem:[#allocation4 + $0xf8] sm:$0xf] %v1557
    %1608 = vst [vmem:[#allocation4 + $0x11c] sm:$0xf] %v1558
    %1609 = vst [vmem:[#allocation4 + $0x140] sm:$0xf] %v1559
    %1610 = vst [vmem:[#allocation4 + $0x164] sm:$0xf] %v1560
    %1611 = vst [vmem:[#allocation4 + $0x188] sm:$0xf] %v1561
    %1612 = vst [vmem:[#allocation4 + $0x1ac] sm:$0xf] %v1562
    %1613 = vst [vmem:[#allocation4 + $0x1d0] sm:$0xf] %v1563
    %1614 = vst [vmem:[#allocation4 + $0x1f4] sm:$0xf] %v1564
    %1615 = vst [vmem:[#allocation4 + $0x218] sm:$0xf] %v1565
    %1616 = vst [vmem:[#allocation4 + $0x23c] sm:$0xf] %v1566
    %1617 = vst [vmem:[#allocation4 + $0x260] sm:$0xf] %v1567
    %1618 = vst [vmem:[#allocation4 + $0x284] sm:$0xf] %v1568
    %1619 = vst [vmem:[#allocation4 + $0x2a8] sm:$0xf] %v1569
    %1620 = vst [vmem:[#allocation4 + $0x2cc] sm:$0xf] %v1570
    %1621 = vst [vmem:[#allocation4 + $0x2f0] sm:$0xf] %v1571
    %1622 = vst [vmem:[#allocation4 + $0x314] sm:$0xf] %v1572
    %1623 = vst [vmem:[#allocation4 + $0x338] sm:$0xf] %v1573
    %1624 = vst [vmem:[#allocation4 + $0x35c] sm:$0xf] %v1574
    %1625 = vst [vmem:[#allocation4 + $0x380] sm:$0xf] %v1575
    %v1626 = vld [vmem:[#allocation4] sm:$0xff]
    %v1627 = vld [vmem:[#allocation4 + $0x8] sm:$0xff]
    %v1628 = vld [vmem:[#allocation4 + $0x10] sm:$0xff]
    %v1629 = vld [vmem:[#allocation4 + $0x18] sm:$0xff]
    %v1630 = vld [vmem:[#allocation4 + $0x20] sm:$0xf]
    %v1631 = vld [vmem:[#allocation4 + $0x24] sm:$0xff]
    %v1632 = vld [vmem:[#allocation4 + $0x2c] sm:$0xff]
    %v1633 = vld [vmem:[#allocation4 + $0x34] sm:$0xff]
    %v1634 = vld [vmem:[#allocation4 + $0x3c] sm:$0xff]
    %v1635 = vld [vmem:[#allocation4 + $0x44] sm:$0xf]
    %v1636 = vld [vmem:[#allocation4 + $0x48] sm:$0xff]
    %v1637 = vld [vmem:[#allocation4 + $0x50] sm:$0xff]
    %v1638 = vld [vmem:[#allocation4 + $0x58] sm:$0xff]
    %v1639 = vld [vmem:[#allocation4 + $0x60] sm:$0xff]
    %v1640 = vld [vmem:[#allocation4 + $0x68] sm:$0xf]
    %v1641 = vld [vmem:[#allocation4 + $0x6c] sm:$0xff]
    %v1642 = vld [vmem:[#allocation4 + $0x74] sm:$0xff]
    %v1643 = vld [vmem:[#allocation4 + $0x7c] sm:$0xff]
    %v1644 = vld [vmem:[#allocation4 + $0x84] sm:$0xff]
    %v1645 = vld [vmem:[#allocation4 + $0x8c] sm:$0xf]
    %v1646 = vld [vmem:[#allocation4 + $0x90] sm:$0xff]
    %v1647 = vld [vmem:[#allocation4 + $0x98] sm:$0xff]
    %v1648 = vld [vmem:[#allocation4 + $0xa0] sm:$0xff]
    %v1649 = vld [vmem:[#allocation4 + $0xa8] sm:$0xff]
    %v1650 = vld [vmem:[#allocation4 + $0xb0] sm:$0xf]
    %v1651 = vld [vmem:[#allocation4 + $0xb4] sm:$0xff]
    %v1652 = vld [vmem:[#allocation4 + $0xbc] sm:$0xff]
    %v1653 = vld [vmem:[#allocation4 + $0xc4] sm:$0xff]
    %v1654 = vld [vmem:[#allocation4 + $0xcc] sm:$0xff]
    %v1655 = vld [vmem:[#allocation4 + $0xd4] sm:$0xf]
    %v1656 = vld [vmem:[#allocation4 + $0xd8] sm:$0xff]
    %v1657 = vld [vmem:[#allocation4 + $0xe0] sm:$0xff]
    %v1658 = vld [vmem:[#allocation4 + $0xe8] sm:$0xff]
    %v1659 = vld [vmem:[#allocation4 + $0xf0] sm:$0xff]
    %v1660 = vld [vmem:[#allocation4 + $0xf8] sm:$0xf]
    %v1661 = vld [vmem:[#allocation4 + $0xfc] sm:$0xff]
    %v1662 = vld [vmem:[#allocation4 + $0x104] sm:$0xff]
    %v1663 = vld [vmem:[#allocation4 + $0x10c] sm:$0xff]
    %v1664 = vld [vmem:[#allocation4 + $0x114] sm:$0xff]
    %v1665 = vld [vmem:[#allocation4 + $0x11c] sm:$0xf]
    %v1666 = vld [vmem:[#allocation4 + $0x120] sm:$0xff]
    %v1667 = vld [vmem:[#allocation4 + $0x128] sm:$0xff]
    %v1668 = vld [vmem:[#allocation4 + $0x130] sm:$0xff]
    %v1669 = vld [vmem:[#allocation4 + $0x138] sm:$0xff]
    %v1670 = vld [vmem:[#allocation4 + $0x140] sm:$0xf]
    %v1671 = vld [vmem:[#allocation4 + $0x144] sm:$0xff]
    %v1672 = vld [vmem:[#allocation4 + $0x14c] sm:$0xff]
    %v1673 = vld [vmem:[#allocation4 + $0x154] sm:$0xff]
    %v1674 = vld [vmem:[#allocation4 + $0x15c] sm:$0xff]
    %v1675 = vld [vmem:[#allocation4 + $0x164] sm:$0xf]
    %v1676 = vld [vmem:[#allocation4 + $0x168] sm:$0xff]
    %v1677 = vld [vmem:[#allocation4 + $0x170] sm:$0xff]
    %v1678 = vld [vmem:[#allocation4 + $0x178] sm:$0xff]
    %v1679 = vld [vmem:[#allocation4 + $0x180] sm:$0xff]
    %v1680 = vld [vmem:[#allocation4 + $0x188] sm:$0xf]
    %v1681 = vld [vmem:[#allocation4 + $0x18c] sm:$0xff]
    %v1682 = vld [vmem:[#allocation4 + $0x194] sm:$0xff]
    %v1683 = vld [vmem:[#allocation4 + $0x19c] sm:$0xff]
    %v1684 = vld [vmem:[#allocation4 + $0x1a4] sm:$0xff]
    %v1685 = vld [vmem:[#allocation4 + $0x1ac] sm:$0xf]
    %v1686 = vld [vmem:[#allocation4 + $0x1b0] sm:$0xff]
    %v1687 = vld [vmem:[#allocation4 + $0x1b8] sm:$0xff]
    %v1688 = vld [vmem:[#allocation4 + $0x1c0] sm:$0xff]
    %v1689 = vld [vmem:[#allocation4 + $0x1c8] sm:$0xff]
    %v1690 = vld [vmem:[#allocation4 + $0x1d0] sm:$0xf]
    %v1691 = vld [vmem:[#allocation4 + $0x1d4] sm:$0xff]
    %v1692 = vld [vmem:[#allocation4 + $0x1dc] sm:$0xff]
    %v1693 = vld [vmem:[#allocation4 + $0x1e4] sm:$0xff]
    %v1694 = vld [vmem:[#allocation4 + $0x1ec] sm:$0xff]
    %v1695 = vld [vmem:[#allocation4 + $0x1f4] sm:$0xf]
    %v1696 = vld [vmem:[#allocation4 + $0x1f8] sm:$0xff]
    %v1697 = vld [vmem:[#allocation4 + $0x200] sm:$0xff]
    %v1698 = vld [vmem:[#allocation4 + $0x208] sm:$0xff]
    %v1699 = vld [vmem:[#allocation4 + $0x210] sm:$0xff]
    %v1700 = vld [vmem:[#allocation4 + $0x218] sm:$0xf]
    %v1701 = vld [vmem:[#allocation4 + $0x21c] sm:$0xff]
    %v1702 = vld [vmem:[#allocation4 + $0x224] sm:$0xff]
    %v1703 = vld [vmem:[#allocation4 + $0x22c] sm:$0xff]
    %v1704 = vld [vmem:[#allocation4 + $0x234] sm:$0xff]
    %v1705 = vld [vmem:[#allocation4 + $0x23c] sm:$0xf]
    %v1706 = vld [vmem:[#allocation4 + $0x240] sm:$0xff]
    %v1707 = vld [vmem:[#allocation4 + $0x248] sm:$0xff]
    %v1708 = vld [vmem:[#allocation4 + $0x250] sm:$0xff]
    %v1709 = vld [vmem:[#allocation4 + $0x258] sm:$0xff]
    %v1710 = vld [vmem:[#allocation4 + $0x260] sm:$0xf]
    %v1711 = vld [vmem:[#allocation4 + $0x264] sm:$0xff]
    %v1712 = vld [vmem:[#allocation4 + $0x26c] sm:$0xff]
    %v1713 = vld [vmem:[#allocation4 + $0x274] sm:$0xff]
    %v1714 = vld [vmem:[#allocation4 + $0x27c] sm:$0xff]
    %v1715 = vld [vmem:[#allocation4 + $0x284] sm:$0xf]
    %v1716 = vld [vmem:[#allocation4 + $0x288] sm:$0xff]
    %v1717 = vld [vmem:[#allocation4 + $0x290] sm:$0xff]
    %v1718 = vld [vmem:[#allocation4 + $0x298] sm:$0xff]
    %v1719 = vld [vmem:[#allocation4 + $0x2a0] sm:$0xff]
    %v1720 = vld [vmem:[#allocation4 + $0x2a8] sm:$0xf]
    %v1721 = vld [vmem:[#allocation4 + $0x2ac] sm:$0xff]
    %v1722 = vld [vmem:[#allocation4 + $0x2b4] sm:$0xff]
    %v1723 = vld [vmem:[#allocation4 + $0x2bc] sm:$0xff]
    %v1724 = vld [vmem:[#allocation4 + $0x2c4] sm:$0xff]
    %v1725 = vld [vmem:[#allocation4 + $0x2cc] sm:$0xf]
    %v1726 = vld [vmem:[#allocation4 + $0x2d0] sm:$0xff]
    %v1727 = vld [vmem:[#allocation4 + $0x2d8] sm:$0xff]
    %v1728 = vld [vmem:[#allocation4 + $0x2e0] sm:$0xff]
    %v1729 = vld [vmem:[#allocation4 + $0x2e8] sm:$0xff]
    %v1730 = vld [vmem:[#allocation4 + $0x2f0] sm:$0xf]
    %v1731 = vld [vmem:[#allocation4 + $0x2f4] sm:$0xff]
    %v1732 = vld [vmem:[#allocation4 + $0x2fc] sm:$0xff]
    %v1733 = vld [vmem:[#allocation4 + $0x304] sm:$0xff]
    %v1734 = vld [vmem:[#allocation4 + $0x30c] sm:$0xff]
    %v1735 = vld [vmem:[#allocation4 + $0x314] sm:$0xf]
    %v1736 = vld [vmem:[#allocation4 + $0x318] sm:$0xff]
    %v1737 = vld [vmem:[#allocation4 + $0x320] sm:$0xff]
    %v1738 = vld [vmem:[#allocation4 + $0x328] sm:$0xff]
    %v1739 = vld [vmem:[#allocation4 + $0x330] sm:$0xff]
    %v1740 = vld [vmem:[#allocation4 + $0x338] sm:$0xf]
    %v1741 = vld [vmem:[#allocation4 + $0x33c] sm:$0xff]
    %v1742 = vld [vmem:[#allocation4 + $0x344] sm:$0xff]
    %v1743 = vld [vmem:[#allocation4 + $0x34c] sm:$0xff]
    %v1744 = vld [vmem:[#allocation4 + $0x354] sm:$0xff]
    %v1745 = vld [vmem:[#allocation4 + $0x35c] sm:$0xf]
    %v1746 = vld [vmem:[#allocation4 + $0x360] sm:$0xff]
    %v1747 = vld [vmem:[#allocation4 + $0x368] sm:$0xff]
    %v1748 = vld [vmem:[#allocation4 + $0x370] sm:$0xff]
    %v1749 = vld [vmem:[#allocation4 + $0x378] sm:$0xff]
    %v1750 = vld [vmem:[#allocation4 + $0x380] sm:$0xf]
    %v1751 = vld [vmem:[#allocation11] sm:$0xf]
    %v1752 = vld [vmem:[#allocation11 + $0x4] sm:$0xf]
    %v1753 = vld [vmem:[#allocation11 + $0x8] sm:$0xf]
    %v1754 = vld [vmem:[#allocation11 + $0xc] sm:$0xf]
    %v1755 = vld [vmem:[#allocation11 + $0x10] sm:$0xf]
    %v1756 = vld [vmem:[#allocation11 + $0x14] sm:$0xf]
    %v1757 = vld [vmem:[#allocation11 + $0x18] sm:$0xf]
    %v1758 = vld [vmem:[#allocation11 + $0x1c] sm:$0xf]
    %v1759 = vld [vmem:[#allocation11 + $0x20] sm:$0xf]
    %v1760 = vld [vmem:[#allocation11 + $0x24] sm:$0xf]
    %v1761 = vld [vmem:[#allocation11 + $0x28] sm:$0xf]
    %v1762 = vld [vmem:[#allocation11 + $0x2c] sm:$0xf]
    %v1763 = vld [vmem:[#allocation11 + $0x30] sm:$0xf]
    %v1764 = vld [vmem:[#allocation11 + $0x34] sm:$0xf]
    %v1765 = vld [vmem:[#allocation11 + $0x38] sm:$0xf]
    %v1766 = vld [vmem:[#allocation11 + $0x3c] sm:$0xf]
    %v1767 = vld [vmem:[#allocation11 + $0x40] sm:$0xf]
    %v1768 = vld [vmem:[#allocation11 + $0x44] sm:$0xf]
    %v1769 = vld [vmem:[#allocation11 + $0x48] sm:$0xf]
    %v1770 = vld [vmem:[#allocation11 + $0x4c] sm:$0xf]
    %v1771 = vld [vmem:[#allocation11 + $0x50] sm:$0xf]
    %v1772 = vld [vmem:[#allocation11 + $0x54] sm:$0xf]
    %v1773 = vld [vmem:[#allocation11 + $0x58] sm:$0xf]
    %v1774 = vld [vmem:[#allocation11 + $0x5c] sm:$0xf]
    %v1775 = vld [vmem:[#allocation11 + $0x60] sm:$0xf]
    %v1776 = vld [vmem:[#allocation11 + $0x64] sm:$0xf]
    %v1777 = vld [vmem:[#allocation11 + $0x68] sm:$0xf]
    %v1778 = vld [vmem:[#allocation11 + $0x6c] sm:$0xf]
    %v1779 = vld [vmem:[#allocation11 + $0x70] sm:$0xf]
    %v1780 = vld [vmem:[#allocation11 + $0x74] sm:$0xf]
    %v1781 = vld [vmem:[#allocation11 + $0x78] sm:$0xf]
    %v1782 = vld [vmem:[#allocation11 + $0x7c] sm:$0xf]
    %v1783 = vld [vmem:[#allocation11 + $0x80] sm:$0xf]
    %v1784 = vld [vmem:[#allocation11 + $0x84] sm:$0xf]
    %v1785 = vld [vmem:[#allocation11 + $0x88] sm:$0xf]
    %v1786 = vld [vmem:[#allocation11 + $0x8c] sm:$0xf]
    %v1787 = vld [vmem:[#allocation11 + $0x90] sm:$0xf]
    %v1788 = vld [vmem:[#allocation11 + $0x94] sm:$0xf]
    %v1789 = vld [vmem:[#allocation11 + $0x98] sm:$0xf]
    %v1790 = vld [vmem:[#allocation11 + $0x9c] sm:$0xf]
    %v1791 = vld [vmem:[#allocation11 + $0xa0] sm:$0xf]
    %v1792 = vld [vmem:[#allocation11 + $0xa4] sm:$0xf]
    %v1793 = vld [vmem:[#allocation11 + $0xa8] sm:$0xf]
    %v1794 = vld [vmem:[#allocation11 + $0xac] sm:$0xf]
    %v1795 = vld [vmem:[#allocation11 + $0xb0] sm:$0xf]
    %v1796 = vld [vmem:[#allocation11 + $0xb4] sm:$0xf]
    %v1797 = vld [vmem:[#allocation11 + $0xb8] sm:$0xf]
    %v1798 = vld [vmem:[#allocation11 + $0xbc] sm:$0xf]
    %v1799 = vld [vmem:[#allocation11 + $0xc0] sm:$0xf]
    %v1800 = vld [vmem:[#allocation11 + $0xc4] sm:$0xf]
    %v1801 = vld [vmem:[#allocation11 + $0xc8] sm:$0xf]
    %v1802 = vld [vmem:[#allocation11 + $0xcc] sm:$0xf]
    %v1803 = vld [vmem:[#allocation11 + $0xd0] sm:$0xf]
    %v1804 = vld [vmem:[#allocation11 + $0xd4] sm:$0xf]
    %v1805 = vld [vmem:[#allocation11 + $0xd8] sm:$0xf]
    %v1806 = vld [vmem:[#allocation11 + $0xdc] sm:$0xf]
    %v1807 = vld [vmem:[#allocation11 + $0xe0] sm:$0xf]
    %v1808 = vld [vmem:[#allocation11 + $0xe4] sm:$0xf]
    %v1809 = vld [vmem:[#allocation11 + $0xe8] sm:$0xf]
    %v1810 = vld [vmem:[#allocation11 + $0xec] sm:$0xf]
    %v1811 = vld [vmem:[#allocation11 + $0xf0] sm:$0xf]
    %v1812 = vld [vmem:[#allocation11 + $0xf4] sm:$0xf]
    %v1813 = vld [vmem:[#allocation11 + $0xf8] sm:$0xf]
    %v1814 = vld [vmem:[#allocation11 + $0xfc] sm:$0xf]
    %v1815 = vld [vmem:[#allocation11 + $0x100] sm:$0xf]
    %v1816 = vld [vmem:[#allocation11 + $0x104] sm:$0xf]
    %v1817 = vld [vmem:[#allocation11 + $0x108] sm:$0xf]
    %v1818 = vld [vmem:[#allocation11 + $0x10c] sm:$0xf]
    %v1819 = vld [vmem:[#allocation11 + $0x110] sm:$0xf]
    %v1820 = vld [vmem:[#allocation11 + $0x114] sm:$0xf]
    %v1821 = vld [vmem:[#allocation11 + $0x118] sm:$0xf]
    %v1822 = vld [vmem:[#allocation11 + $0x11c] sm:$0xf]
    %v1823 = vld [vmem:[#allocation11 + $0x120] sm:$0xf]
    %v1824 = vld [vmem:[#allocation11 + $0x124] sm:$0xf]
    %v1825 = vld [vmem:[#allocation11 + $0x128] sm:$0xf]
    %v1826 = vld [vmem:[#allocation11 + $0x12c] sm:$0xf]
    %v1827 = vld [vmem:[#allocation11 + $0x130] sm:$0xf]
    %v1828 = vld [vmem:[#allocation11 + $0x134] sm:$0xf]
    %v1829 = vld [vmem:[#allocation11 + $0x138] sm:$0xf]
    %v1830 = vld [vmem:[#allocation11 + $0x13c] sm:$0xf]
    %v1831 = vld [vmem:[#allocation11 + $0x140] sm:$0xf]
    %v1832 = vld [vmem:[#allocation11 + $0x144] sm:$0xf]
    %v1833 = vld [vmem:[#allocation11 + $0x148] sm:$0xf]
    %v1834 = vld [vmem:[#allocation11 + $0x14c] sm:$0xf]
    %v1835 = vld [vmem:[#allocation11 + $0x150] sm:$0xf]
    %v1836 = vld [vmem:[#allocation11 + $0x154] sm:$0xf]
    %v1837 = vld [vmem:[#allocation11 + $0x158] sm:$0xf]
    %v1838 = vld [vmem:[#allocation11 + $0x15c] sm:$0xf]
    %v1839 = vld [vmem:[#allocation11 + $0x160] sm:$0xf]
    %v1840 = vld [vmem:[#allocation11 + $0x164] sm:$0xf]
    %v1841 = vld [vmem:[#allocation11 + $0x168] sm:$0xf]
    %v1842 = vld [vmem:[#allocation11 + $0x16c] sm:$0xf]
    %v1843 = vld [vmem:[#allocation11 + $0x170] sm:$0xf]
    %v1844 = vld [vmem:[#allocation11 + $0x174] sm:$0xf]
    %v1845 = vld [vmem:[#allocation11 + $0x178] sm:$0xf]
    %v1846 = vld [vmem:[#allocation11 + $0x17c] sm:$0xf]
    %v1847 = vld [vmem:[#allocation11 + $0x180] sm:$0xf]
    %v1848 = vld [vmem:[#allocation11 + $0x184] sm:$0xf]
    %v1849 = vld [vmem:[#allocation11 + $0x188] sm:$0xf]
    %v1850 = vld [vmem:[#allocation11 + $0x18c] sm:$0xf]
    %v1851 = vld [vmem:[#allocation11 + $0x190] sm:$0xf]
    %v1852 = vld [vmem:[#allocation11 + $0x194] sm:$0xf]
    %v1853 = vld [vmem:[#allocation11 + $0x198] sm:$0xf]
    %v1854 = vld [vmem:[#allocation11 + $0x19c] sm:$0xf]
    %v1855 = vld [vmem:[#allocation11 + $0x1a0] sm:$0xf]
    %v1856 = vld [vmem:[#allocation11 + $0x1a4] sm:$0xf]
    %v1857 = vld [vmem:[#allocation11 + $0x1a8] sm:$0xf]
    %v1858 = vld [vmem:[#allocation11 + $0x1ac] sm:$0xf]
    %v1859 = vld [vmem:[#allocation11 + $0x1b0] sm:$0xf]
    %v1860 = vld [vmem:[#allocation11 + $0x1b4] sm:$0xf]
    %v1861 = vld [vmem:[#allocation11 + $0x1b8] sm:$0xf]
    %v1862 = vld [vmem:[#allocation11 + $0x1bc] sm:$0xf]
    %v1863 = vld [vmem:[#allocation11 + $0x1c0] sm:$0xf]
    %v1864 = vld [vmem:[#allocation11 + $0x1c4] sm:$0xf]
    %v1865 = vld [vmem:[#allocation11 + $0x1c8] sm:$0xf]
    %v1866 = vld [vmem:[#allocation11 + $0x1cc] sm:$0xf]
    %v1867 = vld [vmem:[#allocation11 + $0x1d0] sm:$0xf]
    %v1868 = vld [vmem:[#allocation11 + $0x1d4] sm:$0xf]
    %v1869 = vld [vmem:[#allocation11 + $0x1d8] sm:$0xf]
    %v1870 = vld [vmem:[#allocation11 + $0x1dc] sm:$0xf]
    %v1871 = vld [vmem:[#allocation11 + $0x1e0] sm:$0xf]
    %v1872 = vld [vmem:[#allocation11 + $0x1e4] sm:$0xf]
    %v1873 = vld [vmem:[#allocation11 + $0x1e8] sm:$0xf]
    %v1874 = vld [vmem:[#allocation11 + $0x1ec] sm:$0xf]
    %v1875 = vld [vmem:[#allocation11 + $0x1f0] sm:$0xf]
    %v1876 = vld [vmem:[#allocation11 + $0x1f4] sm:$0xf]
    %v1877 = vld [vmem:[#allocation11 + $0x1f8] sm:$0xf]
    %v1878 = vld [vmem:[#allocation11 + $0x1fc] sm:$0xf]
    %v1879 = vld [vmem:[#allocation11 + $0x200] sm:$0xf]
    %v1880 = vld [vmem:[#allocation11 + $0x204] sm:$0xf]
    %v1881 = vld [vmem:[#allocation11 + $0x208] sm:$0xf]
    %v1882 = vld [vmem:[#allocation11 + $0x20c] sm:$0xf]
    %v1883 = vld [vmem:[#allocation11 + $0x210] sm:$0xf]
    %v1884 = vld [vmem:[#allocation11 + $0x214] sm:$0xf]
    %v1885 = vld [vmem:[#allocation11 + $0x218] sm:$0xf]
    %v1886 = vld [vmem:[#allocation11 + $0x21c] sm:$0xf]
    %v1887 = vld [vmem:[#allocation11 + $0x220] sm:$0xf]
    %v1888 = vld [vmem:[#allocation11 + $0x224] sm:$0xf]
    %v1889 = vld [vmem:[#allocation11 + $0x228] sm:$0xf]
    %v1890 = vld [vmem:[#allocation11 + $0x22c] sm:$0xf]
    %v1891 = vld [vmem:[#allocation11 + $0x230] sm:$0xf]
    %v1892 = vld [vmem:[#allocation11 + $0x234] sm:$0xf]
    %v1893 = vld [vmem:[#allocation11 + $0x238] sm:$0xf]
    %v1894 = vld [vmem:[#allocation11 + $0x23c] sm:$0xf]
    %v2020 = vunpack.c.l.b16 %v1626
    %v2021 = vunpack.c.h.b16 %v1626
    %v2022 = vunpack.c.l.b16 %v1627
    %v2023 = vunpack.c.h.b16 %v1627
    %v2024 = vunpack.c.l.b16 %v1628
    %v2025 = vunpack.c.h.b16 %v1628
    %v2026 = vunpack.c.l.b16 %v1629
    %v2027 = vunpack.c.h.b16 %v1629
    %v2028 = vunpack.c.l.b16 %v1630
    %v2029 = vunpack.c.l.b16 %v1631
    %v2030 = vunpack.c.h.b16 %v1631
    %v2031 = vunpack.c.l.b16 %v1632
    %v2032 = vunpack.c.h.b16 %v1632
    %v2033 = vunpack.c.l.b16 %v1633
    %v2034 = vunpack.c.h.b16 %v1633
    %v2035 = vunpack.c.l.b16 %v1634
    %v2036 = vunpack.c.h.b16 %v1634
    %v2037 = vunpack.c.l.b16 %v1635
    %v2038 = vunpack.c.l.b16 %v1636
    %v2039 = vunpack.c.h.b16 %v1636
    %v2040 = vunpack.c.l.b16 %v1637
    %v2041 = vunpack.c.h.b16 %v1637
    %v2042 = vunpack.c.l.b16 %v1638
    %v2043 = vunpack.c.h.b16 %v1638
    %v2044 = vunpack.c.l.b16 %v1639
    %v2045 = vunpack.c.h.b16 %v1639
    %v2046 = vunpack.c.l.b16 %v1640
    %v2047 = vunpack.c.l.b16 %v1641
    %v2048 = vunpack.c.h.b16 %v1641
    %v2049 = vunpack.c.l.b16 %v1642
    %v2050 = vunpack.c.h.b16 %v1642
    %v2051 = vunpack.c.l.b16 %v1643
    %v2052 = vunpack.c.h.b16 %v1643
    %v2053 = vunpack.c.l.b16 %v1644
    %v2054 = vunpack.c.h.b16 %v1644
    %v2055 = vunpack.c.l.b16 %v1645
    %v2056 = vunpack.c.l.b16 %v1646
    %v2057 = vunpack.c.h.b16 %v1646
    %v2058 = vunpack.c.l.b16 %v1647
    %v2059 = vunpack.c.h.b16 %v1647
    %v2060 = vunpack.c.l.b16 %v1648
    %v2061 = vunpack.c.h.b16 %v1648
    %v2062 = vunpack.c.l.b16 %v1649
    %v2063 = vunpack.c.h.b16 %v1649
    %v2064 = vunpack.c.l.b16 %v1650
    %v2065 = vunpack.c.l.b16 %v1651
    %v2066 = vunpack.c.h.b16 %v1651
    %v2067 = vunpack.c.l.b16 %v1652
    %v2068 = vunpack.c.h.b16 %v1652
    %v2069 = vunpack.c.l.b16 %v1653
    %v2070 = vunpack.c.h.b16 %v1653
    %v2071 = vunpack.c.l.b16 %v1654
    %v2072 = vunpack.c.h.b16 %v1654
    %v2073 = vunpack.c.l.b16 %v1655
    %v2074 = vunpack.c.l.b16 %v1656
    %v2075 = vunpack.c.h.b16 %v1656
    %v2076 = vunpack.c.l.b16 %v1657
    %v2077 = vunpack.c.h.b16 %v1657
    %v2078 = vunpack.c.l.b16 %v1658
    %v2079 = vunpack.c.h.b16 %v1658
    %v2080 = vunpack.c.l.b16 %v1659
    %v2081 = vunpack.c.h.b16 %v1659
    %v2082 = vunpack.c.l.b16 %v1660
    %v2083 = vunpack.c.l.b16 %v1661
    %v2084 = vunpack.c.h.b16 %v1661
    %v2085 = vunpack.c.l.b16 %v1662
    %v2086 = vunpack.c.h.b16 %v1662
    %v2087 = vunpack.c.l.b16 %v1663
    %v2088 = vunpack.c.h.b16 %v1663
    %v2089 = vunpack.c.l.b16 %v1664
    %v2090 = vunpack.c.h.b16 %v1664
    %v2091 = vunpack.c.l.b16 %v1665
    %v2092 = vunpack.c.l.b16 %v1666
    %v2093 = vunpack.c.h.b16 %v1666
    %v2094 = vunpack.c.l.b16 %v1667
    %v2095 = vunpack.c.h.b16 %v1667
    %v2096 = vunpack.c.l.b16 %v1668
    %v2097 = vunpack.c.h.b16 %v1668
    %v2098 = vunpack.c.l.b16 %v1669
    %v2099 = vunpack.c.h.b16 %v1669
    %v2100 = vunpack.c.l.b16 %v1670
    %v2101 = vunpack.c.l.b16 %v1671
    %v2102 = vunpack.c.h.b16 %v1671
    %v2103 = vunpack.c.l.b16 %v1672
    %v2104 = vunpack.c.h.b16 %v1672
    %v2105 = vunpack.c.l.b16 %v1673
    %v2106 = vunpack.c.h.b16 %v1673
    %v2107 = vunpack.c.l.b16 %v1674
    %v2108 = vunpack.c.h.b16 %v1674
    %v2109 = vunpack.c.l.b16 %v1675
    %v2110 = vunpack.c.l.b16 %v1676
    %v2111 = vunpack.c.h.b16 %v1676
    %v2112 = vunpack.c.l.b16 %v1677
    %v2113 = vunpack.c.h.b16 %v1677
    %v2114 = vunpack.c.l.b16 %v1678
    %v2115 = vunpack.c.h.b16 %v1678
    %v2116 = vunpack.c.l.b16 %v1679
    %v2117 = vunpack.c.h.b16 %v1679
    %v2118 = vunpack.c.l.b16 %v1680
    %v2119 = vunpack.c.l.b16 %v1681
    %v2120 = vunpack.c.h.b16 %v1681
    %v2121 = vunpack.c.l.b16 %v1682
    %v2122 = vunpack.c.h.b16 %v1682
    %v2123 = vunpack.c.l.b16 %v1683
    %v2124 = vunpack.c.h.b16 %v1683
    %v2125 = vunpack.c.l.b16 %v1684
    %v2126 = vunpack.c.h.b16 %v1684
    %v2127 = vunpack.c.l.b16 %v1685
    %v2128 = vunpack.c.l.b16 %v1686
    %v2129 = vunpack.c.h.b16 %v1686
    %v2130 = vunpack.c.l.b16 %v1687
    %v2131 = vunpack.c.h.b16 %v1687
    %v2132 = vunpack.c.l.b16 %v1688
    %v2133 = vunpack.c.h.b16 %v1688
    %v2134 = vunpack.c.l.b16 %v1689
    %v2135 = vunpack.c.h.b16 %v1689
    %v2136 = vunpack.c.l.b16 %v1690
    %v2137 = vunpack.c.l.b16 %v1691
    %v2138 = vunpack.c.h.b16 %v1691
    %v2139 = vunpack.c.l.b16 %v1692
    %v2140 = vunpack.c.h.b16 %v1692
    %v2141 = vunpack.c.l.b16 %v1693
    %v2142 = vunpack.c.h.b16 %v1693
    %v2143 = vunpack.c.l.b16 %v1694
    %v2144 = vunpack.c.h.b16 %v1694
    %v2145 = vunpack.c.l.b16 %v1695
    %v2146 = vunpack.c.l.b16 %v1696
    %v2147 = vunpack.c.h.b16 %v1696
    %v2148 = vunpack.c.l.b16 %v1697
    %v2149 = vunpack.c.h.b16 %v1697
    %v2150 = vunpack.c.l.b16 %v1698
    %v2151 = vunpack.c.h.b16 %v1698
    %v2152 = vunpack.c.l.b16 %v1699
    %v2153 = vunpack.c.h.b16 %v1699
    %v2154 = vunpack.c.l.b16 %v1700
    %v2155 = vunpack.c.l.b16 %v1701
    %v2156 = vunpack.c.h.b16 %v1701
    %v2157 = vunpack.c.l.b16 %v1702
    %v2158 = vunpack.c.h.b16 %v1702
    %v2159 = vunpack.c.l.b16 %v1703
    %v2160 = vunpack.c.h.b16 %v1703
    %v2161 = vunpack.c.l.b16 %v1704
    %v2162 = vunpack.c.h.b16 %v1704
    %v2163 = vunpack.c.l.b16 %v1705
    %v2164 = vunpack.c.l.b16 %v1706
    %v2165 = vunpack.c.h.b16 %v1706
    %v2166 = vunpack.c.l.b16 %v1707
    %v2167 = vunpack.c.h.b16 %v1707
    %v2168 = vunpack.c.l.b16 %v1708
    %v2169 = vunpack.c.h.b16 %v1708
    %v2170 = vunpack.c.l.b16 %v1709
    %v2171 = vunpack.c.h.b16 %v1709
    %v2172 = vunpack.c.l.b16 %v1710
    %v2173 = vunpack.c.l.b16 %v1711
    %v2174 = vunpack.c.h.b16 %v1711
    %v2175 = vunpack.c.l.b16 %v1712
    %v2176 = vunpack.c.h.b16 %v1712
    %v2177 = vunpack.c.l.b16 %v1713
    %v2178 = vunpack.c.h.b16 %v1713
    %v2179 = vunpack.c.l.b16 %v1714
    %v2180 = vunpack.c.h.b16 %v1714
    %v2181 = vunpack.c.l.b16 %v1715
    %v2182 = vunpack.c.l.b16 %v1716
    %v2183 = vunpack.c.h.b16 %v1716
    %v2184 = vunpack.c.l.b16 %v1717
    %v2185 = vunpack.c.h.b16 %v1717
    %v2186 = vunpack.c.l.b16 %v1718
    %v2187 = vunpack.c.h.b16 %v1718
    %v2188 = vunpack.c.l.b16 %v1719
    %v2189 = vunpack.c.h.b16 %v1719
    %v2190 = vunpack.c.l.b16 %v1720
    %v2191 = vunpack.c.l.b16 %v1721
    %v2192 = vunpack.c.h.b16 %v1721
    %v2193 = vunpack.c.l.b16 %v1722
    %v2194 = vunpack.c.h.b16 %v1722
    %v2195 = vunpack.c.l.b16 %v1723
    %v2196 = vunpack.c.h.b16 %v1723
    %v2197 = vunpack.c.l.b16 %v1724
    %v2198 = vunpack.c.h.b16 %v1724
    %v2199 = vunpack.c.l.b16 %v1725
    %v2200 = vunpack.c.l.b16 %v1726
    %v2201 = vunpack.c.h.b16 %v1726
    %v2202 = vunpack.c.l.b16 %v1727
    %v2203 = vunpack.c.h.b16 %v1727
    %v2204 = vunpack.c.l.b16 %v1728
    %v2205 = vunpack.c.h.b16 %v1728
    %v2206 = vunpack.c.l.b16 %v1729
    %v2207 = vunpack.c.h.b16 %v1729
    %v2208 = vunpack.c.l.b16 %v1730
    %v2209 = vunpack.c.l.b16 %v1731
    %v2210 = vunpack.c.h.b16 %v1731
    %v2211 = vunpack.c.l.b16 %v1732
    %v2212 = vunpack.c.h.b16 %v1732
    %v2213 = vunpack.c.l.b16 %v1733
    %v2214 = vunpack.c.h.b16 %v1733
    %v2215 = vunpack.c.l.b16 %v1734
    %v2216 = vunpack.c.h.b16 %v1734
    %v2217 = vunpack.c.l.b16 %v1735
    %v2218 = vunpack.c.l.b16 %v1736
    %v2219 = vunpack.c.h.b16 %v1736
    %v2220 = vunpack.c.l.b16 %v1737
    %v2221 = vunpack.c.h.b16 %v1737
    %v2222 = vunpack.c.l.b16 %v1738
    %v2223 = vunpack.c.h.b16 %v1738
    %v2224 = vunpack.c.l.b16 %v1739
    %v2225 = vunpack.c.h.b16 %v1739
    %v2226 = vunpack.c.l.b16 %v1740
    %v2227 = vunpack.c.l.b16 %v1741
    %v2228 = vunpack.c.h.b16 %v1741
    %v2229 = vunpack.c.l.b16 %v1742
    %v2230 = vunpack.c.h.b16 %v1742
    %v2231 = vunpack.c.l.b16 %v1743
    %v2232 = vunpack.c.h.b16 %v1743
    %v2233 = vunpack.c.l.b16 %v1744
    %v2234 = vunpack.c.h.b16 %v1744
    %v2235 = vunpack.c.l.b16 %v1745
    %v2236 = vunpack.c.l.b16 %v1746
    %v2237 = vunpack.c.h.b16 %v1746
    %v2238 = vunpack.c.l.b16 %v1747
    %v2239 = vunpack.c.h.b16 %v1747
    %v2240 = vunpack.c.l.b16 %v1748
    %v2241 = vunpack.c.h.b16 %v1748
    %v2242 = vunpack.c.l.b16 %v1749
    %v2243 = vunpack.c.h.b16 %v1749
    %v2244 = vunpack.c.l.b16 %v1750
    %v2245 = vpack.c.b16 %v2029, %v2020
    %v2246 = vpack.c.b16 %v2030, %v2021
    %v2247 = vpack.c.b16 %v2031, %v2022
    %v2248 = vpack.c.b16 %v2032, %v2023
    %v2249 = vpack.c.b16 %v2033, %v2024
    %v2250 = vpack.c.b16 %v2034, %v2025
    %v2251 = vpack.c.b16 %v2035, %v2026
    %v2252 = vpack.c.b16 %v2036, %v2027
    %v2253 = vpack.c.b16 %v2037, %v2028
    %v2254 = vpack.c.b16 %v2047, %v2038
    %v2255 = vpack.c.b16 %v2048, %v2039
    %v2256 = vpack.c.b16 %v2049, %v2040
    %v2257 = vpack.c.b16 %v2050, %v2041
    %v2258 = vpack.c.b16 %v2051, %v2042
    %v2259 = vpack.c.b16 %v2052, %v2043
    %v2260 = vpack.c.b16 %v2053, %v2044
    %v2261 = vpack.c.b16 %v2054, %v2045
    %v2262 = vpack.c.b16 %v2055, %v2046
    %v2263 = vpack.c.b16 %v2065, %v2056
    %v2264 = vpack.c.b16 %v2066, %v2057
    %v2265 = vpack.c.b16 %v2067, %v2058
    %v2266 = vpack.c.b16 %v2068, %v2059
    %v2267 = vpack.c.b16 %v2069, %v2060
    %v2268 = vpack.c.b16 %v2070, %v2061
    %v2269 = vpack.c.b16 %v2071, %v2062
    %v2270 = vpack.c.b16 %v2072, %v2063
    %v2271 = vpack.c.b16 %v2073, %v2064
    %v2272 = vpack.c.b16 %v2083, %v2074
    %v2273 = vpack.c.b16 %v2084, %v2075
    %v2274 = vpack.c.b16 %v2085, %v2076
    %v2275 = vpack.c.b16 %v2086, %v2077
    %v2276 = vpack.c.b16 %v2087, %v2078
    %v2277 = vpack.c.b16 %v2088, %v2079
    %v2278 = vpack.c.b16 %v2089, %v2080
    %v2279 = vpack.c.b16 %v2090, %v2081
    %v2280 = vpack.c.b16 %v2091, %v2082
    %v2281 = vpack.c.b16 %v2101, %v2092
    %v2282 = vpack.c.b16 %v2102, %v2093
    %v2283 = vpack.c.b16 %v2103, %v2094
    %v2284 = vpack.c.b16 %v2104, %v2095
    %v2285 = vpack.c.b16 %v2105, %v2096
    %v2286 = vpack.c.b16 %v2106, %v2097
    %v2287 = vpack.c.b16 %v2107, %v2098
    %v2288 = vpack.c.b16 %v2108, %v2099
    %v2289 = vpack.c.b16 %v2109, %v2100
    %v2290 = vpack.c.b16 %v2119, %v2110
    %v2291 = vpack.c.b16 %v2120, %v2111
    %v2292 = vpack.c.b16 %v2121, %v2112
    %v2293 = vpack.c.b16 %v2122, %v2113
    %v2294 = vpack.c.b16 %v2123, %v2114
    %v2295 = vpack.c.b16 %v2124, %v2115
    %v2296 = vpack.c.b16 %v2125, %v2116
    %v2297 = vpack.c.b16 %v2126, %v2117
    %v2298 = vpack.c.b16 %v2127, %v2118
    %v2299 = vpack.c.b16 %v2137, %v2128
    %v2300 = vpack.c.b16 %v2138, %v2129
    %v2301 = vpack.c.b16 %v2139, %v2130
    %v2302 = vpack.c.b16 %v2140, %v2131
    %v2303 = vpack.c.b16 %v2141, %v2132
    %v2304 = vpack.c.b16 %v2142, %v2133
    %v2305 = vpack.c.b16 %v2143, %v2134
    %v2306 = vpack.c.b16 %v2144, %v2135
    %v2307 = vpack.c.b16 %v2145, %v2136
    %v2308 = vpack.c.b16 %v2155, %v2146
    %v2309 = vpack.c.b16 %v2156, %v2147
    %v2310 = vpack.c.b16 %v2157, %v2148
    %v2311 = vpack.c.b16 %v2158, %v2149
    %v2312 = vpack.c.b16 %v2159, %v2150
    %v2313 = vpack.c.b16 %v2160, %v2151
    %v2314 = vpack.c.b16 %v2161, %v2152
    %v2315 = vpack.c.b16 %v2162, %v2153
    %v2316 = vpack.c.b16 %v2163, %v2154
    %v2317 = vpack.c.b16 %v2173, %v2164
    %v2318 = vpack.c.b16 %v2174, %v2165
    %v2319 = vpack.c.b16 %v2175, %v2166
    %v2320 = vpack.c.b16 %v2176, %v2167
    %v2321 = vpack.c.b16 %v2177, %v2168
    %v2322 = vpack.c.b16 %v2178, %v2169
    %v2323 = vpack.c.b16 %v2179, %v2170
    %v2324 = vpack.c.b16 %v2180, %v2171
    %v2325 = vpack.c.b16 %v2181, %v2172
    %v2326 = vpack.c.b16 %v2191, %v2182
    %v2327 = vpack.c.b16 %v2192, %v2183
    %v2328 = vpack.c.b16 %v2193, %v2184
    %v2329 = vpack.c.b16 %v2194, %v2185
    %v2330 = vpack.c.b16 %v2195, %v2186
    %v2331 = vpack.c.b16 %v2196, %v2187
    %v2332 = vpack.c.b16 %v2197, %v2188
    %v2333 = vpack.c.b16 %v2198, %v2189
    %v2334 = vpack.c.b16 %v2199, %v2190
    %v2335 = vpack.c.b16 %v2209, %v2200
    %v2336 = vpack.c.b16 %v2210, %v2201
    %v2337 = vpack.c.b16 %v2211, %v2202
    %v2338 = vpack.c.b16 %v2212, %v2203
    %v2339 = vpack.c.b16 %v2213, %v2204
    %v2340 = vpack.c.b16 %v2214, %v2205
    %v2341 = vpack.c.b16 %v2215, %v2206
    %v2342 = vpack.c.b16 %v2216, %v2207
    %v2343 = vpack.c.b16 %v2217, %v2208
    %v2344 = vpack.c.b16 %v2227, %v2218
    %v2345 = vpack.c.b16 %v2228, %v2219
    %v2346 = vpack.c.b16 %v2229, %v2220
    %v2347 = vpack.c.b16 %v2230, %v2221
    %v2348 = vpack.c.b16 %v2231, %v2222
    %v2349 = vpack.c.b16 %v2232, %v2223
    %v2350 = vpack.c.b16 %v2233, %v2224
    %v2351 = vpack.c.b16 %v2234, %v2225
    %v2352 = vpack.c.b16 %v2235, %v2226
    %v2353 = vpack.c.b16 %v2236, %v2236
    %v2354 = vpack.c.b16 %v2237, %v2237
    %v2355 = vpack.c.b16 %v2238, %v2238
    %v2356 = vpack.c.b16 %v2239, %v2239
    %v2357 = vpack.c.b16 %v2240, %v2240
    %v2358 = vpack.c.b16 %v2241, %v2241
    %v2359 = vpack.c.b16 %v2242, %v2242
    %v2360 = vpack.c.b16 %v2243, %v2243
    %v2361 = vpack.c.b16 %v2244, %v2244
    %v2623 = vunpack.c.l.b16 %v1751
    %v2624 = vunpack.c.l.b16 %v1752
    %v2625 = vunpack.c.l.b16 %v1753
    %v2626 = vunpack.c.l.b16 %v1754
    %v2627 = vunpack.c.l.b16 %v1755
    %v2628 = vunpack.c.l.b16 %v1756
    %v2629 = vunpack.c.l.b16 %v1757
    %v2630 = vunpack.c.l.b16 %v1758
    %v2631 = vunpack.c.l.b16 %v1759
    %v2632 = vunpack.c.l.b16 %v1760
    %v2633 = vunpack.c.l.b16 %v1761
    %v2634 = vunpack.c.l.b16 %v1762
    %v2635 = vunpack.c.l.b16 %v1763
    %v2636 = vunpack.c.l.b16 %v1764
    %v2637 = vunpack.c.l.b16 %v1765
    %v2638 = vunpack.c.l.b16 %v1766
    %v2639 = vunpack.c.l.b16 %v1767
    %v2640 = vunpack.c.l.b16 %v1768
    %v2641 = vunpack.c.l.b16 %v1769
    %v2642 = vunpack.c.l.b16 %v1770
    %v2643 = vunpack.c.l.b16 %v1771
    %v2644 = vunpack.c.l.b16 %v1772
    %v2645 = vunpack.c.l.b16 %v1773
    %v2646 = vunpack.c.l.b16 %v1774
    %v2647 = vunpack.c.l.b16 %v1775
    %v2648 = vunpack.c.l.b16 %v1776
    %v2649 = vunpack.c.l.b16 %v1777
    %v2650 = vunpack.c.l.b16 %v1778
    %v2651 = vunpack.c.l.b16 %v1779
    %v2652 = vunpack.c.l.b16 %v1780
    %v2653 = vunpack.c.l.b16 %v1781
    %v2654 = vunpack.c.l.b16 %v1782
    %v2655 = vunpack.c.l.b16 %v1783
    %v2656 = vunpack.c.l.b16 %v1784
    %v2657 = vunpack.c.l.b16 %v1785
    %v2658 = vunpack.c.l.b16 %v1786
    %v2659 = vunpack.c.l.b16 %v1787
    %v2660 = vunpack.c.l.b16 %v1788
    %v2661 = vunpack.c.l.b16 %v1789
    %v2662 = vunpack.c.l.b16 %v1790
    %v2663 = vunpack.c.l.b16 %v1791
    %v2664 = vunpack.c.l.b16 %v1792
    %v2665 = vunpack.c.l.b16 %v1793
    %v2666 = vunpack.c.l.b16 %v1794
    %v2667 = vunpack.c.l.b16 %v1795
    %v2668 = vunpack.c.l.b16 %v1796
    %v2669 = vunpack.c.l.b16 %v1797
    %v2670 = vunpack.c.l.b16 %v1798
    %v2671 = vunpack.c.l.b16 %v1799
    %v2672 = vunpack.c.l.b16 %v1800
    %v2673 = vunpack.c.l.b16 %v1801
    %v2674 = vunpack.c.l.b16 %v1802
    %v2675 = vunpack.c.l.b16 %v1803
    %v2676 = vunpack.c.l.b16 %v1804
    %v2677 = vunpack.c.l.b16 %v1805
    %v2678 = vunpack.c.l.b16 %v1806
    %v2679 = vunpack.c.l.b16 %v1807
    %v2680 = vunpack.c.l.b16 %v1808
    %v2681 = vunpack.c.l.b16 %v1809
    %v2682 = vunpack.c.l.b16 %v1810
    %v2683 = vunpack.c.l.b16 %v1811
    %v2684 = vunpack.c.l.b16 %v1812
    %v2685 = vunpack.c.l.b16 %v1813
    %v2686 = vunpack.c.l.b16 %v1814
    %v2687 = vunpack.c.l.b16 %v1815
    %v2688 = vunpack.c.l.b16 %v1816
    %v2689 = vunpack.c.l.b16 %v1817
    %v2690 = vunpack.c.l.b16 %v1818
    %v2691 = vunpack.c.l.b16 %v1819
    %v2692 = vunpack.c.l.b16 %v1820
    %v2693 = vunpack.c.l.b16 %v1821
    %v2694 = vunpack.c.l.b16 %v1822
    %v2695 = vunpack.c.l.b16 %v1823
    %v2696 = vunpack.c.l.b16 %v1824
    %v2697 = vunpack.c.l.b16 %v1825
    %v2698 = vunpack.c.l.b16 %v1826
    %v2699 = vunpack.c.l.b16 %v1827
    %v2700 = vunpack.c.l.b16 %v1828
    %v2701 = vunpack.c.l.b16 %v1829
    %v2702 = vunpack.c.l.b16 %v1830
    %v2703 = vunpack.c.l.b16 %v1831
    %v2704 = vunpack.c.l.b16 %v1832
    %v2705 = vunpack.c.l.b16 %v1833
    %v2706 = vunpack.c.l.b16 %v1834
    %v2707 = vunpack.c.l.b16 %v1835
    %v2708 = vunpack.c.l.b16 %v1836
    %v2709 = vunpack.c.l.b16 %v1837
    %v2710 = vunpack.c.l.b16 %v1838
    %v2711 = vunpack.c.l.b16 %v1839
    %v2712 = vunpack.c.l.b16 %v1840
    %v2713 = vunpack.c.l.b16 %v1841
    %v2714 = vunpack.c.l.b16 %v1842
    %v2715 = vunpack.c.l.b16 %v1843
    %v2716 = vunpack.c.l.b16 %v1844
    %v2717 = vunpack.c.l.b16 %v1845
    %v2718 = vunpack.c.l.b16 %v1846
    %v2719 = vunpack.c.l.b16 %v1847
    %v2720 = vunpack.c.l.b16 %v1848
    %v2721 = vunpack.c.l.b16 %v1849
    %v2722 = vunpack.c.l.b16 %v1850
    %v2723 = vunpack.c.l.b16 %v1851
    %v2724 = vunpack.c.l.b16 %v1852
    %v2725 = vunpack.c.l.b16 %v1853
    %v2726 = vunpack.c.l.b16 %v1854
    %v2727 = vunpack.c.l.b16 %v1855
    %v2728 = vunpack.c.l.b16 %v1856
    %v2729 = vunpack.c.l.b16 %v1857
    %v2730 = vunpack.c.l.b16 %v1858
    %v2731 = vunpack.c.l.b16 %v1859
    %v2732 = vunpack.c.l.b16 %v1860
    %v2733 = vunpack.c.l.b16 %v1861
    %v2734 = vunpack.c.l.b16 %v1862
    %v2735 = vunpack.c.l.b16 %v1863
    %v2736 = vunpack.c.l.b16 %v1864
    %v2737 = vunpack.c.l.b16 %v1865
    %v2738 = vunpack.c.l.b16 %v1866
    %v2739 = vunpack.c.l.b16 %v1867
    %v2740 = vunpack.c.l.b16 %v1868
    %v2741 = vunpack.c.l.b16 %v1869
    %v2742 = vunpack.c.l.b16 %v1870
    %v2743 = vunpack.c.l.b16 %v1871
    %v2744 = vunpack.c.l.b16 %v1872
    %v2745 = vunpack.c.l.b16 %v1873
    %v2746 = vunpack.c.l.b16 %v1874
    %v2747 = vunpack.c.l.b16 %v1875
    %v2748 = vunpack.c.l.b16 %v1876
    %v2749 = vunpack.c.l.b16 %v1877
    %v2750 = vunpack.c.l.b16 %v1878
    %v2751 = vunpack.c.l.b16 %v1879
    %v2752 = vunpack.c.l.b16 %v1880
    %v2753 = vunpack.c.l.b16 %v1881
    %v2754 = vunpack.c.l.b16 %v1882
    %v2755 = vunpack.c.l.b16 %v1883
    %v2756 = vunpack.c.l.b16 %v1884
    %v2757 = vunpack.c.l.b16 %v1885
    %v2758 = vunpack.c.l.b16 %v1886
    %v2759 = vunpack.c.l.b16 %v1887
    %v2760 = vunpack.c.l.b16 %v1888
    %v2761 = vunpack.c.l.b16 %v1889
    %v2762 = vunpack.c.l.b16 %v1890
    %v2763 = vunpack.c.l.b16 %v1891
    %v2764 = vunpack.c.l.b16 %v1892
    %v2765 = vunpack.c.l.b16 %v1893
    %v2766 = vunpack.c.l.b16 %v1894
    %v2767 = vpack.c.b16 %v2624, %v2623
    %v2768 = vpack.c.b16 %v2626, %v2625
    %v2769 = vpack.c.b16 %v2628, %v2627
    %v2770 = vpack.c.b16 %v2630, %v2629
    %v2771 = vpack.c.b16 %v2632, %v2631
    %v2772 = vpack.c.b16 %v2634, %v2633
    %v2773 = vpack.c.b16 %v2636, %v2635
    %v2774 = vpack.c.b16 %v2638, %v2637
    %v2775 = vpack.c.b16 %v2640, %v2639
    %v2776 = vpack.c.b16 %v2642, %v2641
    %v2777 = vpack.c.b16 %v2644, %v2643
    %v2778 = vpack.c.b16 %v2646, %v2645
    %v2779 = vpack.c.b16 %v2648, %v2647
    %v2780 = vpack.c.b16 %v2650, %v2649
    %v2781 = vpack.c.b16 %v2652, %v2651
    %v2782 = vpack.c.b16 %v2654, %v2653
    %v2783 = vpack.c.b16 %v2656, %v2655
    %v2784 = vpack.c.b16 %v2658, %v2657
    %v2785 = vpack.c.b16 %v2660, %v2659
    %v2786 = vpack.c.b16 %v2662, %v2661
    %v2787 = vpack.c.b16 %v2664, %v2663
    %v2788 = vpack.c.b16 %v2666, %v2665
    %v2789 = vpack.c.b16 %v2668, %v2667
    %v2790 = vpack.c.b16 %v2670, %v2669
    %v2791 = vpack.c.b16 %v2672, %v2671
    %v2792 = vpack.c.b16 %v2674, %v2673
    %v2793 = vpack.c.b16 %v2676, %v2675
    %v2794 = vpack.c.b16 %v2678, %v2677
    %v2795 = vpack.c.b16 %v2680, %v2679
    %v2796 = vpack.c.b16 %v2682, %v2681
    %v2797 = vpack.c.b16 %v2684, %v2683
    %v2798 = vpack.c.b16 %v2686, %v2685
    %v2799 = vpack.c.b16 %v2688, %v2687
    %v2800 = vpack.c.b16 %v2690, %v2689
    %v2801 = vpack.c.b16 %v2692, %v2691
    %v2802 = vpack.c.b16 %v2694, %v2693
    %v2803 = vpack.c.b16 %v2696, %v2695
    %v2804 = vpack.c.b16 %v2698, %v2697
    %v2805 = vpack.c.b16 %v2700, %v2699
    %v2806 = vpack.c.b16 %v2702, %v2701
    %v2807 = vpack.c.b16 %v2704, %v2703
    %v2808 = vpack.c.b16 %v2706, %v2705
    %v2809 = vpack.c.b16 %v2708, %v2707
    %v2810 = vpack.c.b16 %v2710, %v2709
    %v2811 = vpack.c.b16 %v2712, %v2711
    %v2812 = vpack.c.b16 %v2714, %v2713
    %v2813 = vpack.c.b16 %v2716, %v2715
    %v2814 = vpack.c.b16 %v2718, %v2717
    %v2815 = vpack.c.b16 %v2720, %v2719
    %v2816 = vpack.c.b16 %v2722, %v2721
    %v2817 = vpack.c.b16 %v2724, %v2723
    %v2818 = vpack.c.b16 %v2726, %v2725
    %v2819 = vpack.c.b16 %v2728, %v2727
    %v2820 = vpack.c.b16 %v2730, %v2729
    %v2821 = vpack.c.b16 %v2732, %v2731
    %v2822 = vpack.c.b16 %v2734, %v2733
    %v2823 = vpack.c.b16 %v2736, %v2735
    %v2824 = vpack.c.b16 %v2738, %v2737
    %v2825 = vpack.c.b16 %v2740, %v2739
    %v2826 = vpack.c.b16 %v2742, %v2741
    %v2827 = vpack.c.b16 %v2744, %v2743
    %v2828 = vpack.c.b16 %v2746, %v2745
    %v2829 = vpack.c.b16 %v2748, %v2747
    %v2830 = vpack.c.b16 %v2750, %v2749
    %v2831 = vpack.c.b16 %v2752, %v2751
    %v2832 = vpack.c.b16 %v2754, %v2753
    %v2833 = vpack.c.b16 %v2756, %v2755
    %v2834 = vpack.c.b16 %v2758, %v2757
    %v2835 = vpack.c.b16 %v2760, %v2759
    %v2836 = vpack.c.b16 %v2762, %v2761
    %v2837 = vpack.c.b16 %v2764, %v2763
    %v2838 = vpack.c.b16 %v2766, %v2765
    %2911 = vmatprep.subr.bf16.mxu0 0
    %2912 = vmatpush1.bf16.msra.mxu0 %v2774
    %2913 = vmatprep.subr.bf16.mxu0 0
    %2914 = vmatpush1.bf16.msra.mxu0 %v2773
    %2915 = vmatprep.subr.bf16.mxu0 0
    %2916 = vmatpush1.bf16.msra.mxu0 %v2772
    %2917 = vmatprep.subr.bf16.mxu0 0
    %2918 = vmatpush1.bf16.msra.mxu0 %v2771
    %2919 = vmatprep.subr.bf16.mxu0 0
    %2920 = vmatpush1.bf16.msra.mxu0 %v2770
    %2921 = vmatprep.subr.bf16.mxu0 0
    %2922 = vmatpush1.bf16.msra.mxu0 %v2769
    %2923 = vmatprep.subr.bf16.mxu0 0
    %2924 = vmatpush1.bf16.msra.mxu0 %v2768
    %2925 = vmatprep.subr.bf16.mxu0 0
    %2926 = vmatpush1.bf16.msra.mxu0 %v2767
    %2927 = vmatprep.subr.bf16.mxu0 0
    %2928 = vmatpush2.bf16.msra.mxu0 %v2782
    %2929 = vmatprep.subr.bf16.mxu0 0
    %2930 = vmatpush2.bf16.msra.mxu0 %v2781
    %2931 = vmatprep.subr.bf16.mxu0 0
    %2932 = vmatpush2.bf16.msra.mxu0 %v2780
    %2933 = vmatprep.subr.bf16.mxu0 0
    %2934 = vmatpush2.bf16.msra.mxu0 %v2779
    %2935 = vmatprep.subr.bf16.mxu0 0
    %2936 = vmatpush2.bf16.msra.mxu0 %v2778
    %2937 = vmatprep.subr.bf16.mxu0 0
    %2938 = vmatpush2.bf16.msra.mxu0 %v2777
    %2939 = vmatprep.subr.bf16.mxu0 0
    %2940 = vmatpush2.bf16.msra.mxu0 %v2776
    %2941 = vmatprep.subr.bf16.mxu0 0
    %2942 = vmatpush2.bf16.msra.mxu0 %v2775
    %2943 = vmatprep.mubr.bf16.mxu0 %v2246
    %2944 = vmatmul.mubr.bf16.gmra.mxu0 %v2245
    %v2945 = vpop.f32.mrf.mxu0
    %v2946 = vadd.f32 0.0, %v2945
    %v2947 = vpop.f32.mrf.mxu0
    %v2948 = vpop.f32.mrf.mxu0
    %v2949 = vadd.f32 0.0, %v2948
    %v2950 = vpop.f32.mrf.mxu0
    %2951 = vmatprep.mubr.bf16.mxu0 %v2255
    %2952 = vmatmul.mubr.bf16.gmra.mxu0 %v2254
    %v2953 = vpop.f32.mrf.mxu0
    %v2954 = vadd.f32 0.0, %v2953
    %v2955 = vpop.f32.mrf.mxu0
    %v2956 = vpop.f32.mrf.mxu0
    %v2957 = vadd.f32 0.0, %v2956
    %v2958 = vpop.f32.mrf.mxu0
    %2959 = vmatprep.mubr.bf16.mxu0 %v2264
    %2960 = vmatmul.mubr.bf16.gmra.mxu0 %v2263
    %v2961 = vpop.f32.mrf.mxu0
    %v2962 = vadd.f32 0.0, %v2961
    %v2963 = vpop.f32.mrf.mxu0
    %v2964 = vpop.f32.mrf.mxu0
    %v2965 = vadd.f32 0.0, %v2964
    %v2966 = vpop.f32.mrf.mxu0
    %2967 = vmatprep.mubr.bf16.mxu0 %v2273
    %2968 = vmatmul.mubr.bf16.gmra.mxu0 %v2272
    %v2969 = vpop.f32.mrf.mxu0
    %v2970 = vadd.f32 0.0, %v2969
    %v2971 = vpop.f32.mrf.mxu0
    %v2972 = vpop.f32.mrf.mxu0
    %v2973 = vadd.f32 0.0, %v2972
    %v2974 = vpop.f32.mrf.mxu0
    %2975 = vmatprep.mubr.bf16.mxu0 %v2282
    %2976 = vmatmul.mubr.bf16.gmra.mxu0 %v2281
    %v2977 = vpop.f32.mrf.mxu0
    %v2978 = vadd.f32 0.0, %v2977
    %v2979 = vpop.f32.mrf.mxu0
    %v2980 = vpop.f32.mrf.mxu0
    %v2981 = vadd.f32 0.0, %v2980
    %v2982 = vpop.f32.mrf.mxu0
    %2983 = vmatprep.mubr.bf16.mxu0 %v2291
    %2984 = vmatmul.mubr.bf16.gmra.mxu0 %v2290
    %v2985 = vpop.f32.mrf.mxu0
    %v2986 = vadd.f32 0.0, %v2985
    %v2987 = vpop.f32.mrf.mxu0
    %v2988 = vpop.f32.mrf.mxu0
    %v2989 = vadd.f32 0.0, %v2988
    %v2990 = vpop.f32.mrf.mxu0
    %2991 = vmatprep.mubr.bf16.mxu0 %v2300
    %2992 = vmatmul.mubr.bf16.gmra.mxu0 %v2299
    %v2993 = vpop.f32.mrf.mxu0
    %v2994 = vadd.f32 0.0, %v2993
    %v2995 = vpop.f32.mrf.mxu0
    %v2996 = vpop.f32.mrf.mxu0
    %v2997 = vadd.f32 0.0, %v2996
    %v2998 = vpop.f32.mrf.mxu0
    %2999 = vmatprep.mubr.bf16.mxu0 %v2309
    %3000 = vmatmul.mubr.bf16.gmra.mxu0 %v2308
    %v3001 = vpop.f32.mrf.mxu0
    %v3002 = vadd.f32 0.0, %v3001
    %v3003 = vpop.f32.mrf.mxu0
    %v3004 = vpop.f32.mrf.mxu0
    %v3005 = vadd.f32 0.0, %v3004
    %v3006 = vpop.f32.mrf.mxu0
    %3007 = vmatprep.mubr.bf16.mxu0 %v2318
    %3008 = vmatmul.mubr.bf16.gmra.mxu0 %v2317
    %v3009 = vpop.f32.mrf.mxu0
    %v3010 = vadd.f32 0.0, %v3009
    %v3011 = vpop.f32.mrf.mxu0
    %v3012 = vpop.f32.mrf.mxu0
    %v3013 = vadd.f32 0.0, %v3012
    %v3014 = vpop.f32.mrf.mxu0
    %3015 = vmatprep.mubr.bf16.mxu0 %v2327
    %3016 = vmatmul.mubr.bf16.gmra.mxu0 %v2326
    %v3017 = vpop.f32.mrf.mxu0
    %v3018 = vadd.f32 0.0, %v3017
    %v3019 = vpop.f32.mrf.mxu0
    %v3020 = vpop.f32.mrf.mxu0
    %v3021 = vadd.f32 0.0, %v3020
    %v3022 = vpop.f32.mrf.mxu0
    %3023 = vmatprep.mubr.bf16.mxu0 %v2336
    %3024 = vmatmul.mubr.bf16.gmra.mxu0 %v2335
    %v3025 = vpop.f32.mrf.mxu0
    %v3026 = vadd.f32 0.0, %v3025
    %v3027 = vpop.f32.mrf.mxu0
    %v3028 = vpop.f32.mrf.mxu0
    %v3029 = vadd.f32 0.0, %v3028
    %v3030 = vpop.f32.mrf.mxu0
    %3031 = vmatprep.mubr.bf16.mxu0 %v2345
    %3032 = vmatmul.mubr.bf16.gmra.mxu0 %v2344
    %v3033 = vpop.f32.mrf.mxu0
    %v3034 = vadd.f32 0.0, %v3033
    %v3035 = vpop.f32.mrf.mxu0
    %v3036 = vpop.f32.mrf.mxu0
    %v3037 = vadd.f32 0.0, %v3036
    %v3038 = vpop.f32.mrf.mxu0
    %3039 = vmatprep.mubr.bf16.mxu0 %v2354
    %3040 = vmatmul.mubr.bf16.gmra.mxu0 %v2353
    %v3041 = vpop.f32.mrf.mxu0
    %v3042 = vadd.f32 0.0, %v3041
    %v3043 = vpop.f32.mrf.mxu0
    %v3044 = vpop.f32.mrf.mxu0
    %v3045 = vpop.f32.mrf.mxu0
    %3046 = vdwg.mxu0
    %3047 = vmatprep.subr.bf16.mxu0 0
    %3048 = vmatpush1.bf16.msra.mxu0 %v2790
    %3049 = vmatprep.subr.bf16.mxu0 0
    %3050 = vmatpush1.bf16.msra.mxu0 %v2789
    %3051 = vmatprep.subr.bf16.mxu0 0
    %3052 = vmatpush1.bf16.msra.mxu0 %v2788
    %3053 = vmatprep.subr.bf16.mxu0 0
    %3054 = vmatpush1.bf16.msra.mxu0 %v2787
    %3055 = vmatprep.subr.bf16.mxu0 0
    %3056 = vmatpush1.bf16.msra.mxu0 %v2786
    %3057 = vmatprep.subr.bf16.mxu0 0
    %3058 = vmatpush1.bf16.msra.mxu0 %v2785
    %3059 = vmatprep.subr.bf16.mxu0 0
    %3060 = vmatpush1.bf16.msra.mxu0 %v2784
    %3061 = vmatprep.subr.bf16.mxu0 0
    %3062 = vmatpush1.bf16.msra.mxu0 %v2783
    %3063 = vmatprep.subr.bf16.mxu0 0
    %3064 = vmatpush2.bf16.msra.mxu0 %v2798
    %3065 = vmatprep.subr.bf16.mxu0 0
    %3066 = vmatpush2.bf16.msra.mxu0 %v2797
    %3067 = vmatprep.subr.bf16.mxu0 0
    %3068 = vmatpush2.bf16.msra.mxu0 %v2796
    %3069 = vmatprep.subr.bf16.mxu0 0
    %3070 = vmatpush2.bf16.msra.mxu0 %v2795
    %3071 = vmatprep.subr.bf16.mxu0 0
    %3072 = vmatpush2.bf16.msra.mxu0 %v2794
    %3073 = vmatprep.subr.bf16.mxu0 0
    %3074 = vmatpush2.bf16.msra.mxu0 %v2793
    %3075 = vmatprep.subr.bf16.mxu0 0
    %3076 = vmatpush2.bf16.msra.mxu0 %v2792
    %3077 = vmatprep.subr.bf16.mxu0 0
    %3078 = vmatpush2.bf16.msra.mxu0 %v2791
    %3079 = vmatprep.mubr.bf16.mxu0 %v2248
    %3080 = vmatmul.mubr.bf16.gmra.mxu0 %v2247
    %v3081 = vpop.f32.mrf.mxu0
    %v3082 = vadd.f32 %v2946, %v3081
    %v3083 = vpop.f32.mrf.mxu0
    %v3084 = vpop.f32.mrf.mxu0
    %v3085 = vadd.f32 %v2949, %v3084
    %v3086 = vpop.f32.mrf.mxu0
    %3087 = vmatprep.mubr.bf16.mxu0 %v2257
    %3088 = vmatmul.mubr.bf16.gmra.mxu0 %v2256
    %v3089 = vpop.f32.mrf.mxu0
    %v3090 = vadd.f32 %v2954, %v3089
    %v3091 = vpop.f32.mrf.mxu0
    %v3092 = vpop.f32.mrf.mxu0
    %v3093 = vadd.f32 %v2957, %v3092
    %v3094 = vpop.f32.mrf.mxu0
    %3095 = vmatprep.mubr.bf16.mxu0 %v2266
    %3096 = vmatmul.mubr.bf16.gmra.mxu0 %v2265
    %v3097 = vpop.f32.mrf.mxu0
    %v3098 = vadd.f32 %v2962, %v3097
    %v3099 = vpop.f32.mrf.mxu0
    %v3100 = vpop.f32.mrf.mxu0
    %v3101 = vadd.f32 %v2965, %v3100
    %v3102 = vpop.f32.mrf.mxu0
    %3103 = vmatprep.mubr.bf16.mxu0 %v2275
    %3104 = vmatmul.mubr.bf16.gmra.mxu0 %v2274
    %v3105 = vpop.f32.mrf.mxu0
    %v3106 = vadd.f32 %v2970, %v3105
    %v3107 = vpop.f32.mrf.mxu0
    %v3108 = vpop.f32.mrf.mxu0
    %v3109 = vadd.f32 %v2973, %v3108
    %v3110 = vpop.f32.mrf.mxu0
    %3111 = vmatprep.mubr.bf16.mxu0 %v2284
    %3112 = vmatmul.mubr.bf16.gmra.mxu0 %v2283
    %v3113 = vpop.f32.mrf.mxu0
    %v3114 = vadd.f32 %v2978, %v3113
    %v3115 = vpop.f32.mrf.mxu0
    %v3116 = vpop.f32.mrf.mxu0
    %v3117 = vadd.f32 %v2981, %v3116
    %v3118 = vpop.f32.mrf.mxu0
    %3119 = vmatprep.mubr.bf16.mxu0 %v2293
    %3120 = vmatmul.mubr.bf16.gmra.mxu0 %v2292
    %v3121 = vpop.f32.mrf.mxu0
    %v3122 = vadd.f32 %v2986, %v3121
    %v3123 = vpop.f32.mrf.mxu0
    %v3124 = vpop.f32.mrf.mxu0
    %v3125 = vadd.f32 %v2989, %v3124
    %v3126 = vpop.f32.mrf.mxu0
    %3127 = vmatprep.mubr.bf16.mxu0 %v2302
    %3128 = vmatmul.mubr.bf16.gmra.mxu0 %v2301
    %v3129 = vpop.f32.mrf.mxu0
    %v3130 = vadd.f32 %v2994, %v3129
    %v3131 = vpop.f32.mrf.mxu0
    %v3132 = vpop.f32.mrf.mxu0
    %v3133 = vadd.f32 %v2997, %v3132
    %v3134 = vpop.f32.mrf.mxu0
    %3135 = vmatprep.mubr.bf16.mxu0 %v2311
    %3136 = vmatmul.mubr.bf16.gmra.mxu0 %v2310
    %v3137 = vpop.f32.mrf.mxu0
    %v3138 = vadd.f32 %v3002, %v3137
    %v3139 = vpop.f32.mrf.mxu0
    %v3140 = vpop.f32.mrf.mxu0
    %v3141 = vadd.f32 %v3005, %v3140
    %v3142 = vpop.f32.mrf.mxu0
    %3143 = vmatprep.mubr.bf16.mxu0 %v2320
    %3144 = vmatmul.mubr.bf16.gmra.mxu0 %v2319
    %v3145 = vpop.f32.mrf.mxu0
    %v3146 = vadd.f32 %v3010, %v3145
    %v3147 = vpop.f32.mrf.mxu0
    %v3148 = vpop.f32.mrf.mxu0
    %v3149 = vadd.f32 %v3013, %v3148
    %v3150 = vpop.f32.mrf.mxu0
    %3151 = vmatprep.mubr.bf16.mxu0 %v2329
    %3152 = vmatmul.mubr.bf16.gmra.mxu0 %v2328
    %v3153 = vpop.f32.mrf.mxu0
    %v3154 = vadd.f32 %v3018, %v3153
    %v3155 = vpop.f32.mrf.mxu0
    %v3156 = vpop.f32.mrf.mxu0
    %v3157 = vadd.f32 %v3021, %v3156
    %v3158 = vpop.f32.mrf.mxu0
    %3159 = vmatprep.mubr.bf16.mxu0 %v2338
    %3160 = vmatmul.mubr.bf16.gmra.mxu0 %v2337
    %v3161 = vpop.f32.mrf.mxu0
    %v3162 = vadd.f32 %v3026, %v3161
    %v3163 = vpop.f32.mrf.mxu0
    %v3164 = vpop.f32.mrf.mxu0
    %v3165 = vadd.f32 %v3029, %v3164
    %v3166 = vpop.f32.mrf.mxu0
    %3167 = vmatprep.mubr.bf16.mxu0 %v2347
    %3168 = vmatmul.mubr.bf16.gmra.mxu0 %v2346
    %v3169 = vpop.f32.mrf.mxu0
    %v3170 = vadd.f32 %v3034, %v3169
    %v3171 = vpop.f32.mrf.mxu0
    %v3172 = vpop.f32.mrf.mxu0
    %v3173 = vadd.f32 %v3037, %v3172
    %v3174 = vpop.f32.mrf.mxu0
    %3175 = vmatprep.mubr.bf16.mxu0 %v2356
    %3176 = vmatmul.mubr.bf16.gmra.mxu0 %v2355
    %v3177 = vpop.f32.mrf.mxu0
    %v3178 = vadd.f32 %v3042, %v3177
    %v3179 = vpop.f32.mrf.mxu0
    %v3180 = vpop.f32.mrf.mxu0
    %v3181 = vpop.f32.mrf.mxu0
    %3182 = vdwg.mxu0
    %3183 = vmatprep.subr.bf16.mxu0 0
    %3184 = vmatpush1.bf16.msra.mxu0 %v2806
    %3185 = vmatprep.subr.bf16.mxu0 0
    %3186 = vmatpush1.bf16.msra.mxu0 %v2805
    %3187 = vmatprep.subr.bf16.mxu0 0
    %3188 = vmatpush1.bf16.msra.mxu0 %v2804
    %3189 = vmatprep.subr.bf16.mxu0 0
    %3190 = vmatpush1.bf16.msra.mxu0 %v2803
    %3191 = vmatprep.subr.bf16.mxu0 0
    %3192 = vmatpush1.bf16.msra.mxu0 %v2802
    %3193 = vmatprep.subr.bf16.mxu0 0
    %3194 = vmatpush1.bf16.msra.mxu0 %v2801
    %3195 = vmatprep.subr.bf16.mxu0 0
    %3196 = vmatpush1.bf16.msra.mxu0 %v2800
    %3197 = vmatprep.subr.bf16.mxu0 0
    %3198 = vmatpush1.bf16.msra.mxu0 %v2799
    %3199 = vmatprep.subr.bf16.mxu0 0
    %3200 = vmatpush2.bf16.msra.mxu0 %v2814
    %3201 = vmatprep.subr.bf16.mxu0 0
    %3202 = vmatpush2.bf16.msra.mxu0 %v2813
    %3203 = vmatprep.subr.bf16.mxu0 0
    %3204 = vmatpush2.bf16.msra.mxu0 %v2812
    %3205 = vmatprep.subr.bf16.mxu0 0
    %3206 = vmatpush2.bf16.msra.mxu0 %v2811
    %3207 = vmatprep.subr.bf16.mxu0 0
    %3208 = vmatpush2.bf16.msra.mxu0 %v2810
    %3209 = vmatprep.subr.bf16.mxu0 0
    %3210 = vmatpush2.bf16.msra.mxu0 %v2809
    %3211 = vmatprep.subr.bf16.mxu0 0
    %3212 = vmatpush2.bf16.msra.mxu0 %v2808
    %3213 = vmatprep.subr.bf16.mxu0 0
    %3214 = vmatpush2.bf16.msra.mxu0 %v2807
    %3215 = vmatprep.mubr.bf16.mxu0 %v2250
    %3216 = vmatmul.mubr.bf16.gmra.mxu0 %v2249
    %v3217 = vpop.f32.mrf.mxu0
    %v3218 = vadd.f32 %v3082, %v3217
    %v3219 = vpop.f32.mrf.mxu0
    %v3220 = vpop.f32.mrf.mxu0
    %v3221 = vadd.f32 %v3085, %v3220
    %v3222 = vpop.f32.mrf.mxu0
    %3223 = vmatprep.mubr.bf16.mxu0 %v2259
    %3224 = vmatmul.mubr.bf16.gmra.mxu0 %v2258
    %v3225 = vpop.f32.mrf.mxu0
    %v3226 = vadd.f32 %v3090, %v3225
    %v3227 = vpop.f32.mrf.mxu0
    %v3228 = vpop.f32.mrf.mxu0
    %v3229 = vadd.f32 %v3093, %v3228
    %v3230 = vpop.f32.mrf.mxu0
    %3231 = vmatprep.mubr.bf16.mxu0 %v2268
    %3232 = vmatmul.mubr.bf16.gmra.mxu0 %v2267
    %v3233 = vpop.f32.mrf.mxu0
    %v3234 = vadd.f32 %v3098, %v3233
    %v3235 = vpop.f32.mrf.mxu0
    %v3236 = vpop.f32.mrf.mxu0
    %v3237 = vadd.f32 %v3101, %v3236
    %v3238 = vpop.f32.mrf.mxu0
    %3239 = vmatprep.mubr.bf16.mxu0 %v2277
    %3240 = vmatmul.mubr.bf16.gmra.mxu0 %v2276
    %v3241 = vpop.f32.mrf.mxu0
    %v3242 = vadd.f32 %v3106, %v3241
    %v3243 = vpop.f32.mrf.mxu0
    %v3244 = vpop.f32.mrf.mxu0
    %v3245 = vadd.f32 %v3109, %v3244
    %v3246 = vpop.f32.mrf.mxu0
    %3247 = vmatprep.mubr.bf16.mxu0 %v2286
    %3248 = vmatmul.mubr.bf16.gmra.mxu0 %v2285
    %v3249 = vpop.f32.mrf.mxu0
    %v3250 = vadd.f32 %v3114, %v3249
    %v3251 = vpop.f32.mrf.mxu0
    %v3252 = vpop.f32.mrf.mxu0
    %v3253 = vadd.f32 %v3117, %v3252
    %v3254 = vpop.f32.mrf.mxu0
    %3255 = vmatprep.mubr.bf16.mxu0 %v2295
    %3256 = vmatmul.mubr.bf16.gmra.mxu0 %v2294
    %v3257 = vpop.f32.mrf.mxu0
    %v3258 = vadd.f32 %v3122, %v3257
    %v3259 = vpop.f32.mrf.mxu0
    %v3260 = vpop.f32.mrf.mxu0
    %v3261 = vadd.f32 %v3125, %v3260
    %v3262 = vpop.f32.mrf.mxu0
    %3263 = vmatprep.mubr.bf16.mxu0 %v2304
    %3264 = vmatmul.mubr.bf16.gmra.mxu0 %v2303
    %v3265 = vpop.f32.mrf.mxu0
    %v3266 = vadd.f32 %v3130, %v3265
    %v3267 = vpop.f32.mrf.mxu0
    %v3268 = vpop.f32.mrf.mxu0
    %v3269 = vadd.f32 %v3133, %v3268
    %v3270 = vpop.f32.mrf.mxu0
    %3271 = vmatprep.mubr.bf16.mxu0 %v2313
    %3272 = vmatmul.mubr.bf16.gmra.mxu0 %v2312
    %v3273 = vpop.f32.mrf.mxu0
    %v3274 = vadd.f32 %v3138, %v3273
    %v3275 = vpop.f32.mrf.mxu0
    %v3276 = vpop.f32.mrf.mxu0
    %v3277 = vadd.f32 %v3141, %v3276
    %v3278 = vpop.f32.mrf.mxu0
    %3279 = vmatprep.mubr.bf16.mxu0 %v2322
    %3280 = vmatmul.mubr.bf16.gmra.mxu0 %v2321
    %v3281 = vpop.f32.mrf.mxu0
    %v3282 = vadd.f32 %v3146, %v3281
    %v3283 = vpop.f32.mrf.mxu0
    %v3284 = vpop.f32.mrf.mxu0
    %v3285 = vadd.f32 %v3149, %v3284
    %v3286 = vpop.f32.mrf.mxu0
    %3287 = vmatprep.mubr.bf16.mxu0 %v2331
    %3288 = vmatmul.mubr.bf16.gmra.mxu0 %v2330
    %v3289 = vpop.f32.mrf.mxu0
    %v3290 = vadd.f32 %v3154, %v3289
    %v3291 = vpop.f32.mrf.mxu0
    %v3292 = vpop.f32.mrf.mxu0
    %v3293 = vadd.f32 %v3157, %v3292
    %v3294 = vpop.f32.mrf.mxu0
    %3295 = vmatprep.mubr.bf16.mxu0 %v2340
    %3296 = vmatmul.mubr.bf16.gmra.mxu0 %v2339
    %v3297 = vpop.f32.mrf.mxu0
    %v3298 = vadd.f32 %v3162, %v3297
    %v3299 = vpop.f32.mrf.mxu0
    %v3300 = vpop.f32.mrf.mxu0
    %v3301 = vadd.f32 %v3165, %v3300
    %v3302 = vpop.f32.mrf.mxu0
    %3303 = vmatprep.mubr.bf16.mxu0 %v2349
    %3304 = vmatmul.mubr.bf16.gmra.mxu0 %v2348
    %v3305 = vpop.f32.mrf.mxu0
    %v3306 = vadd.f32 %v3170, %v3305
    %v3307 = vpop.f32.mrf.mxu0
    %v3308 = vpop.f32.mrf.mxu0
    %v3309 = vadd.f32 %v3173, %v3308
    %v3310 = vpop.f32.mrf.mxu0
    %3311 = vmatprep.mubr.bf16.mxu0 %v2358
    %3312 = vmatmul.mubr.bf16.gmra.mxu0 %v2357
    %v3313 = vpop.f32.mrf.mxu0
    %v3314 = vadd.f32 %v3178, %v3313
    %v3315 = vpop.f32.mrf.mxu0
    %v3316 = vpop.f32.mrf.mxu0
    %v3317 = vpop.f32.mrf.mxu0
    %3318 = vdwg.mxu0
    %3319 = vmatprep.subr.bf16.mxu0 0
    %3320 = vmatpush1.bf16.msra.mxu0 %v2822
    %3321 = vmatprep.subr.bf16.mxu0 0
    %3322 = vmatpush1.bf16.msra.mxu0 %v2821
    %3323 = vmatprep.subr.bf16.mxu0 0
    %3324 = vmatpush1.bf16.msra.mxu0 %v2820
    %3325 = vmatprep.subr.bf16.mxu0 0
    %3326 = vmatpush1.bf16.msra.mxu0 %v2819
    %3327 = vmatprep.subr.bf16.mxu0 0
    %3328 = vmatpush1.bf16.msra.mxu0 %v2818
    %3329 = vmatprep.subr.bf16.mxu0 0
    %3330 = vmatpush1.bf16.msra.mxu0 %v2817
    %3331 = vmatprep.subr.bf16.mxu0 0
    %3332 = vmatpush1.bf16.msra.mxu0 %v2816
    %3333 = vmatprep.subr.bf16.mxu0 0
    %3334 = vmatpush1.bf16.msra.mxu0 %v2815
    %3335 = vmatprep.subr.bf16.mxu0 0
    %3336 = vmatpush2.bf16.msra.mxu0 %v2830
    %3337 = vmatprep.subr.bf16.mxu0 0
    %3338 = vmatpush2.bf16.msra.mxu0 %v2829
    %3339 = vmatprep.subr.bf16.mxu0 0
    %3340 = vmatpush2.bf16.msra.mxu0 %v2828
    %3341 = vmatprep.subr.bf16.mxu0 0
    %3342 = vmatpush2.bf16.msra.mxu0 %v2827
    %3343 = vmatprep.subr.bf16.mxu0 0
    %3344 = vmatpush2.bf16.msra.mxu0 %v2826
    %3345 = vmatprep.subr.bf16.mxu0 0
    %3346 = vmatpush2.bf16.msra.mxu0 %v2825
    %3347 = vmatprep.subr.bf16.mxu0 0
    %3348 = vmatpush2.bf16.msra.mxu0 %v2824
    %3349 = vmatprep.subr.bf16.mxu0 0
    %3350 = vmatpush2.bf16.msra.mxu0 %v2823
    %3351 = vmatprep.mubr.bf16.mxu0 %v2252
    %3352 = vmatmul.mubr.bf16.gmra.mxu0 %v2251
    %v3353 = vpop.f32.mrf.mxu0
    %v3354 = vadd.f32 %v3218, %v3353
    %v3355 = vpop.f32.mrf.mxu0
    %v3356 = vpop.f32.mrf.mxu0
    %v3357 = vadd.f32 %v3221, %v3356
    %v3358 = vpop.f32.mrf.mxu0
    %3359 = vmatprep.mubr.bf16.mxu0 %v2261
    %3360 = vmatmul.mubr.bf16.gmra.mxu0 %v2260
    %v3361 = vpop.f32.mrf.mxu0
    %v3362 = vadd.f32 %v3226, %v3361
    %v3363 = vpop.f32.mrf.mxu0
    %v3364 = vpop.f32.mrf.mxu0
    %v3365 = vadd.f32 %v3229, %v3364
    %v3366 = vpop.f32.mrf.mxu0
    %3367 = vmatprep.mubr.bf16.mxu0 %v2270
    %3368 = vmatmul.mubr.bf16.gmra.mxu0 %v2269
    %v3369 = vpop.f32.mrf.mxu0
    %v3370 = vadd.f32 %v3234, %v3369
    %v3371 = vpop.f32.mrf.mxu0
    %v3372 = vpop.f32.mrf.mxu0
    %v3373 = vadd.f32 %v3237, %v3372
    %v3374 = vpop.f32.mrf.mxu0
    %3375 = vmatprep.mubr.bf16.mxu0 %v2279
    %3376 = vmatmul.mubr.bf16.gmra.mxu0 %v2278
    %v3377 = vpop.f32.mrf.mxu0
    %v3378 = vadd.f32 %v3242, %v3377
    %v3379 = vpop.f32.mrf.mxu0
    %v3380 = vpop.f32.mrf.mxu0
    %v3381 = vadd.f32 %v3245, %v3380
    %v3382 = vpop.f32.mrf.mxu0
    %3383 = vmatprep.mubr.bf16.mxu0 %v2288
    %3384 = vmatmul.mubr.bf16.gmra.mxu0 %v2287
    %v3385 = vpop.f32.mrf.mxu0
    %v3386 = vadd.f32 %v3250, %v3385
    %v3387 = vpop.f32.mrf.mxu0
    %v3388 = vpop.f32.mrf.mxu0
    %v3389 = vadd.f32 %v3253, %v3388
    %v3390 = vpop.f32.mrf.mxu0
    %3391 = vmatprep.mubr.bf16.mxu0 %v2297
    %3392 = vmatmul.mubr.bf16.gmra.mxu0 %v2296
    %v3393 = vpop.f32.mrf.mxu0
    %v3394 = vadd.f32 %v3258, %v3393
    %v3395 = vpop.f32.mrf.mxu0
    %v3396 = vpop.f32.mrf.mxu0
    %v3397 = vadd.f32 %v3261, %v3396
    %v3398 = vpop.f32.mrf.mxu0
    %3399 = vmatprep.mubr.bf16.mxu0 %v2306
    %3400 = vmatmul.mubr.bf16.gmra.mxu0 %v2305
    %v3401 = vpop.f32.mrf.mxu0
    %v3402 = vadd.f32 %v3266, %v3401
    %v3403 = vpop.f32.mrf.mxu0
    %v3404 = vpop.f32.mrf.mxu0
    %v3405 = vadd.f32 %v3269, %v3404
    %v3406 = vpop.f32.mrf.mxu0
    %3407 = vmatprep.mubr.bf16.mxu0 %v2315
    %3408 = vmatmul.mubr.bf16.gmra.mxu0 %v2314
    %v3409 = vpop.f32.mrf.mxu0
    %v3410 = vadd.f32 %v3274, %v3409
    %v3411 = vpop.f32.mrf.mxu0
    %v3412 = vpop.f32.mrf.mxu0
    %v3413 = vadd.f32 %v3277, %v3412
    %v3414 = vpop.f32.mrf.mxu0
    %3415 = vmatprep.mubr.bf16.mxu0 %v2324
    %3416 = vmatmul.mubr.bf16.gmra.mxu0 %v2323
    %v3417 = vpop.f32.mrf.mxu0
    %v3418 = vadd.f32 %v3282, %v3417
    %v3419 = vpop.f32.mrf.mxu0
    %v3420 = vpop.f32.mrf.mxu0
    %v3421 = vadd.f32 %v3285, %v3420
    %v3422 = vpop.f32.mrf.mxu0
    %3423 = vmatprep.mubr.bf16.mxu0 %v2333
    %3424 = vmatmul.mubr.bf16.gmra.mxu0 %v2332
    %v3425 = vpop.f32.mrf.mxu0
    %v3426 = vadd.f32 %v3290, %v3425
    %v3427 = vpop.f32.mrf.mxu0
    %v3428 = vpop.f32.mrf.mxu0
    %v3429 = vadd.f32 %v3293, %v3428
    %v3430 = vpop.f32.mrf.mxu0
    %3431 = vmatprep.mubr.bf16.mxu0 %v2342
    %3432 = vmatmul.mubr.bf16.gmra.mxu0 %v2341
    %v3433 = vpop.f32.mrf.mxu0
    %v3434 = vadd.f32 %v3298, %v3433
    %v3435 = vpop.f32.mrf.mxu0
    %v3436 = vpop.f32.mrf.mxu0
    %v3437 = vadd.f32 %v3301, %v3436
    %v3438 = vpop.f32.mrf.mxu0
    %3439 = vmatprep.mubr.bf16.mxu0 %v2351
    %3440 = vmatmul.mubr.bf16.gmra.mxu0 %v2350
    %v3441 = vpop.f32.mrf.mxu0
    %v3442 = vadd.f32 %v3306, %v3441
    %v3443 = vpop.f32.mrf.mxu0
    %v3444 = vpop.f32.mrf.mxu0
    %v3445 = vadd.f32 %v3309, %v3444
    %v3446 = vpop.f32.mrf.mxu0
    %3447 = vmatprep.mubr.bf16.mxu0 %v2360
    %3448 = vmatmul.mubr.bf16.gmra.mxu0 %v2359
    %v3449 = vpop.f32.mrf.mxu0
    %v3450 = vadd.f32 %v3314, %v3449
    %v3451 = vpop.f32.mrf.mxu0
    %v3452 = vpop.f32.mrf.mxu0
    %v3453 = vpop.f32.mrf.mxu0
    %3454 = vdwg.mxu0
    %3455 = vmatprep.subr.bf16.mxu0 0
    %3456 = vmatpush1.bf16.msra.mxu0 %v2838
    %3457 = vmatprep.subr.bf16.mxu0 0
    %3458 = vmatpush1.bf16.msra.mxu0 %v2837
    %3459 = vmatprep.subr.bf16.mxu0 0
    %3460 = vmatpush1.bf16.msra.mxu0 %v2836
    %3461 = vmatprep.subr.bf16.mxu0 0
    %3462 = vmatpush1.bf16.msra.mxu0 %v2835
    %3463 = vmatprep.subr.bf16.mxu0 0
    %3464 = vmatpush1.bf16.msra.mxu0 %v2834
    %3465 = vmatprep.subr.bf16.mxu0 0
    %3466 = vmatpush1.bf16.msra.mxu0 %v2833
    %3467 = vmatprep.subr.bf16.mxu0 0
    %3468 = vmatpush1.bf16.msra.mxu0 %v2832
    %3469 = vmatprep.subr.bf16.mxu0 0
    %3470 = vmatpush1.bf16.msra.mxu0 %v2831
    %3471 = vmatprep.subr.bf16.mxu0 0
    %3472 = vmatpush2.bf16.msra.mxu0 0
    %3473 = vmatprep.subr.bf16.mxu0 0
    %3474 = vmatpush2.bf16.msra.mxu0 0
    %3475 = vmatprep.subr.bf16.mxu0 0
    %3476 = vmatpush2.bf16.msra.mxu0 0
    %3477 = vmatprep.subr.bf16.mxu0 0
    %3478 = vmatpush2.bf16.msra.mxu0 0
    %3479 = vmatprep.subr.bf16.mxu0 0
    %3480 = vmatpush2.bf16.msra.mxu0 0
    %3481 = vmatprep.subr.bf16.mxu0 0
    %3482 = vmatpush2.bf16.msra.mxu0 0
    %3483 = vmatprep.subr.bf16.mxu0 0
    %3484 = vmatpush2.bf16.msra.mxu0 0
    %3485 = vmatprep.subr.bf16.mxu0 0
    %3486 = vmatpush2.bf16.msra.mxu0 0
    %3487 = vmatprep.mubr.bf16.mxu0 0
    %3488 = vmatmul.mubr.bf16.gmra.mxu0 %v2253
    %v3489 = vpop.f32.mrf.mxu0
    %v3490 = vadd.f32 %v3354, %v3489
    %v3491 = vpop.f32.mrf.mxu0
    %v3492 = vpop.f32.mrf.mxu0
    %v3493 = vadd.f32 %v3357, %v3492
    %v3494 = vpop.f32.mrf.mxu0
    %3495 = vmatprep.mubr.bf16.mxu0 0
    %3496 = vmatmul.mubr.bf16.gmra.mxu0 %v2262
    %v3497 = vpop.f32.mrf.mxu0
    %v3498 = vadd.f32 %v3362, %v3497
    %v3499 = vpop.f32.mrf.mxu0
    %v3500 = vpop.f32.mrf.mxu0
    %v3501 = vadd.f32 %v3365, %v3500
    %v3502 = vpop.f32.mrf.mxu0
    %3503 = vmatprep.mubr.bf16.mxu0 0
    %3504 = vmatmul.mubr.bf16.gmra.mxu0 %v2271
    %v3505 = vpop.f32.mrf.mxu0
    %v3506 = vadd.f32 %v3370, %v3505
    %v3507 = vpop.f32.mrf.mxu0
    %v3508 = vpop.f32.mrf.mxu0
    %v3509 = vadd.f32 %v3373, %v3508
    %v3510 = vpop.f32.mrf.mxu0
    %3511 = vmatprep.mubr.bf16.mxu0 0
    %3512 = vmatmul.mubr.bf16.gmra.mxu0 %v2280
    %v3513 = vpop.f32.mrf.mxu0
    %v3514 = vadd.f32 %v3378, %v3513
    %v3515 = vpop.f32.mrf.mxu0
    %v3516 = vpop.f32.mrf.mxu0
    %v3517 = vadd.f32 %v3381, %v3516
    %v3518 = vpop.f32.mrf.mxu0
    %3519 = vmatprep.mubr.bf16.mxu0 0
    %3520 = vmatmul.mubr.bf16.gmra.mxu0 %v2289
    %v3521 = vpop.f32.mrf.mxu0
    %v3522 = vadd.f32 %v3386, %v3521
    %v3523 = vpop.f32.mrf.mxu0
    %v3524 = vpop.f32.mrf.mxu0
    %v3525 = vadd.f32 %v3389, %v3524
    %v3526 = vpop.f32.mrf.mxu0
    %3527 = vmatprep.mubr.bf16.mxu0 0
    %3528 = vmatmul.mubr.bf16.gmra.mxu0 %v2298
    %v3529 = vpop.f32.mrf.mxu0
    %v3530 = vadd.f32 %v3394, %v3529
    %v3531 = vpop.f32.mrf.mxu0
    %v3532 = vpop.f32.mrf.mxu0
    %v3533 = vadd.f32 %v3397, %v3532
    %v3534 = vpop.f32.mrf.mxu0
    %3535 = vmatprep.mubr.bf16.mxu0 0
    %3536 = vmatmul.mubr.bf16.gmra.mxu0 %v2307
    %v3537 = vpop.f32.mrf.mxu0
    %v3538 = vadd.f32 %v3402, %v3537
    %v3539 = vpop.f32.mrf.mxu0
    %v3540 = vpop.f32.mrf.mxu0
    %v3541 = vadd.f32 %v3405, %v3540
    %v3542 = vpop.f32.mrf.mxu0
    %3543 = vmatprep.mubr.bf16.mxu0 0
    %3544 = vmatmul.mubr.bf16.gmra.mxu0 %v2316
    %v3545 = vpop.f32.mrf.mxu0
    %v3546 = vadd.f32 %v3410, %v3545
    %v3547 = vpop.f32.mrf.mxu0
    %v3548 = vpop.f32.mrf.mxu0
    %v3549 = vadd.f32 %v3413, %v3548
    %v3550 = vpop.f32.mrf.mxu0
    %3551 = vmatprep.mubr.bf16.mxu0 0
    %3552 = vmatmul.mubr.bf16.gmra.mxu0 %v2325
    %v3553 = vpop.f32.mrf.mxu0
    %v3554 = vadd.f32 %v3418, %v3553
    %v3555 = vpop.f32.mrf.mxu0
    %v3556 = vpop.f32.mrf.mxu0
    %v3557 = vadd.f32 %v3421, %v3556
    %v3558 = vpop.f32.mrf.mxu0
    %3559 = vmatprep.mubr.bf16.mxu0 0
    %3560 = vmatmul.mubr.bf16.gmra.mxu0 %v2334
    %v3561 = vpop.f32.mrf.mxu0
    %v3562 = vadd.f32 %v3426, %v3561
    %v3563 = vpop.f32.mrf.mxu0
    %v3564 = vpop.f32.mrf.mxu0
    %v3565 = vadd.f32 %v3429, %v3564
    %v3566 = vpop.f32.mrf.mxu0
    %3567 = vmatprep.mubr.bf16.mxu0 0
    %3568 = vmatmul.mubr.bf16.gmra.mxu0 %v2343
    %v3569 = vpop.f32.mrf.mxu0
    %v3570 = vadd.f32 %v3434, %v3569
    %v3571 = vpop.f32.mrf.mxu0
    %v3572 = vpop.f32.mrf.mxu0
    %v3573 = vadd.f32 %v3437, %v3572
    %v3574 = vpop.f32.mrf.mxu0
    %3575 = vmatprep.mubr.bf16.mxu0 0
    %3576 = vmatmul.mubr.bf16.gmra.mxu0 %v2352
    %v3577 = vpop.f32.mrf.mxu0
    %v3578 = vadd.f32 %v3442, %v3577
    %v3579 = vpop.f32.mrf.mxu0
    %v3580 = vpop.f32.mrf.mxu0
    %v3581 = vadd.f32 %v3445, %v3580
    %v3582 = vpop.f32.mrf.mxu0
    %3583 = vmatprep.mubr.bf16.mxu0 0
    %3584 = vmatmul.mubr.bf16.gmra.mxu0 %v2361
    %v3585 = vpop.f32.mrf.mxu0
    %v3586 = vadd.f32 %v3450, %v3585
    %v3587 = vpop.f32.mrf.mxu0
    %v3588 = vpop.f32.mrf.mxu0
    %v3589 = vpop.f32.mrf.mxu0
    %3590 = vdwg.mxu0
    %v3591 = vld [vmem:[#allocation13] sm:$0x1]
    %v3593 = vlaneseq
    %v3594 = vshrl.u32 %v3593, 7
    %v3595 = vsub.s32 0, %v3594
    %v3596 = vrot.slane %v3591, %v3595
    %v3598 = vmul.f32 %v3490, %v3596
    %v3599 = vmul.f32 %v3493, %v3596
    %v3600 = vmul.f32 %v3498, %v3596
    %v3601 = vmul.f32 %v3501, %v3596
    %v3602 = vmul.f32 %v3506, %v3596
    %v3603 = vmul.f32 %v3509, %v3596
    %v3604 = vmul.f32 %v3514, %v3596
    %v3605 = vmul.f32 %v3517, %v3596
    %v3606 = vmul.f32 %v3522, %v3596
    %v3607 = vmul.f32 %v3525, %v3596
    %v3608 = vmul.f32 %v3530, %v3596
    %v3609 = vmul.f32 %v3533, %v3596
    %v3610 = vmul.f32 %v3538, %v3596
    %v3611 = vmul.f32 %v3541, %v3596
    %v3612 = vmul.f32 %v3546, %v3596
    %v3613 = vmul.f32 %v3549, %v3596
    %v3614 = vmul.f32 %v3554, %v3596
    %v3615 = vmul.f32 %v3557, %v3596
    %v3616 = vmul.f32 %v3562, %v3596
    %v3617 = vmul.f32 %v3565, %v3596
    %v3618 = vmul.f32 %v3570, %v3596
    %v3619 = vmul.f32 %v3573, %v3596
    %v3620 = vmul.f32 %v3578, %v3596
    %v3621 = vmul.f32 %v3581, %v3596
    %v3622 = vmul.f32 %v3586, %v3596
    %v3623 = vld [vmem:[#allocation14] sm:$0x1]
    %v3625 = vlaneseq
    %v3626 = vshrl.u32 %v3625, 7
    %v3627 = vsub.s32 0, %v3626
    %v3628 = vrot.slane %v3623, %v3627
    %v3630 = vadd.f32 %v3598, %v3628
    %v3631 = vadd.f32 %v3599, %v3628
    %v3632 = vadd.f32 %v3600, %v3628
    %v3633 = vadd.f32 %v3601, %v3628
    %v3634 = vadd.f32 %v3602, %v3628
    %v3635 = vadd.f32 %v3603, %v3628
    %v3636 = vadd.f32 %v3604, %v3628
    %v3637 = vadd.f32 %v3605, %v3628
    %v3638 = vadd.f32 %v3606, %v3628
    %v3639 = vadd.f32 %v3607, %v3628
    %v3640 = vadd.f32 %v3608, %v3628
    %v3641 = vadd.f32 %v3609, %v3628
    %v3642 = vadd.f32 %v3610, %v3628
    %v3643 = vadd.f32 %v3611, %v3628
    %v3644 = vadd.f32 %v3612, %v3628
    %v3645 = vadd.f32 %v3613, %v3628
    %v3646 = vadd.f32 %v3614, %v3628
    %v3647 = vadd.f32 %v3615, %v3628
    %v3648 = vadd.f32 %v3616, %v3628
    %v3649 = vadd.f32 %v3617, %v3628
    %v3650 = vadd.f32 %v3618, %v3628
    %v3651 = vadd.f32 %v3619, %v3628
    %v3652 = vadd.f32 %v3620, %v3628
    %v3653 = vadd.f32 %v3621, %v3628
    %v3654 = vadd.f32 %v3622, %v3628
    %v3655 = vmax.f32 %v3630, 0.0
    %v3656 = vmax.f32 %v3631, 0.0
    %v3657 = vmax.f32 %v3632, 0.0
    %v3658 = vmax.f32 %v3633, 0.0
    %v3659 = vmax.f32 %v3634, 0.0
    %v3660 = vmax.f32 %v3635, 0.0
    %v3661 = vmax.f32 %v3636, 0.0
    %v3662 = vmax.f32 %v3637, 0.0
    %v3663 = vmax.f32 %v3638, 0.0
    %v3664 = vmax.f32 %v3639, 0.0
    %v3665 = vmax.f32 %v3640, 0.0
    %v3666 = vmax.f32 %v3641, 0.0
    %v3667 = vmax.f32 %v3642, 0.0
    %v3668 = vmax.f32 %v3643, 0.0
    %v3669 = vmax.f32 %v3644, 0.0
    %v3670 = vmax.f32 %v3645, 0.0
    %v3671 = vmax.f32 %v3646, 0.0
    %v3672 = vmax.f32 %v3647, 0.0
    %v3673 = vmax.f32 %v3648, 0.0
    %v3674 = vmax.f32 %v3649, 0.0
    %v3675 = vmax.f32 %v3650, 0.0
    %v3676 = vmax.f32 %v3651, 0.0
    %v3677 = vmax.f32 %v3652, 0.0
    %v3678 = vmax.f32 %v3653, 0.0
    %v3679 = vmax.f32 %v3654, 0.0
    %v3680 = vld [vmem:[%s2] sm:$0xff]
    %v3681 = vld [vmem:[%s2 + $0x8] sm:$0xff]
    %v3682 = vld [vmem:[%s2 + $0x10] sm:$0xff]
    %v3683 = vld [vmem:[%s2 + $0x18] sm:$0xff]
    %v3684 = vld [vmem:[%s2 + $0x20] sm:$0xff]
    %v3685 = vld [vmem:[%s2 + $0x28] sm:$0xff]
    %v3686 = vld [vmem:[%s2 + $0x30] sm:$0xff]
    %v3687 = vld [vmem:[%s2 + $0x38] sm:$0xff]
    %v3688 = vld [vmem:[%s2 + $0x40] sm:$0xff]
    %v3689 = vld [vmem:[%s2 + $0x48] sm:$0xff]
    %v3690 = vld [vmem:[%s2 + $0x50] sm:$0xff]
    %v3691 = vld [vmem:[%s2 + $0x58] sm:$0xff]
    %v3692 = vld [vmem:[%s2 + $0x60] sm:$0xff]
    %v3693 = vld [vmem:[%s2 + $0x68] sm:$0xff]
    %v3694 = vld [vmem:[%s2 + $0x70] sm:$0xff]
    %v3695 = vld [vmem:[%s2 + $0x78] sm:$0xff]
    %v3696 = vld [vmem:[%s2 + $0x80] sm:$0xff]
    %v3697 = vld [vmem:[%s2 + $0x88] sm:$0xff]
    %v3698 = vld [vmem:[%s2 + $0x90] sm:$0xff]
    %v3699 = vld [vmem:[%s2 + $0x98] sm:$0xff]
    %v3700 = vld [vmem:[%s2 + $0xa0] sm:$0xff]
    %v3701 = vld [vmem:[%s2 + $0xa8] sm:$0xff]
    %v3702 = vld [vmem:[%s2 + $0xb0] sm:$0xff]
    %v3703 = vld [vmem:[%s2 + $0xb8] sm:$0xff]
    %v3704 = vld [vmem:[%s2 + $0xc0] sm:$0xff]
    %3706 = vset.pattern.permute.xlu0 0
    %3707 = vperm.xlu0 %3706, %v3680
    %v3708 = vpop.permute.xlu0 %3707
    %3711 = vset.pattern.permute.xlu0 0
    %3712 = vperm.xlu0 %3711, %v3681
    %v3713 = vpop.permute.xlu0 %3712
    %3716 = vset.pattern.permute.xlu0 0
    %3717 = vperm.xlu0 %3716, %v3682
    %v3718 = vpop.permute.xlu0 %3717
    %3721 = vset.pattern.permute.xlu0 0
    %3722 = vperm.xlu0 %3721, %v3683
    %v3723 = vpop.permute.xlu0 %3722
    %3726 = vset.pattern.permute.xlu0 0
    %3727 = vperm.xlu0 %3726, %v3684
    %v3728 = vpop.permute.xlu0 %3727
    %3731 = vset.pattern.permute.xlu0 0
    %3732 = vperm.xlu0 %3731, %v3685
    %v3733 = vpop.permute.xlu0 %3732
    %3736 = vset.pattern.permute.xlu0 0
    %3737 = vperm.xlu0 %3736, %v3686
    %v3738 = vpop.permute.xlu0 %3737
    %3741 = vset.pattern.permute.xlu0 0
    %3742 = vperm.xlu0 %3741, %v3687
    %v3743 = vpop.permute.xlu0 %3742
    %3746 = vset.pattern.permute.xlu0 0
    %3747 = vperm.xlu0 %3746, %v3688
    %v3748 = vpop.permute.xlu0 %3747
    %3751 = vset.pattern.permute.xlu0 0
    %3752 = vperm.xlu0 %3751, %v3689
    %v3753 = vpop.permute.xlu0 %3752
    %3756 = vset.pattern.permute.xlu0 0
    %3757 = vperm.xlu0 %3756, %v3690
    %v3758 = vpop.permute.xlu0 %3757
    %3761 = vset.pattern.permute.xlu0 0
    %3762 = vperm.xlu0 %3761, %v3691
    %v3763 = vpop.permute.xlu0 %3762
    %3766 = vset.pattern.permute.xlu0 0
    %3767 = vperm.xlu0 %3766, %v3692
    %v3768 = vpop.permute.xlu0 %3767
    %3771 = vset.pattern.permute.xlu0 0
    %3772 = vperm.xlu0 %3771, %v3693
    %v3773 = vpop.permute.xlu0 %3772
    %3776 = vset.pattern.permute.xlu0 0
    %3777 = vperm.xlu0 %3776, %v3694
    %v3778 = vpop.permute.xlu0 %3777
    %3781 = vset.pattern.permute.xlu0 0
    %3782 = vperm.xlu0 %3781, %v3695
    %v3783 = vpop.permute.xlu0 %3782
    %3786 = vset.pattern.permute.xlu0 0
    %3787 = vperm.xlu0 %3786, %v3696
    %v3788 = vpop.permute.xlu0 %3787
    %3791 = vset.pattern.permute.xlu0 0
    %3792 = vperm.xlu0 %3791, %v3697
    %v3793 = vpop.permute.xlu0 %3792
    %3796 = vset.pattern.permute.xlu0 0
    %3797 = vperm.xlu0 %3796, %v3698
    %v3798 = vpop.permute.xlu0 %3797
    %3801 = vset.pattern.permute.xlu0 0
    %3802 = vperm.xlu0 %3801, %v3699
    %v3803 = vpop.permute.xlu0 %3802
    %3806 = vset.pattern.permute.xlu0 0
    %3807 = vperm.xlu0 %3806, %v3700
    %v3808 = vpop.permute.xlu0 %3807
    %3811 = vset.pattern.permute.xlu0 0
    %3812 = vperm.xlu0 %3811, %v3701
    %v3813 = vpop.permute.xlu0 %3812
    %3816 = vset.pattern.permute.xlu0 0
    %3817 = vperm.xlu0 %3816, %v3702
    %v3818 = vpop.permute.xlu0 %3817
    %3821 = vset.pattern.permute.xlu0 0
    %3822 = vperm.xlu0 %3821, %v3703
    %v3823 = vpop.permute.xlu0 %3822
    %3826 = vset.pattern.permute.xlu0 0
    %3827 = vperm.xlu0 %3826, %v3704
    %v3828 = vpop.permute.xlu0 %3827
    %v3830 = vmul.f32 %v3655, %v3708
    %v3831 = vmul.f32 %v3656, %v3713
    %v3832 = vmul.f32 %v3657, %v3718
    %v3833 = vmul.f32 %v3658, %v3723
    %v3834 = vmul.f32 %v3659, %v3728
    %v3835 = vmul.f32 %v3660, %v3733
    %v3836 = vmul.f32 %v3661, %v3738
    %v3837 = vmul.f32 %v3662, %v3743
    %v3838 = vmul.f32 %v3663, %v3748
    %v3839 = vmul.f32 %v3664, %v3753
    %v3840 = vmul.f32 %v3665, %v3758
    %v3841 = vmul.f32 %v3666, %v3763
    %v3842 = vmul.f32 %v3667, %v3768
    %v3843 = vmul.f32 %v3668, %v3773
    %v3844 = vmul.f32 %v3669, %v3778
    %v3845 = vmul.f32 %v3670, %v3783
    %v3846 = vmul.f32 %v3671, %v3788
    %v3847 = vmul.f32 %v3672, %v3793
    %v3848 = vmul.f32 %v3673, %v3798
    %v3849 = vmul.f32 %v3674, %v3803
    %v3850 = vmul.f32 %v3675, %v3808
    %v3851 = vmul.f32 %v3676, %v3813
    %v3852 = vmul.f32 %v3677, %v3818
    %v3853 = vmul.f32 %v3678, %v3823
    %v3854 = vmul.f32 %v3679, %v3828
    %3855 = vst [vmem:[#allocation5] sm:$0xff] %v3830
    %3856 = vst [vmem:[#allocation5 + $0x8] sm:$0xff] %v3831
    %3857 = vst [vmem:[#allocation5 + $0x10] sm:$0xff] %v3832
    %3858 = vst [vmem:[#allocation5 + $0x18] sm:$0xff] %v3833
    %3859 = vst [vmem:[#allocation5 + $0x20] sm:$0xff] %v3834
    %3860 = vst [vmem:[#allocation5 + $0x28] sm:$0xff] %v3835
    %3861 = vst [vmem:[#allocation5 + $0x30] sm:$0xff] %v3836
    %3862 = vst [vmem:[#allocation5 + $0x38] sm:$0xff] %v3837
    %3863 = vst [vmem:[#allocation5 + $0x40] sm:$0xff] %v3838
    %3864 = vst [vmem:[#allocation5 + $0x48] sm:$0xff] %v3839
    %3865 = vst [vmem:[#allocation5 + $0x50] sm:$0xff] %v3840
    %3866 = vst [vmem:[#allocation5 + $0x58] sm:$0xff] %v3841
    %3867 = vst [vmem:[#allocation5 + $0x60] sm:$0xff] %v3842
    %3868 = vst [vmem:[#allocation5 + $0x68] sm:$0xff] %v3843
    %3869 = vst [vmem:[#allocation5 + $0x70] sm:$0xff] %v3844
    %3870 = vst [vmem:[#allocation5 + $0x78] sm:$0xff] %v3845
    %3871 = vst [vmem:[#allocation5 + $0x80] sm:$0xff] %v3846
    %3872 = vst [vmem:[#allocation5 + $0x88] sm:$0xff] %v3847
    %3873 = vst [vmem:[#allocation5 + $0x90] sm:$0xff] %v3848
    %3874 = vst [vmem:[#allocation5 + $0x98] sm:$0xff] %v3849
    %3875 = vst [vmem:[#allocation5 + $0xa0] sm:$0xff] %v3850
    %3876 = vst [vmem:[#allocation5 + $0xa8] sm:$0xff] %v3851
    %3877 = vst [vmem:[#allocation5 + $0xb0] sm:$0xff] %v3852
    %3878 = vst [vmem:[#allocation5 + $0xb8] sm:$0xff] %v3853
    %3879 = vst [vmem:[#allocation5 + $0xc0] sm:$0xff] %v3854
    %v3880 = vld [vmem:[#allocation5] ss:$2 sm:$0xff]
    %s3881 = scalar_lea.vmem [#allocation5], 16
    %v3882 = vld [vmem:[%s3881] ss:$2 sm:$0xff]
    %s3883 = scalar_lea.vmem [#allocation5], 32
    %v3884 = vld [vmem:[%s3883] ss:$2 sm:$0xff]
    %s3885 = scalar_lea.vmem [#allocation5], 48
    %v3886 = vld [vmem:[%s3885] ss:$2 sm:$0xff]
    %s3887 = scalar_lea.vmem [#allocation5], 64
    %v3888 = vld [vmem:[%s3887] ss:$2 sm:$0xff]
    %s3889 = scalar_lea.vmem [#allocation5], 80
    %v3890 = vld [vmem:[%s3889] ss:$2 sm:$0xff]
    %s3891 = scalar_lea.vmem [#allocation5], 96
    %v3892 = vld [vmem:[%s3891] ss:$2 sm:$0xff]
    %s3893 = scalar_lea.vmem [#allocation5], 112
    %v3894 = vld [vmem:[%s3893] ss:$2 sm:$0xff]
    %s3895 = scalar_lea.vmem [#allocation5], 128
    %v3896 = vld [vmem:[%s3895] ss:$2 sm:$0xff]
    %s3897 = scalar_lea.vmem [#allocation5], 144
    %v3898 = vld [vmem:[%s3897] ss:$2 sm:$0xff]
    %s3899 = scalar_lea.vmem [#allocation5], 160
    %v3900 = vld [vmem:[%s3899] ss:$2 sm:$0xff]
    %s3901 = scalar_lea.vmem [#allocation5], 176
    %v3902 = vld [vmem:[%s3901] ss:$2 sm:$0xff]
    %s3903 = scalar_lea.vmem [#allocation5], 192
    %v3904 = vld [vmem:[%s3903] ss:$2 sm:$0xf]
    %s3905 = scalar_lea.vmem [#allocation5], 1
    %v3906 = vld [vmem:[%s3905] ss:$2 sm:$0xff]
    %s3907 = scalar_lea.vmem [#allocation5], 17
    %v3908 = vld [vmem:[%s3907] ss:$2 sm:$0xff]
    %s3909 = scalar_lea.vmem [#allocation5], 33
    %v3910 = vld [vmem:[%s3909] ss:$2 sm:$0xff]
    %s3911 = scalar_lea.vmem [#allocation5], 49
    %v3912 = vld [vmem:[%s3911] ss:$2 sm:$0xff]
    %s3913 = scalar_lea.vmem [#allocation5], 65
    %v3914 = vld [vmem:[%s3913] ss:$2 sm:$0xff]
    %s3915 = scalar_lea.vmem [#allocation5], 81
    %v3916 = vld [vmem:[%s3915] ss:$2 sm:$0xff]
    %s3917 = scalar_lea.vmem [#allocation5], 97
    %v3918 = vld [vmem:[%s3917] ss:$2 sm:$0xff]
    %s3919 = scalar_lea.vmem [#allocation5], 113
    %v3920 = vld [vmem:[%s3919] ss:$2 sm:$0xff]
    %s3921 = scalar_lea.vmem [#allocation5], 129
    %v3922 = vld [vmem:[%s3921] ss:$2 sm:$0xff]
    %s3923 = scalar_lea.vmem [#allocation5], 145
    %v3924 = vld [vmem:[%s3923] ss:$2 sm:$0xff]
    %s3925 = scalar_lea.vmem [#allocation5], 161
    %v3926 = vld [vmem:[%s3925] ss:$2 sm:$0xff]
    %s3927 = scalar_lea.vmem [#allocation5], 177
    %v3928 = vld [vmem:[%s3927] ss:$2 sm:$0xff]
    %s3929 = scalar_lea.vmem [#allocation5], 193
    %v3930 = vld [vmem:[%s3929] ss:$2 sm:$0xf]
    %v3931 = vmax.f32 %v3880, %v3906
    %v3932 = vmax.f32 %v3882, %v3908
    %v3933 = vmax.f32 %v3884, %v3910
    %v3934 = vmax.f32 %v3886, %v3912
    %v3935 = vmax.f32 %v3888, %v3914
    %v3936 = vmax.f32 %v3890, %v3916
    %v3937 = vmax.f32 %v3892, %v3918
    %v3938 = vmax.f32 %v3894, %v3920
    %v3939 = vmax.f32 %v3896, %v3922
    %v3940 = vmax.f32 %v3898, %v3924
    %v3941 = vmax.f32 %v3900, %v3926
    %v3942 = vmax.f32 %v3902, %v3928
    %v3943 = vmax.f32 %v3904, %v3930
    %3944 = vst [vmem:[#allocation6] sm:$0xff] %v3931
    %3945 = vst [vmem:[#allocation6 + $0x8] sm:$0xff] %v3932
    %3946 = vst [vmem:[#allocation6 + $0x10] sm:$0xff] %v3933
    %3947 = vst [vmem:[#allocation6 + $0x18] sm:$0xff] %v3934
    %3948 = vst [vmem:[#allocation6 + $0x20] sm:$0xff] %v3935
    %3949 = vst [vmem:[#allocation6 + $0x28] sm:$0xff] %v3936
    %3950 = vst [vmem:[#allocation6 + $0x30] sm:$0xff] %v3937
    %3951 = vst [vmem:[#allocation6 + $0x38] sm:$0xff] %v3938
    %3952 = vst [vmem:[#allocation6 + $0x40] sm:$0xff] %v3939
    %3953 = vst [vmem:[#allocation6 + $0x48] sm:$0xff] %v3940
    %3954 = vst [vmem:[#allocation6 + $0x50] sm:$0xff] %v3941
    %3955 = vst [vmem:[#allocation6 + $0x58] sm:$0xff] %v3942
    %3956 = vst [vmem:[#allocation6 + $0x60] sm:$0xf] %v3943
    %v3957 = vld [vmem:[#allocation6] sm:$0x1f]
    %v3958 = vld [vmem:[#allocation6 + $0x5] sm:$0x1f]
    %v3959 = vmax.f32 %v3957, %v3958
    %3960 = vst [vmem:[#allocation3 + $0x12] sm:$0x1f] %v3959
    %v3961 = vld [vmem:[#allocation6 + $0xa] sm:$0x1f]
    %v3962 = vld [vmem:[#allocation6 + $0xf] sm:$0x1f]
    %v3963 = vmax.f32 %v3961, %v3962
    %3964 = vst [vmem:[#allocation3 + $0x1a] sm:$0x1f] %v3963
    %v3965 = vld [vmem:[#allocation6 + $0x14] sm:$0x1f]
    %v3966 = vld [vmem:[#allocation6 + $0x19] sm:$0x1f]
    %v3967 = vmax.f32 %v3965, %v3966
    %3968 = vst [vmem:[#allocation3 + $0x22] sm:$0x1f] %v3967
    %v3969 = vld [vmem:[#allocation6 + $0x1e] sm:$0x1f]
    %v3970 = vld [vmem:[#allocation6 + $0x23] sm:$0x1f]
    %v3971 = vmax.f32 %v3969, %v3970
    %3972 = vst [vmem:[#allocation3 + $0x2a] sm:$0x1f] %v3971
    %v3973 = vld [vmem:[#allocation6 + $0x28] sm:$0x1f]
    %v3974 = vld [vmem:[#allocation6 + $0x2d] sm:$0x1f]
    %v3975 = vmax.f32 %v3973, %v3974
    %3976 = vst [vmem:[#allocation3 + $0x32] sm:$0x1f] %v3975
    %v3977 = vld [vmem:[#allocation6 + $0x32] sm:$0x1f]
    %v3978 = vld [vmem:[#allocation6 + $0x37] sm:$0x1f]
    %v3979 = vmax.f32 %v3977, %v3978
    %3980 = vst [vmem:[#allocation3 + $0x52] sm:$0x1f] %v3979
    %v3981 = vld [vmem:[#allocation6 + $0x3c] sm:$0x1f]
    %v3982 = vld [vmem:[#allocation6 + $0x41] sm:$0x1f]
    %v3983 = vmax.f32 %v3981, %v3982
    %3984 = vst [vmem:[#allocation3 + $0x5a] sm:$0x1f] %v3983
    %v3985 = vld [vmem:[#allocation6 + $0x46] sm:$0x1f]
    %v3986 = vld [vmem:[#allocation6 + $0x4b] sm:$0x1f]
    %v3987 = vmax.f32 %v3985, %v3986
    %3988 = vst [vmem:[#allocation3 + $0x62] sm:$0x1f] %v3987
    %v3989 = vld [vmem:[#allocation6 + $0x50] sm:$0x1f]
    %v3990 = vld [vmem:[#allocation6 + $0x55] sm:$0x1f]
    %v3991 = vmax.f32 %v3989, %v3990
    %3992 = vst [vmem:[#allocation3 + $0x6a] sm:$0x1f] %v3991
    %v3993 = vld [vmem:[#allocation6 + $0x5a] sm:$0x1f]
    %v3994 = vld [vmem:[#allocation6 + $0x5f] sm:$0x1f]
    %v3995 = vmax.f32 %v3993, %v3994
    %3996 = vst [vmem:[#allocation3 + $0x72] sm:$0x1f] %v3995
    %v3997 = vld [vmem:[#allocation3] sm:$0xff]
    %v3998 = vld [vmem:[#allocation3 + $0x8] sm:$0xff]
    %v3999 = vld [vmem:[#allocation3 + $0x10] sm:$0xff]
    %v4000 = vld [vmem:[#allocation3 + $0x18] sm:$0xff]
    %v4001 = vld [vmem:[#allocation3 + $0x20] sm:$0xff]
    %v4002 = vld [vmem:[#allocation3 + $0x28] sm:$0xff]
    %v4003 = vld [vmem:[#allocation3 + $0x30] sm:$0xff]
    %v4004 = vld [vmem:[#allocation3 + $0x38] sm:$0xff]
    %v4005 = vld [vmem:[#allocation3 + $0x40] sm:$0xff]
    %v4006 = vld [vmem:[#allocation3 + $0x48] sm:$0xff]
    %v4007 = vld [vmem:[#allocation3 + $0x50] sm:$0xff]
    %v4008 = vld [vmem:[#allocation3 + $0x58] sm:$0xff]
    %v4009 = vld [vmem:[#allocation3 + $0x60] sm:$0xff]
    %v4010 = vld [vmem:[#allocation3 + $0x68] sm:$0xff]
    %v4011 = vld [vmem:[#allocation3 + $0x70] sm:$0xff]
    %v4012 = vld [vmem:[#allocation3 + $0x78] sm:$0xff]
    %v4013 = vpack.c.bf16 %v3998, %v3997
    %v4014 = vpack.c.bf16 %v4000, %v3999
    %v4015 = vpack.c.bf16 %v4002, %v4001
    %v4016 = vpack.c.bf16 %v4004, %v4003
    %v4017 = vpack.c.bf16 %v4006, %v4005
    %v4018 = vpack.c.bf16 %v4008, %v4007
    %v4019 = vpack.c.bf16 %v4010, %v4009
    %v4020 = vpack.c.bf16 %v4012, %v4011
    %v4029 = vunpack.c.l.b16 %v4013
    %v4030 = vunpack.c.h.b16 %v4013
    %v4031 = vunpack.c.l.b16 %v4014
    %v4032 = vunpack.c.h.b16 %v4014
    %v4033 = vunpack.c.l.b16 %v4015
    %v4034 = vunpack.c.h.b16 %v4015
    %v4035 = vunpack.c.l.b16 %v4016
    %v4036 = vunpack.c.h.b16 %v4016
    %v4037 = vunpack.c.l.b16 %v4017
    %v4038 = vunpack.c.h.b16 %v4017
    %v4039 = vunpack.c.l.b16 %v4018
    %v4040 = vunpack.c.h.b16 %v4018
    %v4041 = vunpack.c.l.b16 %v4019
    %v4042 = vunpack.c.h.b16 %v4019
    %v4043 = vunpack.c.l.b16 %v4020
    %v4044 = vunpack.c.h.b16 %v4020
    %v4045 = vpack.c.b16 %v4029, %v4029
    %v4046 = vpack.c.b16 %v4030, %v4030
    %v4047 = vpack.c.b16 %v4031, %v4031
    %v4048 = vpack.c.b16 %v4032, %v4032
    %v4049 = vpack.c.b16 %v4033, %v4033
    %v4050 = vpack.c.b16 %v4034, %v4034
    %v4051 = vpack.c.b16 %v4035, %v4035
    %v4052 = vpack.c.b16 %v4036, %v4036
    %v4053 = vpack.c.b16 %v4037, %v4037
    %v4054 = vpack.c.b16 %v4038, %v4038
    %v4055 = vpack.c.b16 %v4039, %v4039
    %v4056 = vpack.c.b16 %v4040, %v4040
    %v4057 = vpack.c.b16 %v4041, %v4041
    %v4058 = vpack.c.b16 %v4042, %v4042
    %v4059 = vpack.c.b16 %v4043, %v4043
    %v4060 = vpack.c.b16 %v4044, %v4044
    %4077 = vst [vmem:[#allocation4] sm:$0xf] %v4045
    %4078 = vst [vmem:[#allocation4 + $0x24] sm:$0xf] %v4046
    %4079 = vst [vmem:[#allocation4 + $0x48] sm:$0xf] %v4047
    %4080 = vst [vmem:[#allocation4 + $0x6c] sm:$0xf] %v4048
    %4081 = vst [vmem:[#allocation4 + $0x90] sm:$0xf] %v4049
    %4082 = vst [vmem:[#allocation4 + $0xb4] sm:$0xf] %v4050
    %4083 = vst [vmem:[#allocation4 + $0xd8] sm:$0xf] %v4051
    %4084 = vst [vmem:[#allocation4 + $0xfc] sm:$0xf] %v4052
    %4085 = vst [vmem:[#allocation4 + $0x120] sm:$0xf] %v4053
    %4086 = vst [vmem:[#allocation4 + $0x144] sm:$0xf] %v4054
    %4087 = vst [vmem:[#allocation4 + $0x168] sm:$0xf] %v4055
    %4088 = vst [vmem:[#allocation4 + $0x18c] sm:$0xf] %v4056
    %4089 = vst [vmem:[#allocation4 + $0x1b0] sm:$0xf] %v4057
    %4090 = vst [vmem:[#allocation4 + $0x1d4] sm:$0xf] %v4058
    %4091 = vst [vmem:[#allocation4 + $0x1f8] sm:$0xf] %v4059
    %4092 = vst [vmem:[#allocation4 + $0x21c] sm:$0xf] %v4060
    %v4093 = vld [vmem:[#allocation3 + $0x1] sm:$0xff]
    %v4094 = vld [vmem:[#allocation3 + $0x9] sm:$0xff]
    %v4095 = vld [vmem:[#allocation3 + $0x11] sm:$0xff]
    %v4096 = vld [vmem:[#allocation3 + $0x19] sm:$0xff]
    %v4097 = vld [vmem:[#allocation3 + $0x21] sm:$0xff]
    %v4098 = vld [vmem:[#allocation3 + $0x29] sm:$0xff]
    %v4099 = vld [vmem:[#allocation3 + $0x31] sm:$0xff]
    %v4100 = vld [vmem:[#allocation3 + $0x39] sm:$0xff]
    %v4101 = vld [vmem:[#allocation3 + $0x41] sm:$0xff]
    %v4102 = vld [vmem:[#allocation3 + $0x49] sm:$0xff]
    %v4103 = vld [vmem:[#allocation3 + $0x51] sm:$0xff]
    %v4104 = vld [vmem:[#allocation3 + $0x59] sm:$0xff]
    %v4105 = vld [vmem:[#allocation3 + $0x61] sm:$0xff]
    %v4106 = vld [vmem:[#allocation3 + $0x69] sm:$0xff]
    %v4107 = vld [vmem:[#allocation3 + $0x71] sm:$0xff]
    %v4108 = vld [vmem:[#allocation3 + $0x79] sm:$0xff]
    %v4109 = vpack.c.bf16 %v4094, %v4093
    %v4110 = vpack.c.bf16 %v4096, %v4095
    %v4111 = vpack.c.bf16 %v4098, %v4097
    %v4112 = vpack.c.bf16 %v4100, %v4099
    %v4113 = vpack.c.bf16 %v4102, %v4101
    %v4114 = vpack.c.bf16 %v4104, %v4103
    %v4115 = vpack.c.bf16 %v4106, %v4105
    %v4116 = vpack.c.bf16 %v4108, %v4107
    %v4125 = vunpack.c.l.b16 %v4109
    %v4126 = vunpack.c.h.b16 %v4109
    %v4127 = vunpack.c.l.b16 %v4110
    %v4128 = vunpack.c.h.b16 %v4110
    %v4129 = vunpack.c.l.b16 %v4111
    %v4130 = vunpack.c.h.b16 %v4111
    %v4131 = vunpack.c.l.b16 %v4112
    %v4132 = vunpack.c.h.b16 %v4112
    %v4133 = vunpack.c.l.b16 %v4113
    %v4134 = vunpack.c.h.b16 %v4113
    %v4135 = vunpack.c.l.b16 %v4114
    %v4136 = vunpack.c.h.b16 %v4114
    %v4137 = vunpack.c.l.b16 %v4115
    %v4138 = vunpack.c.h.b16 %v4115
    %v4139 = vunpack.c.l.b16 %v4116
    %v4140 = vunpack.c.h.b16 %v4116
    %v4141 = vpack.c.b16 %v4125, %v4125
    %v4142 = vpack.c.b16 %v4126, %v4126
    %v4143 = vpack.c.b16 %v4127, %v4127
    %v4144 = vpack.c.b16 %v4128, %v4128
    %v4145 = vpack.c.b16 %v4129, %v4129
    %v4146 = vpack.c.b16 %v4130, %v4130
    %v4147 = vpack.c.b16 %v4131, %v4131
    %v4148 = vpack.c.b16 %v4132, %v4132
    %v4149 = vpack.c.b16 %v4133, %v4133
    %v4150 = vpack.c.b16 %v4134, %v4134
    %v4151 = vpack.c.b16 %v4135, %v4135
    %v4152 = vpack.c.b16 %v4136, %v4136
    %v4153 = vpack.c.b16 %v4137, %v4137
    %v4154 = vpack.c.b16 %v4138, %v4138
    %v4155 = vpack.c.b16 %v4139, %v4139
    %v4156 = vpack.c.b16 %v4140, %v4140
    %4173 = vst [vmem:[#allocation4 + $0x4] sm:$0xf] %v4141
    %4174 = vst [vmem:[#allocation4 + $0x28] sm:$0xf] %v4142
    %4175 = vst [vmem:[#allocation4 + $0x4c] sm:$0xf] %v4143
    %4176 = vst [vmem:[#allocation4 + $0x70] sm:$0xf] %v4144
    %4177 = vst [vmem:[#allocation4 + $0x94] sm:$0xf] %v4145
    %4178 = vst [vmem:[#allocation4 + $0xb8] sm:$0xf] %v4146
    %4179 = vst [vmem:[#allocation4 + $0xdc] sm:$0xf] %v4147
    %4180 = vst [vmem:[#allocation4 + $0x100] sm:$0xf] %v4148
    %4181 = vst [vmem:[#allocation4 + $0x124] sm:$0xf] %v4149
    %4182 = vst [vmem:[#allocation4 + $0x148] sm:$0xf] %v4150
    %4183 = vst [vmem:[#allocation4 + $0x16c] sm:$0xf] %v4151
    %4184 = vst [vmem:[#allocation4 + $0x190] sm:$0xf] %v4152
    %4185 = vst [vmem:[#allocation4 + $0x1b4] sm:$0xf] %v4153
    %4186 = vst [vmem:[#allocation4 + $0x1d8] sm:$0xf] %v4154
    %4187 = vst [vmem:[#allocation4 + $0x1fc] sm:$0xf] %v4155
    %4188 = vst [vmem:[#allocation4 + $0x220] sm:$0xf] %v4156
    %v4189 = vld [vmem:[#allocation3 + $0x2] sm:$0xff]
    %v4190 = vld [vmem:[#allocation3 + $0xa] sm:$0xff]
    %v4191 = vld [vmem:[#allocation3 + $0x12] sm:$0xff]
    %v4192 = vld [vmem:[#allocation3 + $0x1a] sm:$0xff]
    %v4193 = vld [vmem:[#allocation3 + $0x22] sm:$0xff]
    %v4194 = vld [vmem:[#allocation3 + $0x2a] sm:$0xff]
    %v4195 = vld [vmem:[#allocation3 + $0x32] sm:$0xff]
    %v4196 = vld [vmem:[#allocation3 + $0x3a] sm:$0xff]
    %v4197 = vld [vmem:[#allocation3 + $0x42] sm:$0xff]
    %v4198 = vld [vmem:[#allocation3 + $0x4a] sm:$0xff]
    %v4199 = vld [vmem:[#allocation3 + $0x52] sm:$0xff]
    %v4200 = vld [vmem:[#allocation3 + $0x5a] sm:$0xff]
    %v4201 = vld [vmem:[#allocation3 + $0x62] sm:$0xff]
    %v4202 = vld [vmem:[#allocation3 + $0x6a] sm:$0xff]
    %v4203 = vld [vmem:[#allocation3 + $0x72] sm:$0xff]
    %v4204 = vld [vmem:[#allocation3 + $0x7a] sm:$0xff]
    %v4205 = vpack.c.bf16 %v4190, %v4189
    %v4206 = vpack.c.bf16 %v4192, %v4191
    %v4207 = vpack.c.bf16 %v4194, %v4193
    %v4208 = vpack.c.bf16 %v4196, %v4195
    %v4209 = vpack.c.bf16 %v4198, %v4197
    %v4210 = vpack.c.bf16 %v4200, %v4199
    %v4211 = vpack.c.bf16 %v4202, %v4201
    %v4212 = vpack.c.bf16 %v4204, %v4203
    %v4221 = vunpack.c.l.b16 %v4205
    %v4222 = vunpack.c.h.b16 %v4205
    %v4223 = vunpack.c.l.b16 %v4206
    %v4224 = vunpack.c.h.b16 %v4206
    %v4225 = vunpack.c.l.b16 %v4207
    %v4226 = vunpack.c.h.b16 %v4207
    %v4227 = vunpack.c.l.b16 %v4208
    %v4228 = vunpack.c.h.b16 %v4208
    %v4229 = vunpack.c.l.b16 %v4209
    %v4230 = vunpack.c.h.b16 %v4209
    %v4231 = vunpack.c.l.b16 %v4210
    %v4232 = vunpack.c.h.b16 %v4210
    %v4233 = vunpack.c.l.b16 %v4211
    %v4234 = vunpack.c.h.b16 %v4211
    %v4235 = vunpack.c.l.b16 %v4212
    %v4236 = vunpack.c.h.b16 %v4212
    %v4237 = vpack.c.b16 %v4221, %v4221
    %v4238 = vpack.c.b16 %v4222, %v4222
    %v4239 = vpack.c.b16 %v4223, %v4223
    %v4240 = vpack.c.b16 %v4224, %v4224
    %v4241 = vpack.c.b16 %v4225, %v4225
    %v4242 = vpack.c.b16 %v4226, %v4226
    %v4243 = vpack.c.b16 %v4227, %v4227
    %v4244 = vpack.c.b16 %v4228, %v4228
    %v4245 = vpack.c.b16 %v4229, %v4229
    %v4246 = vpack.c.b16 %v4230, %v4230
    %v4247 = vpack.c.b16 %v4231, %v4231
    %v4248 = vpack.c.b16 %v4232, %v4232
    %v4249 = vpack.c.b16 %v4233, %v4233
    %v4250 = vpack.c.b16 %v4234, %v4234
    %v4251 = vpack.c.b16 %v4235, %v4235
    %v4252 = vpack.c.b16 %v4236, %v4236
    %4269 = vst [vmem:[#allocation4 + $0x8] sm:$0xf] %v4237
    %4270 = vst [vmem:[#allocation4 + $0x2c] sm:$0xf] %v4238
    %4271 = vst [vmem:[#allocation4 + $0x50] sm:$0xf] %v4239
    %4272 = vst [vmem:[#allocation4 + $0x74] sm:$0xf] %v4240
    %4273 = vst [vmem:[#allocation4 + $0x98] sm:$0xf] %v4241
    %4274 = vst [vmem:[#allocation4 + $0xbc] sm:$0xf] %v4242
    %4275 = vst [vmem:[#allocation4 + $0xe0] sm:$0xf] %v4243
    %4276 = vst [vmem:[#allocation4 + $0x104] sm:$0xf] %v4244
    %4277 = vst [vmem:[#allocation4 + $0x128] sm:$0xf] %v4245
    %4278 = vst [vmem:[#allocation4 + $0x14c] sm:$0xf] %v4246
    %4279 = vst [vmem:[#allocation4 + $0x170] sm:$0xf] %v4247
    %4280 = vst [vmem:[#allocation4 + $0x194] sm:$0xf] %v4248
    %4281 = vst [vmem:[#allocation4 + $0x1b8] sm:$0xf] %v4249
    %4282 = vst [vmem:[#allocation4 + $0x1dc] sm:$0xf] %v4250
    %4283 = vst [vmem:[#allocation4 + $0x200] sm:$0xf] %v4251
    %4284 = vst [vmem:[#allocation4 + $0x224] sm:$0xf] %v4252
    %v4285 = vld [vmem:[#allocation3 + $0x8] sm:$0xff]
    %v4286 = vld [vmem:[#allocation3 + $0x10] sm:$0xff]
    %v4287 = vld [vmem:[#allocation3 + $0x18] sm:$0xff]
    %v4288 = vld [vmem:[#allocation3 + $0x20] sm:$0xff]
    %v4289 = vld [vmem:[#allocation3 + $0x28] sm:$0xff]
    %v4290 = vld [vmem:[#allocation3 + $0x30] sm:$0xff]
    %v4291 = vld [vmem:[#allocation3 + $0x38] sm:$0xff]
    %v4292 = vld [vmem:[#allocation3 + $0x40] sm:$0xff]
    %v4293 = vld [vmem:[#allocation3 + $0x48] sm:$0xff]
    %v4294 = vld [vmem:[#allocation3 + $0x50] sm:$0xff]
    %v4295 = vld [vmem:[#allocation3 + $0x58] sm:$0xff]
    %v4296 = vld [vmem:[#allocation3 + $0x60] sm:$0xff]
    %v4297 = vld [vmem:[#allocation3 + $0x68] sm:$0xff]
    %v4298 = vld [vmem:[#allocation3 + $0x70] sm:$0xff]
    %v4299 = vld [vmem:[#allocation3 + $0x78] sm:$0xff]
    %v4300 = vld [vmem:[#allocation3 + $0x80] sm:$0xff]
    %v4301 = vpack.c.bf16 %v4286, %v4285
    %v4302 = vpack.c.bf16 %v4288, %v4287
    %v4303 = vpack.c.bf16 %v4290, %v4289
    %v4304 = vpack.c.bf16 %v4292, %v4291
    %v4305 = vpack.c.bf16 %v4294, %v4293
    %v4306 = vpack.c.bf16 %v4296, %v4295
    %v4307 = vpack.c.bf16 %v4298, %v4297
    %v4308 = vpack.c.bf16 %v4300, %v4299
    %v4317 = vunpack.c.l.b16 %v4301
    %v4318 = vunpack.c.h.b16 %v4301
    %v4319 = vunpack.c.l.b16 %v4302
    %v4320 = vunpack.c.h.b16 %v4302
    %v4321 = vunpack.c.l.b16 %v4303
    %v4322 = vunpack.c.h.b16 %v4303
    %v4323 = vunpack.c.l.b16 %v4304
    %v4324 = vunpack.c.h.b16 %v4304
    %v4325 = vunpack.c.l.b16 %v4305
    %v4326 = vunpack.c.h.b16 %v4305
    %v4327 = vunpack.c.l.b16 %v4306
    %v4328 = vunpack.c.h.b16 %v4306
    %v4329 = vunpack.c.l.b16 %v4307
    %v4330 = vunpack.c.h.b16 %v4307
    %v4331 = vunpack.c.l.b16 %v4308
    %v4332 = vunpack.c.h.b16 %v4308
    %v4333 = vpack.c.b16 %v4317, %v4317
    %v4334 = vpack.c.b16 %v4318, %v4318
    %v4335 = vpack.c.b16 %v4319, %v4319
    %v4336 = vpack.c.b16 %v4320, %v4320
    %v4337 = vpack.c.b16 %v4321, %v4321
    %v4338 = vpack.c.b16 %v4322, %v4322
    %v4339 = vpack.c.b16 %v4323, %v4323
    %v4340 = vpack.c.b16 %v4324, %v4324
    %v4341 = vpack.c.b16 %v4325, %v4325
    %v4342 = vpack.c.b16 %v4326, %v4326
    %v4343 = vpack.c.b16 %v4327, %v4327
    %v4344 = vpack.c.b16 %v4328, %v4328
    %v4345 = vpack.c.b16 %v4329, %v4329
    %v4346 = vpack.c.b16 %v4330, %v4330
    %v4347 = vpack.c.b16 %v4331, %v4331
    %v4348 = vpack.c.b16 %v4332, %v4332
    %4365 = vst [vmem:[#allocation4 + $0xc] sm:$0xf] %v4333
    %4366 = vst [vmem:[#allocation4 + $0x30] sm:$0xf] %v4334
    %4367 = vst [vmem:[#allocation4 + $0x54] sm:$0xf] %v4335
    %4368 = vst [vmem:[#allocation4 + $0x78] sm:$0xf] %v4336
    %4369 = vst [vmem:[#allocation4 + $0x9c] sm:$0xf] %v4337
    %4370 = vst [vmem:[#allocation4 + $0xc0] sm:$0xf] %v4338
    %4371 = vst [vmem:[#allocation4 + $0xe4] sm:$0xf] %v4339
    %4372 = vst [vmem:[#allocation4 + $0x108] sm:$0xf] %v4340
    %4373 = vst [vmem:[#allocation4 + $0x12c] sm:$0xf] %v4341
    %4374 = vst [vmem:[#allocation4 + $0x150] sm:$0xf] %v4342
    %4375 = vst [vmem:[#allocation4 + $0x174] sm:$0xf] %v4343
    %4376 = vst [vmem:[#allocation4 + $0x198] sm:$0xf] %v4344
    %4377 = vst [vmem:[#allocation4 + $0x1bc] sm:$0xf] %v4345
    %4378 = vst [vmem:[#allocation4 + $0x1e0] sm:$0xf] %v4346
    %4379 = vst [vmem:[#allocation4 + $0x204] sm:$0xf] %v4347
    %4380 = vst [vmem:[#allocation4 + $0x228] sm:$0xf] %v4348
    %v4381 = vld [vmem:[#allocation3 + $0x9] sm:$0xff]
    %v4382 = vld [vmem:[#allocation3 + $0x11] sm:$0xff]
    %v4383 = vld [vmem:[#allocation3 + $0x19] sm:$0xff]
    %v4384 = vld [vmem:[#allocation3 + $0x21] sm:$0xff]
    %v4385 = vld [vmem:[#allocation3 + $0x29] sm:$0xff]
    %v4386 = vld [vmem:[#allocation3 + $0x31] sm:$0xff]
    %v4387 = vld [vmem:[#allocation3 + $0x39] sm:$0xff]
    %v4388 = vld [vmem:[#allocation3 + $0x41] sm:$0xff]
    %v4389 = vld [vmem:[#allocation3 + $0x49] sm:$0xff]
    %v4390 = vld [vmem:[#allocation3 + $0x51] sm:$0xff]
    %v4391 = vld [vmem:[#allocation3 + $0x59] sm:$0xff]
    %v4392 = vld [vmem:[#allocation3 + $0x61] sm:$0xff]
    %v4393 = vld [vmem:[#allocation3 + $0x69] sm:$0xff]
    %v4394 = vld [vmem:[#allocation3 + $0x71] sm:$0xff]
    %v4395 = vld [vmem:[#allocation3 + $0x79] sm:$0xff]
    %v4396 = vld [vmem:[#allocation3 + $0x81] sm:$0xff]
    %v4397 = vpack.c.bf16 %v4382, %v4381
    %v4398 = vpack.c.bf16 %v4384, %v4383
    %v4399 = vpack.c.bf16 %v4386, %v4385
    %v4400 = vpack.c.bf16 %v4388, %v4387
    %v4401 = vpack.c.bf16 %v4390, %v4389
    %v4402 = vpack.c.bf16 %v4392, %v4391
    %v4403 = vpack.c.bf16 %v4394, %v4393
    %v4404 = vpack.c.bf16 %v4396, %v4395
    %v4413 = vunpack.c.l.b16 %v4397
    %v4414 = vunpack.c.h.b16 %v4397
    %v4415 = vunpack.c.l.b16 %v4398
    %v4416 = vunpack.c.h.b16 %v4398
    %v4417 = vunpack.c.l.b16 %v4399
    %v4418 = vunpack.c.h.b16 %v4399
    %v4419 = vunpack.c.l.b16 %v4400
    %v4420 = vunpack.c.h.b16 %v4400
    %v4421 = vunpack.c.l.b16 %v4401
    %v4422 = vunpack.c.h.b16 %v4401
    %v4423 = vunpack.c.l.b16 %v4402
    %v4424 = vunpack.c.h.b16 %v4402
    %v4425 = vunpack.c.l.b16 %v4403
    %v4426 = vunpack.c.h.b16 %v4403
    %v4427 = vunpack.c.l.b16 %v4404
    %v4428 = vunpack.c.h.b16 %v4404
    %v4429 = vpack.c.b16 %v4413, %v4413
    %v4430 = vpack.c.b16 %v4414, %v4414
    %v4431 = vpack.c.b16 %v4415, %v4415
    %v4432 = vpack.c.b16 %v4416, %v4416
    %v4433 = vpack.c.b16 %v4417, %v4417
    %v4434 = vpack.c.b16 %v4418, %v4418
    %v4435 = vpack.c.b16 %v4419, %v4419
    %v4436 = vpack.c.b16 %v4420, %v4420
    %v4437 = vpack.c.b16 %v4421, %v4421
    %v4438 = vpack.c.b16 %v4422, %v4422
    %v4439 = vpack.c.b16 %v4423, %v4423
    %v4440 = vpack.c.b16 %v4424, %v4424
    %v4441 = vpack.c.b16 %v4425, %v4425
    %v4442 = vpack.c.b16 %v4426, %v4426
    %v4443 = vpack.c.b16 %v4427, %v4427
    %v4444 = vpack.c.b16 %v4428, %v4428
    %4461 = vst [vmem:[#allocation4 + $0x10] sm:$0xf] %v4429
    %4462 = vst [vmem:[#allocation4 + $0x34] sm:$0xf] %v4430
    %4463 = vst [vmem:[#allocation4 + $0x58] sm:$0xf] %v4431
    %4464 = vst [vmem:[#allocation4 + $0x7c] sm:$0xf] %v4432
    %4465 = vst [vmem:[#allocation4 + $0xa0] sm:$0xf] %v4433
    %4466 = vst [vmem:[#allocation4 + $0xc4] sm:$0xf] %v4434
    %4467 = vst [vmem:[#allocation4 + $0xe8] sm:$0xf] %v4435
    %4468 = vst [vmem:[#allocation4 + $0x10c] sm:$0xf] %v4436
    %4469 = vst [vmem:[#allocation4 + $0x130] sm:$0xf] %v4437
    %4470 = vst [vmem:[#allocation4 + $0x154] sm:$0xf] %v4438
    %4471 = vst [vmem:[#allocation4 + $0x178] sm:$0xf] %v4439
    %4472 = vst [vmem:[#allocation4 + $0x19c] sm:$0xf] %v4440
    %4473 = vst [vmem:[#allocation4 + $0x1c0] sm:$0xf] %v4441
    %4474 = vst [vmem:[#allocation4 + $0x1e4] sm:$0xf] %v4442
    %4475 = vst [vmem:[#allocation4 + $0x208] sm:$0xf] %v4443
    %4476 = vst [vmem:[#allocation4 + $0x22c] sm:$0xf] %v4444
    %v4477 = vld [vmem:[#allocation3 + $0xa] sm:$0xff]
    %v4478 = vld [vmem:[#allocation3 + $0x12] sm:$0xff]
    %v4479 = vld [vmem:[#allocation3 + $0x1a] sm:$0xff]
    %v4480 = vld [vmem:[#allocation3 + $0x22] sm:$0xff]
    %v4481 = vld [vmem:[#allocation3 + $0x2a] sm:$0xff]
    %v4482 = vld [vmem:[#allocation3 + $0x32] sm:$0xff]
    %v4483 = vld [vmem:[#allocation3 + $0x3a] sm:$0xff]
    %v4484 = vld [vmem:[#allocation3 + $0x42] sm:$0xff]
    %v4485 = vld [vmem:[#allocation3 + $0x4a] sm:$0xff]
    %v4486 = vld [vmem:[#allocation3 + $0x52] sm:$0xff]
    %v4487 = vld [vmem:[#allocation3 + $0x5a] sm:$0xff]
    %v4488 = vld [vmem:[#allocation3 + $0x62] sm:$0xff]
    %v4489 = vld [vmem:[#allocation3 + $0x6a] sm:$0xff]
    %v4490 = vld [vmem:[#allocation3 + $0x72] sm:$0xff]
    %v4491 = vld [vmem:[#allocation3 + $0x7a] sm:$0xff]
    %v4492 = vld [vmem:[#allocation3 + $0x82] sm:$0xff]
    %v4493 = vpack.c.bf16 %v4478, %v4477
    %v4494 = vpack.c.bf16 %v4480, %v4479
    %v4495 = vpack.c.bf16 %v4482, %v4481
    %v4496 = vpack.c.bf16 %v4484, %v4483
    %v4497 = vpack.c.bf16 %v4486, %v4485
    %v4498 = vpack.c.bf16 %v4488, %v4487
    %v4499 = vpack.c.bf16 %v4490, %v4489
    %v4500 = vpack.c.bf16 %v4492, %v4491
    %v4509 = vunpack.c.l.b16 %v4493
    %v4510 = vunpack.c.h.b16 %v4493
    %v4511 = vunpack.c.l.b16 %v4494
    %v4512 = vunpack.c.h.b16 %v4494
    %v4513 = vunpack.c.l.b16 %v4495
    %v4514 = vunpack.c.h.b16 %v4495
    %v4515 = vunpack.c.l.b16 %v4496
    %v4516 = vunpack.c.h.b16 %v4496
    %v4517 = vunpack.c.l.b16 %v4497
    %v4518 = vunpack.c.h.b16 %v4497
    %v4519 = vunpack.c.l.b16 %v4498
    %v4520 = vunpack.c.h.b16 %v4498
    %v4521 = vunpack.c.l.b16 %v4499
    %v4522 = vunpack.c.h.b16 %v4499
    %v4523 = vunpack.c.l.b16 %v4500
    %v4524 = vunpack.c.h.b16 %v4500
    %v4525 = vpack.c.b16 %v4509, %v4509
    %v4526 = vpack.c.b16 %v4510, %v4510
    %v4527 = vpack.c.b16 %v4511, %v4511
    %v4528 = vpack.c.b16 %v4512, %v4512
    %v4529 = vpack.c.b16 %v4513, %v4513
    %v4530 = vpack.c.b16 %v4514, %v4514
    %v4531 = vpack.c.b16 %v4515, %v4515
    %v4532 = vpack.c.b16 %v4516, %v4516
    %v4533 = vpack.c.b16 %v4517, %v4517
    %v4534 = vpack.c.b16 %v4518, %v4518
    %v4535 = vpack.c.b16 %v4519, %v4519
    %v4536 = vpack.c.b16 %v4520, %v4520
    %v4537 = vpack.c.b16 %v4521, %v4521
    %v4538 = vpack.c.b16 %v4522, %v4522
    %v4539 = vpack.c.b16 %v4523, %v4523
    %v4540 = vpack.c.b16 %v4524, %v4524
    %4557 = vst [vmem:[#allocation4 + $0x14] sm:$0xf] %v4525
    %4558 = vst [vmem:[#allocation4 + $0x38] sm:$0xf] %v4526
    %4559 = vst [vmem:[#allocation4 + $0x5c] sm:$0xf] %v4527
    %4560 = vst [vmem:[#allocation4 + $0x80] sm:$0xf] %v4528
    %4561 = vst [vmem:[#allocation4 + $0xa4] sm:$0xf] %v4529
    %4562 = vst [vmem:[#allocation4 + $0xc8] sm:$0xf] %v4530
    %4563 = vst [vmem:[#allocation4 + $0xec] sm:$0xf] %v4531
    %4564 = vst [vmem:[#allocation4 + $0x110] sm:$0xf] %v4532
    %4565 = vst [vmem:[#allocation4 + $0x134] sm:$0xf] %v4533
    %4566 = vst [vmem:[#allocation4 + $0x158] sm:$0xf] %v4534
    %4567 = vst [vmem:[#allocation4 + $0x17c] sm:$0xf] %v4535
    %4568 = vst [vmem:[#allocation4 + $0x1a0] sm:$0xf] %v4536
    %4569 = vst [vmem:[#allocation4 + $0x1c4] sm:$0xf] %v4537
    %4570 = vst [vmem:[#allocation4 + $0x1e8] sm:$0xf] %v4538
    %4571 = vst [vmem:[#allocation4 + $0x20c] sm:$0xf] %v4539
    %4572 = vst [vmem:[#allocation4 + $0x230] sm:$0xf] %v4540
    %v4573 = vld [vmem:[#allocation3 + $0x10] sm:$0xff]
    %v4574 = vld [vmem:[#allocation3 + $0x18] sm:$0xff]
    %v4575 = vld [vmem:[#allocation3 + $0x20] sm:$0xff]
    %v4576 = vld [vmem:[#allocation3 + $0x28] sm:$0xff]
    %v4577 = vld [vmem:[#allocation3 + $0x30] sm:$0xff]
    %v4578 = vld [vmem:[#allocation3 + $0x38] sm:$0xff]
    %v4579 = vld [vmem:[#allocation3 + $0x40] sm:$0xff]
    %v4580 = vld [vmem:[#allocation3 + $0x48] sm:$0xff]
    %v4581 = vld [vmem:[#allocation3 + $0x50] sm:$0xff]
    %v4582 = vld [vmem:[#allocation3 + $0x58] sm:$0xff]
    %v4583 = vld [vmem:[#allocation3 + $0x60] sm:$0xff]
    %v4584 = vld [vmem:[#allocation3 + $0x68] sm:$0xff]
    %v4585 = vld [vmem:[#allocation3 + $0x70] sm:$0xff]
    %v4586 = vld [vmem:[#allocation3 + $0x78] sm:$0xff]
    %v4587 = vld [vmem:[#allocation3 + $0x80] sm:$0xff]
    %v4588 = vld [vmem:[#allocation3 + $0x88] sm:$0xff]
    %v4589 = vpack.c.bf16 %v4574, %v4573
    %v4590 = vpack.c.bf16 %v4576, %v4575
    %v4591 = vpack.c.bf16 %v4578, %v4577
    %v4592 = vpack.c.bf16 %v4580, %v4579
    %v4593 = vpack.c.bf16 %v4582, %v4581
    %v4594 = vpack.c.bf16 %v4584, %v4583
    %v4595 = vpack.c.bf16 %v4586, %v4585
    %v4596 = vpack.c.bf16 %v4588, %v4587
    %v4605 = vunpack.c.l.b16 %v4589
    %v4606 = vunpack.c.h.b16 %v4589
    %v4607 = vunpack.c.l.b16 %v4590
    %v4608 = vunpack.c.h.b16 %v4590
    %v4609 = vunpack.c.l.b16 %v4591
    %v4610 = vunpack.c.h.b16 %v4591
    %v4611 = vunpack.c.l.b16 %v4592
    %v4612 = vunpack.c.h.b16 %v4592
    %v4613 = vunpack.c.l.b16 %v4593
    %v4614 = vunpack.c.h.b16 %v4593
    %v4615 = vunpack.c.l.b16 %v4594
    %v4616 = vunpack.c.h.b16 %v4594
    %v4617 = vunpack.c.l.b16 %v4595
    %v4618 = vunpack.c.h.b16 %v4595
    %v4619 = vunpack.c.l.b16 %v4596
    %v4620 = vunpack.c.h.b16 %v4596
    %v4621 = vpack.c.b16 %v4605, %v4605
    %v4622 = vpack.c.b16 %v4606, %v4606
    %v4623 = vpack.c.b16 %v4607, %v4607
    %v4624 = vpack.c.b16 %v4608, %v4608
    %v4625 = vpack.c.b16 %v4609, %v4609
    %v4626 = vpack.c.b16 %v4610, %v4610
    %v4627 = vpack.c.b16 %v4611, %v4611
    %v4628 = vpack.c.b16 %v4612, %v4612
    %v4629 = vpack.c.b16 %v4613, %v4613
    %v4630 = vpack.c.b16 %v4614, %v4614
    %v4631 = vpack.c.b16 %v4615, %v4615
    %v4632 = vpack.c.b16 %v4616, %v4616
    %v4633 = vpack.c.b16 %v4617, %v4617
    %v4634 = vpack.c.b16 %v4618, %v4618
    %v4635 = vpack.c.b16 %v4619, %v4619
    %v4636 = vpack.c.b16 %v4620, %v4620
    %4653 = vst [vmem:[#allocation4 + $0x18] sm:$0xf] %v4621
    %4654 = vst [vmem:[#allocation4 + $0x3c] sm:$0xf] %v4622
    %4655 = vst [vmem:[#allocation4 + $0x60] sm:$0xf] %v4623
    %4656 = vst [vmem:[#allocation4 + $0x84] sm:$0xf] %v4624
    %4657 = vst [vmem:[#allocation4 + $0xa8] sm:$0xf] %v4625
    %4658 = vst [vmem:[#allocation4 + $0xcc] sm:$0xf] %v4626
    %4659 = vst [vmem:[#allocation4 + $0xf0] sm:$0xf] %v4627
    %4660 = vst [vmem:[#allocation4 + $0x114] sm:$0xf] %v4628
    %4661 = vst [vmem:[#allocation4 + $0x138] sm:$0xf] %v4629
    %4662 = vst [vmem:[#allocation4 + $0x15c] sm:$0xf] %v4630
    %4663 = vst [vmem:[#allocation4 + $0x180] sm:$0xf] %v4631
    %4664 = vst [vmem:[#allocation4 + $0x1a4] sm:$0xf] %v4632
    %4665 = vst [vmem:[#allocation4 + $0x1c8] sm:$0xf] %v4633
    %4666 = vst [vmem:[#allocation4 + $0x1ec] sm:$0xf] %v4634
    %4667 = vst [vmem:[#allocation4 + $0x210] sm:$0xf] %v4635
    %4668 = vst [vmem:[#allocation4 + $0x234] sm:$0xf] %v4636
    %v4669 = vld [vmem:[#allocation3 + $0x11] sm:$0xff]
    %v4670 = vld [vmem:[#allocation3 + $0x19] sm:$0xff]
    %v4671 = vld [vmem:[#allocation3 + $0x21] sm:$0xff]
    %v4672 = vld [vmem:[#allocation3 + $0x29] sm:$0xff]
    %v4673 = vld [vmem:[#allocation3 + $0x31] sm:$0xff]
    %v4674 = vld [vmem:[#allocation3 + $0x39] sm:$0xff]
    %v4675 = vld [vmem:[#allocation3 + $0x41] sm:$0xff]
    %v4676 = vld [vmem:[#allocation3 + $0x49] sm:$0xff]
    %v4677 = vld [vmem:[#allocation3 + $0x51] sm:$0xff]
    %v4678 = vld [vmem:[#allocation3 + $0x59] sm:$0xff]
    %v4679 = vld [vmem:[#allocation3 + $0x61] sm:$0xff]
    %v4680 = vld [vmem:[#allocation3 + $0x69] sm:$0xff]
    %v4681 = vld [vmem:[#allocation3 + $0x71] sm:$0xff]
    %v4682 = vld [vmem:[#allocation3 + $0x79] sm:$0xff]
    %v4683 = vld [vmem:[#allocation3 + $0x81] sm:$0xff]
    %v4684 = vld [vmem:[#allocation3 + $0x89] sm:$0xff]
    %v4685 = vpack.c.bf16 %v4670, %v4669
    %v4686 = vpack.c.bf16 %v4672, %v4671
    %v4687 = vpack.c.bf16 %v4674, %v4673
    %v4688 = vpack.c.bf16 %v4676, %v4675
    %v4689 = vpack.c.bf16 %v4678, %v4677
    %v4690 = vpack.c.bf16 %v4680, %v4679
    %v4691 = vpack.c.bf16 %v4682, %v4681
    %v4692 = vpack.c.bf16 %v4684, %v4683
    %v4701 = vunpack.c.l.b16 %v4685
    %v4702 = vunpack.c.h.b16 %v4685
    %v4703 = vunpack.c.l.b16 %v4686
    %v4704 = vunpack.c.h.b16 %v4686
    %v4705 = vunpack.c.l.b16 %v4687
    %v4706 = vunpack.c.h.b16 %v4687
    %v4707 = vunpack.c.l.b16 %v4688
    %v4708 = vunpack.c.h.b16 %v4688
    %v4709 = vunpack.c.l.b16 %v4689
    %v4710 = vunpack.c.h.b16 %v4689
    %v4711 = vunpack.c.l.b16 %v4690
    %v4712 = vunpack.c.h.b16 %v4690
    %v4713 = vunpack.c.l.b16 %v4691
    %v4714 = vunpack.c.h.b16 %v4691
    %v4715 = vunpack.c.l.b16 %v4692
    %v4716 = vunpack.c.h.b16 %v4692
    %v4717 = vpack.c.b16 %v4701, %v4701
    %v4718 = vpack.c.b16 %v4702, %v4702
    %v4719 = vpack.c.b16 %v4703, %v4703
    %v4720 = vpack.c.b16 %v4704, %v4704
    %v4721 = vpack.c.b16 %v4705, %v4705
    %v4722 = vpack.c.b16 %v4706, %v4706
    %v4723 = vpack.c.b16 %v4707, %v4707
    %v4724 = vpack.c.b16 %v4708, %v4708
    %v4725 = vpack.c.b16 %v4709, %v4709
    %v4726 = vpack.c.b16 %v4710, %v4710
    %v4727 = vpack.c.b16 %v4711, %v4711
    %v4728 = vpack.c.b16 %v4712, %v4712
    %v4729 = vpack.c.b16 %v4713, %v4713
    %v4730 = vpack.c.b16 %v4714, %v4714
    %v4731 = vpack.c.b16 %v4715, %v4715
    %v4732 = vpack.c.b16 %v4716, %v4716
    %4749 = vst [vmem:[#allocation4 + $0x1c] sm:$0xf] %v4717
    %4750 = vst [vmem:[#allocation4 + $0x40] sm:$0xf] %v4718
    %4751 = vst [vmem:[#allocation4 + $0x64] sm:$0xf] %v4719
    %4752 = vst [vmem:[#allocation4 + $0x88] sm:$0xf] %v4720
    %4753 = vst [vmem:[#allocation4 + $0xac] sm:$0xf] %v4721
    %4754 = vst [vmem:[#allocation4 + $0xd0] sm:$0xf] %v4722
    %4755 = vst [vmem:[#allocation4 + $0xf4] sm:$0xf] %v4723
    %4756 = vst [vmem:[#allocation4 + $0x118] sm:$0xf] %v4724
    %4757 = vst [vmem:[#allocation4 + $0x13c] sm:$0xf] %v4725
    %4758 = vst [vmem:[#allocation4 + $0x160] sm:$0xf] %v4726
    %4759 = vst [vmem:[#allocation4 + $0x184] sm:$0xf] %v4727
    %4760 = vst [vmem:[#allocation4 + $0x1a8] sm:$0xf] %v4728
    %4761 = vst [vmem:[#allocation4 + $0x1cc] sm:$0xf] %v4729
    %4762 = vst [vmem:[#allocation4 + $0x1f0] sm:$0xf] %v4730
    %4763 = vst [vmem:[#allocation4 + $0x214] sm:$0xf] %v4731
    %4764 = vst [vmem:[#allocation4 + $0x238] sm:$0xf] %v4732
    %v4765 = vld [vmem:[#allocation3 + $0x12] sm:$0xff]
    %v4766 = vld [vmem:[#allocation3 + $0x1a] sm:$0xff]
    %v4767 = vld [vmem:[#allocation3 + $0x22] sm:$0xff]
    %v4768 = vld [vmem:[#allocation3 + $0x2a] sm:$0xff]
    %v4769 = vld [vmem:[#allocation3 + $0x32] sm:$0xff]
    %v4770 = vld [vmem:[#allocation3 + $0x3a] sm:$0xff]
    %v4771 = vld [vmem:[#allocation3 + $0x42] sm:$0xff]
    %v4772 = vld [vmem:[#allocation3 + $0x4a] sm:$0xff]
    %v4773 = vld [vmem:[#allocation3 + $0x52] sm:$0xff]
    %v4774 = vld [vmem:[#allocation3 + $0x5a] sm:$0xff]
    %v4775 = vld [vmem:[#allocation3 + $0x62] sm:$0xff]
    %v4776 = vld [vmem:[#allocation3 + $0x6a] sm:$0xff]
    %v4777 = vld [vmem:[#allocation3 + $0x72] sm:$0xff]
    %v4778 = vld [vmem:[#allocation3 + $0x7a] sm:$0xff]
    %v4779 = vld [vmem:[#allocation3 + $0x82] sm:$0xff]
    %v4780 = vld [vmem:[#allocation3 + $0x8a] sm:$0xff]
    %v4781 = vpack.c.bf16 %v4766, %v4765
    %v4782 = vpack.c.bf16 %v4768, %v4767
    %v4783 = vpack.c.bf16 %v4770, %v4769
    %v4784 = vpack.c.bf16 %v4772, %v4771
    %v4785 = vpack.c.bf16 %v4774, %v4773
    %v4786 = vpack.c.bf16 %v4776, %v4775
    %v4787 = vpack.c.bf16 %v4778, %v4777
    %v4788 = vpack.c.bf16 %v4780, %v4779
    %v4797 = vunpack.c.l.b16 %v4781
    %v4798 = vunpack.c.h.b16 %v4781
    %v4799 = vunpack.c.l.b16 %v4782
    %v4800 = vunpack.c.h.b16 %v4782
    %v4801 = vunpack.c.l.b16 %v4783
    %v4802 = vunpack.c.h.b16 %v4783
    %v4803 = vunpack.c.l.b16 %v4784
    %v4804 = vunpack.c.h.b16 %v4784
    %v4805 = vunpack.c.l.b16 %v4785
    %v4806 = vunpack.c.h.b16 %v4785
    %v4807 = vunpack.c.l.b16 %v4786
    %v4808 = vunpack.c.h.b16 %v4786
    %v4809 = vunpack.c.l.b16 %v4787
    %v4810 = vunpack.c.h.b16 %v4787
    %v4811 = vunpack.c.l.b16 %v4788
    %v4812 = vunpack.c.h.b16 %v4788
    %v4813 = vpack.c.b16 %v4797, %v4797
    %v4814 = vpack.c.b16 %v4798, %v4798
    %v4815 = vpack.c.b16 %v4799, %v4799
    %v4816 = vpack.c.b16 %v4800, %v4800
    %v4817 = vpack.c.b16 %v4801, %v4801
    %v4818 = vpack.c.b16 %v4802, %v4802
    %v4819 = vpack.c.b16 %v4803, %v4803
    %v4820 = vpack.c.b16 %v4804, %v4804
    %v4821 = vpack.c.b16 %v4805, %v4805
    %v4822 = vpack.c.b16 %v4806, %v4806
    %v4823 = vpack.c.b16 %v4807, %v4807
    %v4824 = vpack.c.b16 %v4808, %v4808
    %v4825 = vpack.c.b16 %v4809, %v4809
    %v4826 = vpack.c.b16 %v4810, %v4810
    %v4827 = vpack.c.b16 %v4811, %v4811
    %v4828 = vpack.c.b16 %v4812, %v4812
    %4845 = vst [vmem:[#allocation4 + $0x20] sm:$0xf] %v4813
    %4846 = vst [vmem:[#allocation4 + $0x44] sm:$0xf] %v4814
    %4847 = vst [vmem:[#allocation4 + $0x68] sm:$0xf] %v4815
    %4848 = vst [vmem:[#allocation4 + $0x8c] sm:$0xf] %v4816
    %4849 = vst [vmem:[#allocation4 + $0xb0] sm:$0xf] %v4817
    %4850 = vst [vmem:[#allocation4 + $0xd4] sm:$0xf] %v4818
    %4851 = vst [vmem:[#allocation4 + $0xf8] sm:$0xf] %v4819
    %4852 = vst [vmem:[#allocation4 + $0x11c] sm:$0xf] %v4820
    %4853 = vst [vmem:[#allocation4 + $0x140] sm:$0xf] %v4821
    %4854 = vst [vmem:[#allocation4 + $0x164] sm:$0xf] %v4822
    %4855 = vst [vmem:[#allocation4 + $0x188] sm:$0xf] %v4823
    %4856 = vst [vmem:[#allocation4 + $0x1ac] sm:$0xf] %v4824
    %4857 = vst [vmem:[#allocation4 + $0x1d0] sm:$0xf] %v4825
    %4858 = vst [vmem:[#allocation4 + $0x1f4] sm:$0xf] %v4826
    %4859 = vst [vmem:[#allocation4 + $0x218] sm:$0xf] %v4827
    %4860 = vst [vmem:[#allocation4 + $0x23c] sm:$0xf] %v4828
    %v4861 = vld [vmem:[#allocation4] sm:$0xff]
    %v4862 = vld [vmem:[#allocation4 + $0x8] sm:$0xff]
    %v4863 = vld [vmem:[#allocation4 + $0x10] sm:$0xff]
    %v4864 = vld [vmem:[#allocation4 + $0x18] sm:$0xff]
    %v4865 = vld [vmem:[#allocation4 + $0x20] sm:$0xf]
    %v4866 = vld [vmem:[#allocation4 + $0x24] sm:$0xff]
    %v4867 = vld [vmem:[#allocation4 + $0x2c] sm:$0xff]
    %v4868 = vld [vmem:[#allocation4 + $0x34] sm:$0xff]
    %v4869 = vld [vmem:[#allocation4 + $0x3c] sm:$0xff]
    %v4870 = vld [vmem:[#allocation4 + $0x44] sm:$0xf]
    %v4871 = vld [vmem:[#allocation4 + $0x48] sm:$0xff]
    %v4872 = vld [vmem:[#allocation4 + $0x50] sm:$0xff]
    %v4873 = vld [vmem:[#allocation4 + $0x58] sm:$0xff]
    %v4874 = vld [vmem:[#allocation4 + $0x60] sm:$0xff]
    %v4875 = vld [vmem:[#allocation4 + $0x68] sm:$0xf]
    %v4876 = vld [vmem:[#allocation4 + $0x6c] sm:$0xff]
    %v4877 = vld [vmem:[#allocation4 + $0x74] sm:$0xff]
    %v4878 = vld [vmem:[#allocation4 + $0x7c] sm:$0xff]
    %v4879 = vld [vmem:[#allocation4 + $0x84] sm:$0xff]
    %v4880 = vld [vmem:[#allocation4 + $0x8c] sm:$0xf]
    %v4881 = vld [vmem:[#allocation4 + $0x90] sm:$0xff]
    %v4882 = vld [vmem:[#allocation4 + $0x98] sm:$0xff]
    %v4883 = vld [vmem:[#allocation4 + $0xa0] sm:$0xff]
    %v4884 = vld [vmem:[#allocation4 + $0xa8] sm:$0xff]
    %v4885 = vld [vmem:[#allocation4 + $0xb0] sm:$0xf]
    %v4886 = vld [vmem:[#allocation4 + $0xb4] sm:$0xff]
    %v4887 = vld [vmem:[#allocation4 + $0xbc] sm:$0xff]
    %v4888 = vld [vmem:[#allocation4 + $0xc4] sm:$0xff]
    %v4889 = vld [vmem:[#allocation4 + $0xcc] sm:$0xff]
    %v4890 = vld [vmem:[#allocation4 + $0xd4] sm:$0xf]
    %v4891 = vld [vmem:[#allocation4 + $0xd8] sm:$0xff]
    %v4892 = vld [vmem:[#allocation4 + $0xe0] sm:$0xff]
    %v4893 = vld [vmem:[#allocation4 + $0xe8] sm:$0xff]
    %v4894 = vld [vmem:[#allocation4 + $0xf0] sm:$0xff]
    %v4895 = vld [vmem:[#allocation4 + $0xf8] sm:$0xf]
    %v4896 = vld [vmem:[#allocation4 + $0xfc] sm:$0xff]
    %v4897 = vld [vmem:[#allocation4 + $0x104] sm:$0xff]
    %v4898 = vld [vmem:[#allocation4 + $0x10c] sm:$0xff]
    %v4899 = vld [vmem:[#allocation4 + $0x114] sm:$0xff]
    %v4900 = vld [vmem:[#allocation4 + $0x11c] sm:$0xf]
    %v4901 = vld [vmem:[#allocation4 + $0x120] sm:$0xff]
    %v4902 = vld [vmem:[#allocation4 + $0x128] sm:$0xff]
    %v4903 = vld [vmem:[#allocation4 + $0x130] sm:$0xff]
    %v4904 = vld [vmem:[#allocation4 + $0x138] sm:$0xff]
    %v4905 = vld [vmem:[#allocation4 + $0x140] sm:$0xf]
    %v4906 = vld [vmem:[#allocation4 + $0x144] sm:$0xff]
    %v4907 = vld [vmem:[#allocation4 + $0x14c] sm:$0xff]
    %v4908 = vld [vmem:[#allocation4 + $0x154] sm:$0xff]
    %v4909 = vld [vmem:[#allocation4 + $0x15c] sm:$0xff]
    %v4910 = vld [vmem:[#allocation4 + $0x164] sm:$0xf]
    %v4911 = vld [vmem:[#allocation4 + $0x168] sm:$0xff]
    %v4912 = vld [vmem:[#allocation4 + $0x170] sm:$0xff]
    %v4913 = vld [vmem:[#allocation4 + $0x178] sm:$0xff]
    %v4914 = vld [vmem:[#allocation4 + $0x180] sm:$0xff]
    %v4915 = vld [vmem:[#allocation4 + $0x188] sm:$0xf]
    %v4916 = vld [vmem:[#allocation4 + $0x18c] sm:$0xff]
    %v4917 = vld [vmem:[#allocation4 + $0x194] sm:$0xff]
    %v4918 = vld [vmem:[#allocation4 + $0x19c] sm:$0xff]
    %v4919 = vld [vmem:[#allocation4 + $0x1a4] sm:$0xff]
    %v4920 = vld [vmem:[#allocation4 + $0x1ac] sm:$0xf]
    %v4921 = vld [vmem:[#allocation4 + $0x1b0] sm:$0xff]
    %v4922 = vld [vmem:[#allocation4 + $0x1b8] sm:$0xff]
    %v4923 = vld [vmem:[#allocation4 + $0x1c0] sm:$0xff]
    %v4924 = vld [vmem:[#allocation4 + $0x1c8] sm:$0xff]
    %v4925 = vld [vmem:[#allocation4 + $0x1d0] sm:$0xf]
    %v4926 = vld [vmem:[#allocation4 + $0x1d4] sm:$0xff]
    %v4927 = vld [vmem:[#allocation4 + $0x1dc] sm:$0xff]
    %v4928 = vld [vmem:[#allocation4 + $0x1e4] sm:$0xff]
    %v4929 = vld [vmem:[#allocation4 + $0x1ec] sm:$0xff]
    %v4930 = vld [vmem:[#allocation4 + $0x1f4] sm:$0xf]
    %v4931 = vld [vmem:[#allocation4 + $0x1f8] sm:$0xff]
    %v4932 = vld [vmem:[#allocation4 + $0x200] sm:$0xff]
    %v4933 = vld [vmem:[#allocation4 + $0x208] sm:$0xff]
    %v4934 = vld [vmem:[#allocation4 + $0x210] sm:$0xff]
    %v4935 = vld [vmem:[#allocation4 + $0x218] sm:$0xf]
    %v4936 = vld [vmem:[#allocation4 + $0x21c] sm:$0xff]
    %v4937 = vld [vmem:[#allocation4 + $0x224] sm:$0xff]
    %v4938 = vld [vmem:[#allocation4 + $0x22c] sm:$0xff]
    %v4939 = vld [vmem:[#allocation4 + $0x234] sm:$0xff]
    %v4940 = vld [vmem:[#allocation4 + $0x23c] sm:$0xf]
    %v4941 = vld [vmem:[#allocation16] sm:$0xf]
    %v4942 = vld [vmem:[#allocation16 + $0x4] sm:$0xf]
    %v4943 = vld [vmem:[#allocation16 + $0x8] sm:$0xf]
    %v4944 = vld [vmem:[#allocation16 + $0xc] sm:$0xf]
    %v4945 = vld [vmem:[#allocation16 + $0x10] sm:$0xf]
    %v4946 = vld [vmem:[#allocation16 + $0x14] sm:$0xf]
    %v4947 = vld [vmem:[#allocation16 + $0x18] sm:$0xf]
    %v4948 = vld [vmem:[#allocation16 + $0x1c] sm:$0xf]
    %v4949 = vld [vmem:[#allocation16 + $0x20] sm:$0xf]
    %v4950 = vld [vmem:[#allocation16 + $0x24] sm:$0xf]
    %v4951 = vld [vmem:[#allocation16 + $0x28] sm:$0xf]
    %v4952 = vld [vmem:[#allocation16 + $0x2c] sm:$0xf]
    %v4953 = vld [vmem:[#allocation16 + $0x30] sm:$0xf]
    %v4954 = vld [vmem:[#allocation16 + $0x34] sm:$0xf]
    %v4955 = vld [vmem:[#allocation16 + $0x38] sm:$0xf]
    %v4956 = vld [vmem:[#allocation16 + $0x3c] sm:$0xf]
    %v4957 = vld [vmem:[#allocation16 + $0x40] sm:$0xf]
    %v4958 = vld [vmem:[#allocation16 + $0x44] sm:$0xf]
    %v4959 = vld [vmem:[#allocation16 + $0x48] sm:$0xf]
    %v4960 = vld [vmem:[#allocation16 + $0x4c] sm:$0xf]
    %v4961 = vld [vmem:[#allocation16 + $0x50] sm:$0xf]
    %v4962 = vld [vmem:[#allocation16 + $0x54] sm:$0xf]
    %v4963 = vld [vmem:[#allocation16 + $0x58] sm:$0xf]
    %v4964 = vld [vmem:[#allocation16 + $0x5c] sm:$0xf]
    %v4965 = vld [vmem:[#allocation16 + $0x60] sm:$0xf]
    %v4966 = vld [vmem:[#allocation16 + $0x64] sm:$0xf]
    %v4967 = vld [vmem:[#allocation16 + $0x68] sm:$0xf]
    %v4968 = vld [vmem:[#allocation16 + $0x6c] sm:$0xf]
    %v4969 = vld [vmem:[#allocation16 + $0x70] sm:$0xf]
    %v4970 = vld [vmem:[#allocation16 + $0x74] sm:$0xf]
    %v4971 = vld [vmem:[#allocation16 + $0x78] sm:$0xf]
    %v4972 = vld [vmem:[#allocation16 + $0x7c] sm:$0xf]
    %v4973 = vld [vmem:[#allocation16 + $0x80] sm:$0xf]
    %v4974 = vld [vmem:[#allocation16 + $0x84] sm:$0xf]
    %v4975 = vld [vmem:[#allocation16 + $0x88] sm:$0xf]
    %v4976 = vld [vmem:[#allocation16 + $0x8c] sm:$0xf]
    %v4977 = vld [vmem:[#allocation16 + $0x90] sm:$0xf]
    %v4978 = vld [vmem:[#allocation16 + $0x94] sm:$0xf]
    %v4979 = vld [vmem:[#allocation16 + $0x98] sm:$0xf]
    %v4980 = vld [vmem:[#allocation16 + $0x9c] sm:$0xf]
    %v4981 = vld [vmem:[#allocation16 + $0xa0] sm:$0xf]
    %v4982 = vld [vmem:[#allocation16 + $0xa4] sm:$0xf]
    %v4983 = vld [vmem:[#allocation16 + $0xa8] sm:$0xf]
    %v4984 = vld [vmem:[#allocation16 + $0xac] sm:$0xf]
    %v4985 = vld [vmem:[#allocation16 + $0xb0] sm:$0xf]
    %v4986 = vld [vmem:[#allocation16 + $0xb4] sm:$0xf]
    %v4987 = vld [vmem:[#allocation16 + $0xb8] sm:$0xf]
    %v4988 = vld [vmem:[#allocation16 + $0xbc] sm:$0xf]
    %v4989 = vld [vmem:[#allocation16 + $0xc0] sm:$0xf]
    %v4990 = vld [vmem:[#allocation16 + $0xc4] sm:$0xf]
    %v4991 = vld [vmem:[#allocation16 + $0xc8] sm:$0xf]
    %v4992 = vld [vmem:[#allocation16 + $0xcc] sm:$0xf]
    %v4993 = vld [vmem:[#allocation16 + $0xd0] sm:$0xf]
    %v4994 = vld [vmem:[#allocation16 + $0xd4] sm:$0xf]
    %v4995 = vld [vmem:[#allocation16 + $0xd8] sm:$0xf]
    %v4996 = vld [vmem:[#allocation16 + $0xdc] sm:$0xf]
    %v4997 = vld [vmem:[#allocation16 + $0xe0] sm:$0xf]
    %v4998 = vld [vmem:[#allocation16 + $0xe4] sm:$0xf]
    %v4999 = vld [vmem:[#allocation16 + $0xe8] sm:$0xf]
    %v5000 = vld [vmem:[#allocation16 + $0xec] sm:$0xf]
    %v5001 = vld [vmem:[#allocation16 + $0xf0] sm:$0xf]
    %v5002 = vld [vmem:[#allocation16 + $0xf4] sm:$0xf]
    %v5003 = vld [vmem:[#allocation16 + $0xf8] sm:$0xf]
    %v5004 = vld [vmem:[#allocation16 + $0xfc] sm:$0xf]
    %v5005 = vld [vmem:[#allocation16 + $0x100] sm:$0xf]
    %v5006 = vld [vmem:[#allocation16 + $0x104] sm:$0xf]
    %v5007 = vld [vmem:[#allocation16 + $0x108] sm:$0xf]
    %v5008 = vld [vmem:[#allocation16 + $0x10c] sm:$0xf]
    %v5009 = vld [vmem:[#allocation16 + $0x110] sm:$0xf]
    %v5010 = vld [vmem:[#allocation16 + $0x114] sm:$0xf]
    %v5011 = vld [vmem:[#allocation16 + $0x118] sm:$0xf]
    %v5012 = vld [vmem:[#allocation16 + $0x11c] sm:$0xf]
    %v5013 = vld [vmem:[#allocation16 + $0x120] sm:$0xf]
    %v5014 = vld [vmem:[#allocation16 + $0x124] sm:$0xf]
    %v5015 = vld [vmem:[#allocation16 + $0x128] sm:$0xf]
    %v5016 = vld [vmem:[#allocation16 + $0x12c] sm:$0xf]
    %v5017 = vld [vmem:[#allocation16 + $0x130] sm:$0xf]
    %v5018 = vld [vmem:[#allocation16 + $0x134] sm:$0xf]
    %v5019 = vld [vmem:[#allocation16 + $0x138] sm:$0xf]
    %v5020 = vld [vmem:[#allocation16 + $0x13c] sm:$0xf]
    %v5021 = vld [vmem:[#allocation16 + $0x140] sm:$0xf]
    %v5022 = vld [vmem:[#allocation16 + $0x144] sm:$0xf]
    %v5023 = vld [vmem:[#allocation16 + $0x148] sm:$0xf]
    %v5024 = vld [vmem:[#allocation16 + $0x14c] sm:$0xf]
    %v5025 = vld [vmem:[#allocation16 + $0x150] sm:$0xf]
    %v5026 = vld [vmem:[#allocation16 + $0x154] sm:$0xf]
    %v5027 = vld [vmem:[#allocation16 + $0x158] sm:$0xf]
    %v5028 = vld [vmem:[#allocation16 + $0x15c] sm:$0xf]
    %v5029 = vld [vmem:[#allocation16 + $0x160] sm:$0xf]
    %v5030 = vld [vmem:[#allocation16 + $0x164] sm:$0xf]
    %v5031 = vld [vmem:[#allocation16 + $0x168] sm:$0xf]
    %v5032 = vld [vmem:[#allocation16 + $0x16c] sm:$0xf]
    %v5033 = vld [vmem:[#allocation16 + $0x170] sm:$0xf]
    %v5034 = vld [vmem:[#allocation16 + $0x174] sm:$0xf]
    %v5035 = vld [vmem:[#allocation16 + $0x178] sm:$0xf]
    %v5036 = vld [vmem:[#allocation16 + $0x17c] sm:$0xf]
    %v5037 = vld [vmem:[#allocation16 + $0x180] sm:$0xf]
    %v5038 = vld [vmem:[#allocation16 + $0x184] sm:$0xf]
    %v5039 = vld [vmem:[#allocation16 + $0x188] sm:$0xf]
    %v5040 = vld [vmem:[#allocation16 + $0x18c] sm:$0xf]
    %v5041 = vld [vmem:[#allocation16 + $0x190] sm:$0xf]
    %v5042 = vld [vmem:[#allocation16 + $0x194] sm:$0xf]
    %v5043 = vld [vmem:[#allocation16 + $0x198] sm:$0xf]
    %v5044 = vld [vmem:[#allocation16 + $0x19c] sm:$0xf]
    %v5045 = vld [vmem:[#allocation16 + $0x1a0] sm:$0xf]
    %v5046 = vld [vmem:[#allocation16 + $0x1a4] sm:$0xf]
    %v5047 = vld [vmem:[#allocation16 + $0x1a8] sm:$0xf]
    %v5048 = vld [vmem:[#allocation16 + $0x1ac] sm:$0xf]
    %v5049 = vld [vmem:[#allocation16 + $0x1b0] sm:$0xf]
    %v5050 = vld [vmem:[#allocation16 + $0x1b4] sm:$0xf]
    %v5051 = vld [vmem:[#allocation16 + $0x1b8] sm:$0xf]
    %v5052 = vld [vmem:[#allocation16 + $0x1bc] sm:$0xf]
    %v5053 = vld [vmem:[#allocation16 + $0x1c0] sm:$0xf]
    %v5054 = vld [vmem:[#allocation16 + $0x1c4] sm:$0xf]
    %v5055 = vld [vmem:[#allocation16 + $0x1c8] sm:$0xf]
    %v5056 = vld [vmem:[#allocation16 + $0x1cc] sm:$0xf]
    %v5057 = vld [vmem:[#allocation16 + $0x1d0] sm:$0xf]
    %v5058 = vld [vmem:[#allocation16 + $0x1d4] sm:$0xf]
    %v5059 = vld [vmem:[#allocation16 + $0x1d8] sm:$0xf]
    %v5060 = vld [vmem:[#allocation16 + $0x1dc] sm:$0xf]
    %v5061 = vld [vmem:[#allocation16 + $0x1e0] sm:$0xf]
    %v5062 = vld [vmem:[#allocation16 + $0x1e4] sm:$0xf]
    %v5063 = vld [vmem:[#allocation16 + $0x1e8] sm:$0xf]
    %v5064 = vld [vmem:[#allocation16 + $0x1ec] sm:$0xf]
    %v5065 = vld [vmem:[#allocation16 + $0x1f0] sm:$0xf]
    %v5066 = vld [vmem:[#allocation16 + $0x1f4] sm:$0xf]
    %v5067 = vld [vmem:[#allocation16 + $0x1f8] sm:$0xf]
    %v5068 = vld [vmem:[#allocation16 + $0x1fc] sm:$0xf]
    %v5069 = vld [vmem:[#allocation16 + $0x200] sm:$0xf]
    %v5070 = vld [vmem:[#allocation16 + $0x204] sm:$0xf]
    %v5071 = vld [vmem:[#allocation16 + $0x208] sm:$0xf]
    %v5072 = vld [vmem:[#allocation16 + $0x20c] sm:$0xf]
    %v5073 = vld [vmem:[#allocation16 + $0x210] sm:$0xf]
    %v5074 = vld [vmem:[#allocation16 + $0x214] sm:$0xf]
    %v5075 = vld [vmem:[#allocation16 + $0x218] sm:$0xf]
    %v5076 = vld [vmem:[#allocation16 + $0x21c] sm:$0xf]
    %v5077 = vld [vmem:[#allocation16 + $0x220] sm:$0xf]
    %v5078 = vld [vmem:[#allocation16 + $0x224] sm:$0xf]
    %v5079 = vld [vmem:[#allocation16 + $0x228] sm:$0xf]
    %v5080 = vld [vmem:[#allocation16 + $0x22c] sm:$0xf]
    %v5081 = vld [vmem:[#allocation16 + $0x230] sm:$0xf]
    %v5082 = vld [vmem:[#allocation16 + $0x234] sm:$0xf]
    %v5083 = vld [vmem:[#allocation16 + $0x238] sm:$0xf]
    %v5084 = vld [vmem:[#allocation16 + $0x23c] sm:$0xf]
    %v5165 = vunpack.c.l.b16 %v4861
    %v5166 = vunpack.c.h.b16 %v4861
    %v5167 = vunpack.c.l.b16 %v4862
    %v5168 = vunpack.c.h.b16 %v4862
    %v5169 = vunpack.c.l.b16 %v4863
    %v5170 = vunpack.c.h.b16 %v4863
    %v5171 = vunpack.c.l.b16 %v4864
    %v5172 = vunpack.c.h.b16 %v4864
    %v5173 = vunpack.c.l.b16 %v4865
    %v5174 = vunpack.c.l.b16 %v4866
    %v5175 = vunpack.c.h.b16 %v4866
    %v5176 = vunpack.c.l.b16 %v4867
    %v5177 = vunpack.c.h.b16 %v4867
    %v5178 = vunpack.c.l.b16 %v4868
    %v5179 = vunpack.c.h.b16 %v4868
    %v5180 = vunpack.c.l.b16 %v4869
    %v5181 = vunpack.c.h.b16 %v4869
    %v5182 = vunpack.c.l.b16 %v4870
    %v5183 = vunpack.c.l.b16 %v4871
    %v5184 = vunpack.c.h.b16 %v4871
    %v5185 = vunpack.c.l.b16 %v4872
    %v5186 = vunpack.c.h.b16 %v4872
    %v5187 = vunpack.c.l.b16 %v4873
    %v5188 = vunpack.c.h.b16 %v4873
    %v5189 = vunpack.c.l.b16 %v4874
    %v5190 = vunpack.c.h.b16 %v4874
    %v5191 = vunpack.c.l.b16 %v4875
    %v5192 = vunpack.c.l.b16 %v4876
    %v5193 = vunpack.c.h.b16 %v4876
    %v5194 = vunpack.c.l.b16 %v4877
    %v5195 = vunpack.c.h.b16 %v4877
    %v5196 = vunpack.c.l.b16 %v4878
    %v5197 = vunpack.c.h.b16 %v4878
    %v5198 = vunpack.c.l.b16 %v4879
    %v5199 = vunpack.c.h.b16 %v4879
    %v5200 = vunpack.c.l.b16 %v4880
    %v5201 = vunpack.c.l.b16 %v4881
    %v5202 = vunpack.c.h.b16 %v4881
    %v5203 = vunpack.c.l.b16 %v4882
    %v5204 = vunpack.c.h.b16 %v4882
    %v5205 = vunpack.c.l.b16 %v4883
    %v5206 = vunpack.c.h.b16 %v4883
    %v5207 = vunpack.c.l.b16 %v4884
    %v5208 = vunpack.c.h.b16 %v4884
    %v5209 = vunpack.c.l.b16 %v4885
    %v5210 = vunpack.c.l.b16 %v4886
    %v5211 = vunpack.c.h.b16 %v4886
    %v5212 = vunpack.c.l.b16 %v4887
    %v5213 = vunpack.c.h.b16 %v4887
    %v5214 = vunpack.c.l.b16 %v4888
    %v5215 = vunpack.c.h.b16 %v4888
    %v5216 = vunpack.c.l.b16 %v4889
    %v5217 = vunpack.c.h.b16 %v4889
    %v5218 = vunpack.c.l.b16 %v4890
    %v5219 = vunpack.c.l.b16 %v4891
    %v5220 = vunpack.c.h.b16 %v4891
    %v5221 = vunpack.c.l.b16 %v4892
    %v5222 = vunpack.c.h.b16 %v4892
    %v5223 = vunpack.c.l.b16 %v4893
    %v5224 = vunpack.c.h.b16 %v4893
    %v5225 = vunpack.c.l.b16 %v4894
    %v5226 = vunpack.c.h.b16 %v4894
    %v5227 = vunpack.c.l.b16 %v4895
    %v5228 = vunpack.c.l.b16 %v4896
    %v5229 = vunpack.c.h.b16 %v4896
    %v5230 = vunpack.c.l.b16 %v4897
    %v5231 = vunpack.c.h.b16 %v4897
    %v5232 = vunpack.c.l.b16 %v4898
    %v5233 = vunpack.c.h.b16 %v4898
    %v5234 = vunpack.c.l.b16 %v4899
    %v5235 = vunpack.c.h.b16 %v4899
    %v5236 = vunpack.c.l.b16 %v4900
    %v5237 = vunpack.c.l.b16 %v4901
    %v5238 = vunpack.c.h.b16 %v4901
    %v5239 = vunpack.c.l.b16 %v4902
    %v5240 = vunpack.c.h.b16 %v4902
    %v5241 = vunpack.c.l.b16 %v4903
    %v5242 = vunpack.c.h.b16 %v4903
    %v5243 = vunpack.c.l.b16 %v4904
    %v5244 = vunpack.c.h.b16 %v4904
    %v5245 = vunpack.c.l.b16 %v4905
    %v5246 = vunpack.c.l.b16 %v4906
    %v5247 = vunpack.c.h.b16 %v4906
    %v5248 = vunpack.c.l.b16 %v4907
    %v5249 = vunpack.c.h.b16 %v4907
    %v5250 = vunpack.c.l.b16 %v4908
    %v5251 = vunpack.c.h.b16 %v4908
    %v5252 = vunpack.c.l.b16 %v4909
    %v5253 = vunpack.c.h.b16 %v4909
    %v5254 = vunpack.c.l.b16 %v4910
    %v5255 = vunpack.c.l.b16 %v4911
    %v5256 = vunpack.c.h.b16 %v4911
    %v5257 = vunpack.c.l.b16 %v4912
    %v5258 = vunpack.c.h.b16 %v4912
    %v5259 = vunpack.c.l.b16 %v4913
    %v5260 = vunpack.c.h.b16 %v4913
    %v5261 = vunpack.c.l.b16 %v4914
    %v5262 = vunpack.c.h.b16 %v4914
    %v5263 = vunpack.c.l.b16 %v4915
    %v5264 = vunpack.c.l.b16 %v4916
    %v5265 = vunpack.c.h.b16 %v4916
    %v5266 = vunpack.c.l.b16 %v4917
    %v5267 = vunpack.c.h.b16 %v4917
    %v5268 = vunpack.c.l.b16 %v4918
    %v5269 = vunpack.c.h.b16 %v4918
    %v5270 = vunpack.c.l.b16 %v4919
    %v5271 = vunpack.c.h.b16 %v4919
    %v5272 = vunpack.c.l.b16 %v4920
    %v5273 = vunpack.c.l.b16 %v4921
    %v5274 = vunpack.c.h.b16 %v4921
    %v5275 = vunpack.c.l.b16 %v4922
    %v5276 = vunpack.c.h.b16 %v4922
    %v5277 = vunpack.c.l.b16 %v4923
    %v5278 = vunpack.c.h.b16 %v4923
    %v5279 = vunpack.c.l.b16 %v4924
    %v5280 = vunpack.c.h.b16 %v4924
    %v5281 = vunpack.c.l.b16 %v4925
    %v5282 = vunpack.c.l.b16 %v4926
    %v5283 = vunpack.c.h.b16 %v4926
    %v5284 = vunpack.c.l.b16 %v4927
    %v5285 = vunpack.c.h.b16 %v4927
    %v5286 = vunpack.c.l.b16 %v4928
    %v5287 = vunpack.c.h.b16 %v4928
    %v5288 = vunpack.c.l.b16 %v4929
    %v5289 = vunpack.c.h.b16 %v4929
    %v5290 = vunpack.c.l.b16 %v4930
    %v5291 = vunpack.c.l.b16 %v4931
    %v5292 = vunpack.c.h.b16 %v4931
    %v5293 = vunpack.c.l.b16 %v4932
    %v5294 = vunpack.c.h.b16 %v4932
    %v5295 = vunpack.c.l.b16 %v4933
    %v5296 = vunpack.c.h.b16 %v4933
    %v5297 = vunpack.c.l.b16 %v4934
    %v5298 = vunpack.c.h.b16 %v4934
    %v5299 = vunpack.c.l.b16 %v4935
    %v5300 = vunpack.c.l.b16 %v4936
    %v5301 = vunpack.c.h.b16 %v4936
    %v5302 = vunpack.c.l.b16 %v4937
    %v5303 = vunpack.c.h.b16 %v4937
    %v5304 = vunpack.c.l.b16 %v4938
    %v5305 = vunpack.c.h.b16 %v4938
    %v5306 = vunpack.c.l.b16 %v4939
    %v5307 = vunpack.c.h.b16 %v4939
    %v5308 = vunpack.c.l.b16 %v4940
    %v5309 = vpack.c.b16 %v5174, %v5165
    %v5310 = vpack.c.b16 %v5175, %v5166
    %v5311 = vpack.c.b16 %v5176, %v5167
    %v5312 = vpack.c.b16 %v5177, %v5168
    %v5313 = vpack.c.b16 %v5178, %v5169
    %v5314 = vpack.c.b16 %v5179, %v5170
    %v5315 = vpack.c.b16 %v5180, %v5171
    %v5316 = vpack.c.b16 %v5181, %v5172
    %v5317 = vpack.c.b16 %v5182, %v5173
    %v5318 = vpack.c.b16 %v5192, %v5183
    %v5319 = vpack.c.b16 %v5193, %v5184
    %v5320 = vpack.c.b16 %v5194, %v5185
    %v5321 = vpack.c.b16 %v5195, %v5186
    %v5322 = vpack.c.b16 %v5196, %v5187
    %v5323 = vpack.c.b16 %v5197, %v5188
    %v5324 = vpack.c.b16 %v5198, %v5189
    %v5325 = vpack.c.b16 %v5199, %v5190
    %v5326 = vpack.c.b16 %v5200, %v5191
    %v5327 = vpack.c.b16 %v5210, %v5201
    %v5328 = vpack.c.b16 %v5211, %v5202
    %v5329 = vpack.c.b16 %v5212, %v5203
    %v5330 = vpack.c.b16 %v5213, %v5204
    %v5331 = vpack.c.b16 %v5214, %v5205
    %v5332 = vpack.c.b16 %v5215, %v5206
    %v5333 = vpack.c.b16 %v5216, %v5207
    %v5334 = vpack.c.b16 %v5217, %v5208
    %v5335 = vpack.c.b16 %v5218, %v5209
    %v5336 = vpack.c.b16 %v5228, %v5219
    %v5337 = vpack.c.b16 %v5229, %v5220
    %v5338 = vpack.c.b16 %v5230, %v5221
    %v5339 = vpack.c.b16 %v5231, %v5222
    %v5340 = vpack.c.b16 %v5232, %v5223
    %v5341 = vpack.c.b16 %v5233, %v5224
    %v5342 = vpack.c.b16 %v5234, %v5225
    %v5343 = vpack.c.b16 %v5235, %v5226
    %v5344 = vpack.c.b16 %v5236, %v5227
    %v5345 = vpack.c.b16 %v5246, %v5237
    %v5346 = vpack.c.b16 %v5247, %v5238
    %v5347 = vpack.c.b16 %v5248, %v5239
    %v5348 = vpack.c.b16 %v5249, %v5240
    %v5349 = vpack.c.b16 %v5250, %v5241
    %v5350 = vpack.c.b16 %v5251, %v5242
    %v5351 = vpack.c.b16 %v5252, %v5243
    %v5352 = vpack.c.b16 %v5253, %v5244
    %v5353 = vpack.c.b16 %v5254, %v5245
    %v5354 = vpack.c.b16 %v5264, %v5255
    %v5355 = vpack.c.b16 %v5265, %v5256
    %v5356 = vpack.c.b16 %v5266, %v5257
    %v5357 = vpack.c.b16 %v5267, %v5258
    %v5358 = vpack.c.b16 %v5268, %v5259
    %v5359 = vpack.c.b16 %v5269, %v5260
    %v5360 = vpack.c.b16 %v5270, %v5261
    %v5361 = vpack.c.b16 %v5271, %v5262
    %v5362 = vpack.c.b16 %v5272, %v5263
    %v5363 = vpack.c.b16 %v5282, %v5273
    %v5364 = vpack.c.b16 %v5283, %v5274
    %v5365 = vpack.c.b16 %v5284, %v5275
    %v5366 = vpack.c.b16 %v5285, %v5276
    %v5367 = vpack.c.b16 %v5286, %v5277
    %v5368 = vpack.c.b16 %v5287, %v5278
    %v5369 = vpack.c.b16 %v5288, %v5279
    %v5370 = vpack.c.b16 %v5289, %v5280
    %v5371 = vpack.c.b16 %v5290, %v5281
    %v5372 = vpack.c.b16 %v5300, %v5291
    %v5373 = vpack.c.b16 %v5301, %v5292
    %v5374 = vpack.c.b16 %v5302, %v5293
    %v5375 = vpack.c.b16 %v5303, %v5294
    %v5376 = vpack.c.b16 %v5304, %v5295
    %v5377 = vpack.c.b16 %v5305, %v5296
    %v5378 = vpack.c.b16 %v5306, %v5297
    %v5379 = vpack.c.b16 %v5307, %v5298
    %v5380 = vpack.c.b16 %v5308, %v5299
    %v5597 = vunpack.c.l.b16 %v4941
    %v5598 = vunpack.c.l.b16 %v4942
    %v5599 = vunpack.c.l.b16 %v4943
    %v5600 = vunpack.c.l.b16 %v4944
    %v5601 = vunpack.c.l.b16 %v4945
    %v5602 = vunpack.c.l.b16 %v4946
    %v5603 = vunpack.c.l.b16 %v4947
    %v5604 = vunpack.c.l.b16 %v4948
    %v5605 = vunpack.c.l.b16 %v4949
    %v5606 = vunpack.c.l.b16 %v4950
    %v5607 = vunpack.c.l.b16 %v4951
    %v5608 = vunpack.c.l.b16 %v4952
    %v5609 = vunpack.c.l.b16 %v4953
    %v5610 = vunpack.c.l.b16 %v4954
    %v5611 = vunpack.c.l.b16 %v4955
    %v5612 = vunpack.c.l.b16 %v4956
    %v5613 = vunpack.c.l.b16 %v4957
    %v5614 = vunpack.c.l.b16 %v4958
    %v5615 = vunpack.c.l.b16 %v4959
    %v5616 = vunpack.c.l.b16 %v4960
    %v5617 = vunpack.c.l.b16 %v4961
    %v5618 = vunpack.c.l.b16 %v4962
    %v5619 = vunpack.c.l.b16 %v4963
    %v5620 = vunpack.c.l.b16 %v4964
    %v5621 = vunpack.c.l.b16 %v4965
    %v5622 = vunpack.c.l.b16 %v4966
    %v5623 = vunpack.c.l.b16 %v4967
    %v5624 = vunpack.c.l.b16 %v4968
    %v5625 = vunpack.c.l.b16 %v4969
    %v5626 = vunpack.c.l.b16 %v4970
    %v5627 = vunpack.c.l.b16 %v4971
    %v5628 = vunpack.c.l.b16 %v4972
    %v5629 = vunpack.c.l.b16 %v4973
    %v5630 = vunpack.c.l.b16 %v4974
    %v5631 = vunpack.c.l.b16 %v4975
    %v5632 = vunpack.c.l.b16 %v4976
    %v5633 = vunpack.c.l.b16 %v4977
    %v5634 = vunpack.c.l.b16 %v4978
    %v5635 = vunpack.c.l.b16 %v4979
    %v5636 = vunpack.c.l.b16 %v4980
    %v5637 = vunpack.c.l.b16 %v4981
    %v5638 = vunpack.c.l.b16 %v4982
    %v5639 = vunpack.c.l.b16 %v4983
    %v5640 = vunpack.c.l.b16 %v4984
    %v5641 = vunpack.c.l.b16 %v4985
    %v5642 = vunpack.c.l.b16 %v4986
    %v5643 = vunpack.c.l.b16 %v4987
    %v5644 = vunpack.c.l.b16 %v4988
    %v5645 = vunpack.c.l.b16 %v4989
    %v5646 = vunpack.c.l.b16 %v4990
    %v5647 = vunpack.c.l.b16 %v4991
    %v5648 = vunpack.c.l.b16 %v4992
    %v5649 = vunpack.c.l.b16 %v4993
    %v5650 = vunpack.c.l.b16 %v4994
    %v5651 = vunpack.c.l.b16 %v4995
    %v5652 = vunpack.c.l.b16 %v4996
    %v5653 = vunpack.c.l.b16 %v4997
    %v5654 = vunpack.c.l.b16 %v4998
    %v5655 = vunpack.c.l.b16 %v4999
    %v5656 = vunpack.c.l.b16 %v5000
    %v5657 = vunpack.c.l.b16 %v5001
    %v5658 = vunpack.c.l.b16 %v5002
    %v5659 = vunpack.c.l.b16 %v5003
    %v5660 = vunpack.c.l.b16 %v5004
    %v5661 = vunpack.c.l.b16 %v5005
    %v5662 = vunpack.c.l.b16 %v5006
    %v5663 = vunpack.c.l.b16 %v5007
    %v5664 = vunpack.c.l.b16 %v5008
    %v5665 = vunpack.c.l.b16 %v5009
    %v5666 = vunpack.c.l.b16 %v5010
    %v5667 = vunpack.c.l.b16 %v5011
    %v5668 = vunpack.c.l.b16 %v5012
    %v5669 = vunpack.c.l.b16 %v5013
    %v5670 = vunpack.c.l.b16 %v5014
    %v5671 = vunpack.c.l.b16 %v5015
    %v5672 = vunpack.c.l.b16 %v5016
    %v5673 = vunpack.c.l.b16 %v5017
    %v5674 = vunpack.c.l.b16 %v5018
    %v5675 = vunpack.c.l.b16 %v5019
    %v5676 = vunpack.c.l.b16 %v5020
    %v5677 = vunpack.c.l.b16 %v5021
    %v5678 = vunpack.c.l.b16 %v5022
    %v5679 = vunpack.c.l.b16 %v5023
    %v5680 = vunpack.c.l.b16 %v5024
    %v5681 = vunpack.c.l.b16 %v5025
    %v5682 = vunpack.c.l.b16 %v5026
    %v5683 = vunpack.c.l.b16 %v5027
    %v5684 = vunpack.c.l.b16 %v5028
    %v5685 = vunpack.c.l.b16 %v5029
    %v5686 = vunpack.c.l.b16 %v5030
    %v5687 = vunpack.c.l.b16 %v5031
    %v5688 = vunpack.c.l.b16 %v5032
    %v5689 = vunpack.c.l.b16 %v5033
    %v5690 = vunpack.c.l.b16 %v5034
    %v5691 = vunpack.c.l.b16 %v5035
    %v5692 = vunpack.c.l.b16 %v5036
    %v5693 = vunpack.c.l.b16 %v5037
    %v5694 = vunpack.c.l.b16 %v5038
    %v5695 = vunpack.c.l.b16 %v5039
    %v5696 = vunpack.c.l.b16 %v5040
    %v5697 = vunpack.c.l.b16 %v5041
    %v5698 = vunpack.c.l.b16 %v5042
    %v5699 = vunpack.c.l.b16 %v5043
    %v5700 = vunpack.c.l.b16 %v5044
    %v5701 = vunpack.c.l.b16 %v5045
    %v5702 = vunpack.c.l.b16 %v5046
    %v5703 = vunpack.c.l.b16 %v5047
    %v5704 = vunpack.c.l.b16 %v5048
    %v5705 = vunpack.c.l.b16 %v5049
    %v5706 = vunpack.c.l.b16 %v5050
    %v5707 = vunpack.c.l.b16 %v5051
    %v5708 = vunpack.c.l.b16 %v5052
    %v5709 = vunpack.c.l.b16 %v5053
    %v5710 = vunpack.c.l.b16 %v5054
    %v5711 = vunpack.c.l.b16 %v5055
    %v5712 = vunpack.c.l.b16 %v5056
    %v5713 = vunpack.c.l.b16 %v5057
    %v5714 = vunpack.c.l.b16 %v5058
    %v5715 = vunpack.c.l.b16 %v5059
    %v5716 = vunpack.c.l.b16 %v5060
    %v5717 = vunpack.c.l.b16 %v5061
    %v5718 = vunpack.c.l.b16 %v5062
    %v5719 = vunpack.c.l.b16 %v5063
    %v5720 = vunpack.c.l.b16 %v5064
    %v5721 = vunpack.c.l.b16 %v5065
    %v5722 = vunpack.c.l.b16 %v5066
    %v5723 = vunpack.c.l.b16 %v5067
    %v5724 = vunpack.c.l.b16 %v5068
    %v5725 = vunpack.c.l.b16 %v5069
    %v5726 = vunpack.c.l.b16 %v5070
    %v5727 = vunpack.c.l.b16 %v5071
    %v5728 = vunpack.c.l.b16 %v5072
    %v5729 = vunpack.c.l.b16 %v5073
    %v5730 = vunpack.c.l.b16 %v5074
    %v5731 = vunpack.c.l.b16 %v5075
    %v5732 = vunpack.c.l.b16 %v5076
    %v5733 = vunpack.c.l.b16 %v5077
    %v5734 = vunpack.c.l.b16 %v5078
    %v5735 = vunpack.c.l.b16 %v5079
    %v5736 = vunpack.c.l.b16 %v5080
    %v5737 = vunpack.c.l.b16 %v5081
    %v5738 = vunpack.c.l.b16 %v5082
    %v5739 = vunpack.c.l.b16 %v5083
    %v5740 = vunpack.c.l.b16 %v5084
    %v5741 = vpack.c.b16 %v5598, %v5597
    %v5742 = vpack.c.b16 %v5600, %v5599
    %v5743 = vpack.c.b16 %v5602, %v5601
    %v5744 = vpack.c.b16 %v5604, %v5603
    %v5745 = vpack.c.b16 %v5606, %v5605
    %v5746 = vpack.c.b16 %v5608, %v5607
    %v5747 = vpack.c.b16 %v5610, %v5609
    %v5748 = vpack.c.b16 %v5612, %v5611
    %v5749 = vpack.c.b16 %v5614, %v5613
    %v5750 = vpack.c.b16 %v5616, %v5615
    %v5751 = vpack.c.b16 %v5618, %v5617
    %v5752 = vpack.c.b16 %v5620, %v5619
    %v5753 = vpack.c.b16 %v5622, %v5621
    %v5754 = vpack.c.b16 %v5624, %v5623
    %v5755 = vpack.c.b16 %v5626, %v5625
    %v5756 = vpack.c.b16 %v5628, %v5627
    %v5757 = vpack.c.b16 %v5630, %v5629
    %v5758 = vpack.c.b16 %v5632, %v5631
    %v5759 = vpack.c.b16 %v5634, %v5633
    %v5760 = vpack.c.b16 %v5636, %v5635
    %v5761 = vpack.c.b16 %v5638, %v5637
    %v5762 = vpack.c.b16 %v5640, %v5639
    %v5763 = vpack.c.b16 %v5642, %v5641
    %v5764 = vpack.c.b16 %v5644, %v5643
    %v5765 = vpack.c.b16 %v5646, %v5645
    %v5766 = vpack.c.b16 %v5648, %v5647
    %v5767 = vpack.c.b16 %v5650, %v5649
    %v5768 = vpack.c.b16 %v5652, %v5651
    %v5769 = vpack.c.b16 %v5654, %v5653
    %v5770 = vpack.c.b16 %v5656, %v5655
    %v5771 = vpack.c.b16 %v5658, %v5657
    %v5772 = vpack.c.b16 %v5660, %v5659
    %v5773 = vpack.c.b16 %v5662, %v5661
    %v5774 = vpack.c.b16 %v5664, %v5663
    %v5775 = vpack.c.b16 %v5666, %v5665
    %v5776 = vpack.c.b16 %v5668, %v5667
    %v5777 = vpack.c.b16 %v5670, %v5669
    %v5778 = vpack.c.b16 %v5672, %v5671
    %v5779 = vpack.c.b16 %v5674, %v5673
    %v5780 = vpack.c.b16 %v5676, %v5675
    %v5781 = vpack.c.b16 %v5678, %v5677
    %v5782 = vpack.c.b16 %v5680, %v5679
    %v5783 = vpack.c.b16 %v5682, %v5681
    %v5784 = vpack.c.b16 %v5684, %v5683
    %v5785 = vpack.c.b16 %v5686, %v5685
    %v5786 = vpack.c.b16 %v5688, %v5687
    %v5787 = vpack.c.b16 %v5690, %v5689
    %v5788 = vpack.c.b16 %v5692, %v5691
    %v5789 = vpack.c.b16 %v5694, %v5693
    %v5790 = vpack.c.b16 %v5696, %v5695
    %v5791 = vpack.c.b16 %v5698, %v5697
    %v5792 = vpack.c.b16 %v5700, %v5699
    %v5793 = vpack.c.b16 %v5702, %v5701
    %v5794 = vpack.c.b16 %v5704, %v5703
    %v5795 = vpack.c.b16 %v5706, %v5705
    %v5796 = vpack.c.b16 %v5708, %v5707
    %v5797 = vpack.c.b16 %v5710, %v5709
    %v5798 = vpack.c.b16 %v5712, %v5711
    %v5799 = vpack.c.b16 %v5714, %v5713
    %v5800 = vpack.c.b16 %v5716, %v5715
    %v5801 = vpack.c.b16 %v5718, %v5717
    %v5802 = vpack.c.b16 %v5720, %v5719
    %v5803 = vpack.c.b16 %v5722, %v5721
    %v5804 = vpack.c.b16 %v5724, %v5723
    %v5805 = vpack.c.b16 %v5726, %v5725
    %v5806 = vpack.c.b16 %v5728, %v5727
    %v5807 = vpack.c.b16 %v5730, %v5729
    %v5808 = vpack.c.b16 %v5732, %v5731
    %v5809 = vpack.c.b16 %v5734, %v5733
    %v5810 = vpack.c.b16 %v5736, %v5735
    %v5811 = vpack.c.b16 %v5738, %v5737
    %v5812 = vpack.c.b16 %v5740, %v5739
    %5885 = vmatprep.subr.bf16.mxu0 0
    %5886 = vmatpush1.bf16.msra.mxu0 %v5748
    %5887 = vmatprep.subr.bf16.mxu0 0
    %5888 = vmatpush1.bf16.msra.mxu0 %v5747
    %5889 = vmatprep.subr.bf16.mxu0 0
    %5890 = vmatpush1.bf16.msra.mxu0 %v5746
    %5891 = vmatprep.subr.bf16.mxu0 0
    %5892 = vmatpush1.bf16.msra.mxu0 %v5745
    %5893 = vmatprep.subr.bf16.mxu0 0
    %5894 = vmatpush1.bf16.msra.mxu0 %v5744
    %5895 = vmatprep.subr.bf16.mxu0 0
    %5896 = vmatpush1.bf16.msra.mxu0 %v5743
    %5897 = vmatprep.subr.bf16.mxu0 0
    %5898 = vmatpush1.bf16.msra.mxu0 %v5742
    %5899 = vmatprep.subr.bf16.mxu0 0
    %5900 = vmatpush1.bf16.msra.mxu0 %v5741
    %5901 = vmatprep.subr.bf16.mxu0 0
    %5902 = vmatpush2.bf16.msra.mxu0 %v5756
    %5903 = vmatprep.subr.bf16.mxu0 0
    %5904 = vmatpush2.bf16.msra.mxu0 %v5755
    %5905 = vmatprep.subr.bf16.mxu0 0
    %5906 = vmatpush2.bf16.msra.mxu0 %v5754
    %5907 = vmatprep.subr.bf16.mxu0 0
    %5908 = vmatpush2.bf16.msra.mxu0 %v5753
    %5909 = vmatprep.subr.bf16.mxu0 0
    %5910 = vmatpush2.bf16.msra.mxu0 %v5752
    %5911 = vmatprep.subr.bf16.mxu0 0
    %5912 = vmatpush2.bf16.msra.mxu0 %v5751
    %5913 = vmatprep.subr.bf16.mxu0 0
    %5914 = vmatpush2.bf16.msra.mxu0 %v5750
    %5915 = vmatprep.subr.bf16.mxu0 0
    %5916 = vmatpush2.bf16.msra.mxu0 %v5749
    %5917 = vmatprep.mubr.bf16.mxu0 %v5310
    %5918 = vmatmul.mubr.bf16.gmra.mxu0 %v5309
    %v5919 = vpop.f32.mrf.mxu0
    %v5920 = vadd.f32 0.0, %v5919
    %v5921 = vpop.f32.mrf.mxu0
    %v5922 = vpop.f32.mrf.mxu0
    %v5923 = vadd.f32 0.0, %v5922
    %v5924 = vpop.f32.mrf.mxu0
    %5925 = vmatprep.mubr.bf16.mxu0 %v5319
    %5926 = vmatmul.mubr.bf16.gmra.mxu0 %v5318
    %v5927 = vpop.f32.mrf.mxu0
    %v5928 = vadd.f32 0.0, %v5927
    %v5929 = vpop.f32.mrf.mxu0
    %v5930 = vpop.f32.mrf.mxu0
    %v5931 = vadd.f32 0.0, %v5930
    %v5932 = vpop.f32.mrf.mxu0
    %5933 = vmatprep.mubr.bf16.mxu0 %v5328
    %5934 = vmatmul.mubr.bf16.gmra.mxu0 %v5327
    %v5935 = vpop.f32.mrf.mxu0
    %v5936 = vadd.f32 0.0, %v5935
    %v5937 = vpop.f32.mrf.mxu0
    %v5938 = vpop.f32.mrf.mxu0
    %v5939 = vadd.f32 0.0, %v5938
    %v5940 = vpop.f32.mrf.mxu0
    %5941 = vmatprep.mubr.bf16.mxu0 %v5337
    %5942 = vmatmul.mubr.bf16.gmra.mxu0 %v5336
    %v5943 = vpop.f32.mrf.mxu0
    %v5944 = vadd.f32 0.0, %v5943
    %v5945 = vpop.f32.mrf.mxu0
    %v5946 = vpop.f32.mrf.mxu0
    %v5947 = vadd.f32 0.0, %v5946
    %v5948 = vpop.f32.mrf.mxu0
    %5949 = vmatprep.mubr.bf16.mxu0 %v5346
    %5950 = vmatmul.mubr.bf16.gmra.mxu0 %v5345
    %v5951 = vpop.f32.mrf.mxu0
    %v5952 = vadd.f32 0.0, %v5951
    %v5953 = vpop.f32.mrf.mxu0
    %v5954 = vpop.f32.mrf.mxu0
    %v5955 = vadd.f32 0.0, %v5954
    %v5956 = vpop.f32.mrf.mxu0
    %5957 = vmatprep.mubr.bf16.mxu0 %v5355
    %5958 = vmatmul.mubr.bf16.gmra.mxu0 %v5354
    %v5959 = vpop.f32.mrf.mxu0
    %v5960 = vadd.f32 0.0, %v5959
    %v5961 = vpop.f32.mrf.mxu0
    %v5962 = vpop.f32.mrf.mxu0
    %v5963 = vadd.f32 0.0, %v5962
    %v5964 = vpop.f32.mrf.mxu0
    %5965 = vmatprep.mubr.bf16.mxu0 %v5364
    %5966 = vmatmul.mubr.bf16.gmra.mxu0 %v5363
    %v5967 = vpop.f32.mrf.mxu0
    %v5968 = vadd.f32 0.0, %v5967
    %v5969 = vpop.f32.mrf.mxu0
    %v5970 = vpop.f32.mrf.mxu0
    %v5971 = vadd.f32 0.0, %v5970
    %v5972 = vpop.f32.mrf.mxu0
    %5973 = vmatprep.mubr.bf16.mxu0 %v5373
    %5974 = vmatmul.mubr.bf16.gmra.mxu0 %v5372
    %v5975 = vpop.f32.mrf.mxu0
    %v5976 = vadd.f32 0.0, %v5975
    %v5977 = vpop.f32.mrf.mxu0
    %v5978 = vpop.f32.mrf.mxu0
    %v5979 = vadd.f32 0.0, %v5978
    %v5980 = vpop.f32.mrf.mxu0
    %5981 = vdwg.mxu0
    %5982 = vmatprep.subr.bf16.mxu0 0
    %5983 = vmatpush1.bf16.msra.mxu0 %v5764
    %5984 = vmatprep.subr.bf16.mxu0 0
    %5985 = vmatpush1.bf16.msra.mxu0 %v5763
    %5986 = vmatprep.subr.bf16.mxu0 0
    %5987 = vmatpush1.bf16.msra.mxu0 %v5762
    %5988 = vmatprep.subr.bf16.mxu0 0
    %5989 = vmatpush1.bf16.msra.mxu0 %v5761
    %5990 = vmatprep.subr.bf16.mxu0 0
    %5991 = vmatpush1.bf16.msra.mxu0 %v5760
    %5992 = vmatprep.subr.bf16.mxu0 0
    %5993 = vmatpush1.bf16.msra.mxu0 %v5759
    %5994 = vmatprep.subr.bf16.mxu0 0
    %5995 = vmatpush1.bf16.msra.mxu0 %v5758
    %5996 = vmatprep.subr.bf16.mxu0 0
    %5997 = vmatpush1.bf16.msra.mxu0 %v5757
    %5998 = vmatprep.subr.bf16.mxu0 0
    %5999 = vmatpush2.bf16.msra.mxu0 %v5772
    %6000 = vmatprep.subr.bf16.mxu0 0
    %6001 = vmatpush2.bf16.msra.mxu0 %v5771
    %6002 = vmatprep.subr.bf16.mxu0 0
    %6003 = vmatpush2.bf16.msra.mxu0 %v5770
    %6004 = vmatprep.subr.bf16.mxu0 0
    %6005 = vmatpush2.bf16.msra.mxu0 %v5769
    %6006 = vmatprep.subr.bf16.mxu0 0
    %6007 = vmatpush2.bf16.msra.mxu0 %v5768
    %6008 = vmatprep.subr.bf16.mxu0 0
    %6009 = vmatpush2.bf16.msra.mxu0 %v5767
    %6010 = vmatprep.subr.bf16.mxu0 0
    %6011 = vmatpush2.bf16.msra.mxu0 %v5766
    %6012 = vmatprep.subr.bf16.mxu0 0
    %6013 = vmatpush2.bf16.msra.mxu0 %v5765
    %6014 = vmatprep.mubr.bf16.mxu0 %v5312
    %6015 = vmatmul.mubr.bf16.gmra.mxu0 %v5311
    %v6016 = vpop.f32.mrf.mxu0
    %v6017 = vadd.f32 %v5920, %v6016
    %v6018 = vpop.f32.mrf.mxu0
    %v6019 = vpop.f32.mrf.mxu0
    %v6020 = vadd.f32 %v5923, %v6019
    %v6021 = vpop.f32.mrf.mxu0
    %6022 = vmatprep.mubr.bf16.mxu0 %v5321
    %6023 = vmatmul.mubr.bf16.gmra.mxu0 %v5320
    %v6024 = vpop.f32.mrf.mxu0
    %v6025 = vadd.f32 %v5928, %v6024
    %v6026 = vpop.f32.mrf.mxu0
    %v6027 = vpop.f32.mrf.mxu0
    %v6028 = vadd.f32 %v5931, %v6027
    %v6029 = vpop.f32.mrf.mxu0
    %6030 = vmatprep.mubr.bf16.mxu0 %v5330
    %6031 = vmatmul.mubr.bf16.gmra.mxu0 %v5329
    %v6032 = vpop.f32.mrf.mxu0
    %v6033 = vadd.f32 %v5936, %v6032
    %v6034 = vpop.f32.mrf.mxu0
    %v6035 = vpop.f32.mrf.mxu0
    %v6036 = vadd.f32 %v5939, %v6035
    %v6037 = vpop.f32.mrf.mxu0
    %6038 = vmatprep.mubr.bf16.mxu0 %v5339
    %6039 = vmatmul.mubr.bf16.gmra.mxu0 %v5338
    %v6040 = vpop.f32.mrf.mxu0
    %v6041 = vadd.f32 %v5944, %v6040
    %v6042 = vpop.f32.mrf.mxu0
    %v6043 = vpop.f32.mrf.mxu0
    %v6044 = vadd.f32 %v5947, %v6043
    %v6045 = vpop.f32.mrf.mxu0
    %6046 = vmatprep.mubr.bf16.mxu0 %v5348
    %6047 = vmatmul.mubr.bf16.gmra.mxu0 %v5347
    %v6048 = vpop.f32.mrf.mxu0
    %v6049 = vadd.f32 %v5952, %v6048
    %v6050 = vpop.f32.mrf.mxu0
    %v6051 = vpop.f32.mrf.mxu0
    %v6052 = vadd.f32 %v5955, %v6051
    %v6053 = vpop.f32.mrf.mxu0
    %6054 = vmatprep.mubr.bf16.mxu0 %v5357
    %6055 = vmatmul.mubr.bf16.gmra.mxu0 %v5356
    %v6056 = vpop.f32.mrf.mxu0
    %v6057 = vadd.f32 %v5960, %v6056
    %v6058 = vpop.f32.mrf.mxu0
    %v6059 = vpop.f32.mrf.mxu0
    %v6060 = vadd.f32 %v5963, %v6059
    %v6061 = vpop.f32.mrf.mxu0
    %6062 = vmatprep.mubr.bf16.mxu0 %v5366
    %6063 = vmatmul.mubr.bf16.gmra.mxu0 %v5365
    %v6064 = vpop.f32.mrf.mxu0
    %v6065 = vadd.f32 %v5968, %v6064
    %v6066 = vpop.f32.mrf.mxu0
    %v6067 = vpop.f32.mrf.mxu0
    %v6068 = vadd.f32 %v5971, %v6067
    %v6069 = vpop.f32.mrf.mxu0
    %6070 = vmatprep.mubr.bf16.mxu0 %v5375
    %6071 = vmatmul.mubr.bf16.gmra.mxu0 %v5374
    %v6072 = vpop.f32.mrf.mxu0
    %v6073 = vadd.f32 %v5976, %v6072
    %v6074 = vpop.f32.mrf.mxu0
    %v6075 = vpop.f32.mrf.mxu0
    %v6076 = vadd.f32 %v5979, %v6075
    %v6077 = vpop.f32.mrf.mxu0
    %6078 = vdwg.mxu0
    %6079 = vmatprep.subr.bf16.mxu0 0
    %6080 = vmatpush1.bf16.msra.mxu0 %v5780
    %6081 = vmatprep.subr.bf16.mxu0 0
    %6082 = vmatpush1.bf16.msra.mxu0 %v5779
    %6083 = vmatprep.subr.bf16.mxu0 0
    %6084 = vmatpush1.bf16.msra.mxu0 %v5778
    %6085 = vmatprep.subr.bf16.mxu0 0
    %6086 = vmatpush1.bf16.msra.mxu0 %v5777
    %6087 = vmatprep.subr.bf16.mxu0 0
    %6088 = vmatpush1.bf16.msra.mxu0 %v5776
    %6089 = vmatprep.subr.bf16.mxu0 0
    %6090 = vmatpush1.bf16.msra.mxu0 %v5775
    %6091 = vmatprep.subr.bf16.mxu0 0
    %6092 = vmatpush1.bf16.msra.mxu0 %v5774
    %6093 = vmatprep.subr.bf16.mxu0 0
    %6094 = vmatpush1.bf16.msra.mxu0 %v5773
    %6095 = vmatprep.subr.bf16.mxu0 0
    %6096 = vmatpush2.bf16.msra.mxu0 %v5788
    %6097 = vmatprep.subr.bf16.mxu0 0
    %6098 = vmatpush2.bf16.msra.mxu0 %v5787
    %6099 = vmatprep.subr.bf16.mxu0 0
    %6100 = vmatpush2.bf16.msra.mxu0 %v5786
    %6101 = vmatprep.subr.bf16.mxu0 0
    %6102 = vmatpush2.bf16.msra.mxu0 %v5785
    %6103 = vmatprep.subr.bf16.mxu0 0
    %6104 = vmatpush2.bf16.msra.mxu0 %v5784
    %6105 = vmatprep.subr.bf16.mxu0 0
    %6106 = vmatpush2.bf16.msra.mxu0 %v5783
    %6107 = vmatprep.subr.bf16.mxu0 0
    %6108 = vmatpush2.bf16.msra.mxu0 %v5782
    %6109 = vmatprep.subr.bf16.mxu0 0
    %6110 = vmatpush2.bf16.msra.mxu0 %v5781
    %6111 = vmatprep.mubr.bf16.mxu0 %v5314
    %6112 = vmatmul.mubr.bf16.gmra.mxu0 %v5313
    %v6113 = vpop.f32.mrf.mxu0
    %v6114 = vadd.f32 %v6017, %v6113
    %v6115 = vpop.f32.mrf.mxu0
    %v6116 = vpop.f32.mrf.mxu0
    %v6117 = vadd.f32 %v6020, %v6116
    %v6118 = vpop.f32.mrf.mxu0
    %6119 = vmatprep.mubr.bf16.mxu0 %v5323
    %6120 = vmatmul.mubr.bf16.gmra.mxu0 %v5322
    %v6121 = vpop.f32.mrf.mxu0
    %v6122 = vadd.f32 %v6025, %v6121
    %v6123 = vpop.f32.mrf.mxu0
    %v6124 = vpop.f32.mrf.mxu0
    %v6125 = vadd.f32 %v6028, %v6124
    %v6126 = vpop.f32.mrf.mxu0
    %6127 = vmatprep.mubr.bf16.mxu0 %v5332
    %6128 = vmatmul.mubr.bf16.gmra.mxu0 %v5331
    %v6129 = vpop.f32.mrf.mxu0
    %v6130 = vadd.f32 %v6033, %v6129
    %v6131 = vpop.f32.mrf.mxu0
    %v6132 = vpop.f32.mrf.mxu0
    %v6133 = vadd.f32 %v6036, %v6132
    %v6134 = vpop.f32.mrf.mxu0
    %6135 = vmatprep.mubr.bf16.mxu0 %v5341
    %6136 = vmatmul.mubr.bf16.gmra.mxu0 %v5340
    %v6137 = vpop.f32.mrf.mxu0
    %v6138 = vadd.f32 %v6041, %v6137
    %v6139 = vpop.f32.mrf.mxu0
    %v6140 = vpop.f32.mrf.mxu0
    %v6141 = vadd.f32 %v6044, %v6140
    %v6142 = vpop.f32.mrf.mxu0
    %6143 = vmatprep.mubr.bf16.mxu0 %v5350
    %6144 = vmatmul.mubr.bf16.gmra.mxu0 %v5349
    %v6145 = vpop.f32.mrf.mxu0
    %v6146 = vadd.f32 %v6049, %v6145
    %v6147 = vpop.f32.mrf.mxu0
    %v6148 = vpop.f32.mrf.mxu0
    %v6149 = vadd.f32 %v6052, %v6148
    %v6150 = vpop.f32.mrf.mxu0
    %6151 = vmatprep.mubr.bf16.mxu0 %v5359
    %6152 = vmatmul.mubr.bf16.gmra.mxu0 %v5358
    %v6153 = vpop.f32.mrf.mxu0
    %v6154 = vadd.f32 %v6057, %v6153
    %v6155 = vpop.f32.mrf.mxu0
    %v6156 = vpop.f32.mrf.mxu0
    %v6157 = vadd.f32 %v6060, %v6156
    %v6158 = vpop.f32.mrf.mxu0
    %6159 = vmatprep.mubr.bf16.mxu0 %v5368
    %6160 = vmatmul.mubr.bf16.gmra.mxu0 %v5367
    %v6161 = vpop.f32.mrf.mxu0
    %v6162 = vadd.f32 %v6065, %v6161
    %v6163 = vpop.f32.mrf.mxu0
    %v6164 = vpop.f32.mrf.mxu0
    %v6165 = vadd.f32 %v6068, %v6164
    %v6166 = vpop.f32.mrf.mxu0
    %6167 = vmatprep.mubr.bf16.mxu0 %v5377
    %6168 = vmatmul.mubr.bf16.gmra.mxu0 %v5376
    %v6169 = vpop.f32.mrf.mxu0
    %v6170 = vadd.f32 %v6073, %v6169
    %v6171 = vpop.f32.mrf.mxu0
    %v6172 = vpop.f32.mrf.mxu0
    %v6173 = vadd.f32 %v6076, %v6172
    %v6174 = vpop.f32.mrf.mxu0
    %6175 = vdwg.mxu0
    %6176 = vmatprep.subr.bf16.mxu0 0
    %6177 = vmatpush1.bf16.msra.mxu0 %v5796
    %6178 = vmatprep.subr.bf16.mxu0 0
    %6179 = vmatpush1.bf16.msra.mxu0 %v5795
    %6180 = vmatprep.subr.bf16.mxu0 0
    %6181 = vmatpush1.bf16.msra.mxu0 %v5794
    %6182 = vmatprep.subr.bf16.mxu0 0
    %6183 = vmatpush1.bf16.msra.mxu0 %v5793
    %6184 = vmatprep.subr.bf16.mxu0 0
    %6185 = vmatpush1.bf16.msra.mxu0 %v5792
    %6186 = vmatprep.subr.bf16.mxu0 0
    %6187 = vmatpush1.bf16.msra.mxu0 %v5791
    %6188 = vmatprep.subr.bf16.mxu0 0
    %6189 = vmatpush1.bf16.msra.mxu0 %v5790
    %6190 = vmatprep.subr.bf16.mxu0 0
    %6191 = vmatpush1.bf16.msra.mxu0 %v5789
    %6192 = vmatprep.subr.bf16.mxu0 0
    %6193 = vmatpush2.bf16.msra.mxu0 %v5804
    %6194 = vmatprep.subr.bf16.mxu0 0
    %6195 = vmatpush2.bf16.msra.mxu0 %v5803
    %6196 = vmatprep.subr.bf16.mxu0 0
    %6197 = vmatpush2.bf16.msra.mxu0 %v5802
    %6198 = vmatprep.subr.bf16.mxu0 0
    %6199 = vmatpush2.bf16.msra.mxu0 %v5801
    %6200 = vmatprep.subr.bf16.mxu0 0
    %6201 = vmatpush2.bf16.msra.mxu0 %v5800
    %6202 = vmatprep.subr.bf16.mxu0 0
    %6203 = vmatpush2.bf16.msra.mxu0 %v5799
    %6204 = vmatprep.subr.bf16.mxu0 0
    %6205 = vmatpush2.bf16.msra.mxu0 %v5798
    %6206 = vmatprep.subr.bf16.mxu0 0
    %6207 = vmatpush2.bf16.msra.mxu0 %v5797
    %6208 = vmatprep.mubr.bf16.mxu0 %v5316
    %6209 = vmatmul.mubr.bf16.gmra.mxu0 %v5315
    %v6210 = vpop.f32.mrf.mxu0
    %v6211 = vadd.f32 %v6114, %v6210
    %v6212 = vpop.f32.mrf.mxu0
    %v6213 = vpop.f32.mrf.mxu0
    %v6214 = vadd.f32 %v6117, %v6213
    %v6215 = vpop.f32.mrf.mxu0
    %6216 = vmatprep.mubr.bf16.mxu0 %v5325
    %6217 = vmatmul.mubr.bf16.gmra.mxu0 %v5324
    %v6218 = vpop.f32.mrf.mxu0
    %v6219 = vadd.f32 %v6122, %v6218
    %v6220 = vpop.f32.mrf.mxu0
    %v6221 = vpop.f32.mrf.mxu0
    %v6222 = vadd.f32 %v6125, %v6221
    %v6223 = vpop.f32.mrf.mxu0
    %6224 = vmatprep.mubr.bf16.mxu0 %v5334
    %6225 = vmatmul.mubr.bf16.gmra.mxu0 %v5333
    %v6226 = vpop.f32.mrf.mxu0
    %v6227 = vadd.f32 %v6130, %v6226
    %v6228 = vpop.f32.mrf.mxu0
    %v6229 = vpop.f32.mrf.mxu0
    %v6230 = vadd.f32 %v6133, %v6229
    %v6231 = vpop.f32.mrf.mxu0
    %6232 = vmatprep.mubr.bf16.mxu0 %v5343
    %6233 = vmatmul.mubr.bf16.gmra.mxu0 %v5342
    %v6234 = vpop.f32.mrf.mxu0
    %v6235 = vadd.f32 %v6138, %v6234
    %v6236 = vpop.f32.mrf.mxu0
    %v6237 = vpop.f32.mrf.mxu0
    %v6238 = vadd.f32 %v6141, %v6237
    %v6239 = vpop.f32.mrf.mxu0
    %6240 = vmatprep.mubr.bf16.mxu0 %v5352
    %6241 = vmatmul.mubr.bf16.gmra.mxu0 %v5351
    %v6242 = vpop.f32.mrf.mxu0
    %v6243 = vadd.f32 %v6146, %v6242
    %v6244 = vpop.f32.mrf.mxu0
    %v6245 = vpop.f32.mrf.mxu0
    %v6246 = vadd.f32 %v6149, %v6245
    %v6247 = vpop.f32.mrf.mxu0
    %6248 = vmatprep.mubr.bf16.mxu0 %v5361
    %6249 = vmatmul.mubr.bf16.gmra.mxu0 %v5360
    %v6250 = vpop.f32.mrf.mxu0
    %v6251 = vadd.f32 %v6154, %v6250
    %v6252 = vpop.f32.mrf.mxu0
    %v6253 = vpop.f32.mrf.mxu0
    %v6254 = vadd.f32 %v6157, %v6253
    %v6255 = vpop.f32.mrf.mxu0
    %6256 = vmatprep.mubr.bf16.mxu0 %v5370
    %6257 = vmatmul.mubr.bf16.gmra.mxu0 %v5369
    %v6258 = vpop.f32.mrf.mxu0
    %v6259 = vadd.f32 %v6162, %v6258
    %v6260 = vpop.f32.mrf.mxu0
    %v6261 = vpop.f32.mrf.mxu0
    %v6262 = vadd.f32 %v6165, %v6261
    %v6263 = vpop.f32.mrf.mxu0
    %6264 = vmatprep.mubr.bf16.mxu0 %v5379
    %6265 = vmatmul.mubr.bf16.gmra.mxu0 %v5378
    %v6266 = vpop.f32.mrf.mxu0
    %v6267 = vadd.f32 %v6170, %v6266
    %v6268 = vpop.f32.mrf.mxu0
    %v6269 = vpop.f32.mrf.mxu0
    %v6270 = vadd.f32 %v6173, %v6269
    %v6271 = vpop.f32.mrf.mxu0
    %6272 = vdwg.mxu0
    %6273 = vmatprep.subr.bf16.mxu0 0
    %6274 = vmatpush1.bf16.msra.mxu0 %v5812
    %6275 = vmatprep.subr.bf16.mxu0 0
    %6276 = vmatpush1.bf16.msra.mxu0 %v5811
    %6277 = vmatprep.subr.bf16.mxu0 0
    %6278 = vmatpush1.bf16.msra.mxu0 %v5810
    %6279 = vmatprep.subr.bf16.mxu0 0
    %6280 = vmatpush1.bf16.msra.mxu0 %v5809
    %6281 = vmatprep.subr.bf16.mxu0 0
    %6282 = vmatpush1.bf16.msra.mxu0 %v5808
    %6283 = vmatprep.subr.bf16.mxu0 0
    %6284 = vmatpush1.bf16.msra.mxu0 %v5807
    %6285 = vmatprep.subr.bf16.mxu0 0
    %6286 = vmatpush1.bf16.msra.mxu0 %v5806
    %6287 = vmatprep.subr.bf16.mxu0 0
    %6288 = vmatpush1.bf16.msra.mxu0 %v5805
    %6289 = vmatprep.subr.bf16.mxu0 0
    %6290 = vmatpush2.bf16.msra.mxu0 0
    %6291 = vmatprep.subr.bf16.mxu0 0
    %6292 = vmatpush2.bf16.msra.mxu0 0
    %6293 = vmatprep.subr.bf16.mxu0 0
    %6294 = vmatpush2.bf16.msra.mxu0 0
    %6295 = vmatprep.subr.bf16.mxu0 0
    %6296 = vmatpush2.bf16.msra.mxu0 0
    %6297 = vmatprep.subr.bf16.mxu0 0
    %6298 = vmatpush2.bf16.msra.mxu0 0
    %6299 = vmatprep.subr.bf16.mxu0 0
    %6300 = vmatpush2.bf16.msra.mxu0 0
    %6301 = vmatprep.subr.bf16.mxu0 0
    %6302 = vmatpush2.bf16.msra.mxu0 0
    %6303 = vmatprep.subr.bf16.mxu0 0
    %6304 = vmatpush2.bf16.msra.mxu0 0
    %6305 = vmatprep.mubr.bf16.mxu0 0
    %6306 = vmatmul.mubr.bf16.gmra.mxu0 %v5317
    %v6307 = vpop.f32.mrf.mxu0
    %v6308 = vadd.f32 %v6211, %v6307
    %v6309 = vpop.f32.mrf.mxu0
    %v6310 = vpop.f32.mrf.mxu0
    %v6311 = vadd.f32 %v6214, %v6310
    %v6312 = vpop.f32.mrf.mxu0
    %6313 = vmatprep.mubr.bf16.mxu0 0
    %6314 = vmatmul.mubr.bf16.gmra.mxu0 %v5326
    %v6315 = vpop.f32.mrf.mxu0
    %v6316 = vadd.f32 %v6219, %v6315
    %v6317 = vpop.f32.mrf.mxu0
    %v6318 = vpop.f32.mrf.mxu0
    %v6319 = vadd.f32 %v6222, %v6318
    %v6320 = vpop.f32.mrf.mxu0
    %6321 = vmatprep.mubr.bf16.mxu0 0
    %6322 = vmatmul.mubr.bf16.gmra.mxu0 %v5335
    %v6323 = vpop.f32.mrf.mxu0
    %v6324 = vadd.f32 %v6227, %v6323
    %v6325 = vpop.f32.mrf.mxu0
    %v6326 = vpop.f32.mrf.mxu0
    %v6327 = vadd.f32 %v6230, %v6326
    %v6328 = vpop.f32.mrf.mxu0
    %6329 = vmatprep.mubr.bf16.mxu0 0
    %6330 = vmatmul.mubr.bf16.gmra.mxu0 %v5344
    %v6331 = vpop.f32.mrf.mxu0
    %v6332 = vadd.f32 %v6235, %v6331
    %v6333 = vpop.f32.mrf.mxu0
    %v6334 = vpop.f32.mrf.mxu0
    %v6335 = vadd.f32 %v6238, %v6334
    %v6336 = vpop.f32.mrf.mxu0
    %6337 = vmatprep.mubr.bf16.mxu0 0
    %6338 = vmatmul.mubr.bf16.gmra.mxu0 %v5353
    %v6339 = vpop.f32.mrf.mxu0
    %v6340 = vadd.f32 %v6243, %v6339
    %v6341 = vpop.f32.mrf.mxu0
    %v6342 = vpop.f32.mrf.mxu0
    %v6343 = vadd.f32 %v6246, %v6342
    %v6344 = vpop.f32.mrf.mxu0
    %6345 = vmatprep.mubr.bf16.mxu0 0
    %6346 = vmatmul.mubr.bf16.gmra.mxu0 %v5362
    %v6347 = vpop.f32.mrf.mxu0
    %v6348 = vadd.f32 %v6251, %v6347
    %v6349 = vpop.f32.mrf.mxu0
    %v6350 = vpop.f32.mrf.mxu0
    %v6351 = vadd.f32 %v6254, %v6350
    %v6352 = vpop.f32.mrf.mxu0
    %6353 = vmatprep.mubr.bf16.mxu0 0
    %6354 = vmatmul.mubr.bf16.gmra.mxu0 %v5371
    %v6355 = vpop.f32.mrf.mxu0
    %v6356 = vadd.f32 %v6259, %v6355
    %v6357 = vpop.f32.mrf.mxu0
    %v6358 = vpop.f32.mrf.mxu0
    %v6359 = vadd.f32 %v6262, %v6358
    %v6360 = vpop.f32.mrf.mxu0
    %6361 = vmatprep.mubr.bf16.mxu0 0
    %6362 = vmatmul.mubr.bf16.gmra.mxu0 %v5380
    %v6363 = vpop.f32.mrf.mxu0
    %v6364 = vadd.f32 %v6267, %v6363
    %v6365 = vpop.f32.mrf.mxu0
    %v6366 = vpop.f32.mrf.mxu0
    %v6367 = vadd.f32 %v6270, %v6366
    %v6368 = vpop.f32.mrf.mxu0
    %6369 = vdwg.mxu0
    %v6370 = vld [vmem:[#allocation17] sm:$0x1]
    %v6372 = vlaneseq
    %v6373 = vshrl.u32 %v6372, 7
    %v6374 = vsub.s32 0, %v6373
    %v6375 = vrot.slane %v6370, %v6374
    %v6377 = vmul.f32 %v6308, %v6375
    %v6378 = vmul.f32 %v6311, %v6375
    %v6379 = vmul.f32 %v6316, %v6375
    %v6380 = vmul.f32 %v6319, %v6375
    %v6381 = vmul.f32 %v6324, %v6375
    %v6382 = vmul.f32 %v6327, %v6375
    %v6383 = vmul.f32 %v6332, %v6375
    %v6384 = vmul.f32 %v6335, %v6375
    %v6385 = vmul.f32 %v6340, %v6375
    %v6386 = vmul.f32 %v6343, %v6375
    %v6387 = vmul.f32 %v6348, %v6375
    %v6388 = vmul.f32 %v6351, %v6375
    %v6389 = vmul.f32 %v6356, %v6375
    %v6390 = vmul.f32 %v6359, %v6375
    %v6391 = vmul.f32 %v6364, %v6375
    %v6392 = vmul.f32 %v6367, %v6375
    %v6393 = vld [vmem:[#allocation19] sm:$0x1]
    %v6395 = vlaneseq
    %v6396 = vshrl.u32 %v6395, 7
    %v6397 = vsub.s32 0, %v6396
    %v6398 = vrot.slane %v6393, %v6397
    %v6400 = vadd.f32 %v6377, %v6398
    %v6401 = vadd.f32 %v6378, %v6398
    %v6402 = vadd.f32 %v6379, %v6398
    %v6403 = vadd.f32 %v6380, %v6398
    %v6404 = vadd.f32 %v6381, %v6398
    %v6405 = vadd.f32 %v6382, %v6398
    %v6406 = vadd.f32 %v6383, %v6398
    %v6407 = vadd.f32 %v6384, %v6398
    %v6408 = vadd.f32 %v6385, %v6398
    %v6409 = vadd.f32 %v6386, %v6398
    %v6410 = vadd.f32 %v6387, %v6398
    %v6411 = vadd.f32 %v6388, %v6398
    %v6412 = vadd.f32 %v6389, %v6398
    %v6413 = vadd.f32 %v6390, %v6398
    %v6414 = vadd.f32 %v6391, %v6398
    %v6415 = vadd.f32 %v6392, %v6398
    %v6416 = vmax.f32 %v6400, 0.0
    %v6417 = vmax.f32 %v6401, 0.0
    %v6418 = vmax.f32 %v6402, 0.0
    %v6419 = vmax.f32 %v6403, 0.0
    %v6420 = vmax.f32 %v6404, 0.0
    %v6421 = vmax.f32 %v6405, 0.0
    %v6422 = vmax.f32 %v6406, 0.0
    %v6423 = vmax.f32 %v6407, 0.0
    %v6424 = vmax.f32 %v6408, 0.0
    %v6425 = vmax.f32 %v6409, 0.0
    %v6426 = vmax.f32 %v6410, 0.0
    %v6427 = vmax.f32 %v6411, 0.0
    %v6428 = vmax.f32 %v6412, 0.0
    %v6429 = vmax.f32 %v6413, 0.0
    %v6430 = vmax.f32 %v6414, 0.0
    %v6431 = vmax.f32 %v6415, 0.0
    %v6432 = vld [vmem:[%s3] sm:$0xff]
    %v6433 = vld [vmem:[%s3 + $0x8] sm:$0xff]
    %v6434 = vld [vmem:[%s3 + $0x10] sm:$0xff]
    %v6435 = vld [vmem:[%s3 + $0x18] sm:$0xff]
    %v6436 = vld [vmem:[%s3 + $0x20] sm:$0xff]
    %v6437 = vld [vmem:[%s3 + $0x28] sm:$0xff]
    %v6438 = vld [vmem:[%s3 + $0x30] sm:$0xff]
    %v6439 = vld [vmem:[%s3 + $0x38] sm:$0xff]
    %v6440 = vld [vmem:[%s3 + $0x40] sm:$0xff]
    %v6441 = vld [vmem:[%s3 + $0x48] sm:$0xff]
    %v6442 = vld [vmem:[%s3 + $0x50] sm:$0xff]
    %v6443 = vld [vmem:[%s3 + $0x58] sm:$0xff]
    %v6444 = vld [vmem:[%s3 + $0x60] sm:$0xff]
    %v6445 = vld [vmem:[%s3 + $0x68] sm:$0xff]
    %v6446 = vld [vmem:[%s3 + $0x70] sm:$0xff]
    %v6447 = vld [vmem:[%s3 + $0x78] sm:$0xff]
    %6449 = vset.pattern.permute.xlu0 0
    %6450 = vperm.xlu0 %6449, %v6432
    %v6451 = vpop.permute.xlu0 %6450
    %6454 = vset.pattern.permute.xlu0 0
    %6455 = vperm.xlu0 %6454, %v6433
    %v6456 = vpop.permute.xlu0 %6455
    %6459 = vset.pattern.permute.xlu0 0
    %6460 = vperm.xlu0 %6459, %v6434
    %v6461 = vpop.permute.xlu0 %6460
    %6464 = vset.pattern.permute.xlu0 0
    %6465 = vperm.xlu0 %6464, %v6435
    %v6466 = vpop.permute.xlu0 %6465
    %6469 = vset.pattern.permute.xlu0 0
    %6470 = vperm.xlu0 %6469, %v6436
    %v6471 = vpop.permute.xlu0 %6470
    %6474 = vset.pattern.permute.xlu0 0
    %6475 = vperm.xlu0 %6474, %v6437
    %v6476 = vpop.permute.xlu0 %6475
    %6479 = vset.pattern.permute.xlu0 0
    %6480 = vperm.xlu0 %6479, %v6438
    %v6481 = vpop.permute.xlu0 %6480
    %6484 = vset.pattern.permute.xlu0 0
    %6485 = vperm.xlu0 %6484, %v6439
    %v6486 = vpop.permute.xlu0 %6485
    %6489 = vset.pattern.permute.xlu0 0
    %6490 = vperm.xlu0 %6489, %v6440
    %v6491 = vpop.permute.xlu0 %6490
    %6494 = vset.pattern.permute.xlu0 0
    %6495 = vperm.xlu0 %6494, %v6441
    %v6496 = vpop.permute.xlu0 %6495
    %6499 = vset.pattern.permute.xlu0 0
    %6500 = vperm.xlu0 %6499, %v6442
    %v6501 = vpop.permute.xlu0 %6500
    %6504 = vset.pattern.permute.xlu0 0
    %6505 = vperm.xlu0 %6504, %v6443
    %v6506 = vpop.permute.xlu0 %6505
    %6509 = vset.pattern.permute.xlu0 0
    %6510 = vperm.xlu0 %6509, %v6444
    %v6511 = vpop.permute.xlu0 %6510
    %6514 = vset.pattern.permute.xlu0 0
    %6515 = vperm.xlu0 %6514, %v6445
    %v6516 = vpop.permute.xlu0 %6515
    %6519 = vset.pattern.permute.xlu0 0
    %6520 = vperm.xlu0 %6519, %v6446
    %v6521 = vpop.permute.xlu0 %6520
    %6524 = vset.pattern.permute.xlu0 0
    %6525 = vperm.xlu0 %6524, %v6447
    %v6526 = vpop.permute.xlu0 %6525
    %v6528 = vmul.f32 %v6416, %v6451
    %v6529 = vmul.f32 %v6417, %v6456
    %v6530 = vmul.f32 %v6418, %v6461
    %v6531 = vmul.f32 %v6419, %v6466
    %v6532 = vmul.f32 %v6420, %v6471
    %v6533 = vmul.f32 %v6421, %v6476
    %v6534 = vmul.f32 %v6422, %v6481
    %v6535 = vmul.f32 %v6423, %v6486
    %v6536 = vmul.f32 %v6424, %v6491
    %v6537 = vmul.f32 %v6425, %v6496
    %v6538 = vmul.f32 %v6426, %v6501
    %v6539 = vmul.f32 %v6427, %v6506
    %v6540 = vmul.f32 %v6428, %v6511
    %v6541 = vmul.f32 %v6429, %v6516
    %v6542 = vmul.f32 %v6430, %v6521
    %v6543 = vmul.f32 %v6431, %v6526
    %6544 = vst [vmem:[#allocation5] sm:$0xff] %v6528
    %6545 = vst [vmem:[#allocation5 + $0x8] sm:$0xff] %v6529
    %6546 = vst [vmem:[#allocation5 + $0x10] sm:$0xff] %v6530
    %6547 = vst [vmem:[#allocation5 + $0x18] sm:$0xff] %v6531
    %6548 = vst [vmem:[#allocation5 + $0x20] sm:$0xff] %v6532
    %6549 = vst [vmem:[#allocation5 + $0x28] sm:$0xff] %v6533
    %6550 = vst [vmem:[#allocation5 + $0x30] sm:$0xff] %v6534
    %6551 = vst [vmem:[#allocation5 + $0x38] sm:$0xff] %v6535
    %6552 = vst [vmem:[#allocation5 + $0x40] sm:$0xff] %v6536
    %6553 = vst [vmem:[#allocation5 + $0x48] sm:$0xff] %v6537
    %6554 = vst [vmem:[#allocation5 + $0x50] sm:$0xff] %v6538
    %6555 = vst [vmem:[#allocation5 + $0x58] sm:$0xff] %v6539
    %6556 = vst [vmem:[#allocation5 + $0x60] sm:$0xff] %v6540
    %6557 = vst [vmem:[#allocation5 + $0x68] sm:$0xff] %v6541
    %6558 = vst [vmem:[#allocation5 + $0x70] sm:$0xff] %v6542
    %6559 = vst [vmem:[#allocation5 + $0x78] sm:$0xff] %v6543
    %v6560 = vld [vmem:[#allocation5] ss:$2 sm:$0xff]
    %s6561 = scalar_lea.vmem [#allocation5], 16
    %v6562 = vld [vmem:[%s6561] ss:$2 sm:$0xff]
    %s6563 = scalar_lea.vmem [#allocation5], 32
    %v6564 = vld [vmem:[%s6563] ss:$2 sm:$0xff]
    %s6565 = scalar_lea.vmem [#allocation5], 48
    %v6566 = vld [vmem:[%s6565] ss:$2 sm:$0xff]
    %s6567 = scalar_lea.vmem [#allocation5], 64
    %v6568 = vld [vmem:[%s6567] ss:$2 sm:$0xff]
    %s6569 = scalar_lea.vmem [#allocation5], 80
    %v6570 = vld [vmem:[%s6569] ss:$2 sm:$0xff]
    %s6571 = scalar_lea.vmem [#allocation5], 96
    %v6572 = vld [vmem:[%s6571] ss:$2 sm:$0xff]
    %s6573 = scalar_lea.vmem [#allocation5], 112
    %v6574 = vld [vmem:[%s6573] ss:$2 sm:$0xff]
    %v6575 = vld [vmem:[%s3905] ss:$2 sm:$0xff]
    %v6576 = vld [vmem:[%s3907] ss:$2 sm:$0xff]
    %v6577 = vld [vmem:[%s3909] ss:$2 sm:$0xff]
    %v6578 = vld [vmem:[%s3911] ss:$2 sm:$0xff]
    %v6579 = vld [vmem:[%s3913] ss:$2 sm:$0xff]
    %v6580 = vld [vmem:[%s3915] ss:$2 sm:$0xff]
    %v6581 = vld [vmem:[%s3917] ss:$2 sm:$0xff]
    %v6582 = vld [vmem:[%s3919] ss:$2 sm:$0xff]
    %v6583 = vmax.f32 %v6560, %v6575
    %v6584 = vmax.f32 %v6562, %v6576
    %v6585 = vmax.f32 %v6564, %v6577
    %v6586 = vmax.f32 %v6566, %v6578
    %v6587 = vmax.f32 %v6568, %v6579
    %v6588 = vmax.f32 %v6570, %v6580
    %v6589 = vmax.f32 %v6572, %v6581
    %v6590 = vmax.f32 %v6574, %v6582
    %6591 = vst [vmem:[#allocation6] sm:$0xff] %v6583
    %6592 = vst [vmem:[#allocation6 + $0x8] sm:$0xff] %v6584
    %6593 = vst [vmem:[#allocation6 + $0x10] sm:$0xff] %v6585
    %6594 = vst [vmem:[#allocation6 + $0x18] sm:$0xff] %v6586
    %6595 = vst [vmem:[#allocation6 + $0x20] sm:$0xff] %v6587
    %6596 = vst [vmem:[#allocation6 + $0x28] sm:$0xff] %v6588
    %6597 = vst [vmem:[#allocation6 + $0x30] sm:$0xff] %v6589
    %6598 = vst [vmem:[#allocation6 + $0x38] sm:$0xff] %v6590
    %v6599 = vld [vmem:[#allocation6] sm:$0x7]
    %v6600 = vld [vmem:[#allocation6 + $0x4] sm:$0x7]
    %v6601 = vmax.f32 %v6599, %v6600
    %6602 = vst [vmem:[#allocation7] sm:$0x1] %v6601
    %v6605 = vunpack.c.l.s4 1983009808
    %v6606 = vunpack.c.0.s8 %v6605
    %v6607 = vlaneseq
    %v6608 = vshrl.u32 %v6607, 7
    %v6609 = vsub.s32 %v6606, %v6608
    %v6610 = vrot.slane %v6601, %v6609
    %v6611 = vrot.slane %v6610, 7
    %v6612 = vrot.slane %v6611, 2
    %6614 = vst [vmem:[#allocation7 + $0x2] sm:$0x1] %v6612
    %v6615 = vcombine.high %v6610, %v6610
    %6617 = vst [vmem:[#allocation7 + $0x4] sm:$0x1] %v6615
    %v6618 = vld [vmem:[#allocation6 + $0x8] sm:$0x7]
    %v6619 = vld [vmem:[#allocation6 + $0xc] sm:$0x7]
    %v6620 = vmax.f32 %v6618, %v6619
    %6621 = vst [vmem:[#allocation7 + $0x6] sm:$0x1] %v6620
    %v6624 = vunpack.c.l.s4 1983009808
    %v6625 = vunpack.c.0.s8 %v6624
    %v6626 = vlaneseq
    %v6627 = vshrl.u32 %v6626, 7
    %v6628 = vsub.s32 %v6625, %v6627
    %v6629 = vrot.slane %v6620, %v6628
    %v6630 = vrot.slane %v6629, 7
    %v6631 = vrot.slane %v6630, 2
    %6633 = vst [vmem:[#allocation7 + $0x8] sm:$0x1] %v6631
    %v6634 = vcombine.high %v6629, %v6629
    %6636 = vst [vmem:[#allocation7 + $0xa] sm:$0x1] %v6634
    %v6637 = vld [vmem:[#allocation6 + $0x10] sm:$0x7]
    %v6638 = vld [vmem:[#allocation6 + $0x14] sm:$0x7]
    %v6639 = vmax.f32 %v6637, %v6638
    %6640 = vst [vmem:[#allocation7 + $0xc] sm:$0x1] %v6639
    %v6643 = vunpack.c.l.s4 1983009808
    %v6644 = vunpack.c.0.s8 %v6643
    %v6645 = vlaneseq
    %v6646 = vshrl.u32 %v6645, 7
    %v6647 = vsub.s32 %v6644, %v6646
    %v6648 = vrot.slane %v6639, %v6647
    %v6649 = vrot.slane %v6648, 7
    %v6650 = vrot.slane %v6649, 2
    %6652 = vst [vmem:[#allocation7 + $0xe] sm:$0x1] %v6650
    %v6653 = vcombine.high %v6648, %v6648
    %6655 = vst [vmem:[#allocation7 + $0x10] sm:$0x1] %v6653
    %v6656 = vld [vmem:[#allocation6 + $0x20] sm:$0x7]
    %v6657 = vld [vmem:[#allocation6 + $0x24] sm:$0x7]
    %v6658 = vmax.f32 %v6656, %v6657
    %6659 = vst [vmem:[#allocation7 + $0x1] sm:$0x1] %v6658
    %v6662 = vunpack.c.l.s4 1983009808
    %v6663 = vunpack.c.0.s8 %v6662
    %v6664 = vlaneseq
    %v6665 = vshrl.u32 %v6664, 7
    %v6666 = vsub.s32 %v6663, %v6665
    %v6667 = vrot.slane %v6658, %v6666
    %v6668 = vrot.slane %v6667, 7
    %v6669 = vrot.slane %v6668, 2
    %6671 = vst [vmem:[#allocation7 + $0x3] sm:$0x1] %v6669
    %v6672 = vcombine.high %v6667, %v6667
    %6674 = vst [vmem:[#allocation7 + $0x5] sm:$0x1] %v6672
    %v6675 = vld [vmem:[#allocation6 + $0x28] sm:$0x7]
    %v6676 = vld [vmem:[#allocation6 + $0x2c] sm:$0x7]
    %v6677 = vmax.f32 %v6675, %v6676
    %6678 = vst [vmem:[#allocation7 + $0x7] sm:$0x1] %v6677
    %v6681 = vunpack.c.l.s4 1983009808
    %v6682 = vunpack.c.0.s8 %v6681
    %v6683 = vlaneseq
    %v6684 = vshrl.u32 %v6683, 7
    %v6685 = vsub.s32 %v6682, %v6684
    %v6686 = vrot.slane %v6677, %v6685
    %v6687 = vrot.slane %v6686, 7
    %v6688 = vrot.slane %v6687, 2
    %6690 = vst [vmem:[#allocation7 + $0x9] sm:$0x1] %v6688
    %v6691 = vcombine.high %v6686, %v6686
    %6693 = vst [vmem:[#allocation7 + $0xb] sm:$0x1] %v6691
    %v6694 = vld [vmem:[#allocation6 + $0x30] sm:$0x7]
    %v6695 = vld [vmem:[#allocation6 + $0x34] sm:$0x7]
    %v6696 = vmax.f32 %v6694, %v6695
    %6697 = vst [vmem:[#allocation7 + $0xd] sm:$0x1] %v6696
    %v6700 = vunpack.c.l.s4 1983009808
    %v6701 = vunpack.c.0.s8 %v6700
    %v6702 = vlaneseq
    %v6703 = vshrl.u32 %v6702, 7
    %v6704 = vsub.s32 %v6701, %v6703
    %v6705 = vrot.slane %v6696, %v6704
    %v6706 = vrot.slane %v6705, 7
    %v6707 = vrot.slane %v6706, 2
    %6709 = vst [vmem:[#allocation7 + $0xf] sm:$0x1] %v6707
    %v6710 = vcombine.high %v6705, %v6705
    %6712 = vst [vmem:[#allocation7 + $0x11] sm:$0x1] %v6710
    %v6713 = vld [vmem:[%s1] sm:$0x3]
    %6714 = vst [vmem:[#allocation7 + $0x12] sm:$0x3] %v6713
    %v6715 = vld [vmem:[#allocation7] sm:$0xff]
    %v6716 = vld [vmem:[#allocation7 + $0x8] sm:$0xff]
    %v6717 = vld [vmem:[#allocation7 + $0x10] sm:$0xf]
    %v6721 = vcombine.high %v6715, %v6715
    %v6723 = vunpack.c.l.s4 1983009808
    %v6724 = vunpack.c.0.s8 %v6723
    %v6725 = vlaneseq
    %v6726 = vshrl.u32 %v6725, 7
    %v6727 = vsub.s32 %v6724, %v6726
    %v6728 = vrot.slane %v6715, %v6727
    %v6730 = vunpack.c.l.s4 1983009808
    %v6731 = vunpack.c.0.s8 %v6730
    %v6732 = vlaneseq
    %v6733 = vshrl.u32 %v6732, 7
    %v6734 = vsub.s32 %v6731, %v6733
    %v6735 = vrot.slane %v6721, %v6734
    %v6736 = vcombine.high %v6728, %v6728
    %v6737 = vcombine.high %v6735, %v6735
    %v6738 = vcombine.high %v6716, %v6716
    %v6740 = vunpack.c.l.s4 1983009808
    %v6741 = vunpack.c.0.s8 %v6740
    %v6742 = vlaneseq
    %v6743 = vshrl.u32 %v6742, 7
    %v6744 = vsub.s32 %v6741, %v6743
    %v6745 = vrot.slane %v6716, %v6744
    %v6747 = vunpack.c.l.s4 1983009808
    %v6748 = vunpack.c.0.s8 %v6747
    %v6749 = vlaneseq
    %v6750 = vshrl.u32 %v6749, 7
    %v6751 = vsub.s32 %v6748, %v6750
    %v6752 = vrot.slane %v6738, %v6751
    %v6753 = vcombine.high %v6745, %v6745
    %v6754 = vcombine.high %v6752, %v6752
    %v6756 = vunpack.c.l.s4 1983009808
    %v6757 = vunpack.c.0.s8 %v6756
    %v6758 = vlaneseq
    %v6759 = vshrl.u32 %v6758, 7
    %v6760 = vsub.s32 %v6757, %v6759
    %v6761 = vrot.slane %v6717, %v6760
    %v6762 = vcombine.high %v6761, %v6761
    %v6773 = vpack.c.bf16 %v6728, %v6728
    %v6774 = vpack.c.bf16 %v6736, %v6736
    %v6775 = vpack.c.bf16 %v6735, %v6735
    %v6776 = vpack.c.bf16 %v6737, %v6737
    %v6777 = vpack.c.bf16 %v6745, %v6745
    %v6778 = vpack.c.bf16 %v6753, %v6753
    %v6779 = vpack.c.bf16 %v6752, %v6752
    %v6780 = vpack.c.bf16 %v6754, %v6754
    %v6781 = vpack.c.bf16 %v6761, %v6761
    %v6782 = vpack.c.bf16 %v6762, %v6762
    %v6783 = vld [vmem:[#allocation20] sm:$0xff]
    %v6784 = vld [vmem:[#allocation20 + $0x8] sm:$0xff]
    %v6785 = vld [vmem:[#allocation20 + $0x10] sm:$0xff]
    %v6786 = vld [vmem:[#allocation20 + $0x18] sm:$0xf]
    %v6787 = vld [vmem:[#allocation20 + $0x1c] sm:$0xff]
    %v6788 = vld [vmem:[#allocation20 + $0x24] sm:$0xff]
    %v6789 = vld [vmem:[#allocation20 + $0x2c] sm:$0xff]
    %v6790 = vld [vmem:[#allocation20 + $0x34] sm:$0xf]
    %v6791 = vld [vmem:[#allocation20 + $0x38] sm:$0xff]
    %v6792 = vld [vmem:[#allocation20 + $0x40] sm:$0xff]
    %v6793 = vld [vmem:[#allocation20 + $0x48] sm:$0xff]
    %v6794 = vld [vmem:[#allocation20 + $0x50] sm:$0xf]
    %v6795 = vld [vmem:[#allocation20 + $0x54] sm:$0xff]
    %v6796 = vld [vmem:[#allocation20 + $0x5c] sm:$0xff]
    %v6797 = vld [vmem:[#allocation20 + $0x64] sm:$0xff]
    %v6798 = vld [vmem:[#allocation20 + $0x6c] sm:$0xf]
    %v6799 = vld [vmem:[#allocation20 + $0x70] sm:$0xff]
    %v6800 = vld [vmem:[#allocation20 + $0x78] sm:$0xff]
    %v6801 = vld [vmem:[#allocation20 + $0x80] sm:$0xff]
    %v6802 = vld [vmem:[#allocation20 + $0x88] sm:$0xf]
    %v6803 = vld [vmem:[#allocation20 + $0x8c] sm:$0xff]
    %v6804 = vld [vmem:[#allocation20 + $0x94] sm:$0xff]
    %v6805 = vld [vmem:[#allocation20 + $0x9c] sm:$0xff]
    %v6806 = vld [vmem:[#allocation20 + $0xa4] sm:$0xf]
    %v6807 = vld [vmem:[#allocation20 + $0xa8] sm:$0xff]
    %v6808 = vld [vmem:[#allocation20 + $0xb0] sm:$0xff]
    %v6809 = vld [vmem:[#allocation20 + $0xb8] sm:$0xff]
    %v6810 = vld [vmem:[#allocation20 + $0xc0] sm:$0xf]
    %v6811 = vld [vmem:[#allocation20 + $0xc4] sm:$0xff]
    %v6812 = vld [vmem:[#allocation20 + $0xcc] sm:$0xff]
    %v6813 = vld [vmem:[#allocation20 + $0xd4] sm:$0xff]
    %v6814 = vld [vmem:[#allocation20 + $0xdc] sm:$0xf]
    %v6815 = vld [vmem:[#allocation20 + $0xe0] sm:$0xff]
    %v6816 = vld [vmem:[#allocation20 + $0xe8] sm:$0xff]
    %v6817 = vld [vmem:[#allocation20 + $0xf0] sm:$0xff]
    %v6818 = vld [vmem:[#allocation20 + $0xf8] sm:$0xf]
    %v6819 = vld [vmem:[#allocation20 + $0xfc] sm:$0xff]
    %v6820 = vld [vmem:[#allocation20 + $0x104] sm:$0xff]
    %v6821 = vld [vmem:[#allocation20 + $0x10c] sm:$0xff]
    %v6822 = vld [vmem:[#allocation20 + $0x114] sm:$0xf]
    %v6823 = vld [vmem:[#allocation20 + $0x118] sm:$0xff]
    %v6824 = vld [vmem:[#allocation20 + $0x120] sm:$0xff]
    %v6825 = vld [vmem:[#allocation20 + $0x128] sm:$0xff]
    %v6826 = vld [vmem:[#allocation20 + $0x130] sm:$0xf]
    %v6827 = vld [vmem:[#allocation20 + $0x134] sm:$0xff]
    %v6828 = vld [vmem:[#allocation20 + $0x13c] sm:$0xff]
    %v6829 = vld [vmem:[#allocation20 + $0x144] sm:$0xff]
    %v6830 = vld [vmem:[#allocation20 + $0x14c] sm:$0xf]
    %v6831 = vld [vmem:[#allocation20 + $0x150] sm:$0xff]
    %v6832 = vld [vmem:[#allocation20 + $0x158] sm:$0xff]
    %v6833 = vld [vmem:[#allocation20 + $0x160] sm:$0xff]
    %v6834 = vld [vmem:[#allocation20 + $0x168] sm:$0xf]
    %v6835 = vld [vmem:[#allocation20 + $0x16c] sm:$0xff]
    %v6836 = vld [vmem:[#allocation20 + $0x174] sm:$0xff]
    %v6837 = vld [vmem:[#allocation20 + $0x17c] sm:$0xff]
    %v6838 = vld [vmem:[#allocation20 + $0x184] sm:$0xf]
    %v6839 = vld [vmem:[#allocation20 + $0x188] sm:$0xff]
    %v6840 = vld [vmem:[#allocation20 + $0x190] sm:$0xff]
    %v6841 = vld [vmem:[#allocation20 + $0x198] sm:$0xff]
    %v6842 = vld [vmem:[#allocation20 + $0x1a0] sm:$0xf]
    %v6843 = vld [vmem:[#allocation20 + $0x1a4] sm:$0xff]
    %v6844 = vld [vmem:[#allocation20 + $0x1ac] sm:$0xff]
    %v6845 = vld [vmem:[#allocation20 + $0x1b4] sm:$0xff]
    %v6846 = vld [vmem:[#allocation20 + $0x1bc] sm:$0xf]
    %v6847 = vld [vmem:[#allocation20 + $0x1c0] sm:$0xff]
    %v6848 = vld [vmem:[#allocation20 + $0x1c8] sm:$0xff]
    %v6849 = vld [vmem:[#allocation20 + $0x1d0] sm:$0xff]
    %v6850 = vld [vmem:[#allocation20 + $0x1d8] sm:$0xf]
    %v6851 = vld [vmem:[#allocation20 + $0x1dc] sm:$0xff]
    %v6852 = vld [vmem:[#allocation20 + $0x1e4] sm:$0xff]
    %v6853 = vld [vmem:[#allocation20 + $0x1ec] sm:$0xff]
    %v6854 = vld [vmem:[#allocation20 + $0x1f4] sm:$0xf]
    %v6855 = vld [vmem:[#allocation20 + $0x1f8] sm:$0xff]
    %v6856 = vld [vmem:[#allocation20 + $0x200] sm:$0xff]
    %v6857 = vld [vmem:[#allocation20 + $0x208] sm:$0xff]
    %v6858 = vld [vmem:[#allocation20 + $0x210] sm:$0xf]
    %v6859 = vld [vmem:[#allocation20 + $0x214] sm:$0xff]
    %v6860 = vld [vmem:[#allocation20 + $0x21c] sm:$0xff]
    %v6861 = vld [vmem:[#allocation20 + $0x224] sm:$0xff]
    %v6862 = vld [vmem:[#allocation20 + $0x22c] sm:$0xf]
    %v6863 = vld [vmem:[#allocation20 + $0x230] sm:$0xff]
    %v6864 = vld [vmem:[#allocation20 + $0x238] sm:$0xff]
    %v6865 = vld [vmem:[#allocation20 + $0x240] sm:$0xff]
    %v6866 = vld [vmem:[#allocation20 + $0x248] sm:$0xf]
    %v6867 = vld [vmem:[#allocation20 + $0x24c] sm:$0xff]
    %v6868 = vld [vmem:[#allocation20 + $0x254] sm:$0xff]
    %v6869 = vld [vmem:[#allocation20 + $0x25c] sm:$0xff]
    %v6870 = vld [vmem:[#allocation20 + $0x264] sm:$0xf]
    %v6871 = vld [vmem:[#allocation20 + $0x268] sm:$0xff]
    %v6872 = vld [vmem:[#allocation20 + $0x270] sm:$0xff]
    %v6873 = vld [vmem:[#allocation20 + $0x278] sm:$0xff]
    %v6874 = vld [vmem:[#allocation20 + $0x280] sm:$0xf]
    %v6875 = vld [vmem:[#allocation20 + $0x284] sm:$0xff]
    %v6876 = vld [vmem:[#allocation20 + $0x28c] sm:$0xff]
    %v6877 = vld [vmem:[#allocation20 + $0x294] sm:$0xff]
    %v6878 = vld [vmem:[#allocation20 + $0x29c] sm:$0xf]
    %v6879 = vld [vmem:[#allocation20 + $0x2a0] sm:$0xff]
    %v6880 = vld [vmem:[#allocation20 + $0x2a8] sm:$0xff]
    %v6881 = vld [vmem:[#allocation20 + $0x2b0] sm:$0xff]
    %v6882 = vld [vmem:[#allocation20 + $0x2b8] sm:$0xf]
    %v6883 = vld [vmem:[#allocation20 + $0x2bc] sm:$0xff]
    %v6884 = vld [vmem:[#allocation20 + $0x2c4] sm:$0xff]
    %v6885 = vld [vmem:[#allocation20 + $0x2cc] sm:$0xff]
    %v6886 = vld [vmem:[#allocation20 + $0x2d4] sm:$0xf]
    %v6887 = vld [vmem:[#allocation20 + $0x2d8] sm:$0xff]
    %v6888 = vld [vmem:[#allocation20 + $0x2e0] sm:$0xff]
    %v6889 = vld [vmem:[#allocation20 + $0x2e8] sm:$0xff]
    %v6890 = vld [vmem:[#allocation20 + $0x2f0] sm:$0xf]
    %v6891 = vld [vmem:[#allocation20 + $0x2f4] sm:$0xff]
    %v6892 = vld [vmem:[#allocation20 + $0x2fc] sm:$0xff]
    %v6893 = vld [vmem:[#allocation20 + $0x304] sm:$0xff]
    %v6894 = vld [vmem:[#allocation20 + $0x30c] sm:$0xf]
    %v6895 = vld [vmem:[#allocation20 + $0x310] sm:$0xff]
    %v6896 = vld [vmem:[#allocation20 + $0x318] sm:$0xff]
    %v6897 = vld [vmem:[#allocation20 + $0x320] sm:$0xff]
    %v6898 = vld [vmem:[#allocation20 + $0x328] sm:$0xf]
    %v6899 = vld [vmem:[#allocation20 + $0x32c] sm:$0xff]
    %v6900 = vld [vmem:[#allocation20 + $0x334] sm:$0xff]
    %v6901 = vld [vmem:[#allocation20 + $0x33c] sm:$0xff]
    %v6902 = vld [vmem:[#allocation20 + $0x344] sm:$0xf]
    %v6903 = vld [vmem:[#allocation20 + $0x348] sm:$0xff]
    %v6904 = vld [vmem:[#allocation20 + $0x350] sm:$0xff]
    %v6905 = vld [vmem:[#allocation20 + $0x358] sm:$0xff]
    %v6906 = vld [vmem:[#allocation20 + $0x360] sm:$0xf]
    %v6907 = vld [vmem:[#allocation20 + $0x364] sm:$0xff]
    %v6908 = vld [vmem:[#allocation20 + $0x36c] sm:$0xff]
    %v6909 = vld [vmem:[#allocation20 + $0x374] sm:$0xff]
    %v6910 = vld [vmem:[#allocation20 + $0x37c] sm:$0xf]
    %v6911 = vld [vmem:[#allocation20 + $0x380] sm:$0xff]
    %v6912 = vld [vmem:[#allocation20 + $0x388] sm:$0xff]
    %v6913 = vld [vmem:[#allocation20 + $0x390] sm:$0xff]
    %v6914 = vld [vmem:[#allocation20 + $0x398] sm:$0xf]
    %v6915 = vld [vmem:[#allocation20 + $0x39c] sm:$0xff]
    %v6916 = vld [vmem:[#allocation20 + $0x3a4] sm:$0xff]
    %v6917 = vld [vmem:[#allocation20 + $0x3ac] sm:$0xff]
    %v6918 = vld [vmem:[#allocation20 + $0x3b4] sm:$0xf]
    %v6919 = vld [vmem:[#allocation20 + $0x3b8] sm:$0xff]
    %v6920 = vld [vmem:[#allocation20 + $0x3c0] sm:$0xff]
    %v6921 = vld [vmem:[#allocation20 + $0x3c8] sm:$0xff]
    %v6922 = vld [vmem:[#allocation20 + $0x3d0] sm:$0xf]
    %v6923 = vld [vmem:[#allocation20 + $0x3d4] sm:$0xff]
    %v6924 = vld [vmem:[#allocation20 + $0x3dc] sm:$0xff]
    %v6925 = vld [vmem:[#allocation20 + $0x3e4] sm:$0xff]
    %v6926 = vld [vmem:[#allocation20 + $0x3ec] sm:$0xf]
    %v6927 = vld [vmem:[#allocation20 + $0x3f0] sm:$0xff]
    %v6928 = vld [vmem:[#allocation20 + $0x3f8] sm:$0xff]
    %v6929 = vld [vmem:[#allocation20 + $0x400] sm:$0xff]
    %v6930 = vld [vmem:[#allocation20 + $0x408] sm:$0xf]
    %v6931 = vld [vmem:[#allocation20 + $0x40c] sm:$0xff]
    %v6932 = vld [vmem:[#allocation20 + $0x414] sm:$0xff]
    %v6933 = vld [vmem:[#allocation20 + $0x41c] sm:$0xff]
    %v6934 = vld [vmem:[#allocation20 + $0x424] sm:$0xf]
    %v6935 = vld [vmem:[#allocation20 + $0x428] sm:$0xff]
    %v6936 = vld [vmem:[#allocation20 + $0x430] sm:$0xff]
    %v6937 = vld [vmem:[#allocation20 + $0x438] sm:$0xff]
    %v6938 = vld [vmem:[#allocation20 + $0x440] sm:$0xf]
    %v6939 = vld [vmem:[#allocation20 + $0x444] sm:$0xff]
    %v6940 = vld [vmem:[#allocation20 + $0x44c] sm:$0xff]
    %v6941 = vld [vmem:[#allocation20 + $0x454] sm:$0xff]
    %v6942 = vld [vmem:[#allocation20 + $0x45c] sm:$0xf]
    %v6943 = vld [vmem:[#allocation20 + $0x460] sm:$0xff]
    %v6944 = vld [vmem:[#allocation20 + $0x468] sm:$0xff]
    %v6945 = vld [vmem:[#allocation20 + $0x470] sm:$0xff]
    %v6946 = vld [vmem:[#allocation20 + $0x478] sm:$0xf]
    %v6947 = vld [vmem:[#allocation20 + $0x47c] sm:$0xff]
    %v6948 = vld [vmem:[#allocation20 + $0x484] sm:$0xff]
    %v6949 = vld [vmem:[#allocation20 + $0x48c] sm:$0xff]
    %v6950 = vld [vmem:[#allocation20 + $0x494] sm:$0xf]
    %v6951 = vld [vmem:[#allocation20 + $0x498] sm:$0xff]
    %v6952 = vld [vmem:[#allocation20 + $0x4a0] sm:$0xff]
    %v6953 = vld [vmem:[#allocation20 + $0x4a8] sm:$0xff]
    %v6954 = vld [vmem:[#allocation20 + $0x4b0] sm:$0xf]
    %v6955 = vld [vmem:[#allocation20 + $0x4b4] sm:$0xff]
    %v6956 = vld [vmem:[#allocation20 + $0x4bc] sm:$0xff]
    %v6957 = vld [vmem:[#allocation20 + $0x4c4] sm:$0xff]
    %v6958 = vld [vmem:[#allocation20 + $0x4cc] sm:$0xf]
    %v6959 = vld [vmem:[#allocation20 + $0x4d0] sm:$0xff]
    %v6960 = vld [vmem:[#allocation20 + $0x4d8] sm:$0xff]
    %v6961 = vld [vmem:[#allocation20 + $0x4e0] sm:$0xff]
    %v6962 = vld [vmem:[#allocation20 + $0x4e8] sm:$0xf]
    %v6963 = vld [vmem:[#allocation20 + $0x4ec] sm:$0xff]
    %v6964 = vld [vmem:[#allocation20 + $0x4f4] sm:$0xff]
    %v6965 = vld [vmem:[#allocation20 + $0x4fc] sm:$0xff]
    %v6966 = vld [vmem:[#allocation20 + $0x504] sm:$0xf]
    %v6967 = vld [vmem:[#allocation20 + $0x508] sm:$0xff]
    %v6968 = vld [vmem:[#allocation20 + $0x510] sm:$0xff]
    %v6969 = vld [vmem:[#allocation20 + $0x518] sm:$0xff]
    %v6970 = vld [vmem:[#allocation20 + $0x520] sm:$0xf]
    %v6971 = vld [vmem:[#allocation20 + $0x524] sm:$0xff]
    %v6972 = vld [vmem:[#allocation20 + $0x52c] sm:$0xff]
    %v6973 = vld [vmem:[#allocation20 + $0x534] sm:$0xff]
    %v6974 = vld [vmem:[#allocation20 + $0x53c] sm:$0xf]
    %v6975 = vld [vmem:[#allocation20 + $0x540] sm:$0xff]
    %v6976 = vld [vmem:[#allocation20 + $0x548] sm:$0xff]
    %v6977 = vld [vmem:[#allocation20 + $0x550] sm:$0xff]
    %v6978 = vld [vmem:[#allocation20 + $0x558] sm:$0xf]
    %v6979 = vld [vmem:[#allocation20 + $0x55c] sm:$0xff]
    %v6980 = vld [vmem:[#allocation20 + $0x564] sm:$0xff]
    %v6981 = vld [vmem:[#allocation20 + $0x56c] sm:$0xff]
    %v6982 = vld [vmem:[#allocation20 + $0x574] sm:$0xf]
    %v6983 = vld [vmem:[#allocation20 + $0x578] sm:$0xff]
    %v6984 = vld [vmem:[#allocation20 + $0x580] sm:$0xff]
    %v6985 = vld [vmem:[#allocation20 + $0x588] sm:$0xff]
    %v6986 = vld [vmem:[#allocation20 + $0x590] sm:$0xf]
    %v6987 = vld [vmem:[#allocation20 + $0x594] sm:$0xff]
    %v6988 = vld [vmem:[#allocation20 + $0x59c] sm:$0xff]
    %v6989 = vld [vmem:[#allocation20 + $0x5a4] sm:$0xff]
    %v6990 = vld [vmem:[#allocation20 + $0x5ac] sm:$0xf]
    %v6991 = vld [vmem:[#allocation20 + $0x5b0] sm:$0xff]
    %v6992 = vld [vmem:[#allocation20 + $0x5b8] sm:$0xff]
    %v6993 = vld [vmem:[#allocation20 + $0x5c0] sm:$0xff]
    %v6994 = vld [vmem:[#allocation20 + $0x5c8] sm:$0xf]
    %v6995 = vld [vmem:[#allocation20 + $0x5cc] sm:$0xff]
    %v6996 = vld [vmem:[#allocation20 + $0x5d4] sm:$0xff]
    %v6997 = vld [vmem:[#allocation20 + $0x5dc] sm:$0xff]
    %v6998 = vld [vmem:[#allocation20 + $0x5e4] sm:$0xf]
    %v6999 = vld [vmem:[#allocation20 + $0x5e8] sm:$0xff]
    %v7000 = vld [vmem:[#allocation20 + $0x5f0] sm:$0xff]
    %v7001 = vld [vmem:[#allocation20 + $0x5f8] sm:$0xff]
    %v7002 = vld [vmem:[#allocation20 + $0x600] sm:$0xf]
    %v7003 = vld [vmem:[#allocation20 + $0x604] sm:$0xff]
    %v7004 = vld [vmem:[#allocation20 + $0x60c] sm:$0xff]
    %v7005 = vld [vmem:[#allocation20 + $0x614] sm:$0xff]
    %v7006 = vld [vmem:[#allocation20 + $0x61c] sm:$0xf]
    %v7007 = vld [vmem:[#allocation20 + $0x620] sm:$0xff]
    %v7008 = vld [vmem:[#allocation20 + $0x628] sm:$0xff]
    %v7009 = vld [vmem:[#allocation20 + $0x630] sm:$0xff]
    %v7010 = vld [vmem:[#allocation20 + $0x638] sm:$0xf]
    %v7011 = vld [vmem:[#allocation20 + $0x63c] sm:$0xff]
    %v7012 = vld [vmem:[#allocation20 + $0x644] sm:$0xff]
    %v7013 = vld [vmem:[#allocation20 + $0x64c] sm:$0xff]
    %v7014 = vld [vmem:[#allocation20 + $0x654] sm:$0xf]
    %v7015 = vld [vmem:[#allocation20 + $0x658] sm:$0xff]
    %v7016 = vld [vmem:[#allocation20 + $0x660] sm:$0xff]
    %v7017 = vld [vmem:[#allocation20 + $0x668] sm:$0xff]
    %v7018 = vld [vmem:[#allocation20 + $0x670] sm:$0xf]
    %v7019 = vld [vmem:[#allocation20 + $0x674] sm:$0xff]
    %v7020 = vld [vmem:[#allocation20 + $0x67c] sm:$0xff]
    %v7021 = vld [vmem:[#allocation20 + $0x684] sm:$0xff]
    %v7022 = vld [vmem:[#allocation20 + $0x68c] sm:$0xf]
    %v7023 = vld [vmem:[#allocation20 + $0x690] sm:$0xff]
    %v7024 = vld [vmem:[#allocation20 + $0x698] sm:$0xff]
    %v7025 = vld [vmem:[#allocation20 + $0x6a0] sm:$0xff]
    %v7026 = vld [vmem:[#allocation20 + $0x6a8] sm:$0xf]
    %v7027 = vld [vmem:[#allocation20 + $0x6ac] sm:$0xff]
    %v7028 = vld [vmem:[#allocation20 + $0x6b4] sm:$0xff]
    %v7029 = vld [vmem:[#allocation20 + $0x6bc] sm:$0xff]
    %v7030 = vld [vmem:[#allocation20 + $0x6c4] sm:$0xf]
    %v7031 = vld [vmem:[#allocation20 + $0x6c8] sm:$0xff]
    %v7032 = vld [vmem:[#allocation20 + $0x6d0] sm:$0xff]
    %v7033 = vld [vmem:[#allocation20 + $0x6d8] sm:$0xff]
    %v7034 = vld [vmem:[#allocation20 + $0x6e0] sm:$0xf]
    %v7035 = vld [vmem:[#allocation20 + $0x6e4] sm:$0xff]
    %v7036 = vld [vmem:[#allocation20 + $0x6ec] sm:$0xff]
    %v7037 = vld [vmem:[#allocation20 + $0x6f4] sm:$0xff]
    %v7038 = vld [vmem:[#allocation20 + $0x6fc] sm:$0xf]
    %v7039 = vld [vmem:[#allocation20 + $0x700] sm:$0xff]
    %v7040 = vld [vmem:[#allocation20 + $0x708] sm:$0xff]
    %v7041 = vld [vmem:[#allocation20 + $0x710] sm:$0xff]
    %v7042 = vld [vmem:[#allocation20 + $0x718] sm:$0xf]
    %v7043 = vld [vmem:[#allocation20 + $0x71c] sm:$0xff]
    %v7044 = vld [vmem:[#allocation20 + $0x724] sm:$0xff]
    %v7045 = vld [vmem:[#allocation20 + $0x72c] sm:$0xff]
    %v7046 = vld [vmem:[#allocation20 + $0x734] sm:$0xf]
    %v7047 = vld [vmem:[#allocation20 + $0x738] sm:$0xff]
    %v7048 = vld [vmem:[#allocation20 + $0x740] sm:$0xff]
    %v7049 = vld [vmem:[#allocation20 + $0x748] sm:$0xff]
    %v7050 = vld [vmem:[#allocation20 + $0x750] sm:$0xf]
    %v7051 = vld [vmem:[#allocation20 + $0x754] sm:$0xff]
    %v7052 = vld [vmem:[#allocation20 + $0x75c] sm:$0xff]
    %v7053 = vld [vmem:[#allocation20 + $0x764] sm:$0xff]
    %v7054 = vld [vmem:[#allocation20 + $0x76c] sm:$0xf]
    %v7055 = vld [vmem:[#allocation20 + $0x770] sm:$0xff]
    %v7056 = vld [vmem:[#allocation20 + $0x778] sm:$0xff]
    %v7057 = vld [vmem:[#allocation20 + $0x780] sm:$0xff]
    %v7058 = vld [vmem:[#allocation20 + $0x788] sm:$0xf]
    %v7059 = vld [vmem:[#allocation20 + $0x78c] sm:$0xff]
    %v7060 = vld [vmem:[#allocation20 + $0x794] sm:$0xff]
    %v7061 = vld [vmem:[#allocation20 + $0x79c] sm:$0xff]
    %v7062 = vld [vmem:[#allocation20 + $0x7a4] sm:$0xf]
    %v7063 = vld [vmem:[#allocation20 + $0x7a8] sm:$0xff]
    %v7064 = vld [vmem:[#allocation20 + $0x7b0] sm:$0xff]
    %v7065 = vld [vmem:[#allocation20 + $0x7b8] sm:$0xff]
    %v7066 = vld [vmem:[#allocation20 + $0x7c0] sm:$0xf]
    %v7067 = vld [vmem:[#allocation20 + $0x7c4] sm:$0xff]
    %v7068 = vld [vmem:[#allocation20 + $0x7cc] sm:$0xff]
    %v7069 = vld [vmem:[#allocation20 + $0x7d4] sm:$0xff]
    %v7070 = vld [vmem:[#allocation20 + $0x7dc] sm:$0xf]
    %v7071 = vld [vmem:[#allocation20 + $0x7e0] sm:$0xff]
    %v7072 = vld [vmem:[#allocation20 + $0x7e8] sm:$0xff]
    %v7073 = vld [vmem:[#allocation20 + $0x7f0] sm:$0xff]
    %v7074 = vld [vmem:[#allocation20 + $0x7f8] sm:$0xf]
    %v7075 = vld [vmem:[#allocation20 + $0x7fc] sm:$0xff]
    %v7076 = vld [vmem:[#allocation20 + $0x804] sm:$0xff]
    %v7077 = vld [vmem:[#allocation20 + $0x80c] sm:$0xff]
    %v7078 = vld [vmem:[#allocation20 + $0x814] sm:$0xf]
    %v7079 = vld [vmem:[#allocation20 + $0x818] sm:$0xff]
    %v7080 = vld [vmem:[#allocation20 + $0x820] sm:$0xff]
    %v7081 = vld [vmem:[#allocation20 + $0x828] sm:$0xff]
    %v7082 = vld [vmem:[#allocation20 + $0x830] sm:$0xf]
    %v7083 = vld [vmem:[#allocation20 + $0x834] sm:$0xff]
    %v7084 = vld [vmem:[#allocation20 + $0x83c] sm:$0xff]
    %v7085 = vld [vmem:[#allocation20 + $0x844] sm:$0xff]
    %v7086 = vld [vmem:[#allocation20 + $0x84c] sm:$0xf]
    %v7087 = vld [vmem:[#allocation20 + $0x850] sm:$0xff]
    %v7088 = vld [vmem:[#allocation20 + $0x858] sm:$0xff]
    %v7089 = vld [vmem:[#allocation20 + $0x860] sm:$0xff]
    %v7090 = vld [vmem:[#allocation20 + $0x868] sm:$0xf]
    %v7091 = vld [vmem:[#allocation20 + $0x86c] sm:$0xff]
    %v7092 = vld [vmem:[#allocation20 + $0x874] sm:$0xff]
    %v7093 = vld [vmem:[#allocation20 + $0x87c] sm:$0xff]
    %v7094 = vld [vmem:[#allocation20 + $0x884] sm:$0xf]
    %v7095 = vld [vmem:[#allocation20 + $0x888] sm:$0xff]
    %v7096 = vld [vmem:[#allocation20 + $0x890] sm:$0xff]
    %v7097 = vld [vmem:[#allocation20 + $0x898] sm:$0xff]
    %v7098 = vld [vmem:[#allocation20 + $0x8a0] sm:$0xf]
    %v7099 = vld [vmem:[#allocation20 + $0x8a4] sm:$0xff]
    %v7100 = vld [vmem:[#allocation20 + $0x8ac] sm:$0xff]
    %v7101 = vld [vmem:[#allocation20 + $0x8b4] sm:$0xff]
    %v7102 = vld [vmem:[#allocation20 + $0x8bc] sm:$0xf]
    %v7103 = vld [vmem:[#allocation20 + $0x8c0] sm:$0xff]
    %v7104 = vld [vmem:[#allocation20 + $0x8c8] sm:$0xff]
    %v7105 = vld [vmem:[#allocation20 + $0x8d0] sm:$0xff]
    %v7106 = vld [vmem:[#allocation20 + $0x8d8] sm:$0xf]
    %v7107 = vld [vmem:[#allocation20 + $0x8dc] sm:$0xff]
    %v7108 = vld [vmem:[#allocation20 + $0x8e4] sm:$0xff]
    %v7109 = vld [vmem:[#allocation20 + $0x8ec] sm:$0xff]
    %v7110 = vld [vmem:[#allocation20 + $0x8f4] sm:$0xf]
    %v7111 = vld [vmem:[#allocation20 + $0x8f8] sm:$0xff]
    %v7112 = vld [vmem:[#allocation20 + $0x900] sm:$0xff]
    %v7113 = vld [vmem:[#allocation20 + $0x908] sm:$0xff]
    %v7114 = vld [vmem:[#allocation20 + $0x910] sm:$0xf]
    %v7115 = vld [vmem:[#allocation20 + $0x914] sm:$0xff]
    %v7116 = vld [vmem:[#allocation20 + $0x91c] sm:$0xff]
    %v7117 = vld [vmem:[#allocation20 + $0x924] sm:$0xff]
    %v7118 = vld [vmem:[#allocation20 + $0x92c] sm:$0xf]
    %v7119 = vld [vmem:[#allocation20 + $0x930] sm:$0xff]
    %v7120 = vld [vmem:[#allocation20 + $0x938] sm:$0xff]
    %v7121 = vld [vmem:[#allocation20 + $0x940] sm:$0xff]
    %v7122 = vld [vmem:[#allocation20 + $0x948] sm:$0xf]
    %v7123 = vld [vmem:[#allocation20 + $0x94c] sm:$0xff]
    %v7124 = vld [vmem:[#allocation20 + $0x954] sm:$0xff]
    %v7125 = vld [vmem:[#allocation20 + $0x95c] sm:$0xff]
    %v7126 = vld [vmem:[#allocation20 + $0x964] sm:$0xf]
    %v7127 = vld [vmem:[#allocation20 + $0x968] sm:$0xff]
    %v7128 = vld [vmem:[#allocation20 + $0x970] sm:$0xff]
    %v7129 = vld [vmem:[#allocation20 + $0x978] sm:$0xff]
    %v7130 = vld [vmem:[#allocation20 + $0x980] sm:$0xf]
    %v7131 = vld [vmem:[#allocation20 + $0x984] sm:$0xff]
    %v7132 = vld [vmem:[#allocation20 + $0x98c] sm:$0xff]
    %v7133 = vld [vmem:[#allocation20 + $0x994] sm:$0xff]
    %v7134 = vld [vmem:[#allocation20 + $0x99c] sm:$0xf]
    %v7135 = vld [vmem:[#allocation20 + $0x9a0] sm:$0xff]
    %v7136 = vld [vmem:[#allocation20 + $0x9a8] sm:$0xff]
    %v7137 = vld [vmem:[#allocation20 + $0x9b0] sm:$0xff]
    %v7138 = vld [vmem:[#allocation20 + $0x9b8] sm:$0xf]
    %v7139 = vld [vmem:[#allocation20 + $0x9bc] sm:$0xff]
    %v7140 = vld [vmem:[#allocation20 + $0x9c4] sm:$0xff]
    %v7141 = vld [vmem:[#allocation20 + $0x9cc] sm:$0xff]
    %v7142 = vld [vmem:[#allocation20 + $0x9d4] sm:$0xf]
    %v7143 = vld [vmem:[#allocation20 + $0x9d8] sm:$0xff]
    %v7144 = vld [vmem:[#allocation20 + $0x9e0] sm:$0xff]
    %v7145 = vld [vmem:[#allocation20 + $0x9e8] sm:$0xff]
    %v7146 = vld [vmem:[#allocation20 + $0x9f0] sm:$0xf]
    %v7147 = vld [vmem:[#allocation20 + $0x9f4] sm:$0xff]
    %v7148 = vld [vmem:[#allocation20 + $0x9fc] sm:$0xff]
    %v7149 = vld [vmem:[#allocation20 + $0xa04] sm:$0xff]
    %v7150 = vld [vmem:[#allocation20 + $0xa0c] sm:$0xf]
    %v7151 = vld [vmem:[#allocation20 + $0xa10] sm:$0xff]
    %v7152 = vld [vmem:[#allocation20 + $0xa18] sm:$0xff]
    %v7153 = vld [vmem:[#allocation20 + $0xa20] sm:$0xff]
    %v7154 = vld [vmem:[#allocation20 + $0xa28] sm:$0xf]
    %v7155 = vld [vmem:[#allocation20 + $0xa2c] sm:$0xff]
    %v7156 = vld [vmem:[#allocation20 + $0xa34] sm:$0xff]
    %v7157 = vld [vmem:[#allocation20 + $0xa3c] sm:$0xff]
    %v7158 = vld [vmem:[#allocation20 + $0xa44] sm:$0xf]
    %v7159 = vld [vmem:[#allocation20 + $0xa48] sm:$0xff]
    %v7160 = vld [vmem:[#allocation20 + $0xa50] sm:$0xff]
    %v7161 = vld [vmem:[#allocation20 + $0xa58] sm:$0xff]
    %v7162 = vld [vmem:[#allocation20 + $0xa60] sm:$0xf]
    %v7163 = vld [vmem:[#allocation20 + $0xa64] sm:$0xff]
    %v7164 = vld [vmem:[#allocation20 + $0xa6c] sm:$0xff]
    %v7165 = vld [vmem:[#allocation20 + $0xa74] sm:$0xff]
    %v7166 = vld [vmem:[#allocation20 + $0xa7c] sm:$0xf]
    %v7167 = vld [vmem:[#allocation20 + $0xa80] sm:$0xff]
    %v7168 = vld [vmem:[#allocation20 + $0xa88] sm:$0xff]
    %v7169 = vld [vmem:[#allocation20 + $0xa90] sm:$0xff]
    %v7170 = vld [vmem:[#allocation20 + $0xa98] sm:$0xf]
    %v7171 = vld [vmem:[#allocation20 + $0xa9c] sm:$0xff]
    %v7172 = vld [vmem:[#allocation20 + $0xaa4] sm:$0xff]
    %v7173 = vld [vmem:[#allocation20 + $0xaac] sm:$0xff]
    %v7174 = vld [vmem:[#allocation20 + $0xab4] sm:$0xf]
    %v7175 = vld [vmem:[#allocation20 + $0xab8] sm:$0xff]
    %v7176 = vld [vmem:[#allocation20 + $0xac0] sm:$0xff]
    %v7177 = vld [vmem:[#allocation20 + $0xac8] sm:$0xff]
    %v7178 = vld [vmem:[#allocation20 + $0xad0] sm:$0xf]
    %v7179 = vld [vmem:[#allocation20 + $0xad4] sm:$0xff]
    %v7180 = vld [vmem:[#allocation20 + $0xadc] sm:$0xff]
    %v7181 = vld [vmem:[#allocation20 + $0xae4] sm:$0xff]
    %v7182 = vld [vmem:[#allocation20 + $0xaec] sm:$0xf]
    %v7183 = vld [vmem:[#allocation20 + $0xaf0] sm:$0xff]
    %v7184 = vld [vmem:[#allocation20 + $0xaf8] sm:$0xff]
    %v7185 = vld [vmem:[#allocation20 + $0xb00] sm:$0xff]
    %v7186 = vld [vmem:[#allocation20 + $0xb08] sm:$0xf]
    %v7187 = vld [vmem:[#allocation20 + $0xb0c] sm:$0xff]
    %v7188 = vld [vmem:[#allocation20 + $0xb14] sm:$0xff]
    %v7189 = vld [vmem:[#allocation20 + $0xb1c] sm:$0xff]
    %v7190 = vld [vmem:[#allocation20 + $0xb24] sm:$0xf]
    %v7191 = vld [vmem:[#allocation20 + $0xb28] sm:$0xff]
    %v7192 = vld [vmem:[#allocation20 + $0xb30] sm:$0xff]
    %v7193 = vld [vmem:[#allocation20 + $0xb38] sm:$0xff]
    %v7194 = vld [vmem:[#allocation20 + $0xb40] sm:$0xf]
    %v7195 = vld [vmem:[#allocation20 + $0xb44] sm:$0xff]
    %v7196 = vld [vmem:[#allocation20 + $0xb4c] sm:$0xff]
    %v7197 = vld [vmem:[#allocation20 + $0xb54] sm:$0xff]
    %v7198 = vld [vmem:[#allocation20 + $0xb5c] sm:$0xf]
    %v7199 = vld [vmem:[#allocation20 + $0xb60] sm:$0xff]
    %v7200 = vld [vmem:[#allocation20 + $0xb68] sm:$0xff]
    %v7201 = vld [vmem:[#allocation20 + $0xb70] sm:$0xff]
    %v7202 = vld [vmem:[#allocation20 + $0xb78] sm:$0xf]
    %v7203 = vld [vmem:[#allocation20 + $0xb7c] sm:$0xff]
    %v7204 = vld [vmem:[#allocation20 + $0xb84] sm:$0xff]
    %v7205 = vld [vmem:[#allocation20 + $0xb8c] sm:$0xff]
    %v7206 = vld [vmem:[#allocation20 + $0xb94] sm:$0xf]
    %v7207 = vld [vmem:[#allocation20 + $0xb98] sm:$0xff]
    %v7208 = vld [vmem:[#allocation20 + $0xba0] sm:$0xff]
    %v7209 = vld [vmem:[#allocation20 + $0xba8] sm:$0xff]
    %v7210 = vld [vmem:[#allocation20 + $0xbb0] sm:$0xf]
    %v7211 = vld [vmem:[#allocation20 + $0xbb4] sm:$0xff]
    %v7212 = vld [vmem:[#allocation20 + $0xbbc] sm:$0xff]
    %v7213 = vld [vmem:[#allocation20 + $0xbc4] sm:$0xff]
    %v7214 = vld [vmem:[#allocation20 + $0xbcc] sm:$0xf]
    %v7215 = vld [vmem:[#allocation20 + $0xbd0] sm:$0xff]
    %v7216 = vld [vmem:[#allocation20 + $0xbd8] sm:$0xff]
    %v7217 = vld [vmem:[#allocation20 + $0xbe0] sm:$0xff]
    %v7218 = vld [vmem:[#allocation20 + $0xbe8] sm:$0xf]
    %v7219 = vld [vmem:[#allocation20 + $0xbec] sm:$0xff]
    %v7220 = vld [vmem:[#allocation20 + $0xbf4] sm:$0xff]
    %v7221 = vld [vmem:[#allocation20 + $0xbfc] sm:$0xff]
    %v7222 = vld [vmem:[#allocation20 + $0xc04] sm:$0xf]
    %v7223 = vld [vmem:[#allocation20 + $0xc08] sm:$0xff]
    %v7224 = vld [vmem:[#allocation20 + $0xc10] sm:$0xff]
    %v7225 = vld [vmem:[#allocation20 + $0xc18] sm:$0xff]
    %v7226 = vld [vmem:[#allocation20 + $0xc20] sm:$0xf]
    %v7227 = vld [vmem:[#allocation20 + $0xc24] sm:$0xff]
    %v7228 = vld [vmem:[#allocation20 + $0xc2c] sm:$0xff]
    %v7229 = vld [vmem:[#allocation20 + $0xc34] sm:$0xff]
    %v7230 = vld [vmem:[#allocation20 + $0xc3c] sm:$0xf]
    %v7231 = vld [vmem:[#allocation20 + $0xc40] sm:$0xff]
    %v7232 = vld [vmem:[#allocation20 + $0xc48] sm:$0xff]
    %v7233 = vld [vmem:[#allocation20 + $0xc50] sm:$0xff]
    %v7234 = vld [vmem:[#allocation20 + $0xc58] sm:$0xf]
    %v7235 = vld [vmem:[#allocation20 + $0xc5c] sm:$0xff]
    %v7236 = vld [vmem:[#allocation20 + $0xc64] sm:$0xff]
    %v7237 = vld [vmem:[#allocation20 + $0xc6c] sm:$0xff]
    %v7238 = vld [vmem:[#allocation20 + $0xc74] sm:$0xf]
    %v7239 = vld [vmem:[#allocation20 + $0xc78] sm:$0xff]
    %v7240 = vld [vmem:[#allocation20 + $0xc80] sm:$0xff]
    %v7241 = vld [vmem:[#allocation20 + $0xc88] sm:$0xff]
    %v7242 = vld [vmem:[#allocation20 + $0xc90] sm:$0xf]
    %v7243 = vld [vmem:[#allocation20 + $0xc94] sm:$0xff]
    %v7244 = vld [vmem:[#allocation20 + $0xc9c] sm:$0xff]
    %v7245 = vld [vmem:[#allocation20 + $0xca4] sm:$0xff]
    %v7246 = vld [vmem:[#allocation20 + $0xcac] sm:$0xf]
    %v7247 = vld [vmem:[#allocation20 + $0xcb0] sm:$0xff]
    %v7248 = vld [vmem:[#allocation20 + $0xcb8] sm:$0xff]
    %v7249 = vld [vmem:[#allocation20 + $0xcc0] sm:$0xff]
    %v7250 = vld [vmem:[#allocation20 + $0xcc8] sm:$0xf]
    %v7251 = vld [vmem:[#allocation20 + $0xccc] sm:$0xff]
    %v7252 = vld [vmem:[#allocation20 + $0xcd4] sm:$0xff]
    %v7253 = vld [vmem:[#allocation20 + $0xcdc] sm:$0xff]
    %v7254 = vld [vmem:[#allocation20 + $0xce4] sm:$0xf]
    %v7255 = vld [vmem:[#allocation20 + $0xce8] sm:$0xff]
    %v7256 = vld [vmem:[#allocation20 + $0xcf0] sm:$0xff]
    %v7257 = vld [vmem:[#allocation20 + $0xcf8] sm:$0xff]
    %v7258 = vld [vmem:[#allocation20 + $0xd00] sm:$0xf]
    %v7259 = vld [vmem:[#allocation20 + $0xd04] sm:$0xff]
    %v7260 = vld [vmem:[#allocation20 + $0xd0c] sm:$0xff]
    %v7261 = vld [vmem:[#allocation20 + $0xd14] sm:$0xff]
    %v7262 = vld [vmem:[#allocation20 + $0xd1c] sm:$0xf]
    %v7263 = vld [vmem:[#allocation20 + $0xd20] sm:$0xff]
    %v7264 = vld [vmem:[#allocation20 + $0xd28] sm:$0xff]
    %v7265 = vld [vmem:[#allocation20 + $0xd30] sm:$0xff]
    %v7266 = vld [vmem:[#allocation20 + $0xd38] sm:$0xf]
    %v7267 = vld [vmem:[#allocation20 + $0xd3c] sm:$0xff]
    %v7268 = vld [vmem:[#allocation20 + $0xd44] sm:$0xff]
    %v7269 = vld [vmem:[#allocation20 + $0xd4c] sm:$0xff]
    %v7270 = vld [vmem:[#allocation20 + $0xd54] sm:$0xf]
    %v7271 = vld [vmem:[#allocation20 + $0xd58] sm:$0xff]
    %v7272 = vld [vmem:[#allocation20 + $0xd60] sm:$0xff]
    %v7273 = vld [vmem:[#allocation20 + $0xd68] sm:$0xff]
    %v7274 = vld [vmem:[#allocation20 + $0xd70] sm:$0xf]
    %v7275 = vld [vmem:[#allocation20 + $0xd74] sm:$0xff]
    %v7276 = vld [vmem:[#allocation20 + $0xd7c] sm:$0xff]
    %v7277 = vld [vmem:[#allocation20 + $0xd84] sm:$0xff]
    %v7278 = vld [vmem:[#allocation20 + $0xd8c] sm:$0xf]
    %v7279 = vld [vmem:[#allocation20 + $0xd90] sm:$0xff]
    %v7280 = vld [vmem:[#allocation20 + $0xd98] sm:$0xff]
    %v7281 = vld [vmem:[#allocation20 + $0xda0] sm:$0xff]
    %v7282 = vld [vmem:[#allocation20 + $0xda8] sm:$0xf]
    %v7283 = vld [vmem:[#allocation20 + $0xdac] sm:$0xff]
    %v7284 = vld [vmem:[#allocation20 + $0xdb4] sm:$0xff]
    %v7285 = vld [vmem:[#allocation20 + $0xdbc] sm:$0xff]
    %v7286 = vld [vmem:[#allocation20 + $0xdc4] sm:$0xf]
    %v7287 = vld [vmem:[#allocation20 + $0xdc8] sm:$0xff]
    %v7288 = vld [vmem:[#allocation20 + $0xdd0] sm:$0xff]
    %v7289 = vld [vmem:[#allocation20 + $0xdd8] sm:$0xff]
    %v7290 = vld [vmem:[#allocation20 + $0xde0] sm:$0xf]
    %v7291 = vld [vmem:[#allocation20 + $0xde4] sm:$0xff]
    %v7292 = vld [vmem:[#allocation20 + $0xdec] sm:$0xff]
    %v7293 = vld [vmem:[#allocation20 + $0xdf4] sm:$0xff]
    %v7294 = vld [vmem:[#allocation20 + $0xdfc] sm:$0xf]
    %v7295 = vld [vmem:[#allocation20 + $0xe00] sm:$0xff]
    %v7296 = vld [vmem:[#allocation20 + $0xe08] sm:$0xff]
    %v7297 = vld [vmem:[#allocation20 + $0xe10] sm:$0xff]
    %v7298 = vld [vmem:[#allocation20 + $0xe18] sm:$0xf]
    %v7299 = vld [vmem:[#allocation20 + $0xe1c] sm:$0xff]
    %v7300 = vld [vmem:[#allocation20 + $0xe24] sm:$0xff]
    %v7301 = vld [vmem:[#allocation20 + $0xe2c] sm:$0xff]
    %v7302 = vld [vmem:[#allocation20 + $0xe34] sm:$0xf]
    %v7303 = vld [vmem:[#allocation20 + $0xe38] sm:$0xff]
    %v7304 = vld [vmem:[#allocation20 + $0xe40] sm:$0xff]
    %v7305 = vld [vmem:[#allocation20 + $0xe48] sm:$0xff]
    %v7306 = vld [vmem:[#allocation20 + $0xe50] sm:$0xf]
    %v7307 = vld [vmem:[#allocation20 + $0xe54] sm:$0xff]
    %v7308 = vld [vmem:[#allocation20 + $0xe5c] sm:$0xff]
    %v7309 = vld [vmem:[#allocation20 + $0xe64] sm:$0xff]
    %v7310 = vld [vmem:[#allocation20 + $0xe6c] sm:$0xf]
    %v7311 = vld [vmem:[#allocation20 + $0xe70] sm:$0xff]
    %v7312 = vld [vmem:[#allocation20 + $0xe78] sm:$0xff]
    %v7313 = vld [vmem:[#allocation20 + $0xe80] sm:$0xff]
    %v7314 = vld [vmem:[#allocation20 + $0xe88] sm:$0xf]
    %v7315 = vld [vmem:[#allocation20 + $0xe8c] sm:$0xff]
    %v7316 = vld [vmem:[#allocation20 + $0xe94] sm:$0xff]
    %v7317 = vld [vmem:[#allocation20 + $0xe9c] sm:$0xff]
    %v7318 = vld [vmem:[#allocation20 + $0xea4] sm:$0xf]
    %v7319 = vld [vmem:[#allocation20 + $0xea8] sm:$0xff]
    %v7320 = vld [vmem:[#allocation20 + $0xeb0] sm:$0xff]
    %v7321 = vld [vmem:[#allocation20 + $0xeb8] sm:$0xff]
    %v7322 = vld [vmem:[#allocation20 + $0xec0] sm:$0xf]
    %v7323 = vld [vmem:[#allocation20 + $0xec4] sm:$0xff]
    %v7324 = vld [vmem:[#allocation20 + $0xecc] sm:$0xff]
    %v7325 = vld [vmem:[#allocation20 + $0xed4] sm:$0xff]
    %v7326 = vld [vmem:[#allocation20 + $0xedc] sm:$0xf]
    %v7327 = vld [vmem:[#allocation20 + $0xee0] sm:$0xff]
    %v7328 = vld [vmem:[#allocation20 + $0xee8] sm:$0xff]
    %v7329 = vld [vmem:[#allocation20 + $0xef0] sm:$0xff]
    %v7330 = vld [vmem:[#allocation20 + $0xef8] sm:$0xf]
    %v7331 = vld [vmem:[#allocation20 + $0xefc] sm:$0xff]
    %v7332 = vld [vmem:[#allocation20 + $0xf04] sm:$0xff]
    %v7333 = vld [vmem:[#allocation20 + $0xf0c] sm:$0xff]
    %v7334 = vld [vmem:[#allocation20 + $0xf14] sm:$0xf]
    %v7335 = vld [vmem:[#allocation20 + $0xf18] sm:$0xff]
    %v7336 = vld [vmem:[#allocation20 + $0xf20] sm:$0xff]
    %v7337 = vld [vmem:[#allocation20 + $0xf28] sm:$0xff]
    %v7338 = vld [vmem:[#allocation20 + $0xf30] sm:$0xf]
    %v7339 = vld [vmem:[#allocation20 + $0xf34] sm:$0xff]
    %v7340 = vld [vmem:[#allocation20 + $0xf3c] sm:$0xff]
    %v7341 = vld [vmem:[#allocation20 + $0xf44] sm:$0xff]
    %v7342 = vld [vmem:[#allocation20 + $0xf4c] sm:$0xf]
    %v7343 = vld [vmem:[#allocation20 + $0xf50] sm:$0xff]
    %v7344 = vld [vmem:[#allocation20 + $0xf58] sm:$0xff]
    %v7345 = vld [vmem:[#allocation20 + $0xf60] sm:$0xff]
    %v7346 = vld [vmem:[#allocation20 + $0xf68] sm:$0xf]
    %v7347 = vld [vmem:[#allocation20 + $0xf6c] sm:$0xff]
    %v7348 = vld [vmem:[#allocation20 + $0xf74] sm:$0xff]
    %v7349 = vld [vmem:[#allocation20 + $0xf7c] sm:$0xff]
    %v7350 = vld [vmem:[#allocation20 + $0xf84] sm:$0xf]
    %v7351 = vld [vmem:[#allocation20 + $0xf88] sm:$0xff]
    %v7352 = vld [vmem:[#allocation20 + $0xf90] sm:$0xff]
    %v7353 = vld [vmem:[#allocation20 + $0xf98] sm:$0xff]
    %v7354 = vld [vmem:[#allocation20 + $0xfa0] sm:$0xf]
    %v7355 = vld [vmem:[#allocation20 + $0xfa4] sm:$0xff]
    %v7356 = vld [vmem:[#allocation20 + $0xfac] sm:$0xff]
    %v7357 = vld [vmem:[#allocation20 + $0xfb4] sm:$0xff]
    %v7358 = vld [vmem:[#allocation20 + $0xfbc] sm:$0xf]
    %v7359 = vld [vmem:[#allocation20 + $0xfc0] sm:$0xff]
    %v7360 = vld [vmem:[#allocation20 + $0xfc8] sm:$0xff]
    %v7361 = vld [vmem:[#allocation20 + $0xfd0] sm:$0xff]
    %v7362 = vld [vmem:[#allocation20 + $0xfd8] sm:$0xf]
    %v7363 = vld [vmem:[#allocation20 + $0xfdc] sm:$0xff]
    %v7364 = vld [vmem:[#allocation20 + $0xfe4] sm:$0xff]
    %v7365 = vld [vmem:[#allocation20 + $0xfec] sm:$0xff]
    %v7366 = vld [vmem:[#allocation20 + $0xff4] sm:$0xf]
    %v7367 = vld [vmem:[#allocation20 + $0xff8] sm:$0xff]
    %v7368 = vld [vmem:[#allocation20 + $0x1000] sm:$0xff]
    %v7369 = vld [vmem:[#allocation20 + $0x1008] sm:$0xff]
    %v7370 = vld [vmem:[#allocation20 + $0x1010] sm:$0xf]
    %v7371 = vld [vmem:[#allocation20 + $0x1014] sm:$0xff]
    %v7372 = vld [vmem:[#allocation20 + $0x101c] sm:$0xff]
    %v7373 = vld [vmem:[#allocation20 + $0x1024] sm:$0xff]
    %v7374 = vld [vmem:[#allocation20 + $0x102c] sm:$0xf]
    %v7375 = vld [vmem:[#allocation20 + $0x1030] sm:$0xff]
    %v7376 = vld [vmem:[#allocation20 + $0x1038] sm:$0xff]
    %v7377 = vld [vmem:[#allocation20 + $0x1040] sm:$0xff]
    %v7378 = vld [vmem:[#allocation20 + $0x1048] sm:$0xf]
    %v7379 = vld [vmem:[#allocation20 + $0x104c] sm:$0xff]
    %v7380 = vld [vmem:[#allocation20 + $0x1054] sm:$0xff]
    %v7381 = vld [vmem:[#allocation20 + $0x105c] sm:$0xff]
    %v7382 = vld [vmem:[#allocation20 + $0x1064] sm:$0xf]
    %v7383 = vld [vmem:[#allocation20 + $0x1068] sm:$0xff]
    %v7384 = vld [vmem:[#allocation20 + $0x1070] sm:$0xff]
    %v7385 = vld [vmem:[#allocation20 + $0x1078] sm:$0xff]
    %v7386 = vld [vmem:[#allocation20 + $0x1080] sm:$0xf]
    %v7387 = vld [vmem:[#allocation20 + $0x1084] sm:$0xff]
    %v7388 = vld [vmem:[#allocation20 + $0x108c] sm:$0xff]
    %v7389 = vld [vmem:[#allocation20 + $0x1094] sm:$0xff]
    %v7390 = vld [vmem:[#allocation20 + $0x109c] sm:$0xf]
    %v7391 = vld [vmem:[#allocation20 + $0x10a0] sm:$0xff]
    %v7392 = vld [vmem:[#allocation20 + $0x10a8] sm:$0xff]
    %v7393 = vld [vmem:[#allocation20 + $0x10b0] sm:$0xff]
    %v7394 = vld [vmem:[#allocation20 + $0x10b8] sm:$0xf]
    %v7395 = vld [vmem:[#allocation20 + $0x10bc] sm:$0xff]
    %v7396 = vld [vmem:[#allocation20 + $0x10c4] sm:$0xff]
    %v7397 = vld [vmem:[#allocation20 + $0x10cc] sm:$0xff]
    %v7398 = vld [vmem:[#allocation20 + $0x10d4] sm:$0xf]
    %v7399 = vld [vmem:[#allocation20 + $0x10d8] sm:$0xff]
    %v7400 = vld [vmem:[#allocation20 + $0x10e0] sm:$0xff]
    %v7401 = vld [vmem:[#allocation20 + $0x10e8] sm:$0xff]
    %v7402 = vld [vmem:[#allocation20 + $0x10f0] sm:$0xf]
    %v7403 = vld [vmem:[#allocation20 + $0x10f4] sm:$0xff]
    %v7404 = vld [vmem:[#allocation20 + $0x10fc] sm:$0xff]
    %v7405 = vld [vmem:[#allocation20 + $0x1104] sm:$0xff]
    %v7406 = vld [vmem:[#allocation20 + $0x110c] sm:$0xf]
    %v7407 = vld [vmem:[#allocation20 + $0x1110] sm:$0xff]
    %v7408 = vld [vmem:[#allocation20 + $0x1118] sm:$0xff]
    %v7409 = vld [vmem:[#allocation20 + $0x1120] sm:$0xff]
    %v7410 = vld [vmem:[#allocation20 + $0x1128] sm:$0xf]
    %v7411 = vld [vmem:[#allocation20 + $0x112c] sm:$0xff]
    %v7412 = vld [vmem:[#allocation20 + $0x1134] sm:$0xff]
    %v7413 = vld [vmem:[#allocation20 + $0x113c] sm:$0xff]
    %v7414 = vld [vmem:[#allocation20 + $0x1144] sm:$0xf]
    %v7415 = vld [vmem:[#allocation20 + $0x1148] sm:$0xff]
    %v7416 = vld [vmem:[#allocation20 + $0x1150] sm:$0xff]
    %v7417 = vld [vmem:[#allocation20 + $0x1158] sm:$0xff]
    %v7418 = vld [vmem:[#allocation20 + $0x1160] sm:$0xf]
    %v7419 = vld [vmem:[#allocation20 + $0x1164] sm:$0xff]
    %v7420 = vld [vmem:[#allocation20 + $0x116c] sm:$0xff]
    %v7421 = vld [vmem:[#allocation20 + $0x1174] sm:$0xff]
    %v7422 = vld [vmem:[#allocation20 + $0x117c] sm:$0xf]
    %v7423 = vld [vmem:[#allocation22] sm:$0xff]
    %v7425 = vlaneseq
    %v7426 = vshrl.u32 %v7425, 7
    %v7427 = vsub.s32 0, %v7426
    %v7428 = vrot.slane %v7423, %v7427
    %v7429 = vlaneseq
    %v7430 = vshrl.u32 %v7429, 7
    %v7431 = vsub.s32 1, %v7430
    %v7432 = vrot.slane %v7423, %v7431
    %v7433 = vlaneseq
    %v7434 = vshrl.u32 %v7433, 7
    %v7435 = vsub.s32 2, %v7434
    %v7436 = vrot.slane %v7423, %v7435
    %v7437 = vlaneseq
    %v7438 = vshrl.u32 %v7437, 7
    %v7439 = vsub.s32 3, %v7438
    %v7440 = vrot.slane %v7423, %v7439
    %v7441 = vlaneseq
    %v7442 = vshrl.u32 %v7441, 7
    %v7443 = vsub.s32 4, %v7442
    %v7444 = vrot.slane %v7423, %v7443
    %v7445 = vlaneseq
    %v7446 = vshrl.u32 %v7445, 7
    %v7447 = vsub.s32 5, %v7446
    %v7448 = vrot.slane %v7423, %v7447
    %v7449 = vlaneseq
    %v7450 = vshrl.u32 %v7449, 7
    %v7451 = vsub.s32 6, %v7450
    %v7452 = vrot.slane %v7423, %v7451
    %v8100 = vunpack.c.l.b16 %v6783
    %v8101 = vunpack.c.h.b16 %v6783
    %v8102 = vunpack.c.l.b16 %v6784
    %v8103 = vunpack.c.h.b16 %v6784
    %v8104 = vunpack.c.l.b16 %v6785
    %v8105 = vunpack.c.h.b16 %v6785
    %v8106 = vunpack.c.l.b16 %v6786
    %v8107 = vunpack.c.l.b16 %v6787
    %v8108 = vunpack.c.h.b16 %v6787
    %v8109 = vunpack.c.l.b16 %v6788
    %v8110 = vunpack.c.h.b16 %v6788
    %v8111 = vunpack.c.l.b16 %v6789
    %v8112 = vunpack.c.h.b16 %v6789
    %v8113 = vunpack.c.l.b16 %v6790
    %v8114 = vunpack.c.l.b16 %v6791
    %v8115 = vunpack.c.h.b16 %v6791
    %v8116 = vunpack.c.l.b16 %v6792
    %v8117 = vunpack.c.h.b16 %v6792
    %v8118 = vunpack.c.l.b16 %v6793
    %v8119 = vunpack.c.h.b16 %v6793
    %v8120 = vunpack.c.l.b16 %v6794
    %v8121 = vunpack.c.l.b16 %v6795
    %v8122 = vunpack.c.h.b16 %v6795
    %v8123 = vunpack.c.l.b16 %v6796
    %v8124 = vunpack.c.h.b16 %v6796
    %v8125 = vunpack.c.l.b16 %v6797
    %v8126 = vunpack.c.h.b16 %v6797
    %v8127 = vunpack.c.l.b16 %v6798
    %v8128 = vunpack.c.l.b16 %v6799
    %v8129 = vunpack.c.h.b16 %v6799
    %v8130 = vunpack.c.l.b16 %v6800
    %v8131 = vunpack.c.h.b16 %v6800
    %v8132 = vunpack.c.l.b16 %v6801
    %v8133 = vunpack.c.h.b16 %v6801
    %v8134 = vunpack.c.l.b16 %v6802
    %v8135 = vunpack.c.l.b16 %v6803
    %v8136 = vunpack.c.h.b16 %v6803
    %v8137 = vunpack.c.l.b16 %v6804
    %v8138 = vunpack.c.h.b16 %v6804
    %v8139 = vunpack.c.l.b16 %v6805
    %v8140 = vunpack.c.h.b16 %v6805
    %v8141 = vunpack.c.l.b16 %v6806
    %v8142 = vunpack.c.l.b16 %v6807
    %v8143 = vunpack.c.h.b16 %v6807
    %v8144 = vunpack.c.l.b16 %v6808
    %v8145 = vunpack.c.h.b16 %v6808
    %v8146 = vunpack.c.l.b16 %v6809
    %v8147 = vunpack.c.h.b16 %v6809
    %v8148 = vunpack.c.l.b16 %v6810
    %v8149 = vunpack.c.l.b16 %v6811
    %v8150 = vunpack.c.h.b16 %v6811
    %v8151 = vunpack.c.l.b16 %v6812
    %v8152 = vunpack.c.h.b16 %v6812
    %v8153 = vunpack.c.l.b16 %v6813
    %v8154 = vunpack.c.h.b16 %v6813
    %v8155 = vunpack.c.l.b16 %v6814
    %v8156 = vunpack.c.l.b16 %v6815
    %v8157 = vunpack.c.h.b16 %v6815
    %v8158 = vunpack.c.l.b16 %v6816
    %v8159 = vunpack.c.h.b16 %v6816
    %v8160 = vunpack.c.l.b16 %v6817
    %v8161 = vunpack.c.h.b16 %v6817
    %v8162 = vunpack.c.l.b16 %v6818
    %v8163 = vunpack.c.l.b16 %v6819
    %v8164 = vunpack.c.h.b16 %v6819
    %v8165 = vunpack.c.l.b16 %v6820
    %v8166 = vunpack.c.h.b16 %v6820
    %v8167 = vunpack.c.l.b16 %v6821
    %v8168 = vunpack.c.h.b16 %v6821
    %v8169 = vunpack.c.l.b16 %v6822
    %v8170 = vunpack.c.l.b16 %v6823
    %v8171 = vunpack.c.h.b16 %v6823
    %v8172 = vunpack.c.l.b16 %v6824
    %v8173 = vunpack.c.h.b16 %v6824
    %v8174 = vunpack.c.l.b16 %v6825
    %v8175 = vunpack.c.h.b16 %v6825
    %v8176 = vunpack.c.l.b16 %v6826
    %v8177 = vunpack.c.l.b16 %v6827
    %v8178 = vunpack.c.h.b16 %v6827
    %v8179 = vunpack.c.l.b16 %v6828
    %v8180 = vunpack.c.h.b16 %v6828
    %v8181 = vunpack.c.l.b16 %v6829
    %v8182 = vunpack.c.h.b16 %v6829
    %v8183 = vunpack.c.l.b16 %v6830
    %v8184 = vunpack.c.l.b16 %v6831
    %v8185 = vunpack.c.h.b16 %v6831
    %v8186 = vunpack.c.l.b16 %v6832
    %v8187 = vunpack.c.h.b16 %v6832
    %v8188 = vunpack.c.l.b16 %v6833
    %v8189 = vunpack.c.h.b16 %v6833
    %v8190 = vunpack.c.l.b16 %v6834
    %v8191 = vunpack.c.l.b16 %v6835
    %v8192 = vunpack.c.h.b16 %v6835
    %v8193 = vunpack.c.l.b16 %v6836
    %v8194 = vunpack.c.h.b16 %v6836
    %v8195 = vunpack.c.l.b16 %v6837
    %v8196 = vunpack.c.h.b16 %v6837
    %v8197 = vunpack.c.l.b16 %v6838
    %v8198 = vunpack.c.l.b16 %v6839
    %v8199 = vunpack.c.h.b16 %v6839
    %v8200 = vunpack.c.l.b16 %v6840
    %v8201 = vunpack.c.h.b16 %v6840
    %v8202 = vunpack.c.l.b16 %v6841
    %v8203 = vunpack.c.h.b16 %v6841
    %v8204 = vunpack.c.l.b16 %v6842
    %v8205 = vunpack.c.l.b16 %v6843
    %v8206 = vunpack.c.h.b16 %v6843
    %v8207 = vunpack.c.l.b16 %v6844
    %v8208 = vunpack.c.h.b16 %v6844
    %v8209 = vunpack.c.l.b16 %v6845
    %v8210 = vunpack.c.h.b16 %v6845
    %v8211 = vunpack.c.l.b16 %v6846
    %v8212 = vunpack.c.l.b16 %v6847
    %v8213 = vunpack.c.h.b16 %v6847
    %v8214 = vunpack.c.l.b16 %v6848
    %v8215 = vunpack.c.h.b16 %v6848
    %v8216 = vunpack.c.l.b16 %v6849
    %v8217 = vunpack.c.h.b16 %v6849
    %v8218 = vunpack.c.l.b16 %v6850
    %v8219 = vunpack.c.l.b16 %v6851
    %v8220 = vunpack.c.h.b16 %v6851
    %v8221 = vunpack.c.l.b16 %v6852
    %v8222 = vunpack.c.h.b16 %v6852
    %v8223 = vunpack.c.l.b16 %v6853
    %v8224 = vunpack.c.h.b16 %v6853
    %v8225 = vunpack.c.l.b16 %v6854
    %v8226 = vunpack.c.l.b16 %v6855
    %v8227 = vunpack.c.h.b16 %v6855
    %v8228 = vunpack.c.l.b16 %v6856
    %v8229 = vunpack.c.h.b16 %v6856
    %v8230 = vunpack.c.l.b16 %v6857
    %v8231 = vunpack.c.h.b16 %v6857
    %v8232 = vunpack.c.l.b16 %v6858
    %v8233 = vunpack.c.l.b16 %v6859
    %v8234 = vunpack.c.h.b16 %v6859
    %v8235 = vunpack.c.l.b16 %v6860
    %v8236 = vunpack.c.h.b16 %v6860
    %v8237 = vunpack.c.l.b16 %v6861
    %v8238 = vunpack.c.h.b16 %v6861
    %v8239 = vunpack.c.l.b16 %v6862
    %v8240 = vunpack.c.l.b16 %v6863
    %v8241 = vunpack.c.h.b16 %v6863
    %v8242 = vunpack.c.l.b16 %v6864
    %v8243 = vunpack.c.h.b16 %v6864
    %v8244 = vunpack.c.l.b16 %v6865
    %v8245 = vunpack.c.h.b16 %v6865
    %v8246 = vunpack.c.l.b16 %v6866
    %v8247 = vunpack.c.l.b16 %v6867
    %v8248 = vunpack.c.h.b16 %v6867
    %v8249 = vunpack.c.l.b16 %v6868
    %v8250 = vunpack.c.h.b16 %v6868
    %v8251 = vunpack.c.l.b16 %v6869
    %v8252 = vunpack.c.h.b16 %v6869
    %v8253 = vunpack.c.l.b16 %v6870
    %v8254 = vunpack.c.l.b16 %v6871
    %v8255 = vunpack.c.h.b16 %v6871
    %v8256 = vunpack.c.l.b16 %v6872
    %v8257 = vunpack.c.h.b16 %v6872
    %v8258 = vunpack.c.l.b16 %v6873
    %v8259 = vunpack.c.h.b16 %v6873
    %v8260 = vunpack.c.l.b16 %v6874
    %v8261 = vunpack.c.l.b16 %v6875
    %v8262 = vunpack.c.h.b16 %v6875
    %v8263 = vunpack.c.l.b16 %v6876
    %v8264 = vunpack.c.h.b16 %v6876
    %v8265 = vunpack.c.l.b16 %v6877
    %v8266 = vunpack.c.h.b16 %v6877
    %v8267 = vunpack.c.l.b16 %v6878
    %v8268 = vunpack.c.l.b16 %v6879
    %v8269 = vunpack.c.h.b16 %v6879
    %v8270 = vunpack.c.l.b16 %v6880
    %v8271 = vunpack.c.h.b16 %v6880
    %v8272 = vunpack.c.l.b16 %v6881
    %v8273 = vunpack.c.h.b16 %v6881
    %v8274 = vunpack.c.l.b16 %v6882
    %v8275 = vunpack.c.l.b16 %v6883
    %v8276 = vunpack.c.h.b16 %v6883
    %v8277 = vunpack.c.l.b16 %v6884
    %v8278 = vunpack.c.h.b16 %v6884
    %v8279 = vunpack.c.l.b16 %v6885
    %v8280 = vunpack.c.h.b16 %v6885
    %v8281 = vunpack.c.l.b16 %v6886
    %v8282 = vunpack.c.l.b16 %v6887
    %v8283 = vunpack.c.h.b16 %v6887
    %v8284 = vunpack.c.l.b16 %v6888
    %v8285 = vunpack.c.h.b16 %v6888
    %v8286 = vunpack.c.l.b16 %v6889
    %v8287 = vunpack.c.h.b16 %v6889
    %v8288 = vunpack.c.l.b16 %v6890
    %v8289 = vunpack.c.l.b16 %v6891
    %v8290 = vunpack.c.h.b16 %v6891
    %v8291 = vunpack.c.l.b16 %v6892
    %v8292 = vunpack.c.h.b16 %v6892
    %v8293 = vunpack.c.l.b16 %v6893
    %v8294 = vunpack.c.h.b16 %v6893
    %v8295 = vunpack.c.l.b16 %v6894
    %v8296 = vunpack.c.l.b16 %v6895
    %v8297 = vunpack.c.h.b16 %v6895
    %v8298 = vunpack.c.l.b16 %v6896
    %v8299 = vunpack.c.h.b16 %v6896
    %v8300 = vunpack.c.l.b16 %v6897
    %v8301 = vunpack.c.h.b16 %v6897
    %v8302 = vunpack.c.l.b16 %v6898
    %v8303 = vunpack.c.l.b16 %v6899
    %v8304 = vunpack.c.h.b16 %v6899
    %v8305 = vunpack.c.l.b16 %v6900
    %v8306 = vunpack.c.h.b16 %v6900
    %v8307 = vunpack.c.l.b16 %v6901
    %v8308 = vunpack.c.h.b16 %v6901
    %v8309 = vunpack.c.l.b16 %v6902
    %v8310 = vunpack.c.l.b16 %v6903
    %v8311 = vunpack.c.h.b16 %v6903
    %v8312 = vunpack.c.l.b16 %v6904
    %v8313 = vunpack.c.h.b16 %v6904
    %v8314 = vunpack.c.l.b16 %v6905
    %v8315 = vunpack.c.h.b16 %v6905
    %v8316 = vunpack.c.l.b16 %v6906
    %v8317 = vunpack.c.l.b16 %v6907
    %v8318 = vunpack.c.h.b16 %v6907
    %v8319 = vunpack.c.l.b16 %v6908
    %v8320 = vunpack.c.h.b16 %v6908
    %v8321 = vunpack.c.l.b16 %v6909
    %v8322 = vunpack.c.h.b16 %v6909
    %v8323 = vunpack.c.l.b16 %v6910
    %v8324 = vunpack.c.l.b16 %v6911
    %v8325 = vunpack.c.h.b16 %v6911
    %v8326 = vunpack.c.l.b16 %v6912
    %v8327 = vunpack.c.h.b16 %v6912
    %v8328 = vunpack.c.l.b16 %v6913
    %v8329 = vunpack.c.h.b16 %v6913
    %v8330 = vunpack.c.l.b16 %v6914
    %v8331 = vunpack.c.l.b16 %v6915
    %v8332 = vunpack.c.h.b16 %v6915
    %v8333 = vunpack.c.l.b16 %v6916
    %v8334 = vunpack.c.h.b16 %v6916
    %v8335 = vunpack.c.l.b16 %v6917
    %v8336 = vunpack.c.h.b16 %v6917
    %v8337 = vunpack.c.l.b16 %v6918
    %v8338 = vunpack.c.l.b16 %v6919
    %v8339 = vunpack.c.h.b16 %v6919
    %v8340 = vunpack.c.l.b16 %v6920
    %v8341 = vunpack.c.h.b16 %v6920
    %v8342 = vunpack.c.l.b16 %v6921
    %v8343 = vunpack.c.h.b16 %v6921
    %v8344 = vunpack.c.l.b16 %v6922
    %v8345 = vunpack.c.l.b16 %v6923
    %v8346 = vunpack.c.h.b16 %v6923
    %v8347 = vunpack.c.l.b16 %v6924
    %v8348 = vunpack.c.h.b16 %v6924
    %v8349 = vunpack.c.l.b16 %v6925
    %v8350 = vunpack.c.h.b16 %v6925
    %v8351 = vunpack.c.l.b16 %v6926
    %v8352 = vunpack.c.l.b16 %v6927
    %v8353 = vunpack.c.h.b16 %v6927
    %v8354 = vunpack.c.l.b16 %v6928
    %v8355 = vunpack.c.h.b16 %v6928
    %v8356 = vunpack.c.l.b16 %v6929
    %v8357 = vunpack.c.h.b16 %v6929
    %v8358 = vunpack.c.l.b16 %v6930
    %v8359 = vunpack.c.l.b16 %v6931
    %v8360 = vunpack.c.h.b16 %v6931
    %v8361 = vunpack.c.l.b16 %v6932
    %v8362 = vunpack.c.h.b16 %v6932
    %v8363 = vunpack.c.l.b16 %v6933
    %v8364 = vunpack.c.h.b16 %v6933
    %v8365 = vunpack.c.l.b16 %v6934
    %v8366 = vunpack.c.l.b16 %v6935
    %v8367 = vunpack.c.h.b16 %v6935
    %v8368 = vunpack.c.l.b16 %v6936
    %v8369 = vunpack.c.h.b16 %v6936
    %v8370 = vunpack.c.l.b16 %v6937
    %v8371 = vunpack.c.h.b16 %v6937
    %v8372 = vunpack.c.l.b16 %v6938
    %v8373 = vunpack.c.l.b16 %v6939
    %v8374 = vunpack.c.h.b16 %v6939
    %v8375 = vunpack.c.l.b16 %v6940
    %v8376 = vunpack.c.h.b16 %v6940
    %v8377 = vunpack.c.l.b16 %v6941
    %v8378 = vunpack.c.h.b16 %v6941
    %v8379 = vunpack.c.l.b16 %v6942
    %v8380 = vunpack.c.l.b16 %v6943
    %v8381 = vunpack.c.h.b16 %v6943
    %v8382 = vunpack.c.l.b16 %v6944
    %v8383 = vunpack.c.h.b16 %v6944
    %v8384 = vunpack.c.l.b16 %v6945
    %v8385 = vunpack.c.h.b16 %v6945
    %v8386 = vunpack.c.l.b16 %v6946
    %v8387 = vunpack.c.l.b16 %v6947
    %v8388 = vunpack.c.h.b16 %v6947
    %v8389 = vunpack.c.l.b16 %v6948
    %v8390 = vunpack.c.h.b16 %v6948
    %v8391 = vunpack.c.l.b16 %v6949
    %v8392 = vunpack.c.h.b16 %v6949
    %v8393 = vunpack.c.l.b16 %v6950
    %v8394 = vunpack.c.l.b16 %v6951
    %v8395 = vunpack.c.h.b16 %v6951
    %v8396 = vunpack.c.l.b16 %v6952
    %v8397 = vunpack.c.h.b16 %v6952
    %v8398 = vunpack.c.l.b16 %v6953
    %v8399 = vunpack.c.h.b16 %v6953
    %v8400 = vunpack.c.l.b16 %v6954
    %v8401 = vunpack.c.l.b16 %v6955
    %v8402 = vunpack.c.h.b16 %v6955
    %v8403 = vunpack.c.l.b16 %v6956
    %v8404 = vunpack.c.h.b16 %v6956
    %v8405 = vunpack.c.l.b16 %v6957
    %v8406 = vunpack.c.h.b16 %v6957
    %v8407 = vunpack.c.l.b16 %v6958
    %v8408 = vunpack.c.l.b16 %v6959
    %v8409 = vunpack.c.h.b16 %v6959
    %v8410 = vunpack.c.l.b16 %v6960
    %v8411 = vunpack.c.h.b16 %v6960
    %v8412 = vunpack.c.l.b16 %v6961
    %v8413 = vunpack.c.h.b16 %v6961
    %v8414 = vunpack.c.l.b16 %v6962
    %v8415 = vunpack.c.l.b16 %v6963
    %v8416 = vunpack.c.h.b16 %v6963
    %v8417 = vunpack.c.l.b16 %v6964
    %v8418 = vunpack.c.h.b16 %v6964
    %v8419 = vunpack.c.l.b16 %v6965
    %v8420 = vunpack.c.h.b16 %v6965
    %v8421 = vunpack.c.l.b16 %v6966
    %v8422 = vunpack.c.l.b16 %v6967
    %v8423 = vunpack.c.h.b16 %v6967
    %v8424 = vunpack.c.l.b16 %v6968
    %v8425 = vunpack.c.h.b16 %v6968
    %v8426 = vunpack.c.l.b16 %v6969
    %v8427 = vunpack.c.h.b16 %v6969
    %v8428 = vunpack.c.l.b16 %v6970
    %v8429 = vunpack.c.l.b16 %v6971
    %v8430 = vunpack.c.h.b16 %v6971
    %v8431 = vunpack.c.l.b16 %v6972
    %v8432 = vunpack.c.h.b16 %v6972
    %v8433 = vunpack.c.l.b16 %v6973
    %v8434 = vunpack.c.h.b16 %v6973
    %v8435 = vunpack.c.l.b16 %v6974
    %v8436 = vunpack.c.l.b16 %v6975
    %v8437 = vunpack.c.h.b16 %v6975
    %v8438 = vunpack.c.l.b16 %v6976
    %v8439 = vunpack.c.h.b16 %v6976
    %v8440 = vunpack.c.l.b16 %v6977
    %v8441 = vunpack.c.h.b16 %v6977
    %v8442 = vunpack.c.l.b16 %v6978
    %v8443 = vunpack.c.l.b16 %v6979
    %v8444 = vunpack.c.h.b16 %v6979
    %v8445 = vunpack.c.l.b16 %v6980
    %v8446 = vunpack.c.h.b16 %v6980
    %v8447 = vunpack.c.l.b16 %v6981
    %v8448 = vunpack.c.h.b16 %v6981
    %v8449 = vunpack.c.l.b16 %v6982
    %v8450 = vunpack.c.l.b16 %v6983
    %v8451 = vunpack.c.h.b16 %v6983
    %v8452 = vunpack.c.l.b16 %v6984
    %v8453 = vunpack.c.h.b16 %v6984
    %v8454 = vunpack.c.l.b16 %v6985
    %v8455 = vunpack.c.h.b16 %v6985
    %v8456 = vunpack.c.l.b16 %v6986
    %v8457 = vunpack.c.l.b16 %v6987
    %v8458 = vunpack.c.h.b16 %v6987
    %v8459 = vunpack.c.l.b16 %v6988
    %v8460 = vunpack.c.h.b16 %v6988
    %v8461 = vunpack.c.l.b16 %v6989
    %v8462 = vunpack.c.h.b16 %v6989
    %v8463 = vunpack.c.l.b16 %v6990
    %v8464 = vunpack.c.l.b16 %v6991
    %v8465 = vunpack.c.h.b16 %v6991
    %v8466 = vunpack.c.l.b16 %v6992
    %v8467 = vunpack.c.h.b16 %v6992
    %v8468 = vunpack.c.l.b16 %v6993
    %v8469 = vunpack.c.h.b16 %v6993
    %v8470 = vunpack.c.l.b16 %v6994
    %v8471 = vunpack.c.l.b16 %v6995
    %v8472 = vunpack.c.h.b16 %v6995
    %v8473 = vunpack.c.l.b16 %v6996
    %v8474 = vunpack.c.h.b16 %v6996
    %v8475 = vunpack.c.l.b16 %v6997
    %v8476 = vunpack.c.h.b16 %v6997
    %v8477 = vunpack.c.l.b16 %v6998
    %v8478 = vunpack.c.l.b16 %v6999
    %v8479 = vunpack.c.h.b16 %v6999
    %v8480 = vunpack.c.l.b16 %v7000
    %v8481 = vunpack.c.h.b16 %v7000
    %v8482 = vunpack.c.l.b16 %v7001
    %v8483 = vunpack.c.h.b16 %v7001
    %v8484 = vunpack.c.l.b16 %v7002
    %v8485 = vunpack.c.l.b16 %v7003
    %v8486 = vunpack.c.h.b16 %v7003
    %v8487 = vunpack.c.l.b16 %v7004
    %v8488 = vunpack.c.h.b16 %v7004
    %v8489 = vunpack.c.l.b16 %v7005
    %v8490 = vunpack.c.h.b16 %v7005
    %v8491 = vunpack.c.l.b16 %v7006
    %v8492 = vunpack.c.l.b16 %v7007
    %v8493 = vunpack.c.h.b16 %v7007
    %v8494 = vunpack.c.l.b16 %v7008
    %v8495 = vunpack.c.h.b16 %v7008
    %v8496 = vunpack.c.l.b16 %v7009
    %v8497 = vunpack.c.h.b16 %v7009
    %v8498 = vunpack.c.l.b16 %v7010
    %v8499 = vunpack.c.l.b16 %v7011
    %v8500 = vunpack.c.h.b16 %v7011
    %v8501 = vunpack.c.l.b16 %v7012
    %v8502 = vunpack.c.h.b16 %v7012
    %v8503 = vunpack.c.l.b16 %v7013
    %v8504 = vunpack.c.h.b16 %v7013
    %v8505 = vunpack.c.l.b16 %v7014
    %v8506 = vunpack.c.l.b16 %v7015
    %v8507 = vunpack.c.h.b16 %v7015
    %v8508 = vunpack.c.l.b16 %v7016
    %v8509 = vunpack.c.h.b16 %v7016
    %v8510 = vunpack.c.l.b16 %v7017
    %v8511 = vunpack.c.h.b16 %v7017
    %v8512 = vunpack.c.l.b16 %v7018
    %v8513 = vunpack.c.l.b16 %v7019
    %v8514 = vunpack.c.h.b16 %v7019
    %v8515 = vunpack.c.l.b16 %v7020
    %v8516 = vunpack.c.h.b16 %v7020
    %v8517 = vunpack.c.l.b16 %v7021
    %v8518 = vunpack.c.h.b16 %v7021
    %v8519 = vunpack.c.l.b16 %v7022
    %v8520 = vunpack.c.l.b16 %v7023
    %v8521 = vunpack.c.h.b16 %v7023
    %v8522 = vunpack.c.l.b16 %v7024
    %v8523 = vunpack.c.h.b16 %v7024
    %v8524 = vunpack.c.l.b16 %v7025
    %v8525 = vunpack.c.h.b16 %v7025
    %v8526 = vunpack.c.l.b16 %v7026
    %v8527 = vunpack.c.l.b16 %v7027
    %v8528 = vunpack.c.h.b16 %v7027
    %v8529 = vunpack.c.l.b16 %v7028
    %v8530 = vunpack.c.h.b16 %v7028
    %v8531 = vunpack.c.l.b16 %v7029
    %v8532 = vunpack.c.h.b16 %v7029
    %v8533 = vunpack.c.l.b16 %v7030
    %v8534 = vunpack.c.l.b16 %v7031
    %v8535 = vunpack.c.h.b16 %v7031
    %v8536 = vunpack.c.l.b16 %v7032
    %v8537 = vunpack.c.h.b16 %v7032
    %v8538 = vunpack.c.l.b16 %v7033
    %v8539 = vunpack.c.h.b16 %v7033
    %v8540 = vunpack.c.l.b16 %v7034
    %v8541 = vunpack.c.l.b16 %v7035
    %v8542 = vunpack.c.h.b16 %v7035
    %v8543 = vunpack.c.l.b16 %v7036
    %v8544 = vunpack.c.h.b16 %v7036
    %v8545 = vunpack.c.l.b16 %v7037
    %v8546 = vunpack.c.h.b16 %v7037
    %v8547 = vunpack.c.l.b16 %v7038
    %v8548 = vunpack.c.l.b16 %v7039
    %v8549 = vunpack.c.h.b16 %v7039
    %v8550 = vunpack.c.l.b16 %v7040
    %v8551 = vunpack.c.h.b16 %v7040
    %v8552 = vunpack.c.l.b16 %v7041
    %v8553 = vunpack.c.h.b16 %v7041
    %v8554 = vunpack.c.l.b16 %v7042
    %v8555 = vunpack.c.l.b16 %v7043
    %v8556 = vunpack.c.h.b16 %v7043
    %v8557 = vunpack.c.l.b16 %v7044
    %v8558 = vunpack.c.h.b16 %v7044
    %v8559 = vunpack.c.l.b16 %v7045
    %v8560 = vunpack.c.h.b16 %v7045
    %v8561 = vunpack.c.l.b16 %v7046
    %v8562 = vunpack.c.l.b16 %v7047
    %v8563 = vunpack.c.h.b16 %v7047
    %v8564 = vunpack.c.l.b16 %v7048
    %v8565 = vunpack.c.h.b16 %v7048
    %v8566 = vunpack.c.l.b16 %v7049
    %v8567 = vunpack.c.h.b16 %v7049
    %v8568 = vunpack.c.l.b16 %v7050
    %v8569 = vunpack.c.l.b16 %v7051
    %v8570 = vunpack.c.h.b16 %v7051
    %v8571 = vunpack.c.l.b16 %v7052
    %v8572 = vunpack.c.h.b16 %v7052
    %v8573 = vunpack.c.l.b16 %v7053
    %v8574 = vunpack.c.h.b16 %v7053
    %v8575 = vunpack.c.l.b16 %v7054
    %v8576 = vunpack.c.l.b16 %v7055
    %v8577 = vunpack.c.h.b16 %v7055
    %v8578 = vunpack.c.l.b16 %v7056
    %v8579 = vunpack.c.h.b16 %v7056
    %v8580 = vunpack.c.l.b16 %v7057
    %v8581 = vunpack.c.h.b16 %v7057
    %v8582 = vunpack.c.l.b16 %v7058
    %v8583 = vunpack.c.l.b16 %v7059
    %v8584 = vunpack.c.h.b16 %v7059
    %v8585 = vunpack.c.l.b16 %v7060
    %v8586 = vunpack.c.h.b16 %v7060
    %v8587 = vunpack.c.l.b16 %v7061
    %v8588 = vunpack.c.h.b16 %v7061
    %v8589 = vunpack.c.l.b16 %v7062
    %v8590 = vunpack.c.l.b16 %v7063
    %v8591 = vunpack.c.h.b16 %v7063
    %v8592 = vunpack.c.l.b16 %v7064
    %v8593 = vunpack.c.h.b16 %v7064
    %v8594 = vunpack.c.l.b16 %v7065
    %v8595 = vunpack.c.h.b16 %v7065
    %v8596 = vunpack.c.l.b16 %v7066
    %v8597 = vunpack.c.l.b16 %v7067
    %v8598 = vunpack.c.h.b16 %v7067
    %v8599 = vunpack.c.l.b16 %v7068
    %v8600 = vunpack.c.h.b16 %v7068
    %v8601 = vunpack.c.l.b16 %v7069
    %v8602 = vunpack.c.h.b16 %v7069
    %v8603 = vunpack.c.l.b16 %v7070
    %v8604 = vunpack.c.l.b16 %v7071
    %v8605 = vunpack.c.h.b16 %v7071
    %v8606 = vunpack.c.l.b16 %v7072
    %v8607 = vunpack.c.h.b16 %v7072
    %v8608 = vunpack.c.l.b16 %v7073
    %v8609 = vunpack.c.h.b16 %v7073
    %v8610 = vunpack.c.l.b16 %v7074
    %v8611 = vunpack.c.l.b16 %v7075
    %v8612 = vunpack.c.h.b16 %v7075
    %v8613 = vunpack.c.l.b16 %v7076
    %v8614 = vunpack.c.h.b16 %v7076
    %v8615 = vunpack.c.l.b16 %v7077
    %v8616 = vunpack.c.h.b16 %v7077
    %v8617 = vunpack.c.l.b16 %v7078
    %v8618 = vunpack.c.l.b16 %v7079
    %v8619 = vunpack.c.h.b16 %v7079
    %v8620 = vunpack.c.l.b16 %v7080
    %v8621 = vunpack.c.h.b16 %v7080
    %v8622 = vunpack.c.l.b16 %v7081
    %v8623 = vunpack.c.h.b16 %v7081
    %v8624 = vunpack.c.l.b16 %v7082
    %v8625 = vunpack.c.l.b16 %v7083
    %v8626 = vunpack.c.h.b16 %v7083
    %v8627 = vunpack.c.l.b16 %v7084
    %v8628 = vunpack.c.h.b16 %v7084
    %v8629 = vunpack.c.l.b16 %v7085
    %v8630 = vunpack.c.h.b16 %v7085
    %v8631 = vunpack.c.l.b16 %v7086
    %v8632 = vunpack.c.l.b16 %v7087
    %v8633 = vunpack.c.h.b16 %v7087
    %v8634 = vunpack.c.l.b16 %v7088
    %v8635 = vunpack.c.h.b16 %v7088
    %v8636 = vunpack.c.l.b16 %v7089
    %v8637 = vunpack.c.h.b16 %v7089
    %v8638 = vunpack.c.l.b16 %v7090
    %v8639 = vunpack.c.l.b16 %v7091
    %v8640 = vunpack.c.h.b16 %v7091
    %v8641 = vunpack.c.l.b16 %v7092
    %v8642 = vunpack.c.h.b16 %v7092
    %v8643 = vunpack.c.l.b16 %v7093
    %v8644 = vunpack.c.h.b16 %v7093
    %v8645 = vunpack.c.l.b16 %v7094
    %v8646 = vunpack.c.l.b16 %v7095
    %v8647 = vunpack.c.h.b16 %v7095
    %v8648 = vunpack.c.l.b16 %v7096
    %v8649 = vunpack.c.h.b16 %v7096
    %v8650 = vunpack.c.l.b16 %v7097
    %v8651 = vunpack.c.h.b16 %v7097
    %v8652 = vunpack.c.l.b16 %v7098
    %v8653 = vunpack.c.l.b16 %v7099
    %v8654 = vunpack.c.h.b16 %v7099
    %v8655 = vunpack.c.l.b16 %v7100
    %v8656 = vunpack.c.h.b16 %v7100
    %v8657 = vunpack.c.l.b16 %v7101
    %v8658 = vunpack.c.h.b16 %v7101
    %v8659 = vunpack.c.l.b16 %v7102
    %v8660 = vunpack.c.l.b16 %v7103
    %v8661 = vunpack.c.h.b16 %v7103
    %v8662 = vunpack.c.l.b16 %v7104
    %v8663 = vunpack.c.h.b16 %v7104
    %v8664 = vunpack.c.l.b16 %v7105
    %v8665 = vunpack.c.h.b16 %v7105
    %v8666 = vunpack.c.l.b16 %v7106
    %v8667 = vunpack.c.l.b16 %v7107
    %v8668 = vunpack.c.h.b16 %v7107
    %v8669 = vunpack.c.l.b16 %v7108
    %v8670 = vunpack.c.h.b16 %v7108
    %v8671 = vunpack.c.l.b16 %v7109
    %v8672 = vunpack.c.h.b16 %v7109
    %v8673 = vunpack.c.l.b16 %v7110
    %v8674 = vunpack.c.l.b16 %v7111
    %v8675 = vunpack.c.h.b16 %v7111
    %v8676 = vunpack.c.l.b16 %v7112
    %v8677 = vunpack.c.h.b16 %v7112
    %v8678 = vunpack.c.l.b16 %v7113
    %v8679 = vunpack.c.h.b16 %v7113
    %v8680 = vunpack.c.l.b16 %v7114
    %v8681 = vunpack.c.l.b16 %v7115
    %v8682 = vunpack.c.h.b16 %v7115
    %v8683 = vunpack.c.l.b16 %v7116
    %v8684 = vunpack.c.h.b16 %v7116
    %v8685 = vunpack.c.l.b16 %v7117
    %v8686 = vunpack.c.h.b16 %v7117
    %v8687 = vunpack.c.l.b16 %v7118
    %v8688 = vunpack.c.l.b16 %v7119
    %v8689 = vunpack.c.h.b16 %v7119
    %v8690 = vunpack.c.l.b16 %v7120
    %v8691 = vunpack.c.h.b16 %v7120
    %v8692 = vunpack.c.l.b16 %v7121
    %v8693 = vunpack.c.h.b16 %v7121
    %v8694 = vunpack.c.l.b16 %v7122
    %v8695 = vunpack.c.l.b16 %v7123
    %v8696 = vunpack.c.h.b16 %v7123
    %v8697 = vunpack.c.l.b16 %v7124
    %v8698 = vunpack.c.h.b16 %v7124
    %v8699 = vunpack.c.l.b16 %v7125
    %v8700 = vunpack.c.h.b16 %v7125
    %v8701 = vunpack.c.l.b16 %v7126
    %v8702 = vunpack.c.l.b16 %v7127
    %v8703 = vunpack.c.h.b16 %v7127
    %v8704 = vunpack.c.l.b16 %v7128
    %v8705 = vunpack.c.h.b16 %v7128
    %v8706 = vunpack.c.l.b16 %v7129
    %v8707 = vunpack.c.h.b16 %v7129
    %v8708 = vunpack.c.l.b16 %v7130
    %v8709 = vunpack.c.l.b16 %v7131
    %v8710 = vunpack.c.h.b16 %v7131
    %v8711 = vunpack.c.l.b16 %v7132
    %v8712 = vunpack.c.h.b16 %v7132
    %v8713 = vunpack.c.l.b16 %v7133
    %v8714 = vunpack.c.h.b16 %v7133
    %v8715 = vunpack.c.l.b16 %v7134
    %v8716 = vunpack.c.l.b16 %v7135
    %v8717 = vunpack.c.h.b16 %v7135
    %v8718 = vunpack.c.l.b16 %v7136
    %v8719 = vunpack.c.h.b16 %v7136
    %v8720 = vunpack.c.l.b16 %v7137
    %v8721 = vunpack.c.h.b16 %v7137
    %v8722 = vunpack.c.l.b16 %v7138
    %v8723 = vunpack.c.l.b16 %v7139
    %v8724 = vunpack.c.h.b16 %v7139
    %v8725 = vunpack.c.l.b16 %v7140
    %v8726 = vunpack.c.h.b16 %v7140
    %v8727 = vunpack.c.l.b16 %v7141
    %v8728 = vunpack.c.h.b16 %v7141
    %v8729 = vunpack.c.l.b16 %v7142
    %v8730 = vunpack.c.l.b16 %v7143
    %v8731 = vunpack.c.h.b16 %v7143
    %v8732 = vunpack.c.l.b16 %v7144
    %v8733 = vunpack.c.h.b16 %v7144
    %v8734 = vunpack.c.l.b16 %v7145
    %v8735 = vunpack.c.h.b16 %v7145
    %v8736 = vunpack.c.l.b16 %v7146
    %v8737 = vunpack.c.l.b16 %v7147
    %v8738 = vunpack.c.h.b16 %v7147
    %v8739 = vunpack.c.l.b16 %v7148
    %v8740 = vunpack.c.h.b16 %v7148
    %v8741 = vunpack.c.l.b16 %v7149
    %v8742 = vunpack.c.h.b16 %v7149
    %v8743 = vunpack.c.l.b16 %v7150
    %v8744 = vunpack.c.l.b16 %v7151
    %v8745 = vunpack.c.h.b16 %v7151
    %v8746 = vunpack.c.l.b16 %v7152
    %v8747 = vunpack.c.h.b16 %v7152
    %v8748 = vunpack.c.l.b16 %v7153
    %v8749 = vunpack.c.h.b16 %v7153
    %v8750 = vunpack.c.l.b16 %v7154
    %v8751 = vunpack.c.l.b16 %v7155
    %v8752 = vunpack.c.h.b16 %v7155
    %v8753 = vunpack.c.l.b16 %v7156
    %v8754 = vunpack.c.h.b16 %v7156
    %v8755 = vunpack.c.l.b16 %v7157
    %v8756 = vunpack.c.h.b16 %v7157
    %v8757 = vunpack.c.l.b16 %v7158
    %v8758 = vunpack.c.l.b16 %v7159
    %v8759 = vunpack.c.h.b16 %v7159
    %v8760 = vunpack.c.l.b16 %v7160
    %v8761 = vunpack.c.h.b16 %v7160
    %v8762 = vunpack.c.l.b16 %v7161
    %v8763 = vunpack.c.h.b16 %v7161
    %v8764 = vunpack.c.l.b16 %v7162
    %v8765 = vunpack.c.l.b16 %v7163
    %v8766 = vunpack.c.h.b16 %v7163
    %v8767 = vunpack.c.l.b16 %v7164
    %v8768 = vunpack.c.h.b16 %v7164
    %v8769 = vunpack.c.l.b16 %v7165
    %v8770 = vunpack.c.h.b16 %v7165
    %v8771 = vunpack.c.l.b16 %v7166
    %v8772 = vunpack.c.l.b16 %v7167
    %v8773 = vunpack.c.h.b16 %v7167
    %v8774 = vunpack.c.l.b16 %v7168
    %v8775 = vunpack.c.h.b16 %v7168
    %v8776 = vunpack.c.l.b16 %v7169
    %v8777 = vunpack.c.h.b16 %v7169
    %v8778 = vunpack.c.l.b16 %v7170
    %v8779 = vunpack.c.l.b16 %v7171
    %v8780 = vunpack.c.h.b16 %v7171
    %v8781 = vunpack.c.l.b16 %v7172
    %v8782 = vunpack.c.h.b16 %v7172
    %v8783 = vunpack.c.l.b16 %v7173
    %v8784 = vunpack.c.h.b16 %v7173
    %v8785 = vunpack.c.l.b16 %v7174
    %v8786 = vunpack.c.l.b16 %v7175
    %v8787 = vunpack.c.h.b16 %v7175
    %v8788 = vunpack.c.l.b16 %v7176
    %v8789 = vunpack.c.h.b16 %v7176
    %v8790 = vunpack.c.l.b16 %v7177
    %v8791 = vunpack.c.h.b16 %v7177
    %v8792 = vunpack.c.l.b16 %v7178
    %v8793 = vunpack.c.l.b16 %v7179
    %v8794 = vunpack.c.h.b16 %v7179
    %v8795 = vunpack.c.l.b16 %v7180
    %v8796 = vunpack.c.h.b16 %v7180
    %v8797 = vunpack.c.l.b16 %v7181
    %v8798 = vunpack.c.h.b16 %v7181
    %v8799 = vunpack.c.l.b16 %v7182
    %v8800 = vunpack.c.l.b16 %v7183
    %v8801 = vunpack.c.h.b16 %v7183
    %v8802 = vunpack.c.l.b16 %v7184
    %v8803 = vunpack.c.h.b16 %v7184
    %v8804 = vunpack.c.l.b16 %v7185
    %v8805 = vunpack.c.h.b16 %v7185
    %v8806 = vunpack.c.l.b16 %v7186
    %v8807 = vunpack.c.l.b16 %v7187
    %v8808 = vunpack.c.h.b16 %v7187
    %v8809 = vunpack.c.l.b16 %v7188
    %v8810 = vunpack.c.h.b16 %v7188
    %v8811 = vunpack.c.l.b16 %v7189
    %v8812 = vunpack.c.h.b16 %v7189
    %v8813 = vunpack.c.l.b16 %v7190
    %v8814 = vunpack.c.l.b16 %v7191
    %v8815 = vunpack.c.h.b16 %v7191
    %v8816 = vunpack.c.l.b16 %v7192
    %v8817 = vunpack.c.h.b16 %v7192
    %v8818 = vunpack.c.l.b16 %v7193
    %v8819 = vunpack.c.h.b16 %v7193
    %v8820 = vunpack.c.l.b16 %v7194
    %v8821 = vunpack.c.l.b16 %v7195
    %v8822 = vunpack.c.h.b16 %v7195
    %v8823 = vunpack.c.l.b16 %v7196
    %v8824 = vunpack.c.h.b16 %v7196
    %v8825 = vunpack.c.l.b16 %v7197
    %v8826 = vunpack.c.h.b16 %v7197
    %v8827 = vunpack.c.l.b16 %v7198
    %v8828 = vunpack.c.l.b16 %v7199
    %v8829 = vunpack.c.h.b16 %v7199
    %v8830 = vunpack.c.l.b16 %v7200
    %v8831 = vunpack.c.h.b16 %v7200
    %v8832 = vunpack.c.l.b16 %v7201
    %v8833 = vunpack.c.h.b16 %v7201
    %v8834 = vunpack.c.l.b16 %v7202
    %v8835 = vunpack.c.l.b16 %v7203
    %v8836 = vunpack.c.h.b16 %v7203
    %v8837 = vunpack.c.l.b16 %v7204
    %v8838 = vunpack.c.h.b16 %v7204
    %v8839 = vunpack.c.l.b16 %v7205
    %v8840 = vunpack.c.h.b16 %v7205
    %v8841 = vunpack.c.l.b16 %v7206
    %v8842 = vunpack.c.l.b16 %v7207
    %v8843 = vunpack.c.h.b16 %v7207
    %v8844 = vunpack.c.l.b16 %v7208
    %v8845 = vunpack.c.h.b16 %v7208
    %v8846 = vunpack.c.l.b16 %v7209
    %v8847 = vunpack.c.h.b16 %v7209
    %v8848 = vunpack.c.l.b16 %v7210
    %v8849 = vunpack.c.l.b16 %v7211
    %v8850 = vunpack.c.h.b16 %v7211
    %v8851 = vunpack.c.l.b16 %v7212
    %v8852 = vunpack.c.h.b16 %v7212
    %v8853 = vunpack.c.l.b16 %v7213
    %v8854 = vunpack.c.h.b16 %v7213
    %v8855 = vunpack.c.l.b16 %v7214
    %v8856 = vunpack.c.l.b16 %v7215
    %v8857 = vunpack.c.h.b16 %v7215
    %v8858 = vunpack.c.l.b16 %v7216
    %v8859 = vunpack.c.h.b16 %v7216
    %v8860 = vunpack.c.l.b16 %v7217
    %v8861 = vunpack.c.h.b16 %v7217
    %v8862 = vunpack.c.l.b16 %v7218
    %v8863 = vunpack.c.l.b16 %v7219
    %v8864 = vunpack.c.h.b16 %v7219
    %v8865 = vunpack.c.l.b16 %v7220
    %v8866 = vunpack.c.h.b16 %v7220
    %v8867 = vunpack.c.l.b16 %v7221
    %v8868 = vunpack.c.h.b16 %v7221
    %v8869 = vunpack.c.l.b16 %v7222
    %v8870 = vunpack.c.l.b16 %v7223
    %v8871 = vunpack.c.h.b16 %v7223
    %v8872 = vunpack.c.l.b16 %v7224
    %v8873 = vunpack.c.h.b16 %v7224
    %v8874 = vunpack.c.l.b16 %v7225
    %v8875 = vunpack.c.h.b16 %v7225
    %v8876 = vunpack.c.l.b16 %v7226
    %v8877 = vunpack.c.l.b16 %v7227
    %v8878 = vunpack.c.h.b16 %v7227
    %v8879 = vunpack.c.l.b16 %v7228
    %v8880 = vunpack.c.h.b16 %v7228
    %v8881 = vunpack.c.l.b16 %v7229
    %v8882 = vunpack.c.h.b16 %v7229
    %v8883 = vunpack.c.l.b16 %v7230
    %v8884 = vunpack.c.l.b16 %v7231
    %v8885 = vunpack.c.h.b16 %v7231
    %v8886 = vunpack.c.l.b16 %v7232
    %v8887 = vunpack.c.h.b16 %v7232
    %v8888 = vunpack.c.l.b16 %v7233
    %v8889 = vunpack.c.h.b16 %v7233
    %v8890 = vunpack.c.l.b16 %v7234
    %v8891 = vunpack.c.l.b16 %v7235
    %v8892 = vunpack.c.h.b16 %v7235
    %v8893 = vunpack.c.l.b16 %v7236
    %v8894 = vunpack.c.h.b16 %v7236
    %v8895 = vunpack.c.l.b16 %v7237
    %v8896 = vunpack.c.h.b16 %v7237
    %v8897 = vunpack.c.l.b16 %v7238
    %v8898 = vunpack.c.l.b16 %v7239
    %v8899 = vunpack.c.h.b16 %v7239
    %v8900 = vunpack.c.l.b16 %v7240
    %v8901 = vunpack.c.h.b16 %v7240
    %v8902 = vunpack.c.l.b16 %v7241
    %v8903 = vunpack.c.h.b16 %v7241
    %v8904 = vunpack.c.l.b16 %v7242
    %v8905 = vunpack.c.l.b16 %v7243
    %v8906 = vunpack.c.h.b16 %v7243
    %v8907 = vunpack.c.l.b16 %v7244
    %v8908 = vunpack.c.h.b16 %v7244
    %v8909 = vunpack.c.l.b16 %v7245
    %v8910 = vunpack.c.h.b16 %v7245
    %v8911 = vunpack.c.l.b16 %v7246
    %v8912 = vunpack.c.l.b16 %v7247
    %v8913 = vunpack.c.h.b16 %v7247
    %v8914 = vunpack.c.l.b16 %v7248
    %v8915 = vunpack.c.h.b16 %v7248
    %v8916 = vunpack.c.l.b16 %v7249
    %v8917 = vunpack.c.h.b16 %v7249
    %v8918 = vunpack.c.l.b16 %v7250
    %v8919 = vunpack.c.l.b16 %v7251
    %v8920 = vunpack.c.h.b16 %v7251
    %v8921 = vunpack.c.l.b16 %v7252
    %v8922 = vunpack.c.h.b16 %v7252
    %v8923 = vunpack.c.l.b16 %v7253
    %v8924 = vunpack.c.h.b16 %v7253
    %v8925 = vunpack.c.l.b16 %v7254
    %v8926 = vunpack.c.l.b16 %v7255
    %v8927 = vunpack.c.h.b16 %v7255
    %v8928 = vunpack.c.l.b16 %v7256
    %v8929 = vunpack.c.h.b16 %v7256
    %v8930 = vunpack.c.l.b16 %v7257
    %v8931 = vunpack.c.h.b16 %v7257
    %v8932 = vunpack.c.l.b16 %v7258
    %v8933 = vunpack.c.l.b16 %v7259
    %v8934 = vunpack.c.h.b16 %v7259
    %v8935 = vunpack.c.l.b16 %v7260
    %v8936 = vunpack.c.h.b16 %v7260
    %v8937 = vunpack.c.l.b16 %v7261
    %v8938 = vunpack.c.h.b16 %v7261
    %v8939 = vunpack.c.l.b16 %v7262
    %v8940 = vunpack.c.l.b16 %v7263
    %v8941 = vunpack.c.h.b16 %v7263
    %v8942 = vunpack.c.l.b16 %v7264
    %v8943 = vunpack.c.h.b16 %v7264
    %v8944 = vunpack.c.l.b16 %v7265
    %v8945 = vunpack.c.h.b16 %v7265
    %v8946 = vunpack.c.l.b16 %v7266
    %v8947 = vunpack.c.l.b16 %v7267
    %v8948 = vunpack.c.h.b16 %v7267
    %v8949 = vunpack.c.l.b16 %v7268
    %v8950 = vunpack.c.h.b16 %v7268
    %v8951 = vunpack.c.l.b16 %v7269
    %v8952 = vunpack.c.h.b16 %v7269
    %v8953 = vunpack.c.l.b16 %v7270
    %v8954 = vunpack.c.l.b16 %v7271
    %v8955 = vunpack.c.h.b16 %v7271
    %v8956 = vunpack.c.l.b16 %v7272
    %v8957 = vunpack.c.h.b16 %v7272
    %v8958 = vunpack.c.l.b16 %v7273
    %v8959 = vunpack.c.h.b16 %v7273
    %v8960 = vunpack.c.l.b16 %v7274
    %v8961 = vunpack.c.l.b16 %v7275
    %v8962 = vunpack.c.h.b16 %v7275
    %v8963 = vunpack.c.l.b16 %v7276
    %v8964 = vunpack.c.h.b16 %v7276
    %v8965 = vunpack.c.l.b16 %v7277
    %v8966 = vunpack.c.h.b16 %v7277
    %v8967 = vunpack.c.l.b16 %v7278
    %v8968 = vunpack.c.l.b16 %v7279
    %v8969 = vunpack.c.h.b16 %v7279
    %v8970 = vunpack.c.l.b16 %v7280
    %v8971 = vunpack.c.h.b16 %v7280
    %v8972 = vunpack.c.l.b16 %v7281
    %v8973 = vunpack.c.h.b16 %v7281
    %v8974 = vunpack.c.l.b16 %v7282
    %v8975 = vunpack.c.l.b16 %v7283
    %v8976 = vunpack.c.h.b16 %v7283
    %v8977 = vunpack.c.l.b16 %v7284
    %v8978 = vunpack.c.h.b16 %v7284
    %v8979 = vunpack.c.l.b16 %v7285
    %v8980 = vunpack.c.h.b16 %v7285
    %v8981 = vunpack.c.l.b16 %v7286
    %v8982 = vunpack.c.l.b16 %v7287
    %v8983 = vunpack.c.h.b16 %v7287
    %v8984 = vunpack.c.l.b16 %v7288
    %v8985 = vunpack.c.h.b16 %v7288
    %v8986 = vunpack.c.l.b16 %v7289
    %v8987 = vunpack.c.h.b16 %v7289
    %v8988 = vunpack.c.l.b16 %v7290
    %v8989 = vunpack.c.l.b16 %v7291
    %v8990 = vunpack.c.h.b16 %v7291
    %v8991 = vunpack.c.l.b16 %v7292
    %v8992 = vunpack.c.h.b16 %v7292
    %v8993 = vunpack.c.l.b16 %v7293
    %v8994 = vunpack.c.h.b16 %v7293
    %v8995 = vunpack.c.l.b16 %v7294
    %v8996 = vunpack.c.l.b16 %v7295
    %v8997 = vunpack.c.h.b16 %v7295
    %v8998 = vunpack.c.l.b16 %v7296
    %v8999 = vunpack.c.h.b16 %v7296
    %v9000 = vunpack.c.l.b16 %v7297
    %v9001 = vunpack.c.h.b16 %v7297
    %v9002 = vunpack.c.l.b16 %v7298
    %v9003 = vunpack.c.l.b16 %v7299
    %v9004 = vunpack.c.h.b16 %v7299
    %v9005 = vunpack.c.l.b16 %v7300
    %v9006 = vunpack.c.h.b16 %v7300
    %v9007 = vunpack.c.l.b16 %v7301
    %v9008 = vunpack.c.h.b16 %v7301
    %v9009 = vunpack.c.l.b16 %v7302
    %v9010 = vunpack.c.l.b16 %v7303
    %v9011 = vunpack.c.h.b16 %v7303
    %v9012 = vunpack.c.l.b16 %v7304
    %v9013 = vunpack.c.h.b16 %v7304
    %v9014 = vunpack.c.l.b16 %v7305
    %v9015 = vunpack.c.h.b16 %v7305
    %v9016 = vunpack.c.l.b16 %v7306
    %v9017 = vunpack.c.l.b16 %v7307
    %v9018 = vunpack.c.h.b16 %v7307
    %v9019 = vunpack.c.l.b16 %v7308
    %v9020 = vunpack.c.h.b16 %v7308
    %v9021 = vunpack.c.l.b16 %v7309
    %v9022 = vunpack.c.h.b16 %v7309
    %v9023 = vunpack.c.l.b16 %v7310
    %v9024 = vunpack.c.l.b16 %v7311
    %v9025 = vunpack.c.h.b16 %v7311
    %v9026 = vunpack.c.l.b16 %v7312
    %v9027 = vunpack.c.h.b16 %v7312
    %v9028 = vunpack.c.l.b16 %v7313
    %v9029 = vunpack.c.h.b16 %v7313
    %v9030 = vunpack.c.l.b16 %v7314
    %v9031 = vunpack.c.l.b16 %v7315
    %v9032 = vunpack.c.h.b16 %v7315
    %v9033 = vunpack.c.l.b16 %v7316
    %v9034 = vunpack.c.h.b16 %v7316
    %v9035 = vunpack.c.l.b16 %v7317
    %v9036 = vunpack.c.h.b16 %v7317
    %v9037 = vunpack.c.l.b16 %v7318
    %v9038 = vunpack.c.l.b16 %v7319
    %v9039 = vunpack.c.h.b16 %v7319
    %v9040 = vunpack.c.l.b16 %v7320
    %v9041 = vunpack.c.h.b16 %v7320
    %v9042 = vunpack.c.l.b16 %v7321
    %v9043 = vunpack.c.h.b16 %v7321
    %v9044 = vunpack.c.l.b16 %v7322
    %v9045 = vunpack.c.l.b16 %v7323
    %v9046 = vunpack.c.h.b16 %v7323
    %v9047 = vunpack.c.l.b16 %v7324
    %v9048 = vunpack.c.h.b16 %v7324
    %v9049 = vunpack.c.l.b16 %v7325
    %v9050 = vunpack.c.h.b16 %v7325
    %v9051 = vunpack.c.l.b16 %v7326
    %v9052 = vunpack.c.l.b16 %v7327
    %v9053 = vunpack.c.h.b16 %v7327
    %v9054 = vunpack.c.l.b16 %v7328
    %v9055 = vunpack.c.h.b16 %v7328
    %v9056 = vunpack.c.l.b16 %v7329
    %v9057 = vunpack.c.h.b16 %v7329
    %v9058 = vunpack.c.l.b16 %v7330
    %v9059 = vunpack.c.l.b16 %v7331
    %v9060 = vunpack.c.h.b16 %v7331
    %v9061 = vunpack.c.l.b16 %v7332
    %v9062 = vunpack.c.h.b16 %v7332
    %v9063 = vunpack.c.l.b16 %v7333
    %v9064 = vunpack.c.h.b16 %v7333
    %v9065 = vunpack.c.l.b16 %v7334
    %v9066 = vunpack.c.l.b16 %v7335
    %v9067 = vunpack.c.h.b16 %v7335
    %v9068 = vunpack.c.l.b16 %v7336
    %v9069 = vunpack.c.h.b16 %v7336
    %v9070 = vunpack.c.l.b16 %v7337
    %v9071 = vunpack.c.h.b16 %v7337
    %v9072 = vunpack.c.l.b16 %v7338
    %v9073 = vunpack.c.l.b16 %v7339
    %v9074 = vunpack.c.h.b16 %v7339
    %v9075 = vunpack.c.l.b16 %v7340
    %v9076 = vunpack.c.h.b16 %v7340
    %v9077 = vunpack.c.l.b16 %v7341
    %v9078 = vunpack.c.h.b16 %v7341
    %v9079 = vunpack.c.l.b16 %v7342
    %v9080 = vunpack.c.l.b16 %v7343
    %v9081 = vunpack.c.h.b16 %v7343
    %v9082 = vunpack.c.l.b16 %v7344
    %v9083 = vunpack.c.h.b16 %v7344
    %v9084 = vunpack.c.l.b16 %v7345
    %v9085 = vunpack.c.h.b16 %v7345
    %v9086 = vunpack.c.l.b16 %v7346
    %v9087 = vunpack.c.l.b16 %v7347
    %v9088 = vunpack.c.h.b16 %v7347
    %v9089 = vunpack.c.l.b16 %v7348
    %v9090 = vunpack.c.h.b16 %v7348
    %v9091 = vunpack.c.l.b16 %v7349
    %v9092 = vunpack.c.h.b16 %v7349
    %v9093 = vunpack.c.l.b16 %v7350
    %v9094 = vunpack.c.l.b16 %v7351
    %v9095 = vunpack.c.h.b16 %v7351
    %v9096 = vunpack.c.l.b16 %v7352
    %v9097 = vunpack.c.h.b16 %v7352
    %v9098 = vunpack.c.l.b16 %v7353
    %v9099 = vunpack.c.h.b16 %v7353
    %v9100 = vunpack.c.l.b16 %v7354
    %v9101 = vunpack.c.l.b16 %v7355
    %v9102 = vunpack.c.h.b16 %v7355
    %v9103 = vunpack.c.l.b16 %v7356
    %v9104 = vunpack.c.h.b16 %v7356
    %v9105 = vunpack.c.l.b16 %v7357
    %v9106 = vunpack.c.h.b16 %v7357
    %v9107 = vunpack.c.l.b16 %v7358
    %v9108 = vunpack.c.l.b16 %v7359
    %v9109 = vunpack.c.h.b16 %v7359
    %v9110 = vunpack.c.l.b16 %v7360
    %v9111 = vunpack.c.h.b16 %v7360
    %v9112 = vunpack.c.l.b16 %v7361
    %v9113 = vunpack.c.h.b16 %v7361
    %v9114 = vunpack.c.l.b16 %v7362
    %v9115 = vunpack.c.l.b16 %v7363
    %v9116 = vunpack.c.h.b16 %v7363
    %v9117 = vunpack.c.l.b16 %v7364
    %v9118 = vunpack.c.h.b16 %v7364
    %v9119 = vunpack.c.l.b16 %v7365
    %v9120 = vunpack.c.h.b16 %v7365
    %v9121 = vunpack.c.l.b16 %v7366
    %v9122 = vunpack.c.l.b16 %v7367
    %v9123 = vunpack.c.h.b16 %v7367
    %v9124 = vunpack.c.l.b16 %v7368
    %v9125 = vunpack.c.h.b16 %v7368
    %v9126 = vunpack.c.l.b16 %v7369
    %v9127 = vunpack.c.h.b16 %v7369
    %v9128 = vunpack.c.l.b16 %v7370
    %v9129 = vunpack.c.l.b16 %v7371
    %v9130 = vunpack.c.h.b16 %v7371
    %v9131 = vunpack.c.l.b16 %v7372
    %v9132 = vunpack.c.h.b16 %v7372
    %v9133 = vunpack.c.l.b16 %v7373
    %v9134 = vunpack.c.h.b16 %v7373
    %v9135 = vunpack.c.l.b16 %v7374
    %v9136 = vunpack.c.l.b16 %v7375
    %v9137 = vunpack.c.h.b16 %v7375
    %v9138 = vunpack.c.l.b16 %v7376
    %v9139 = vunpack.c.h.b16 %v7376
    %v9140 = vunpack.c.l.b16 %v7377
    %v9141 = vunpack.c.h.b16 %v7377
    %v9142 = vunpack.c.l.b16 %v7378
    %v9143 = vunpack.c.l.b16 %v7379
    %v9144 = vunpack.c.h.b16 %v7379
    %v9145 = vunpack.c.l.b16 %v7380
    %v9146 = vunpack.c.h.b16 %v7380
    %v9147 = vunpack.c.l.b16 %v7381
    %v9148 = vunpack.c.h.b16 %v7381
    %v9149 = vunpack.c.l.b16 %v7382
    %v9150 = vunpack.c.l.b16 %v7383
    %v9151 = vunpack.c.h.b16 %v7383
    %v9152 = vunpack.c.l.b16 %v7384
    %v9153 = vunpack.c.h.b16 %v7384
    %v9154 = vunpack.c.l.b16 %v7385
    %v9155 = vunpack.c.h.b16 %v7385
    %v9156 = vunpack.c.l.b16 %v7386
    %v9157 = vunpack.c.l.b16 %v7387
    %v9158 = vunpack.c.h.b16 %v7387
    %v9159 = vunpack.c.l.b16 %v7388
    %v9160 = vunpack.c.h.b16 %v7388
    %v9161 = vunpack.c.l.b16 %v7389
    %v9162 = vunpack.c.h.b16 %v7389
    %v9163 = vunpack.c.l.b16 %v7390
    %v9164 = vunpack.c.l.b16 %v7391
    %v9165 = vunpack.c.h.b16 %v7391
    %v9166 = vunpack.c.l.b16 %v7392
    %v9167 = vunpack.c.h.b16 %v7392
    %v9168 = vunpack.c.l.b16 %v7393
    %v9169 = vunpack.c.h.b16 %v7393
    %v9170 = vunpack.c.l.b16 %v7394
    %v9171 = vunpack.c.l.b16 %v7395
    %v9172 = vunpack.c.h.b16 %v7395
    %v9173 = vunpack.c.l.b16 %v7396
    %v9174 = vunpack.c.h.b16 %v7396
    %v9175 = vunpack.c.l.b16 %v7397
    %v9176 = vunpack.c.h.b16 %v7397
    %v9177 = vunpack.c.l.b16 %v7398
    %v9178 = vunpack.c.l.b16 %v7399
    %v9179 = vunpack.c.h.b16 %v7399
    %v9180 = vunpack.c.l.b16 %v7400
    %v9181 = vunpack.c.h.b16 %v7400
    %v9182 = vunpack.c.l.b16 %v7401
    %v9183 = vunpack.c.h.b16 %v7401
    %v9184 = vunpack.c.l.b16 %v7402
    %v9185 = vunpack.c.l.b16 %v7403
    %v9186 = vunpack.c.h.b16 %v7403
    %v9187 = vunpack.c.l.b16 %v7404
    %v9188 = vunpack.c.h.b16 %v7404
    %v9189 = vunpack.c.l.b16 %v7405
    %v9190 = vunpack.c.h.b16 %v7405
    %v9191 = vunpack.c.l.b16 %v7406
    %v9192 = vunpack.c.l.b16 %v7407
    %v9193 = vunpack.c.h.b16 %v7407
    %v9194 = vunpack.c.l.b16 %v7408
    %v9195 = vunpack.c.h.b16 %v7408
    %v9196 = vunpack.c.l.b16 %v7409
    %v9197 = vunpack.c.h.b16 %v7409
    %v9198 = vunpack.c.l.b16 %v7410
    %v9199 = vunpack.c.l.b16 %v7411
    %v9200 = vunpack.c.h.b16 %v7411
    %v9201 = vunpack.c.l.b16 %v7412
    %v9202 = vunpack.c.h.b16 %v7412
    %v9203 = vunpack.c.l.b16 %v7413
    %v9204 = vunpack.c.h.b16 %v7413
    %v9205 = vunpack.c.l.b16 %v7414
    %v9206 = vunpack.c.l.b16 %v7415
    %v9207 = vunpack.c.h.b16 %v7415
    %v9208 = vunpack.c.l.b16 %v7416
    %v9209 = vunpack.c.h.b16 %v7416
    %v9210 = vunpack.c.l.b16 %v7417
    %v9211 = vunpack.c.h.b16 %v7417
    %v9212 = vunpack.c.l.b16 %v7418
    %v9213 = vunpack.c.l.b16 %v7419
    %v9214 = vunpack.c.h.b16 %v7419
    %v9215 = vunpack.c.l.b16 %v7420
    %v9216 = vunpack.c.h.b16 %v7420
    %v9217 = vunpack.c.l.b16 %v7421
    %v9218 = vunpack.c.h.b16 %v7421
    %v9219 = vunpack.c.l.b16 %v7422
    %v9220 = vpack.c.b16 %v8107, %v8100
    %v9221 = vpack.c.b16 %v8108, %v8101
    %v9222 = vpack.c.b16 %v8109, %v8102
    %v9223 = vpack.c.b16 %v8110, %v8103
    %v9224 = vpack.c.b16 %v8111, %v8104
    %v9225 = vpack.c.b16 %v8112, %v8105
    %v9226 = vpack.c.b16 %v8113, %v8106
    %v9227 = vpack.c.b16 %v8121, %v8114
    %v9228 = vpack.c.b16 %v8122, %v8115
    %v9229 = vpack.c.b16 %v8123, %v8116
    %v9230 = vpack.c.b16 %v8124, %v8117
    %v9231 = vpack.c.b16 %v8125, %v8118
    %v9232 = vpack.c.b16 %v8126, %v8119
    %v9233 = vpack.c.b16 %v8127, %v8120
    %v9234 = vpack.c.b16 %v8135, %v8128
    %v9235 = vpack.c.b16 %v8136, %v8129
    %v9236 = vpack.c.b16 %v8137, %v8130
    %v9237 = vpack.c.b16 %v8138, %v8131
    %v9238 = vpack.c.b16 %v8139, %v8132
    %v9239 = vpack.c.b16 %v8140, %v8133
    %v9240 = vpack.c.b16 %v8141, %v8134
    %v9241 = vpack.c.b16 %v8149, %v8142
    %v9242 = vpack.c.b16 %v8150, %v8143
    %v9243 = vpack.c.b16 %v8151, %v8144
    %v9244 = vpack.c.b16 %v8152, %v8145
    %v9245 = vpack.c.b16 %v8153, %v8146
    %v9246 = vpack.c.b16 %v8154, %v8147
    %v9247 = vpack.c.b16 %v8155, %v8148
    %v9248 = vpack.c.b16 %v8163, %v8156
    %v9249 = vpack.c.b16 %v8164, %v8157
    %v9250 = vpack.c.b16 %v8165, %v8158
    %v9251 = vpack.c.b16 %v8166, %v8159
    %v9252 = vpack.c.b16 %v8167, %v8160
    %v9253 = vpack.c.b16 %v8168, %v8161
    %v9254 = vpack.c.b16 %v8169, %v8162
    %v9255 = vpack.c.b16 %v8177, %v8170
    %v9256 = vpack.c.b16 %v8178, %v8171
    %v9257 = vpack.c.b16 %v8179, %v8172
    %v9258 = vpack.c.b16 %v8180, %v8173
    %v9259 = vpack.c.b16 %v8181, %v8174
    %v9260 = vpack.c.b16 %v8182, %v8175
    %v9261 = vpack.c.b16 %v8183, %v8176
    %v9262 = vpack.c.b16 %v8191, %v8184
    %v9263 = vpack.c.b16 %v8192, %v8185
    %v9264 = vpack.c.b16 %v8193, %v8186
    %v9265 = vpack.c.b16 %v8194, %v8187
    %v9266 = vpack.c.b16 %v8195, %v8188
    %v9267 = vpack.c.b16 %v8196, %v8189
    %v9268 = vpack.c.b16 %v8197, %v8190
    %v9269 = vpack.c.b16 %v8205, %v8198
    %v9270 = vpack.c.b16 %v8206, %v8199
    %v9271 = vpack.c.b16 %v8207, %v8200
    %v9272 = vpack.c.b16 %v8208, %v8201
    %v9273 = vpack.c.b16 %v8209, %v8202
    %v9274 = vpack.c.b16 %v8210, %v8203
    %v9275 = vpack.c.b16 %v8211, %v8204
    %v9276 = vpack.c.b16 %v8219, %v8212
    %v9277 = vpack.c.b16 %v8220, %v8213
    %v9278 = vpack.c.b16 %v8221, %v8214
    %v9279 = vpack.c.b16 %v8222, %v8215
    %v9280 = vpack.c.b16 %v8223, %v8216
    %v9281 = vpack.c.b16 %v8224, %v8217
    %v9282 = vpack.c.b16 %v8225, %v8218
    %v9283 = vpack.c.b16 %v8233, %v8226
    %v9284 = vpack.c.b16 %v8234, %v8227
    %v9285 = vpack.c.b16 %v8235, %v8228
    %v9286 = vpack.c.b16 %v8236, %v8229
    %v9287 = vpack.c.b16 %v8237, %v8230
    %v9288 = vpack.c.b16 %v8238, %v8231
    %v9289 = vpack.c.b16 %v8239, %v8232
    %v9290 = vpack.c.b16 %v8247, %v8240
    %v9291 = vpack.c.b16 %v8248, %v8241
    %v9292 = vpack.c.b16 %v8249, %v8242
    %v9293 = vpack.c.b16 %v8250, %v8243
    %v9294 = vpack.c.b16 %v8251, %v8244
    %v9295 = vpack.c.b16 %v8252, %v8245
    %v9296 = vpack.c.b16 %v8253, %v8246
    %v9297 = vpack.c.b16 %v8261, %v8254
    %v9298 = vpack.c.b16 %v8262, %v8255
    %v9299 = vpack.c.b16 %v8263, %v8256
    %v9300 = vpack.c.b16 %v8264, %v8257
    %v9301 = vpack.c.b16 %v8265, %v8258
    %v9302 = vpack.c.b16 %v8266, %v8259
    %v9303 = vpack.c.b16 %v8267, %v8260
    %v9304 = vpack.c.b16 %v8275, %v8268
    %v9305 = vpack.c.b16 %v8276, %v8269
    %v9306 = vpack.c.b16 %v8277, %v8270
    %v9307 = vpack.c.b16 %v8278, %v8271
    %v9308 = vpack.c.b16 %v8279, %v8272
    %v9309 = vpack.c.b16 %v8280, %v8273
    %v9310 = vpack.c.b16 %v8281, %v8274
    %v9311 = vpack.c.b16 %v8289, %v8282
    %v9312 = vpack.c.b16 %v8290, %v8283
    %v9313 = vpack.c.b16 %v8291, %v8284
    %v9314 = vpack.c.b16 %v8292, %v8285
    %v9315 = vpack.c.b16 %v8293, %v8286
    %v9316 = vpack.c.b16 %v8294, %v8287
    %v9317 = vpack.c.b16 %v8295, %v8288
    %v9318 = vpack.c.b16 %v8303, %v8296
    %v9319 = vpack.c.b16 %v8304, %v8297
    %v9320 = vpack.c.b16 %v8305, %v8298
    %v9321 = vpack.c.b16 %v8306, %v8299
    %v9322 = vpack.c.b16 %v8307, %v8300
    %v9323 = vpack.c.b16 %v8308, %v8301
    %v9324 = vpack.c.b16 %v8309, %v8302
    %v9325 = vpack.c.b16 %v8317, %v8310
    %v9326 = vpack.c.b16 %v8318, %v8311
    %v9327 = vpack.c.b16 %v8319, %v8312
    %v9328 = vpack.c.b16 %v8320, %v8313
    %v9329 = vpack.c.b16 %v8321, %v8314
    %v9330 = vpack.c.b16 %v8322, %v8315
    %v9331 = vpack.c.b16 %v8323, %v8316
    %v9332 = vpack.c.b16 %v8331, %v8324
    %v9333 = vpack.c.b16 %v8332, %v8325
    %v9334 = vpack.c.b16 %v8333, %v8326
    %v9335 = vpack.c.b16 %v8334, %v8327
    %v9336 = vpack.c.b16 %v8335, %v8328
    %v9337 = vpack.c.b16 %v8336, %v8329
    %v9338 = vpack.c.b16 %v8337, %v8330
    %v9339 = vpack.c.b16 %v8345, %v8338
    %v9340 = vpack.c.b16 %v8346, %v8339
    %v9341 = vpack.c.b16 %v8347, %v8340
    %v9342 = vpack.c.b16 %v8348, %v8341
    %v9343 = vpack.c.b16 %v8349, %v8342
    %v9344 = vpack.c.b16 %v8350, %v8343
    %v9345 = vpack.c.b16 %v8351, %v8344
    %v9346 = vpack.c.b16 %v8359, %v8352
    %v9347 = vpack.c.b16 %v8360, %v8353
    %v9348 = vpack.c.b16 %v8361, %v8354
    %v9349 = vpack.c.b16 %v8362, %v8355
    %v9350 = vpack.c.b16 %v8363, %v8356
    %v9351 = vpack.c.b16 %v8364, %v8357
    %v9352 = vpack.c.b16 %v8365, %v8358
    %v9353 = vpack.c.b16 %v8373, %v8366
    %v9354 = vpack.c.b16 %v8374, %v8367
    %v9355 = vpack.c.b16 %v8375, %v8368
    %v9356 = vpack.c.b16 %v8376, %v8369
    %v9357 = vpack.c.b16 %v8377, %v8370
    %v9358 = vpack.c.b16 %v8378, %v8371
    %v9359 = vpack.c.b16 %v8379, %v8372
    %v9360 = vpack.c.b16 %v8387, %v8380
    %v9361 = vpack.c.b16 %v8388, %v8381
    %v9362 = vpack.c.b16 %v8389, %v8382
    %v9363 = vpack.c.b16 %v8390, %v8383
    %v9364 = vpack.c.b16 %v8391, %v8384
    %v9365 = vpack.c.b16 %v8392, %v8385
    %v9366 = vpack.c.b16 %v8393, %v8386
    %v9367 = vpack.c.b16 %v8401, %v8394
    %v9368 = vpack.c.b16 %v8402, %v8395
    %v9369 = vpack.c.b16 %v8403, %v8396
    %v9370 = vpack.c.b16 %v8404, %v8397
    %v9371 = vpack.c.b16 %v8405, %v8398
    %v9372 = vpack.c.b16 %v8406, %v8399
    %v9373 = vpack.c.b16 %v8407, %v8400
    %v9374 = vpack.c.b16 %v8415, %v8408
    %v9375 = vpack.c.b16 %v8416, %v8409
    %v9376 = vpack.c.b16 %v8417, %v8410
    %v9377 = vpack.c.b16 %v8418, %v8411
    %v9378 = vpack.c.b16 %v8419, %v8412
    %v9379 = vpack.c.b16 %v8420, %v8413
    %v9380 = vpack.c.b16 %v8421, %v8414
    %v9381 = vpack.c.b16 %v8429, %v8422
    %v9382 = vpack.c.b16 %v8430, %v8423
    %v9383 = vpack.c.b16 %v8431, %v8424
    %v9384 = vpack.c.b16 %v8432, %v8425
    %v9385 = vpack.c.b16 %v8433, %v8426
    %v9386 = vpack.c.b16 %v8434, %v8427
    %v9387 = vpack.c.b16 %v8435, %v8428
    %v9388 = vpack.c.b16 %v8443, %v8436
    %v9389 = vpack.c.b16 %v8444, %v8437
    %v9390 = vpack.c.b16 %v8445, %v8438
    %v9391 = vpack.c.b16 %v8446, %v8439
    %v9392 = vpack.c.b16 %v8447, %v8440
    %v9393 = vpack.c.b16 %v8448, %v8441
    %v9394 = vpack.c.b16 %v8449, %v8442
    %v9395 = vpack.c.b16 %v8457, %v8450
    %v9396 = vpack.c.b16 %v8458, %v8451
    %v9397 = vpack.c.b16 %v8459, %v8452
    %v9398 = vpack.c.b16 %v8460, %v8453
    %v9399 = vpack.c.b16 %v8461, %v8454
    %v9400 = vpack.c.b16 %v8462, %v8455
    %v9401 = vpack.c.b16 %v8463, %v8456
    %v9402 = vpack.c.b16 %v8471, %v8464
    %v9403 = vpack.c.b16 %v8472, %v8465
    %v9404 = vpack.c.b16 %v8473, %v8466
    %v9405 = vpack.c.b16 %v8474, %v8467
    %v9406 = vpack.c.b16 %v8475, %v8468
    %v9407 = vpack.c.b16 %v8476, %v8469
    %v9408 = vpack.c.b16 %v8477, %v8470
    %v9409 = vpack.c.b16 %v8485, %v8478
    %v9410 = vpack.c.b16 %v8486, %v8479
    %v9411 = vpack.c.b16 %v8487, %v8480
    %v9412 = vpack.c.b16 %v8488, %v8481
    %v9413 = vpack.c.b16 %v8489, %v8482
    %v9414 = vpack.c.b16 %v8490, %v8483
    %v9415 = vpack.c.b16 %v8491, %v8484
    %v9416 = vpack.c.b16 %v8499, %v8492
    %v9417 = vpack.c.b16 %v8500, %v8493
    %v9418 = vpack.c.b16 %v8501, %v8494
    %v9419 = vpack.c.b16 %v8502, %v8495
    %v9420 = vpack.c.b16 %v8503, %v8496
    %v9421 = vpack.c.b16 %v8504, %v8497
    %v9422 = vpack.c.b16 %v8505, %v8498
    %v9423 = vpack.c.b16 %v8513, %v8506
    %v9424 = vpack.c.b16 %v8514, %v8507
    %v9425 = vpack.c.b16 %v8515, %v8508
    %v9426 = vpack.c.b16 %v8516, %v8509
    %v9427 = vpack.c.b16 %v8517, %v8510
    %v9428 = vpack.c.b16 %v8518, %v8511
    %v9429 = vpack.c.b16 %v8519, %v8512
    %v9430 = vpack.c.b16 %v8527, %v8520
    %v9431 = vpack.c.b16 %v8528, %v8521
    %v9432 = vpack.c.b16 %v8529, %v8522
    %v9433 = vpack.c.b16 %v8530, %v8523
    %v9434 = vpack.c.b16 %v8531, %v8524
    %v9435 = vpack.c.b16 %v8532, %v8525
    %v9436 = vpack.c.b16 %v8533, %v8526
    %v9437 = vpack.c.b16 %v8541, %v8534
    %v9438 = vpack.c.b16 %v8542, %v8535
    %v9439 = vpack.c.b16 %v8543, %v8536
    %v9440 = vpack.c.b16 %v8544, %v8537
    %v9441 = vpack.c.b16 %v8545, %v8538
    %v9442 = vpack.c.b16 %v8546, %v8539
    %v9443 = vpack.c.b16 %v8547, %v8540
    %v9444 = vpack.c.b16 %v8555, %v8548
    %v9445 = vpack.c.b16 %v8556, %v8549
    %v9446 = vpack.c.b16 %v8557, %v8550
    %v9447 = vpack.c.b16 %v8558, %v8551
    %v9448 = vpack.c.b16 %v8559, %v8552
    %v9449 = vpack.c.b16 %v8560, %v8553
    %v9450 = vpack.c.b16 %v8561, %v8554
    %v9451 = vpack.c.b16 %v8569, %v8562
    %v9452 = vpack.c.b16 %v8570, %v8563
    %v9453 = vpack.c.b16 %v8571, %v8564
    %v9454 = vpack.c.b16 %v8572, %v8565
    %v9455 = vpack.c.b16 %v8573, %v8566
    %v9456 = vpack.c.b16 %v8574, %v8567
    %v9457 = vpack.c.b16 %v8575, %v8568
    %v9458 = vpack.c.b16 %v8583, %v8576
    %v9459 = vpack.c.b16 %v8584, %v8577
    %v9460 = vpack.c.b16 %v8585, %v8578
    %v9461 = vpack.c.b16 %v8586, %v8579
    %v9462 = vpack.c.b16 %v8587, %v8580
    %v9463 = vpack.c.b16 %v8588, %v8581
    %v9464 = vpack.c.b16 %v8589, %v8582
    %v9465 = vpack.c.b16 %v8597, %v8590
    %v9466 = vpack.c.b16 %v8598, %v8591
    %v9467 = vpack.c.b16 %v8599, %v8592
    %v9468 = vpack.c.b16 %v8600, %v8593
    %v9469 = vpack.c.b16 %v8601, %v8594
    %v9470 = vpack.c.b16 %v8602, %v8595
    %v9471 = vpack.c.b16 %v8603, %v8596
    %v9472 = vpack.c.b16 %v8611, %v8604
    %v9473 = vpack.c.b16 %v8612, %v8605
    %v9474 = vpack.c.b16 %v8613, %v8606
    %v9475 = vpack.c.b16 %v8614, %v8607
    %v9476 = vpack.c.b16 %v8615, %v8608
    %v9477 = vpack.c.b16 %v8616, %v8609
    %v9478 = vpack.c.b16 %v8617, %v8610
    %v9479 = vpack.c.b16 %v8625, %v8618
    %v9480 = vpack.c.b16 %v8626, %v8619
    %v9481 = vpack.c.b16 %v8627, %v8620
    %v9482 = vpack.c.b16 %v8628, %v8621
    %v9483 = vpack.c.b16 %v8629, %v8622
    %v9484 = vpack.c.b16 %v8630, %v8623
    %v9485 = vpack.c.b16 %v8631, %v8624
    %v9486 = vpack.c.b16 %v8639, %v8632
    %v9487 = vpack.c.b16 %v8640, %v8633
    %v9488 = vpack.c.b16 %v8641, %v8634
    %v9489 = vpack.c.b16 %v8642, %v8635
    %v9490 = vpack.c.b16 %v8643, %v8636
    %v9491 = vpack.c.b16 %v8644, %v8637
    %v9492 = vpack.c.b16 %v8645, %v8638
    %v9493 = vpack.c.b16 %v8653, %v8646
    %v9494 = vpack.c.b16 %v8654, %v8647
    %v9495 = vpack.c.b16 %v8655, %v8648
    %v9496 = vpack.c.b16 %v8656, %v8649
    %v9497 = vpack.c.b16 %v8657, %v8650
    %v9498 = vpack.c.b16 %v8658, %v8651
    %v9499 = vpack.c.b16 %v8659, %v8652
    %v9500 = vpack.c.b16 %v8667, %v8660
    %v9501 = vpack.c.b16 %v8668, %v8661
    %v9502 = vpack.c.b16 %v8669, %v8662
    %v9503 = vpack.c.b16 %v8670, %v8663
    %v9504 = vpack.c.b16 %v8671, %v8664
    %v9505 = vpack.c.b16 %v8672, %v8665
    %v9506 = vpack.c.b16 %v8673, %v8666
    %v9507 = vpack.c.b16 %v8681, %v8674
    %v9508 = vpack.c.b16 %v8682, %v8675
    %v9509 = vpack.c.b16 %v8683, %v8676
    %v9510 = vpack.c.b16 %v8684, %v8677
    %v9511 = vpack.c.b16 %v8685, %v8678
    %v9512 = vpack.c.b16 %v8686, %v8679
    %v9513 = vpack.c.b16 %v8687, %v8680
    %v9514 = vpack.c.b16 %v8695, %v8688
    %v9515 = vpack.c.b16 %v8696, %v8689
    %v9516 = vpack.c.b16 %v8697, %v8690
    %v9517 = vpack.c.b16 %v8698, %v8691
    %v9518 = vpack.c.b16 %v8699, %v8692
    %v9519 = vpack.c.b16 %v8700, %v8693
    %v9520 = vpack.c.b16 %v8701, %v8694
    %v9521 = vpack.c.b16 %v8709, %v8702
    %v9522 = vpack.c.b16 %v8710, %v8703
    %v9523 = vpack.c.b16 %v8711, %v8704
    %v9524 = vpack.c.b16 %v8712, %v8705
    %v9525 = vpack.c.b16 %v8713, %v8706
    %v9526 = vpack.c.b16 %v8714, %v8707
    %v9527 = vpack.c.b16 %v8715, %v8708
    %v9528 = vpack.c.b16 %v8723, %v8716
    %v9529 = vpack.c.b16 %v8724, %v8717
    %v9530 = vpack.c.b16 %v8725, %v8718
    %v9531 = vpack.c.b16 %v8726, %v8719
    %v9532 = vpack.c.b16 %v8727, %v8720
    %v9533 = vpack.c.b16 %v8728, %v8721
    %v9534 = vpack.c.b16 %v8729, %v8722
    %v9535 = vpack.c.b16 %v8737, %v8730
    %v9536 = vpack.c.b16 %v8738, %v8731
    %v9537 = vpack.c.b16 %v8739, %v8732
    %v9538 = vpack.c.b16 %v8740, %v8733
    %v9539 = vpack.c.b16 %v8741, %v8734
    %v9540 = vpack.c.b16 %v8742, %v8735
    %v9541 = vpack.c.b16 %v8743, %v8736
    %v9542 = vpack.c.b16 %v8751, %v8744
    %v9543 = vpack.c.b16 %v8752, %v8745
    %v9544 = vpack.c.b16 %v8753, %v8746
    %v9545 = vpack.c.b16 %v8754, %v8747
    %v9546 = vpack.c.b16 %v8755, %v8748
    %v9547 = vpack.c.b16 %v8756, %v8749
    %v9548 = vpack.c.b16 %v8757, %v8750
    %v9549 = vpack.c.b16 %v8765, %v8758
    %v9550 = vpack.c.b16 %v8766, %v8759
    %v9551 = vpack.c.b16 %v8767, %v8760
    %v9552 = vpack.c.b16 %v8768, %v8761
    %v9553 = vpack.c.b16 %v8769, %v8762
    %v9554 = vpack.c.b16 %v8770, %v8763
    %v9555 = vpack.c.b16 %v8771, %v8764
    %v9556 = vpack.c.b16 %v8779, %v8772
    %v9557 = vpack.c.b16 %v8780, %v8773
    %v9558 = vpack.c.b16 %v8781, %v8774
    %v9559 = vpack.c.b16 %v8782, %v8775
    %v9560 = vpack.c.b16 %v8783, %v8776
    %v9561 = vpack.c.b16 %v8784, %v8777
    %v9562 = vpack.c.b16 %v8785, %v8778
    %v9563 = vpack.c.b16 %v8793, %v8786
    %v9564 = vpack.c.b16 %v8794, %v8787
    %v9565 = vpack.c.b16 %v8795, %v8788
    %v9566 = vpack.c.b16 %v8796, %v8789
    %v9567 = vpack.c.b16 %v8797, %v8790
    %v9568 = vpack.c.b16 %v8798, %v8791
    %v9569 = vpack.c.b16 %v8799, %v8792
    %v9570 = vpack.c.b16 %v8807, %v8800
    %v9571 = vpack.c.b16 %v8808, %v8801
    %v9572 = vpack.c.b16 %v8809, %v8802
    %v9573 = vpack.c.b16 %v8810, %v8803
    %v9574 = vpack.c.b16 %v8811, %v8804
    %v9575 = vpack.c.b16 %v8812, %v8805
    %v9576 = vpack.c.b16 %v8813, %v8806
    %v9577 = vpack.c.b16 %v8821, %v8814
    %v9578 = vpack.c.b16 %v8822, %v8815
    %v9579 = vpack.c.b16 %v8823, %v8816
    %v9580 = vpack.c.b16 %v8824, %v8817
    %v9581 = vpack.c.b16 %v8825, %v8818
    %v9582 = vpack.c.b16 %v8826, %v8819
    %v9583 = vpack.c.b16 %v8827, %v8820
    %v9584 = vpack.c.b16 %v8835, %v8828
    %v9585 = vpack.c.b16 %v8836, %v8829
    %v9586 = vpack.c.b16 %v8837, %v8830
    %v9587 = vpack.c.b16 %v8838, %v8831
    %v9588 = vpack.c.b16 %v8839, %v8832
    %v9589 = vpack.c.b16 %v8840, %v8833
    %v9590 = vpack.c.b16 %v8841, %v8834
    %v9591 = vpack.c.b16 %v8849, %v8842
    %v9592 = vpack.c.b16 %v8850, %v8843
    %v9593 = vpack.c.b16 %v8851, %v8844
    %v9594 = vpack.c.b16 %v8852, %v8845
    %v9595 = vpack.c.b16 %v8853, %v8846
    %v9596 = vpack.c.b16 %v8854, %v8847
    %v9597 = vpack.c.b16 %v8855, %v8848
    %v9598 = vpack.c.b16 %v8863, %v8856
    %v9599 = vpack.c.b16 %v8864, %v8857
    %v9600 = vpack.c.b16 %v8865, %v8858
    %v9601 = vpack.c.b16 %v8866, %v8859
    %v9602 = vpack.c.b16 %v8867, %v8860
    %v9603 = vpack.c.b16 %v8868, %v8861
    %v9604 = vpack.c.b16 %v8869, %v8862
    %v9605 = vpack.c.b16 %v8877, %v8870
    %v9606 = vpack.c.b16 %v8878, %v8871
    %v9607 = vpack.c.b16 %v8879, %v8872
    %v9608 = vpack.c.b16 %v8880, %v8873
    %v9609 = vpack.c.b16 %v8881, %v8874
    %v9610 = vpack.c.b16 %v8882, %v8875
    %v9611 = vpack.c.b16 %v8883, %v8876
    %v9612 = vpack.c.b16 %v8891, %v8884
    %v9613 = vpack.c.b16 %v8892, %v8885
    %v9614 = vpack.c.b16 %v8893, %v8886
    %v9615 = vpack.c.b16 %v8894, %v8887
    %v9616 = vpack.c.b16 %v8895, %v8888
    %v9617 = vpack.c.b16 %v8896, %v8889
    %v9618 = vpack.c.b16 %v8897, %v8890
    %v9619 = vpack.c.b16 %v8905, %v8898
    %v9620 = vpack.c.b16 %v8906, %v8899
    %v9621 = vpack.c.b16 %v8907, %v8900
    %v9622 = vpack.c.b16 %v8908, %v8901
    %v9623 = vpack.c.b16 %v8909, %v8902
    %v9624 = vpack.c.b16 %v8910, %v8903
    %v9625 = vpack.c.b16 %v8911, %v8904
    %v9626 = vpack.c.b16 %v8919, %v8912
    %v9627 = vpack.c.b16 %v8920, %v8913
    %v9628 = vpack.c.b16 %v8921, %v8914
    %v9629 = vpack.c.b16 %v8922, %v8915
    %v9630 = vpack.c.b16 %v8923, %v8916
    %v9631 = vpack.c.b16 %v8924, %v8917
    %v9632 = vpack.c.b16 %v8925, %v8918
    %v9633 = vpack.c.b16 %v8933, %v8926
    %v9634 = vpack.c.b16 %v8934, %v8927
    %v9635 = vpack.c.b16 %v8935, %v8928
    %v9636 = vpack.c.b16 %v8936, %v8929
    %v9637 = vpack.c.b16 %v8937, %v8930
    %v9638 = vpack.c.b16 %v8938, %v8931
    %v9639 = vpack.c.b16 %v8939, %v8932
    %v9640 = vpack.c.b16 %v8947, %v8940
    %v9641 = vpack.c.b16 %v8948, %v8941
    %v9642 = vpack.c.b16 %v8949, %v8942
    %v9643 = vpack.c.b16 %v8950, %v8943
    %v9644 = vpack.c.b16 %v8951, %v8944
    %v9645 = vpack.c.b16 %v8952, %v8945
    %v9646 = vpack.c.b16 %v8953, %v8946
    %v9647 = vpack.c.b16 %v8961, %v8954
    %v9648 = vpack.c.b16 %v8962, %v8955
    %v9649 = vpack.c.b16 %v8963, %v8956
    %v9650 = vpack.c.b16 %v8964, %v8957
    %v9651 = vpack.c.b16 %v8965, %v8958
    %v9652 = vpack.c.b16 %v8966, %v8959
    %v9653 = vpack.c.b16 %v8967, %v8960
    %v9654 = vpack.c.b16 %v8975, %v8968
    %v9655 = vpack.c.b16 %v8976, %v8969
    %v9656 = vpack.c.b16 %v8977, %v8970
    %v9657 = vpack.c.b16 %v8978, %v8971
    %v9658 = vpack.c.b16 %v8979, %v8972
    %v9659 = vpack.c.b16 %v8980, %v8973
    %v9660 = vpack.c.b16 %v8981, %v8974
    %v9661 = vpack.c.b16 %v8989, %v8982
    %v9662 = vpack.c.b16 %v8990, %v8983
    %v9663 = vpack.c.b16 %v8991, %v8984
    %v9664 = vpack.c.b16 %v8992, %v8985
    %v9665 = vpack.c.b16 %v8993, %v8986
    %v9666 = vpack.c.b16 %v8994, %v8987
    %v9667 = vpack.c.b16 %v8995, %v8988
    %v9668 = vpack.c.b16 %v9003, %v8996
    %v9669 = vpack.c.b16 %v9004, %v8997
    %v9670 = vpack.c.b16 %v9005, %v8998
    %v9671 = vpack.c.b16 %v9006, %v8999
    %v9672 = vpack.c.b16 %v9007, %v9000
    %v9673 = vpack.c.b16 %v9008, %v9001
    %v9674 = vpack.c.b16 %v9009, %v9002
    %v9675 = vpack.c.b16 %v9017, %v9010
    %v9676 = vpack.c.b16 %v9018, %v9011
    %v9677 = vpack.c.b16 %v9019, %v9012
    %v9678 = vpack.c.b16 %v9020, %v9013
    %v9679 = vpack.c.b16 %v9021, %v9014
    %v9680 = vpack.c.b16 %v9022, %v9015
    %v9681 = vpack.c.b16 %v9023, %v9016
    %v9682 = vpack.c.b16 %v9031, %v9024
    %v9683 = vpack.c.b16 %v9032, %v9025
    %v9684 = vpack.c.b16 %v9033, %v9026
    %v9685 = vpack.c.b16 %v9034, %v9027
    %v9686 = vpack.c.b16 %v9035, %v9028
    %v9687 = vpack.c.b16 %v9036, %v9029
    %v9688 = vpack.c.b16 %v9037, %v9030
    %v9689 = vpack.c.b16 %v9045, %v9038
    %v9690 = vpack.c.b16 %v9046, %v9039
    %v9691 = vpack.c.b16 %v9047, %v9040
    %v9692 = vpack.c.b16 %v9048, %v9041
    %v9693 = vpack.c.b16 %v9049, %v9042
    %v9694 = vpack.c.b16 %v9050, %v9043
    %v9695 = vpack.c.b16 %v9051, %v9044
    %v9696 = vpack.c.b16 %v9059, %v9052
    %v9697 = vpack.c.b16 %v9060, %v9053
    %v9698 = vpack.c.b16 %v9061, %v9054
    %v9699 = vpack.c.b16 %v9062, %v9055
    %v9700 = vpack.c.b16 %v9063, %v9056
    %v9701 = vpack.c.b16 %v9064, %v9057
    %v9702 = vpack.c.b16 %v9065, %v9058
    %v9703 = vpack.c.b16 %v9073, %v9066
    %v9704 = vpack.c.b16 %v9074, %v9067
    %v9705 = vpack.c.b16 %v9075, %v9068
    %v9706 = vpack.c.b16 %v9076, %v9069
    %v9707 = vpack.c.b16 %v9077, %v9070
    %v9708 = vpack.c.b16 %v9078, %v9071
    %v9709 = vpack.c.b16 %v9079, %v9072
    %v9710 = vpack.c.b16 %v9087, %v9080
    %v9711 = vpack.c.b16 %v9088, %v9081
    %v9712 = vpack.c.b16 %v9089, %v9082
    %v9713 = vpack.c.b16 %v9090, %v9083
    %v9714 = vpack.c.b16 %v9091, %v9084
    %v9715 = vpack.c.b16 %v9092, %v9085
    %v9716 = vpack.c.b16 %v9093, %v9086
    %v9717 = vpack.c.b16 %v9101, %v9094
    %v9718 = vpack.c.b16 %v9102, %v9095
    %v9719 = vpack.c.b16 %v9103, %v9096
    %v9720 = vpack.c.b16 %v9104, %v9097
    %v9721 = vpack.c.b16 %v9105, %v9098
    %v9722 = vpack.c.b16 %v9106, %v9099
    %v9723 = vpack.c.b16 %v9107, %v9100
    %v9724 = vpack.c.b16 %v9115, %v9108
    %v9725 = vpack.c.b16 %v9116, %v9109
    %v9726 = vpack.c.b16 %v9117, %v9110
    %v9727 = vpack.c.b16 %v9118, %v9111
    %v9728 = vpack.c.b16 %v9119, %v9112
    %v9729 = vpack.c.b16 %v9120, %v9113
    %v9730 = vpack.c.b16 %v9121, %v9114
    %v9731 = vpack.c.b16 %v9129, %v9122
    %v9732 = vpack.c.b16 %v9130, %v9123
    %v9733 = vpack.c.b16 %v9131, %v9124
    %v9734 = vpack.c.b16 %v9132, %v9125
    %v9735 = vpack.c.b16 %v9133, %v9126
    %v9736 = vpack.c.b16 %v9134, %v9127
    %v9737 = vpack.c.b16 %v9135, %v9128
    %v9738 = vpack.c.b16 %v9143, %v9136
    %v9739 = vpack.c.b16 %v9144, %v9137
    %v9740 = vpack.c.b16 %v9145, %v9138
    %v9741 = vpack.c.b16 %v9146, %v9139
    %v9742 = vpack.c.b16 %v9147, %v9140
    %v9743 = vpack.c.b16 %v9148, %v9141
    %v9744 = vpack.c.b16 %v9149, %v9142
    %v9745 = vpack.c.b16 %v9157, %v9150
    %v9746 = vpack.c.b16 %v9158, %v9151
    %v9747 = vpack.c.b16 %v9159, %v9152
    %v9748 = vpack.c.b16 %v9160, %v9153
    %v9749 = vpack.c.b16 %v9161, %v9154
    %v9750 = vpack.c.b16 %v9162, %v9155
    %v9751 = vpack.c.b16 %v9163, %v9156
    %v9752 = vpack.c.b16 %v9171, %v9164
    %v9753 = vpack.c.b16 %v9172, %v9165
    %v9754 = vpack.c.b16 %v9173, %v9166
    %v9755 = vpack.c.b16 %v9174, %v9167
    %v9756 = vpack.c.b16 %v9175, %v9168
    %v9757 = vpack.c.b16 %v9176, %v9169
    %v9758 = vpack.c.b16 %v9177, %v9170
    %v9759 = vpack.c.b16 %v9185, %v9178
    %v9760 = vpack.c.b16 %v9186, %v9179
    %v9761 = vpack.c.b16 %v9187, %v9180
    %v9762 = vpack.c.b16 %v9188, %v9181
    %v9763 = vpack.c.b16 %v9189, %v9182
    %v9764 = vpack.c.b16 %v9190, %v9183
    %v9765 = vpack.c.b16 %v9191, %v9184
    %v9766 = vpack.c.b16 %v9199, %v9192
    %v9767 = vpack.c.b16 %v9200, %v9193
    %v9768 = vpack.c.b16 %v9201, %v9194
    %v9769 = vpack.c.b16 %v9202, %v9195
    %v9770 = vpack.c.b16 %v9203, %v9196
    %v9771 = vpack.c.b16 %v9204, %v9197
    %v9772 = vpack.c.b16 %v9205, %v9198
    %v9773 = vpack.c.b16 %v9213, %v9206
    %v9774 = vpack.c.b16 %v9214, %v9207
    %v9775 = vpack.c.b16 %v9215, %v9208
    %v9776 = vpack.c.b16 %v9216, %v9209
    %v9777 = vpack.c.b16 %v9217, %v9210
    %v9778 = vpack.c.b16 %v9218, %v9211
    %v9779 = vpack.c.b16 %v9219, %v9212
    %10340 = vmatprep.subr.bf16.mxu0 %v9270
    %10341 = vmatpush1.bf16.msra.mxu0 %v9269
    %10342 = vmatprep.subr.bf16.mxu0 %v9263
    %10343 = vmatpush1.bf16.msra.mxu0 %v9262
    %10344 = vmatprep.subr.bf16.mxu0 %v9256
    %10345 = vmatpush1.bf16.msra.mxu0 %v9255
    %10346 = vmatprep.subr.bf16.mxu0 %v9249
    %10347 = vmatpush1.bf16.msra.mxu0 %v9248
    %10348 = vmatprep.subr.bf16.mxu0 %v9242
    %10349 = vmatpush1.bf16.msra.mxu0 %v9241
    %10350 = vmatprep.subr.bf16.mxu0 %v9235
    %10351 = vmatpush1.bf16.msra.mxu0 %v9234
    %10352 = vmatprep.subr.bf16.mxu0 %v9228
    %10353 = vmatpush1.bf16.msra.mxu0 %v9227
    %10354 = vmatprep.subr.bf16.mxu0 %v9221
    %10355 = vmatpush1.bf16.msra.mxu0 %v9220
    %10356 = vmatprep.subr.bf16.mxu0 %v9326
    %10357 = vmatpush2.bf16.msra.mxu0 %v9325
    %10358 = vmatprep.subr.bf16.mxu0 %v9319
    %10359 = vmatpush2.bf16.msra.mxu0 %v9318
    %10360 = vmatprep.subr.bf16.mxu0 %v9312
    %10361 = vmatpush2.bf16.msra.mxu0 %v9311
    %10362 = vmatprep.subr.bf16.mxu0 %v9305
    %10363 = vmatpush2.bf16.msra.mxu0 %v9304
    %10364 = vmatprep.subr.bf16.mxu0 %v9298
    %10365 = vmatpush2.bf16.msra.mxu0 %v9297
    %10366 = vmatprep.subr.bf16.mxu0 %v9291
    %10367 = vmatpush2.bf16.msra.mxu0 %v9290
    %10368 = vmatprep.subr.bf16.mxu0 %v9284
    %10369 = vmatpush2.bf16.msra.mxu0 %v9283
    %10370 = vmatprep.subr.bf16.mxu0 %v9277
    %10371 = vmatpush2.bf16.msra.mxu0 %v9276
    %10372 = vmatprep.mubr.bf16.mxu0 %v6774
    %10373 = vmatmul.mubr.bf16.gmra.mxu0 %v6773
    %v10374 = vpop.f32.mrf.mxu0
    %v10375 = vadd.f32 %v7428, %v10374
    %v10376 = vpop.f32.mrf.mxu0
    %v10377 = vadd.f32 %v7432, %v10376
    %v10378 = vpop.f32.mrf.mxu0
    %v10379 = vpop.f32.mrf.mxu0
    %10380 = vdwg.mxu0
    %10381 = vmatprep.subr.bf16.mxu0 %v9382
    %10382 = vmatpush1.bf16.msra.mxu0 %v9381
    %10383 = vmatprep.subr.bf16.mxu0 %v9375
    %10384 = vmatpush1.bf16.msra.mxu0 %v9374
    %10385 = vmatprep.subr.bf16.mxu0 %v9368
    %10386 = vmatpush1.bf16.msra.mxu0 %v9367
    %10387 = vmatprep.subr.bf16.mxu0 %v9361
    %10388 = vmatpush1.bf16.msra.mxu0 %v9360
    %10389 = vmatprep.subr.bf16.mxu0 %v9354
    %10390 = vmatpush1.bf16.msra.mxu0 %v9353
    %10391 = vmatprep.subr.bf16.mxu0 %v9347
    %10392 = vmatpush1.bf16.msra.mxu0 %v9346
    %10393 = vmatprep.subr.bf16.mxu0 %v9340
    %10394 = vmatpush1.bf16.msra.mxu0 %v9339
    %10395 = vmatprep.subr.bf16.mxu0 %v9333
    %10396 = vmatpush1.bf16.msra.mxu0 %v9332
    %10397 = vmatprep.subr.bf16.mxu0 %v9438
    %10398 = vmatpush2.bf16.msra.mxu0 %v9437
    %10399 = vmatprep.subr.bf16.mxu0 %v9431
    %10400 = vmatpush2.bf16.msra.mxu0 %v9430
    %10401 = vmatprep.subr.bf16.mxu0 %v9424
    %10402 = vmatpush2.bf16.msra.mxu0 %v9423
    %10403 = vmatprep.subr.bf16.mxu0 %v9417
    %10404 = vmatpush2.bf16.msra.mxu0 %v9416
    %10405 = vmatprep.subr.bf16.mxu0 %v9410
    %10406 = vmatpush2.bf16.msra.mxu0 %v9409
    %10407 = vmatprep.subr.bf16.mxu0 %v9403
    %10408 = vmatpush2.bf16.msra.mxu0 %v9402
    %10409 = vmatprep.subr.bf16.mxu0 %v9396
    %10410 = vmatpush2.bf16.msra.mxu0 %v9395
    %10411 = vmatprep.subr.bf16.mxu0 %v9389
    %10412 = vmatpush2.bf16.msra.mxu0 %v9388
    %10413 = vmatprep.mubr.bf16.mxu0 %v6776
    %10414 = vmatmul.mubr.bf16.gmra.mxu0 %v6775
    %v10415 = vpop.f32.mrf.mxu0
    %v10416 = vadd.f32 %v10375, %v10415
    %v10417 = vpop.f32.mrf.mxu0
    %v10418 = vadd.f32 %v10377, %v10417
    %v10419 = vpop.f32.mrf.mxu0
    %v10420 = vpop.f32.mrf.mxu0
    %10421 = vdwg.mxu0
    %10422 = vmatprep.subr.bf16.mxu0 %v9494
    %10423 = vmatpush1.bf16.msra.mxu0 %v9493
    %10424 = vmatprep.subr.bf16.mxu0 %v9487
    %10425 = vmatpush1.bf16.msra.mxu0 %v9486
    %10426 = vmatprep.subr.bf16.mxu0 %v9480
    %10427 = vmatpush1.bf16.msra.mxu0 %v9479
    %10428 = vmatprep.subr.bf16.mxu0 %v9473
    %10429 = vmatpush1.bf16.msra.mxu0 %v9472
    %10430 = vmatprep.subr.bf16.mxu0 %v9466
    %10431 = vmatpush1.bf16.msra.mxu0 %v9465
    %10432 = vmatprep.subr.bf16.mxu0 %v9459
    %10433 = vmatpush1.bf16.msra.mxu0 %v9458
    %10434 = vmatprep.subr.bf16.mxu0 %v9452
    %10435 = vmatpush1.bf16.msra.mxu0 %v9451
    %10436 = vmatprep.subr.bf16.mxu0 %v9445
    %10437 = vmatpush1.bf16.msra.mxu0 %v9444
    %10438 = vmatprep.subr.bf16.mxu0 %v9550
    %10439 = vmatpush2.bf16.msra.mxu0 %v9549
    %10440 = vmatprep.subr.bf16.mxu0 %v9543
    %10441 = vmatpush2.bf16.msra.mxu0 %v9542
    %10442 = vmatprep.subr.bf16.mxu0 %v9536
    %10443 = vmatpush2.bf16.msra.mxu0 %v9535
    %10444 = vmatprep.subr.bf16.mxu0 %v9529
    %10445 = vmatpush2.bf16.msra.mxu0 %v9528
    %10446 = vmatprep.subr.bf16.mxu0 %v9522
    %10447 = vmatpush2.bf16.msra.mxu0 %v9521
    %10448 = vmatprep.subr.bf16.mxu0 %v9515
    %10449 = vmatpush2.bf16.msra.mxu0 %v9514
    %10450 = vmatprep.subr.bf16.mxu0 %v9508
    %10451 = vmatpush2.bf16.msra.mxu0 %v9507
    %10452 = vmatprep.subr.bf16.mxu0 %v9501
    %10453 = vmatpush2.bf16.msra.mxu0 %v9500
    %10454 = vmatprep.mubr.bf16.mxu0 %v6778
    %10455 = vmatmul.mubr.bf16.gmra.mxu0 %v6777
    %v10456 = vpop.f32.mrf.mxu0
    %v10457 = vadd.f32 %v10416, %v10456
    %v10458 = vpop.f32.mrf.mxu0
    %v10459 = vadd.f32 %v10418, %v10458
    %v10460 = vpop.f32.mrf.mxu0
    %v10461 = vpop.f32.mrf.mxu0
    %10462 = vdwg.mxu0
    %10463 = vmatprep.subr.bf16.mxu0 %v9606
    %10464 = vmatpush1.bf16.msra.mxu0 %v9605
    %10465 = vmatprep.subr.bf16.mxu0 %v9599
    %10466 = vmatpush1.bf16.msra.mxu0 %v9598
    %10467 = vmatprep.subr.bf16.mxu0 %v9592
    %10468 = vmatpush1.bf16.msra.mxu0 %v9591
    %10469 = vmatprep.subr.bf16.mxu0 %v9585
    %10470 = vmatpush1.bf16.msra.mxu0 %v9584
    %10471 = vmatprep.subr.bf16.mxu0 %v9578
    %10472 = vmatpush1.bf16.msra.mxu0 %v9577
    %10473 = vmatprep.subr.bf16.mxu0 %v9571
    %10474 = vmatpush1.bf16.msra.mxu0 %v9570
    %10475 = vmatprep.subr.bf16.mxu0 %v9564
    %10476 = vmatpush1.bf16.msra.mxu0 %v9563
    %10477 = vmatprep.subr.bf16.mxu0 %v9557
    %10478 = vmatpush1.bf16.msra.mxu0 %v9556
    %10479 = vmatprep.subr.bf16.mxu0 %v9662
    %10480 = vmatpush2.bf16.msra.mxu0 %v9661
    %10481 = vmatprep.subr.bf16.mxu0 %v9655
    %10482 = vmatpush2.bf16.msra.mxu0 %v9654
    %10483 = vmatprep.subr.bf16.mxu0 %v9648
    %10484 = vmatpush2.bf16.msra.mxu0 %v9647
    %10485 = vmatprep.subr.bf16.mxu0 %v9641
    %10486 = vmatpush2.bf16.msra.mxu0 %v9640
    %10487 = vmatprep.subr.bf16.mxu0 %v9634
    %10488 = vmatpush2.bf16.msra.mxu0 %v9633
    %10489 = vmatprep.subr.bf16.mxu0 %v9627
    %10490 = vmatpush2.bf16.msra.mxu0 %v9626
    %10491 = vmatprep.subr.bf16.mxu0 %v9620
    %10492 = vmatpush2.bf16.msra.mxu0 %v9619
    %10493 = vmatprep.subr.bf16.mxu0 %v9613
    %10494 = vmatpush2.bf16.msra.mxu0 %v9612
    %10495 = vmatprep.mubr.bf16.mxu0 %v6780
    %10496 = vmatmul.mubr.bf16.gmra.mxu0 %v6779
    %v10497 = vpop.f32.mrf.mxu0
    %v10498 = vadd.f32 %v10457, %v10497
    %v10499 = vpop.f32.mrf.mxu0
    %v10500 = vadd.f32 %v10459, %v10499
    %v10501 = vpop.f32.mrf.mxu0
    %v10502 = vpop.f32.mrf.mxu0
    %10503 = vdwg.mxu0
    %10504 = vmatprep.subr.bf16.mxu0 %v9718
    %10505 = vmatpush1.bf16.msra.mxu0 %v9717
    %10506 = vmatprep.subr.bf16.mxu0 %v9711
    %10507 = vmatpush1.bf16.msra.mxu0 %v9710
    %10508 = vmatprep.subr.bf16.mxu0 %v9704
    %10509 = vmatpush1.bf16.msra.mxu0 %v9703
    %10510 = vmatprep.subr.bf16.mxu0 %v9697
    %10511 = vmatpush1.bf16.msra.mxu0 %v9696
    %10512 = vmatprep.subr.bf16.mxu0 %v9690
    %10513 = vmatpush1.bf16.msra.mxu0 %v9689
    %10514 = vmatprep.subr.bf16.mxu0 %v9683
    %10515 = vmatpush1.bf16.msra.mxu0 %v9682
    %10516 = vmatprep.subr.bf16.mxu0 %v9676
    %10517 = vmatpush1.bf16.msra.mxu0 %v9675
    %10518 = vmatprep.subr.bf16.mxu0 %v9669
    %10519 = vmatpush1.bf16.msra.mxu0 %v9668
    %10520 = vmatprep.subr.bf16.mxu0 %v9774
    %10521 = vmatpush2.bf16.msra.mxu0 %v9773
    %10522 = vmatprep.subr.bf16.mxu0 %v9767
    %10523 = vmatpush2.bf16.msra.mxu0 %v9766
    %10524 = vmatprep.subr.bf16.mxu0 %v9760
    %10525 = vmatpush2.bf16.msra.mxu0 %v9759
    %10526 = vmatprep.subr.bf16.mxu0 %v9753
    %10527 = vmatpush2.bf16.msra.mxu0 %v9752
    %10528 = vmatprep.subr.bf16.mxu0 %v9746
    %10529 = vmatpush2.bf16.msra.mxu0 %v9745
    %10530 = vmatprep.subr.bf16.mxu0 %v9739
    %10531 = vmatpush2.bf16.msra.mxu0 %v9738
    %10532 = vmatprep.subr.bf16.mxu0 %v9732
    %10533 = vmatpush2.bf16.msra.mxu0 %v9731
    %10534 = vmatprep.subr.bf16.mxu0 %v9725
    %10535 = vmatpush2.bf16.msra.mxu0 %v9724
    %10536 = vmatprep.mubr.bf16.mxu0 %v6782
    %10537 = vmatmul.mubr.bf16.gmra.mxu0 %v6781
    %v10538 = vpop.f32.mrf.mxu0
    %v10539 = vadd.f32 %v10498, %v10538
    %v10540 = vpop.f32.mrf.mxu0
    %v10541 = vadd.f32 %v10500, %v10540
    %v10542 = vpop.f32.mrf.mxu0
    %v10543 = vpop.f32.mrf.mxu0
    %10544 = vdwg.mxu0
    %10545 = vmatprep.subr.bf16.mxu0 %v9272
    %10546 = vmatpush1.bf16.msra.mxu0 %v9271
    %10547 = vmatprep.subr.bf16.mxu0 %v9265
    %10548 = vmatpush1.bf16.msra.mxu0 %v9264
    %10549 = vmatprep.subr.bf16.mxu0 %v9258
    %10550 = vmatpush1.bf16.msra.mxu0 %v9257
    %10551 = vmatprep.subr.bf16.mxu0 %v9251
    %10552 = vmatpush1.bf16.msra.mxu0 %v9250
    %10553 = vmatprep.subr.bf16.mxu0 %v9244
    %10554 = vmatpush1.bf16.msra.mxu0 %v9243
    %10555 = vmatprep.subr.bf16.mxu0 %v9237
    %10556 = vmatpush1.bf16.msra.mxu0 %v9236
    %10557 = vmatprep.subr.bf16.mxu0 %v9230
    %10558 = vmatpush1.bf16.msra.mxu0 %v9229
    %10559 = vmatprep.subr.bf16.mxu0 %v9223
    %10560 = vmatpush1.bf16.msra.mxu0 %v9222
    %10561 = vmatprep.subr.bf16.mxu0 %v9328
    %10562 = vmatpush2.bf16.msra.mxu0 %v9327
    %10563 = vmatprep.subr.bf16.mxu0 %v9321
    %10564 = vmatpush2.bf16.msra.mxu0 %v9320
    %10565 = vmatprep.subr.bf16.mxu0 %v9314
    %10566 = vmatpush2.bf16.msra.mxu0 %v9313
    %10567 = vmatprep.subr.bf16.mxu0 %v9307
    %10568 = vmatpush2.bf16.msra.mxu0 %v9306
    %10569 = vmatprep.subr.bf16.mxu0 %v9300
    %10570 = vmatpush2.bf16.msra.mxu0 %v9299
    %10571 = vmatprep.subr.bf16.mxu0 %v9293
    %10572 = vmatpush2.bf16.msra.mxu0 %v9292
    %10573 = vmatprep.subr.bf16.mxu0 %v9286
    %10574 = vmatpush2.bf16.msra.mxu0 %v9285
    %10575 = vmatprep.subr.bf16.mxu0 %v9279
    %10576 = vmatpush2.bf16.msra.mxu0 %v9278
    %10577 = vmatprep.mubr.bf16.mxu0 %v6774
    %10578 = vmatmul.mubr.bf16.gmra.mxu0 %v6773
    %v10579 = vpop.f32.mrf.mxu0
    %v10580 = vadd.f32 %v7436, %v10579
    %v10581 = vpop.f32.mrf.mxu0
    %v10582 = vadd.f32 %v7440, %v10581
    %v10583 = vpop.f32.mrf.mxu0
    %v10584 = vpop.f32.mrf.mxu0
    %10585 = vdwg.mxu0
    %10586 = vmatprep.subr.bf16.mxu0 %v9384
    %10587 = vmatpush1.bf16.msra.mxu0 %v9383
    %10588 = vmatprep.subr.bf16.mxu0 %v9377
    %10589 = vmatpush1.bf16.msra.mxu0 %v9376
    %10590 = vmatprep.subr.bf16.mxu0 %v9370
    %10591 = vmatpush1.bf16.msra.mxu0 %v9369
    %10592 = vmatprep.subr.bf16.mxu0 %v9363
    %10593 = vmatpush1.bf16.msra.mxu0 %v9362
    %10594 = vmatprep.subr.bf16.mxu0 %v9356
    %10595 = vmatpush1.bf16.msra.mxu0 %v9355
    %10596 = vmatprep.subr.bf16.mxu0 %v9349
    %10597 = vmatpush1.bf16.msra.mxu0 %v9348
    %10598 = vmatprep.subr.bf16.mxu0 %v9342
    %10599 = vmatpush1.bf16.msra.mxu0 %v9341
    %10600 = vmatprep.subr.bf16.mxu0 %v9335
    %10601 = vmatpush1.bf16.msra.mxu0 %v9334
    %10602 = vmatprep.subr.bf16.mxu0 %v9440
    %10603 = vmatpush2.bf16.msra.mxu0 %v9439
    %10604 = vmatprep.subr.bf16.mxu0 %v9433
    %10605 = vmatpush2.bf16.msra.mxu0 %v9432
    %10606 = vmatprep.subr.bf16.mxu0 %v9426
    %10607 = vmatpush2.bf16.msra.mxu0 %v9425
    %10608 = vmatprep.subr.bf16.mxu0 %v9419
    %10609 = vmatpush2.bf16.msra.mxu0 %v9418
    %10610 = vmatprep.subr.bf16.mxu0 %v9412
    %10611 = vmatpush2.bf16.msra.mxu0 %v9411
    %10612 = vmatprep.subr.bf16.mxu0 %v9405
    %10613 = vmatpush2.bf16.msra.mxu0 %v9404
    %10614 = vmatprep.subr.bf16.mxu0 %v9398
    %10615 = vmatpush2.bf16.msra.mxu0 %v9397
    %10616 = vmatprep.subr.bf16.mxu0 %v9391
    %10617 = vmatpush2.bf16.msra.mxu0 %v9390
    %10618 = vmatprep.mubr.bf16.mxu0 %v6776
    %10619 = vmatmul.mubr.bf16.gmra.mxu0 %v6775
    %v10620 = vpop.f32.mrf.mxu0
    %v10621 = vadd.f32 %v10580, %v10620
    %v10622 = vpop.f32.mrf.mxu0
    %v10623 = vadd.f32 %v10582, %v10622
    %v10624 = vpop.f32.mrf.mxu0
    %v10625 = vpop.f32.mrf.mxu0
    %10626 = vdwg.mxu0
    %10627 = vmatprep.subr.bf16.mxu0 %v9496
    %10628 = vmatpush1.bf16.msra.mxu0 %v9495
    %10629 = vmatprep.subr.bf16.mxu0 %v9489
    %10630 = vmatpush1.bf16.msra.mxu0 %v9488
    %10631 = vmatprep.subr.bf16.mxu0 %v9482
    %10632 = vmatpush1.bf16.msra.mxu0 %v9481
    %10633 = vmatprep.subr.bf16.mxu0 %v9475
    %10634 = vmatpush1.bf16.msra.mxu0 %v9474
    %10635 = vmatprep.subr.bf16.mxu0 %v9468
    %10636 = vmatpush1.bf16.msra.mxu0 %v9467
    %10637 = vmatprep.subr.bf16.mxu0 %v9461
    %10638 = vmatpush1.bf16.msra.mxu0 %v9460
    %10639 = vmatprep.subr.bf16.mxu0 %v9454
    %10640 = vmatpush1.bf16.msra.mxu0 %v9453
    %10641 = vmatprep.subr.bf16.mxu0 %v9447
    %10642 = vmatpush1.bf16.msra.mxu0 %v9446
    %10643 = vmatprep.subr.bf16.mxu0 %v9552
    %10644 = vmatpush2.bf16.msra.mxu0 %v9551
    %10645 = vmatprep.subr.bf16.mxu0 %v9545
    %10646 = vmatpush2.bf16.msra.mxu0 %v9544
    %10647 = vmatprep.subr.bf16.mxu0 %v9538
    %10648 = vmatpush2.bf16.msra.mxu0 %v9537
    %10649 = vmatprep.subr.bf16.mxu0 %v9531
    %10650 = vmatpush2.bf16.msra.mxu0 %v9530
    %10651 = vmatprep.subr.bf16.mxu0 %v9524
    %10652 = vmatpush2.bf16.msra.mxu0 %v9523
    %10653 = vmatprep.subr.bf16.mxu0 %v9517
    %10654 = vmatpush2.bf16.msra.mxu0 %v9516
    %10655 = vmatprep.subr.bf16.mxu0 %v9510
    %10656 = vmatpush2.bf16.msra.mxu0 %v9509
    %10657 = vmatprep.subr.bf16.mxu0 %v9503
    %10658 = vmatpush2.bf16.msra.mxu0 %v9502
    %10659 = vmatprep.mubr.bf16.mxu0 %v6778
    %10660 = vmatmul.mubr.bf16.gmra.mxu0 %v6777
    %v10661 = vpop.f32.mrf.mxu0
    %v10662 = vadd.f32 %v10621, %v10661
    %v10663 = vpop.f32.mrf.mxu0
    %v10664 = vadd.f32 %v10623, %v10663
    %v10665 = vpop.f32.mrf.mxu0
    %v10666 = vpop.f32.mrf.mxu0
    %10667 = vdwg.mxu0
    %10668 = vmatprep.subr.bf16.mxu0 %v9608
    %10669 = vmatpush1.bf16.msra.mxu0 %v9607
    %10670 = vmatprep.subr.bf16.mxu0 %v9601
    %10671 = vmatpush1.bf16.msra.mxu0 %v9600
    %10672 = vmatprep.subr.bf16.mxu0 %v9594
    %10673 = vmatpush1.bf16.msra.mxu0 %v9593
    %10674 = vmatprep.subr.bf16.mxu0 %v9587
    %10675 = vmatpush1.bf16.msra.mxu0 %v9586
    %10676 = vmatprep.subr.bf16.mxu0 %v9580
    %10677 = vmatpush1.bf16.msra.mxu0 %v9579
    %10678 = vmatprep.subr.bf16.mxu0 %v9573
    %10679 = vmatpush1.bf16.msra.mxu0 %v9572
    %10680 = vmatprep.subr.bf16.mxu0 %v9566
    %10681 = vmatpush1.bf16.msra.mxu0 %v9565
    %10682 = vmatprep.subr.bf16.mxu0 %v9559
    %10683 = vmatpush1.bf16.msra.mxu0 %v9558
    %10684 = vmatprep.subr.bf16.mxu0 %v9664
    %10685 = vmatpush2.bf16.msra.mxu0 %v9663
    %10686 = vmatprep.subr.bf16.mxu0 %v9657
    %10687 = vmatpush2.bf16.msra.mxu0 %v9656
    %10688 = vmatprep.subr.bf16.mxu0 %v9650
    %10689 = vmatpush2.bf16.msra.mxu0 %v9649
    %10690 = vmatprep.subr.bf16.mxu0 %v9643
    %10691 = vmatpush2.bf16.msra.mxu0 %v9642
    %10692 = vmatprep.subr.bf16.mxu0 %v9636
    %10693 = vmatpush2.bf16.msra.mxu0 %v9635
    %10694 = vmatprep.subr.bf16.mxu0 %v9629
    %10695 = vmatpush2.bf16.msra.mxu0 %v9628
    %10696 = vmatprep.subr.bf16.mxu0 %v9622
    %10697 = vmatpush2.bf16.msra.mxu0 %v9621
    %10698 = vmatprep.subr.bf16.mxu0 %v9615
    %10699 = vmatpush2.bf16.msra.mxu0 %v9614
    %10700 = vmatprep.mubr.bf16.mxu0 %v6780
    %10701 = vmatmul.mubr.bf16.gmra.mxu0 %v6779
    %v10702 = vpop.f32.mrf.mxu0
    %v10703 = vadd.f32 %v10662, %v10702
    %v10704 = vpop.f32.mrf.mxu0
    %v10705 = vadd.f32 %v10664, %v10704
    %v10706 = vpop.f32.mrf.mxu0
    %v10707 = vpop.f32.mrf.mxu0
    %10708 = vdwg.mxu0
    %10709 = vmatprep.subr.bf16.mxu0 %v9720
    %10710 = vmatpush1.bf16.msra.mxu0 %v9719
    %10711 = vmatprep.subr.bf16.mxu0 %v9713
    %10712 = vmatpush1.bf16.msra.mxu0 %v9712
    %10713 = vmatprep.subr.bf16.mxu0 %v9706
    %10714 = vmatpush1.bf16.msra.mxu0 %v9705
    %10715 = vmatprep.subr.bf16.mxu0 %v9699
    %10716 = vmatpush1.bf16.msra.mxu0 %v9698
    %10717 = vmatprep.subr.bf16.mxu0 %v9692
    %10718 = vmatpush1.bf16.msra.mxu0 %v9691
    %10719 = vmatprep.subr.bf16.mxu0 %v9685
    %10720 = vmatpush1.bf16.msra.mxu0 %v9684
    %10721 = vmatprep.subr.bf16.mxu0 %v9678
    %10722 = vmatpush1.bf16.msra.mxu0 %v9677
    %10723 = vmatprep.subr.bf16.mxu0 %v9671
    %10724 = vmatpush1.bf16.msra.mxu0 %v9670
    %10725 = vmatprep.subr.bf16.mxu0 %v9776
    %10726 = vmatpush2.bf16.msra.mxu0 %v9775
    %10727 = vmatprep.subr.bf16.mxu0 %v9769
    %10728 = vmatpush2.bf16.msra.mxu0 %v9768
    %10729 = vmatprep.subr.bf16.mxu0 %v9762
    %10730 = vmatpush2.bf16.msra.mxu0 %v9761
    %10731 = vmatprep.subr.bf16.mxu0 %v9755
    %10732 = vmatpush2.bf16.msra.mxu0 %v9754
    %10733 = vmatprep.subr.bf16.mxu0 %v9748
    %10734 = vmatpush2.bf16.msra.mxu0 %v9747
    %10735 = vmatprep.subr.bf16.mxu0 %v9741
    %10736 = vmatpush2.bf16.msra.mxu0 %v9740
    %10737 = vmatprep.subr.bf16.mxu0 %v9734
    %10738 = vmatpush2.bf16.msra.mxu0 %v9733
    %10739 = vmatprep.subr.bf16.mxu0 %v9727
    %10740 = vmatpush2.bf16.msra.mxu0 %v9726
    %10741 = vmatprep.mubr.bf16.mxu0 %v6782
    %10742 = vmatmul.mubr.bf16.gmra.mxu0 %v6781
    %v10743 = vpop.f32.mrf.mxu0
    %v10744 = vadd.f32 %v10703, %v10743
    %v10745 = vpop.f32.mrf.mxu0
    %v10746 = vadd.f32 %v10705, %v10745
    %v10747 = vpop.f32.mrf.mxu0
    %v10748 = vpop.f32.mrf.mxu0
    %10749 = vdwg.mxu0
    %10750 = vmatprep.subr.bf16.mxu0 %v9274
    %10751 = vmatpush1.bf16.msra.mxu0 %v9273
    %10752 = vmatprep.subr.bf16.mxu0 %v9267
    %10753 = vmatpush1.bf16.msra.mxu0 %v9266
    %10754 = vmatprep.subr.bf16.mxu0 %v9260
    %10755 = vmatpush1.bf16.msra.mxu0 %v9259
    %10756 = vmatprep.subr.bf16.mxu0 %v9253
    %10757 = vmatpush1.bf16.msra.mxu0 %v9252
    %10758 = vmatprep.subr.bf16.mxu0 %v9246
    %10759 = vmatpush1.bf16.msra.mxu0 %v9245
    %10760 = vmatprep.subr.bf16.mxu0 %v9239
    %10761 = vmatpush1.bf16.msra.mxu0 %v9238
    %10762 = vmatprep.subr.bf16.mxu0 %v9232
    %10763 = vmatpush1.bf16.msra.mxu0 %v9231
    %10764 = vmatprep.subr.bf16.mxu0 %v9225
    %10765 = vmatpush1.bf16.msra.mxu0 %v9224
    %10766 = vmatprep.subr.bf16.mxu0 %v9330
    %10767 = vmatpush2.bf16.msra.mxu0 %v9329
    %10768 = vmatprep.subr.bf16.mxu0 %v9323
    %10769 = vmatpush2.bf16.msra.mxu0 %v9322
    %10770 = vmatprep.subr.bf16.mxu0 %v9316
    %10771 = vmatpush2.bf16.msra.mxu0 %v9315
    %10772 = vmatprep.subr.bf16.mxu0 %v9309
    %10773 = vmatpush2.bf16.msra.mxu0 %v9308
    %10774 = vmatprep.subr.bf16.mxu0 %v9302
    %10775 = vmatpush2.bf16.msra.mxu0 %v9301
    %10776 = vmatprep.subr.bf16.mxu0 %v9295
    %10777 = vmatpush2.bf16.msra.mxu0 %v9294
    %10778 = vmatprep.subr.bf16.mxu0 %v9288
    %10779 = vmatpush2.bf16.msra.mxu0 %v9287
    %10780 = vmatprep.subr.bf16.mxu0 %v9281
    %10781 = vmatpush2.bf16.msra.mxu0 %v9280
    %10782 = vmatprep.mubr.bf16.mxu0 %v6774
    %10783 = vmatmul.mubr.bf16.gmra.mxu0 %v6773
    %v10784 = vpop.f32.mrf.mxu0
    %v10785 = vadd.f32 %v7444, %v10784
    %v10786 = vpop.f32.mrf.mxu0
    %v10787 = vadd.f32 %v7448, %v10786
    %v10788 = vpop.f32.mrf.mxu0
    %v10789 = vpop.f32.mrf.mxu0
    %10790 = vdwg.mxu0
    %10791 = vmatprep.subr.bf16.mxu0 %v9386
    %10792 = vmatpush1.bf16.msra.mxu0 %v9385
    %10793 = vmatprep.subr.bf16.mxu0 %v9379
    %10794 = vmatpush1.bf16.msra.mxu0 %v9378
    %10795 = vmatprep.subr.bf16.mxu0 %v9372
    %10796 = vmatpush1.bf16.msra.mxu0 %v9371
    %10797 = vmatprep.subr.bf16.mxu0 %v9365
    %10798 = vmatpush1.bf16.msra.mxu0 %v9364
    %10799 = vmatprep.subr.bf16.mxu0 %v9358
    %10800 = vmatpush1.bf16.msra.mxu0 %v9357
    %10801 = vmatprep.subr.bf16.mxu0 %v9351
    %10802 = vmatpush1.bf16.msra.mxu0 %v9350
    %10803 = vmatprep.subr.bf16.mxu0 %v9344
    %10804 = vmatpush1.bf16.msra.mxu0 %v9343
    %10805 = vmatprep.subr.bf16.mxu0 %v9337
    %10806 = vmatpush1.bf16.msra.mxu0 %v9336
    %10807 = vmatprep.subr.bf16.mxu0 %v9442
    %10808 = vmatpush2.bf16.msra.mxu0 %v9441
    %10809 = vmatprep.subr.bf16.mxu0 %v9435
    %10810 = vmatpush2.bf16.msra.mxu0 %v9434
    %10811 = vmatprep.subr.bf16.mxu0 %v9428
    %10812 = vmatpush2.bf16.msra.mxu0 %v9427
    %10813 = vmatprep.subr.bf16.mxu0 %v9421
    %10814 = vmatpush2.bf16.msra.mxu0 %v9420
    %10815 = vmatprep.subr.bf16.mxu0 %v9414
    %10816 = vmatpush2.bf16.msra.mxu0 %v9413
    %10817 = vmatprep.subr.bf16.mxu0 %v9407
    %10818 = vmatpush2.bf16.msra.mxu0 %v9406
    %10819 = vmatprep.subr.bf16.mxu0 %v9400
    %10820 = vmatpush2.bf16.msra.mxu0 %v9399
    %10821 = vmatprep.subr.bf16.mxu0 %v9393
    %10822 = vmatpush2.bf16.msra.mxu0 %v9392
    %10823 = vmatprep.mubr.bf16.mxu0 %v6776
    %10824 = vmatmul.mubr.bf16.gmra.mxu0 %v6775
    %v10825 = vpop.f32.mrf.mxu0
    %v10826 = vadd.f32 %v10785, %v10825
    %v10827 = vpop.f32.mrf.mxu0
    %v10828 = vadd.f32 %v10787, %v10827
    %v10829 = vpop.f32.mrf.mxu0
    %v10830 = vpop.f32.mrf.mxu0
    %10831 = vdwg.mxu0
    %10832 = vmatprep.subr.bf16.mxu0 %v9498
    %10833 = vmatpush1.bf16.msra.mxu0 %v9497
    %10834 = vmatprep.subr.bf16.mxu0 %v9491
    %10835 = vmatpush1.bf16.msra.mxu0 %v9490
    %10836 = vmatprep.subr.bf16.mxu0 %v9484
    %10837 = vmatpush1.bf16.msra.mxu0 %v9483
    %10838 = vmatprep.subr.bf16.mxu0 %v9477
    %10839 = vmatpush1.bf16.msra.mxu0 %v9476
    %10840 = vmatprep.subr.bf16.mxu0 %v9470
    %10841 = vmatpush1.bf16.msra.mxu0 %v9469
    %10842 = vmatprep.subr.bf16.mxu0 %v9463
    %10843 = vmatpush1.bf16.msra.mxu0 %v9462
    %10844 = vmatprep.subr.bf16.mxu0 %v9456
    %10845 = vmatpush1.bf16.msra.mxu0 %v9455
    %10846 = vmatprep.subr.bf16.mxu0 %v9449
    %10847 = vmatpush1.bf16.msra.mxu0 %v9448
    %10848 = vmatprep.subr.bf16.mxu0 %v9554
    %10849 = vmatpush2.bf16.msra.mxu0 %v9553
    %10850 = vmatprep.subr.bf16.mxu0 %v9547
    %10851 = vmatpush2.bf16.msra.mxu0 %v9546
    %10852 = vmatprep.subr.bf16.mxu0 %v9540
    %10853 = vmatpush2.bf16.msra.mxu0 %v9539
    %10854 = vmatprep.subr.bf16.mxu0 %v9533
    %10855 = vmatpush2.bf16.msra.mxu0 %v9532
    %10856 = vmatprep.subr.bf16.mxu0 %v9526
    %10857 = vmatpush2.bf16.msra.mxu0 %v9525
    %10858 = vmatprep.subr.bf16.mxu0 %v9519
    %10859 = vmatpush2.bf16.msra.mxu0 %v9518
    %10860 = vmatprep.subr.bf16.mxu0 %v9512
    %10861 = vmatpush2.bf16.msra.mxu0 %v9511
    %10862 = vmatprep.subr.bf16.mxu0 %v9505
    %10863 = vmatpush2.bf16.msra.mxu0 %v9504
    %10864 = vmatprep.mubr.bf16.mxu0 %v6778
    %10865 = vmatmul.mubr.bf16.gmra.mxu0 %v6777
    %v10866 = vpop.f32.mrf.mxu0
    %v10867 = vadd.f32 %v10826, %v10866
    %v10868 = vpop.f32.mrf.mxu0
    %v10869 = vadd.f32 %v10828, %v10868
    %v10870 = vpop.f32.mrf.mxu0
    %v10871 = vpop.f32.mrf.mxu0
    %10872 = vdwg.mxu0
    %10873 = vmatprep.subr.bf16.mxu0 %v9610
    %10874 = vmatpush1.bf16.msra.mxu0 %v9609
    %10875 = vmatprep.subr.bf16.mxu0 %v9603
    %10876 = vmatpush1.bf16.msra.mxu0 %v9602
    %10877 = vmatprep.subr.bf16.mxu0 %v9596
    %10878 = vmatpush1.bf16.msra.mxu0 %v9595
    %10879 = vmatprep.subr.bf16.mxu0 %v9589
    %10880 = vmatpush1.bf16.msra.mxu0 %v9588
    %10881 = vmatprep.subr.bf16.mxu0 %v9582
    %10882 = vmatpush1.bf16.msra.mxu0 %v9581
    %10883 = vmatprep.subr.bf16.mxu0 %v9575
    %10884 = vmatpush1.bf16.msra.mxu0 %v9574
    %10885 = vmatprep.subr.bf16.mxu0 %v9568
    %10886 = vmatpush1.bf16.msra.mxu0 %v9567
    %10887 = vmatprep.subr.bf16.mxu0 %v9561
    %10888 = vmatpush1.bf16.msra.mxu0 %v9560
    %10889 = vmatprep.subr.bf16.mxu0 %v9666
    %10890 = vmatpush2.bf16.msra.mxu0 %v9665
    %10891 = vmatprep.subr.bf16.mxu0 %v9659
    %10892 = vmatpush2.bf16.msra.mxu0 %v9658
    %10893 = vmatprep.subr.bf16.mxu0 %v9652
    %10894 = vmatpush2.bf16.msra.mxu0 %v9651
    %10895 = vmatprep.subr.bf16.mxu0 %v9645
    %10896 = vmatpush2.bf16.msra.mxu0 %v9644
    %10897 = vmatprep.subr.bf16.mxu0 %v9638
    %10898 = vmatpush2.bf16.msra.mxu0 %v9637
    %10899 = vmatprep.subr.bf16.mxu0 %v9631
    %10900 = vmatpush2.bf16.msra.mxu0 %v9630
    %10901 = vmatprep.subr.bf16.mxu0 %v9624
    %10902 = vmatpush2.bf16.msra.mxu0 %v9623
    %10903 = vmatprep.subr.bf16.mxu0 %v9617
    %10904 = vmatpush2.bf16.msra.mxu0 %v9616
    %10905 = vmatprep.mubr.bf16.mxu0 %v6780
    %10906 = vmatmul.mubr.bf16.gmra.mxu0 %v6779
    %v10907 = vpop.f32.mrf.mxu0
    %v10908 = vadd.f32 %v10867, %v10907
    %v10909 = vpop.f32.mrf.mxu0
    %v10910 = vadd.f32 %v10869, %v10909
    %v10911 = vpop.f32.mrf.mxu0
    %v10912 = vpop.f32.mrf.mxu0
    %10913 = vdwg.mxu0
    %10914 = vmatprep.subr.bf16.mxu0 %v9722
    %10915 = vmatpush1.bf16.msra.mxu0 %v9721
    %10916 = vmatprep.subr.bf16.mxu0 %v9715
    %10917 = vmatpush1.bf16.msra.mxu0 %v9714
    %10918 = vmatprep.subr.bf16.mxu0 %v9708
    %10919 = vmatpush1.bf16.msra.mxu0 %v9707
    %10920 = vmatprep.subr.bf16.mxu0 %v9701
    %10921 = vmatpush1.bf16.msra.mxu0 %v9700
    %10922 = vmatprep.subr.bf16.mxu0 %v9694
    %10923 = vmatpush1.bf16.msra.mxu0 %v9693
    %10924 = vmatprep.subr.bf16.mxu0 %v9687
    %10925 = vmatpush1.bf16.msra.mxu0 %v9686
    %10926 = vmatprep.subr.bf16.mxu0 %v9680
    %10927 = vmatpush1.bf16.msra.mxu0 %v9679
    %10928 = vmatprep.subr.bf16.mxu0 %v9673
    %10929 = vmatpush1.bf16.msra.mxu0 %v9672
    %10930 = vmatprep.subr.bf16.mxu0 %v9778
    %10931 = vmatpush2.bf16.msra.mxu0 %v9777
    %10932 = vmatprep.subr.bf16.mxu0 %v9771
    %10933 = vmatpush2.bf16.msra.mxu0 %v9770
    %10934 = vmatprep.subr.bf16.mxu0 %v9764
    %10935 = vmatpush2.bf16.msra.mxu0 %v9763
    %10936 = vmatprep.subr.bf16.mxu0 %v9757
    %10937 = vmatpush2.bf16.msra.mxu0 %v9756
    %10938 = vmatprep.subr.bf16.mxu0 %v9750
    %10939 = vmatpush2.bf16.msra.mxu0 %v9749
    %10940 = vmatprep.subr.bf16.mxu0 %v9743
    %10941 = vmatpush2.bf16.msra.mxu0 %v9742
    %10942 = vmatprep.subr.bf16.mxu0 %v9736
    %10943 = vmatpush2.bf16.msra.mxu0 %v9735
    %10944 = vmatprep.subr.bf16.mxu0 %v9729
    %10945 = vmatpush2.bf16.msra.mxu0 %v9728
    %10946 = vmatprep.mubr.bf16.mxu0 %v6782
    %10947 = vmatmul.mubr.bf16.gmra.mxu0 %v6781
    %v10948 = vpop.f32.mrf.mxu0
    %v10949 = vadd.f32 %v10908, %v10948
    %v10950 = vpop.f32.mrf.mxu0
    %v10951 = vadd.f32 %v10910, %v10950
    %v10952 = vpop.f32.mrf.mxu0
    %v10953 = vpop.f32.mrf.mxu0
    %10954 = vdwg.mxu0
    %10955 = vmatprep.subr.bf16.mxu0 0
    %10956 = vmatpush1.bf16.msra.mxu0 %v9275
    %10957 = vmatprep.subr.bf16.mxu0 0
    %10958 = vmatpush1.bf16.msra.mxu0 %v9268
    %10959 = vmatprep.subr.bf16.mxu0 0
    %10960 = vmatpush1.bf16.msra.mxu0 %v9261
    %10961 = vmatprep.subr.bf16.mxu0 0
    %10962 = vmatpush1.bf16.msra.mxu0 %v9254
    %10963 = vmatprep.subr.bf16.mxu0 0
    %10964 = vmatpush1.bf16.msra.mxu0 %v9247
    %10965 = vmatprep.subr.bf16.mxu0 0
    %10966 = vmatpush1.bf16.msra.mxu0 %v9240
    %10967 = vmatprep.subr.bf16.mxu0 0
    %10968 = vmatpush1.bf16.msra.mxu0 %v9233
    %10969 = vmatprep.subr.bf16.mxu0 0
    %10970 = vmatpush1.bf16.msra.mxu0 %v9226
    %10971 = vmatprep.subr.bf16.mxu0 0
    %10972 = vmatpush2.bf16.msra.mxu0 %v9331
    %10973 = vmatprep.subr.bf16.mxu0 0
    %10974 = vmatpush2.bf16.msra.mxu0 %v9324
    %10975 = vmatprep.subr.bf16.mxu0 0
    %10976 = vmatpush2.bf16.msra.mxu0 %v9317
    %10977 = vmatprep.subr.bf16.mxu0 0
    %10978 = vmatpush2.bf16.msra.mxu0 %v9310
    %10979 = vmatprep.subr.bf16.mxu0 0
    %10980 = vmatpush2.bf16.msra.mxu0 %v9303
    %10981 = vmatprep.subr.bf16.mxu0 0
    %10982 = vmatpush2.bf16.msra.mxu0 %v9296
    %10983 = vmatprep.subr.bf16.mxu0 0
    %10984 = vmatpush2.bf16.msra.mxu0 %v9289
    %10985 = vmatprep.subr.bf16.mxu0 0
    %10986 = vmatpush2.bf16.msra.mxu0 %v9282
    %10987 = vmatprep.mubr.bf16.mxu0 %v6774
    %10988 = vmatmul.mubr.bf16.gmra.mxu0 %v6773
    %v10989 = vpop.f32.mrf.mxu0
    %v10990 = vadd.f32 %v7452, %v10989
    %v10991 = vpop.f32.mrf.mxu0
    %v10992 = vpop.f32.mrf.mxu0
    %v10993 = vpop.f32.mrf.mxu0
    %10994 = vdwg.mxu0
    %10995 = vmatprep.subr.bf16.mxu0 0
    %10996 = vmatpush1.bf16.msra.mxu0 %v9387
    %10997 = vmatprep.subr.bf16.mxu0 0
    %10998 = vmatpush1.bf16.msra.mxu0 %v9380
    %10999 = vmatprep.subr.bf16.mxu0 0
    %11000 = vmatpush1.bf16.msra.mxu0 %v9373
    %11001 = vmatprep.subr.bf16.mxu0 0
    %11002 = vmatpush1.bf16.msra.mxu0 %v9366
    %11003 = vmatprep.subr.bf16.mxu0 0
    %11004 = vmatpush1.bf16.msra.mxu0 %v9359
    %11005 = vmatprep.subr.bf16.mxu0 0
    %11006 = vmatpush1.bf16.msra.mxu0 %v9352
    %11007 = vmatprep.subr.bf16.mxu0 0
    %11008 = vmatpush1.bf16.msra.mxu0 %v9345
    %11009 = vmatprep.subr.bf16.mxu0 0
    %11010 = vmatpush1.bf16.msra.mxu0 %v9338
    %11011 = vmatprep.subr.bf16.mxu0 0
    %11012 = vmatpush2.bf16.msra.mxu0 %v9443
    %11013 = vmatprep.subr.bf16.mxu0 0
    %11014 = vmatpush2.bf16.msra.mxu0 %v9436
    %11015 = vmatprep.subr.bf16.mxu0 0
    %11016 = vmatpush2.bf16.msra.mxu0 %v9429
    %11017 = vmatprep.subr.bf16.mxu0 0
    %11018 = vmatpush2.bf16.msra.mxu0 %v9422
    %11019 = vmatprep.subr.bf16.mxu0 0
    %11020 = vmatpush2.bf16.msra.mxu0 %v9415
    %11021 = vmatprep.subr.bf16.mxu0 0
    %11022 = vmatpush2.bf16.msra.mxu0 %v9408
    %11023 = vmatprep.subr.bf16.mxu0 0
    %11024 = vmatpush2.bf16.msra.mxu0 %v9401
    %11025 = vmatprep.subr.bf16.mxu0 0
    %11026 = vmatpush2.bf16.msra.mxu0 %v9394
    %11027 = vmatprep.mubr.bf16.mxu0 %v6776
    %11028 = vmatmul.mubr.bf16.gmra.mxu0 %v6775
    %v11029 = vpop.f32.mrf.mxu0
    %v11030 = vadd.f32 %v10990, %v11029
    %v11031 = vpop.f32.mrf.mxu0
    %v11032 = vpop.f32.mrf.mxu0
    %v11033 = vpop.f32.mrf.mxu0
    %11034 = vdwg.mxu0
    %11035 = vmatprep.subr.bf16.mxu0 0
    %11036 = vmatpush1.bf16.msra.mxu0 %v9499
    %11037 = vmatprep.subr.bf16.mxu0 0
    %11038 = vmatpush1.bf16.msra.mxu0 %v9492
    %11039 = vmatprep.subr.bf16.mxu0 0
    %11040 = vmatpush1.bf16.msra.mxu0 %v9485
    %11041 = vmatprep.subr.bf16.mxu0 0
    %11042 = vmatpush1.bf16.msra.mxu0 %v9478
    %11043 = vmatprep.subr.bf16.mxu0 0
    %11044 = vmatpush1.bf16.msra.mxu0 %v9471
    %11045 = vmatprep.subr.bf16.mxu0 0
    %11046 = vmatpush1.bf16.msra.mxu0 %v9464
    %11047 = vmatprep.subr.bf16.mxu0 0
    %11048 = vmatpush1.bf16.msra.mxu0 %v9457
    %11049 = vmatprep.subr.bf16.mxu0 0
    %11050 = vmatpush1.bf16.msra.mxu0 %v9450
    %11051 = vmatprep.subr.bf16.mxu0 0
    %11052 = vmatpush2.bf16.msra.mxu0 %v9555
    %11053 = vmatprep.subr.bf16.mxu0 0
    %11054 = vmatpush2.bf16.msra.mxu0 %v9548
    %11055 = vmatprep.subr.bf16.mxu0 0
    %11056 = vmatpush2.bf16.msra.mxu0 %v9541
    %11057 = vmatprep.subr.bf16.mxu0 0
    %11058 = vmatpush2.bf16.msra.mxu0 %v9534
    %11059 = vmatprep.subr.bf16.mxu0 0
    %11060 = vmatpush2.bf16.msra.mxu0 %v9527
    %11061 = vmatprep.subr.bf16.mxu0 0
    %11062 = vmatpush2.bf16.msra.mxu0 %v9520
    %11063 = vmatprep.subr.bf16.mxu0 0
    %11064 = vmatpush2.bf16.msra.mxu0 %v9513
    %11065 = vmatprep.subr.bf16.mxu0 0
    %11066 = vmatpush2.bf16.msra.mxu0 %v9506
    %11067 = vmatprep.mubr.bf16.mxu0 %v6778
    %11068 = vmatmul.mubr.bf16.gmra.mxu0 %v6777
    %v11069 = vpop.f32.mrf.mxu0
    %v11070 = vadd.f32 %v11030, %v11069
    %v11071 = vpop.f32.mrf.mxu0
    %v11072 = vpop.f32.mrf.mxu0
    %v11073 = vpop.f32.mrf.mxu0
    %11074 = vdwg.mxu0
    %11075 = vmatprep.subr.bf16.mxu0 0
    %11076 = vmatpush1.bf16.msra.mxu0 %v9611
    %11077 = vmatprep.subr.bf16.mxu0 0
    %11078 = vmatpush1.bf16.msra.mxu0 %v9604
    %11079 = vmatprep.subr.bf16.mxu0 0
    %11080 = vmatpush1.bf16.msra.mxu0 %v9597
    %11081 = vmatprep.subr.bf16.mxu0 0
    %11082 = vmatpush1.bf16.msra.mxu0 %v9590
    %11083 = vmatprep.subr.bf16.mxu0 0
    %11084 = vmatpush1.bf16.msra.mxu0 %v9583
    %11085 = vmatprep.subr.bf16.mxu0 0
    %11086 = vmatpush1.bf16.msra.mxu0 %v9576
    %11087 = vmatprep.subr.bf16.mxu0 0
    %11088 = vmatpush1.bf16.msra.mxu0 %v9569
    %11089 = vmatprep.subr.bf16.mxu0 0
    %11090 = vmatpush1.bf16.msra.mxu0 %v9562
    %11091 = vmatprep.subr.bf16.mxu0 0
    %11092 = vmatpush2.bf16.msra.mxu0 %v9667
    %11093 = vmatprep.subr.bf16.mxu0 0
    %11094 = vmatpush2.bf16.msra.mxu0 %v9660
    %11095 = vmatprep.subr.bf16.mxu0 0
    %11096 = vmatpush2.bf16.msra.mxu0 %v9653
    %11097 = vmatprep.subr.bf16.mxu0 0
    %11098 = vmatpush2.bf16.msra.mxu0 %v9646
    %11099 = vmatprep.subr.bf16.mxu0 0
    %11100 = vmatpush2.bf16.msra.mxu0 %v9639
    %11101 = vmatprep.subr.bf16.mxu0 0
    %11102 = vmatpush2.bf16.msra.mxu0 %v9632
    %11103 = vmatprep.subr.bf16.mxu0 0
    %11104 = vmatpush2.bf16.msra.mxu0 %v9625
    %11105 = vmatprep.subr.bf16.mxu0 0
    %11106 = vmatpush2.bf16.msra.mxu0 %v9618
    %11107 = vmatprep.mubr.bf16.mxu0 %v6780
    %11108 = vmatmul.mubr.bf16.gmra.mxu0 %v6779
    %v11109 = vpop.f32.mrf.mxu0
    %v11110 = vadd.f32 %v11070, %v11109
    %v11111 = vpop.f32.mrf.mxu0
    %v11112 = vpop.f32.mrf.mxu0
    %v11113 = vpop.f32.mrf.mxu0
    %11114 = vdwg.mxu0
    %11115 = vmatprep.subr.bf16.mxu0 0
    %11116 = vmatpush1.bf16.msra.mxu0 %v9723
    %11117 = vmatprep.subr.bf16.mxu0 0
    %11118 = vmatpush1.bf16.msra.mxu0 %v9716
    %11119 = vmatprep.subr.bf16.mxu0 0
    %11120 = vmatpush1.bf16.msra.mxu0 %v9709
    %11121 = vmatprep.subr.bf16.mxu0 0
    %11122 = vmatpush1.bf16.msra.mxu0 %v9702
    %11123 = vmatprep.subr.bf16.mxu0 0
    %11124 = vmatpush1.bf16.msra.mxu0 %v9695
    %11125 = vmatprep.subr.bf16.mxu0 0
    %11126 = vmatpush1.bf16.msra.mxu0 %v9688
    %11127 = vmatprep.subr.bf16.mxu0 0
    %11128 = vmatpush1.bf16.msra.mxu0 %v9681
    %11129 = vmatprep.subr.bf16.mxu0 0
    %11130 = vmatpush1.bf16.msra.mxu0 %v9674
    %11131 = vmatprep.subr.bf16.mxu0 0
    %11132 = vmatpush2.bf16.msra.mxu0 %v9779
    %11133 = vmatprep.subr.bf16.mxu0 0
    %11134 = vmatpush2.bf16.msra.mxu0 %v9772
    %11135 = vmatprep.subr.bf16.mxu0 0
    %11136 = vmatpush2.bf16.msra.mxu0 %v9765
    %11137 = vmatprep.subr.bf16.mxu0 0
    %11138 = vmatpush2.bf16.msra.mxu0 %v9758
    %11139 = vmatprep.subr.bf16.mxu0 0
    %11140 = vmatpush2.bf16.msra.mxu0 %v9751
    %11141 = vmatprep.subr.bf16.mxu0 0
    %11142 = vmatpush2.bf16.msra.mxu0 %v9744
    %11143 = vmatprep.subr.bf16.mxu0 0
    %11144 = vmatpush2.bf16.msra.mxu0 %v9737
    %11145 = vmatprep.subr.bf16.mxu0 0
    %11146 = vmatpush2.bf16.msra.mxu0 %v9730
    %11147 = vmatprep.mubr.bf16.mxu0 %v6782
    %11148 = vmatmul.mubr.bf16.gmra.mxu0 %v6781
    %v11149 = vpop.f32.mrf.mxu0
    %v11150 = vadd.f32 %v11110, %v11149
    %v11151 = vpop.f32.mrf.mxu0
    %v11152 = vpop.f32.mrf.mxu0
    %v11153 = vpop.f32.mrf.mxu0
    %11154 = vdwg.mxu0
    %v11155 = vtanh.pop %v10539
    %v11156 = vtanh.pop %v10541
    %v11157 = vtanh.pop %v10744
    %v11158 = vtanh.pop %v10746
    %v11159 = vtanh.pop %v10949
    %v11160 = vtanh.pop %v10951
    %v11161 = vtanh.pop %v11150
    %v11162 = vld [vmem:[#allocation23] sm:$0xff]
    %v11164 = vlaneseq
    %v11165 = vshrl.u32 %v11164, 7
    %v11166 = vsub.s32 0, %v11165
    %v11167 = vrot.slane %v11162, %v11166
    %v11168 = vlaneseq
    %v11169 = vshrl.u32 %v11168, 7
    %v11170 = vsub.s32 1, %v11169
    %v11171 = vrot.slane %v11162, %v11170
    %v11172 = vlaneseq
    %v11173 = vshrl.u32 %v11172, 7
    %v11174 = vsub.s32 2, %v11173
    %v11175 = vrot.slane %v11162, %v11174
    %v11176 = vlaneseq
    %v11177 = vshrl.u32 %v11176, 7
    %v11178 = vsub.s32 3, %v11177
    %v11179 = vrot.slane %v11162, %v11178
    %v11180 = vlaneseq
    %v11181 = vshrl.u32 %v11180, 7
    %v11182 = vsub.s32 4, %v11181
    %v11183 = vrot.slane %v11162, %v11182
    %v11184 = vlaneseq
    %v11185 = vshrl.u32 %v11184, 7
    %v11186 = vsub.s32 5, %v11185
    %v11187 = vrot.slane %v11162, %v11186
    %v11188 = vlaneseq
    %v11189 = vshrl.u32 %v11188, 7
    %v11190 = vsub.s32 6, %v11189
    %v11191 = vrot.slane %v11162, %v11190
    %v11199 = vmul.f32 %v11155, %v11167
    %v11200 = vmul.f32 %v11156, %v11171
    %v11201 = vmul.f32 %v11157, %v11175
    %v11202 = vmul.f32 %v11158, %v11179
    %v11203 = vmul.f32 %v11159, %v11183
    %v11204 = vmul.f32 %v11160, %v11187
    %v11205 = vmul.f32 %v11161, %v11191
    %vm11206 = vcmask 1041408
    %v11207 = vsel %vm11206, %v11199, 0.0
    %v11208 = vsel %vm11206, %v11200, 0.0
    %v11209 = vadd.f32 %v11207, %v11208
    %v11210 = vsel %vm11206, %v11201, 0.0
    %v11211 = vadd.f32 %v11209, %v11210
    %v11212 = vsel %vm11206, %v11202, 0.0
    %v11213 = vadd.f32 %v11211, %v11212
    %v11214 = vsel %vm11206, %v11203, 0.0
    %v11215 = vadd.f32 %v11213, %v11214
    %v11216 = vsel %vm11206, %v11204, 0.0
    %v11217 = vadd.f32 %v11215, %v11216
    %v11218 = vsel %vm11206, %v11205, 0.0
    %v11219 = vadd.f32 %v11217, %v11218
    %11220 = vadd.xlane.f32.xlu0 %v11219
    %v11221 = vpop.xlane.xlu0 %11220
    %s11222 = sld [smem:[#allocation8]]
    %v11223 = vstv %s11222
    %v11224 = vadd.f32 %v11221, %v11223
    %v11225 = vsub.f32 0.0, %v11224
    %v11226 = vmul.f32 %v11225, 1.442695
    %v11227 = vpow.pop %v11226
    %v11228 = vadd.f32 %v11227, 1.0
    %v11229 = vrcp.pop %v11228
    %v11230 = vmul.f32 1.0, %v11229
    %vm11231 = vcmask 1024
    %11232 = vst.msk [vmem:[%s14] sm:$0x3] %vm11231, %v11230
    // Predicated region
    $region98: #{class_specialist_forward.1} parent=1 // pred_check
      _
    $region99: #{class_specialist_forward.1} parent=1 // pred_check_branch
      %11234 = sbr.rel (0) target = $region101
    $region100: #{class_specialist_forward.1} parent=1 // pred_region
      _
    $region101: #{class_specialist_forward.1} parent=1 // pred_fallthru
      _
    // Predicated region
    $region102: #{class_specialist_forward.1} parent=1 // pred_check
      _
    $region103: #{class_specialist_forward.1} parent=1 // pred_check_branch
      %11236 = sbr.rel (0) target = $region105
    $region104: #{class_specialist_forward.1} parent=1 // pred_region
      _
    $region105: #{class_specialist_forward.1} parent=1 // pred_fallthru
      _
    %11237 = vsyncpa [#allocation10], 1
    %11238 = vsyncpa [#allocation12], 1
    %11239 = vsyncpa [#allocation15], 1
    %11240 = vsyncpa [#allocation18], 1
    %11241 = vsyncpa [#allocation21], 1
    %11242 = vsyncpa [#allocation24], 1

</llo_original>
